<compile_context>
chip_gen: v5e
topology: v5e:2x2
jax: 0.10.0
libtpu: 0.0.40
codegen_flags: <defaults>
</compile_context>

<pallas_src>
import functools

import jax
import jax.numpy as jnp
from jax import lax
from jax.experimental import pallas as pl
from jax.experimental.pallas import tpu as pltpu

D_MODEL = 8          # d_model in the reference
HEAD_SIZE = 8        # MaskedAttention(d_model, 8) -> head_size hard-coded to 8
SEQ = 8              # tril mask is (8, 8) -> sequence length must be 8
EPS = 1e-6


def _block_kernel(x_ref, wqkv_ref, w1_ref, b1_ref, w2_ref, b2_ref, ln_ref, o_ref):
    """One grid step = `block_b` batch elements laid out as (D, T, block_b).

    Batch lives on the 128-wide lane axis, the T=8 sequence positions on the
    sublane axis; the tiny D=8 / H=8 feature dims are unrolled Python loops
    over (T, block_b) slabs with weight scalars read from SMEM.
    """
    D, T, H = D_MODEL, SEQ, HEAD_SIZE
    a1, g1 = ln_ref[0], ln_ref[1]
    a2, g2 = ln_ref[2], ln_ref[3]

    # Load the (D, T, BB) block as D dense (T, BB) lane-slabs.
    xs = [x_ref[d] for d in range(D)]

    def layernorm(slabs, alpha, bias):
        # PyTorch-style: unbiased std, alpha*(x-mean)/(std+eps)+bias.
        mean = sum(slabs) * (1.0 / D)
        var = sum((s - mean) * (s - mean) for s in slabs) * (1.0 / (D - 1))
        inv = 1.0 / (jnp.sqrt(var) + EPS)   # computed once per row, reused for all D
        return [alpha * (s - mean) * inv + bias for s in slabs]

    def linear(slabs, w_ref, col0, n_out, b_ref=None):
        # out[j] = sum_i slabs[i] * W[i, col0 + j] (+ b[j]); W scalars from SMEM.
        outs = []
        for j in range(n_out):
            acc = slabs[0] * w_ref[0, col0 + j]
            for i in range(1, D):
                acc = acc + slabs[i] * w_ref[i, col0 + j]
            if b_ref is not None:
                acc = acc + b_ref[j]
            outs.append(acc)
        return outs

    # ---- LayerNorm 1 ----
    xn = layernorm(xs, a1, g1)

    # ---- Fused Q/K/V projection (no bias) ----
    q = linear(xn, wqkv_ref, 0 * H, H)
    k = linear(xn, wqkv_ref, 1 * H, H)
    v = linear(xn, wqkv_ref, 2 * H, H)

    # ---- Causal attention, no 1/sqrt(d) scaling (matches reference) ----
    row = lax.broadcasted_iota(jnp.int32, (T, 1), 0)      # hoisted once (query index)
    scores = []
    for tj in range(T):                                   # key / column index
        s = q[0] * k[0][tj:tj + 1, :]
        for h in range(1, H):
            s = s + q[h] * k[h][tj:tj + 1, :]
        scores.append(jnp.where(row >= tj, s, -jnp.inf))  # tril mask

    m = functools.reduce(jnp.maximum, scores)
    es = [jnp.exp(s - m) for s in scores]
    # Exact reciprocal keeps the tight tolerance; approx=True would push it to the EUP.
    inv_den = pl.reciprocal(sum(es), approx=False)
    wei = [e * inv_den for e in es]

    att = []
    for h in range(H):
        a = wei[0] * v[h][0:1, :]
        for tj in range(1, T):
            a = a + wei[tj] * v[h][tj:tj + 1, :]
        att.append(a)

    # ---- Residual 1 (head_size == d_model) ----
    xa = [xs[d] + att[d] for d in range(D)]

    # ---- LayerNorm 2 ----
    xn2 = layernorm(xa, a2, g2)

    # ---- Positionwise FFN: relu(L2(L1(x))); dropout(p=0.1) == identity (eval) ----
    # TODO(synk): training-mode dropout RNG not implemented (eval semantics only).
    h1 = linear(xn2, w1_ref, 0, D, b1_ref)
    h2 = linear(h1, w2_ref, 0, D, b2_ref)

    # ---- Residual 2; dense, unmasked lane stores ----
    for d in range(D):
        o_ref[d] = xa[d] + jnp.maximum(h2[d], 0.0)


def _round_up(n, m):
    return ((n + m - 1) // m) * m


def block_forward(x, ln_params, wq, wk, wv, w1, b1, w2, b2, *, block_b=256):
    B, T, D = x.shape
    assert T == SEQ and D == D_MODEL
    assert block_b % 128 == 0

    wqkv = jnp.concatenate([wq, wk, wv], axis=1)          # fused (D, 3H) weight
    b1 = jnp.reshape(b1, (-1,))
    b2 = jnp.reshape(b2, (-1,))
    ln_params = jnp.reshape(ln_params, (-1,))

    # Batch-in-lanes layout: (B, T, D) -> (D, T, B); pad batch to a block multiple.
    bb = block_b
    Bp = _round_up(B, bb)
    xt = jnp.transpose(x, (2, 1, 0))
    if Bp != B:
        xt = jnp.pad(xt, ((0, 0), (0, 0), (0, Bp - B)))

    grid = (Bp // bb,)

    flops_per_elem = (2 * T * D * 3 * HEAD_SIZE           # qkv projection
                      + 2 * T * T * HEAD_SIZE             # q @ k^T
                      + 2 * T * T * HEAD_SIZE             # wei @ v
                      + 2 * 2 * T * D * D                 # FFN
                      + 8 * T * D)                        # layernorms / residuals
    cost = pl.CostEstimate(
        flops=flops_per_elem * Bp,
        transcendentals=(T * T + 2 * T) * Bp,
        bytes_accessed=2 * Bp * T * D * 4
        + 4 * (wqkv.size + w1.size + w2.size + b1.size + b2.size + ln_params.size),
    )

    out_t = pl.pallas_call(
        _block_kernel,
        out_shape=jax.ShapeDtypeStruct((D, T, Bp), jnp.float32),
        grid_spec=pltpu.PrefetchScalarGridSpec(
            num_scalar_prefetch=0,
            grid=grid,
            in_specs=[
                pl.BlockSpec((D, T, bb), lambda i: (0, 0, i)),       # x slab (VMEM)
                pl.BlockSpec(memory_space=pltpu.MemorySpace.SMEM),   # Wqkv
                pl.BlockSpec(memory_space=pltpu.MemorySpace.SMEM),   # W1
                pl.BlockSpec(memory_space=pltpu.MemorySpace.SMEM),   # b1
                pl.BlockSpec(memory_space=pltpu.MemorySpace.SMEM),   # W2
                pl.BlockSpec(memory_space=pltpu.MemorySpace.SMEM),   # b2
                pl.BlockSpec(memory_space=pltpu.MemorySpace.SMEM),   # [a1, g1, a2, g2]
            ],
            out_specs=pl.BlockSpec((D, T, bb), lambda i: (0, 0, i)),
        ),
        compiler_params=pltpu.CompilerParams(
            dimension_semantics=("parallel",),   # batch blocks are independent
        ),
        cost_estimate=cost,
    )(xt, wqkv, w1, b1, w2, b2, ln_params)

    out = jnp.transpose(out_t, (2, 1, 0))
    return out[:B]


def block_reference(x, ln_params, wq, wk, wv, w1, b1, w2, b2):
    """Pure-JAX reference with identical semantics, for validation."""
    a1, g1, a2, g2 = ln_params

    def ln(t, alpha, bias):
        mean = jnp.mean(t, axis=-1, keepdims=True)
        var = jnp.sum((t - mean) ** 2, axis=-1, keepdims=True) / (t.shape[-1] - 1)
        return alpha * (t - mean) / (jnp.sqrt(var) + EPS) + bias

    with jax.default_matmul_precision("highest"):
        xn = ln(x, a1, g1)
        q, k, v = xn @ wq, xn @ wk, xn @ wv
        wei = q @ jnp.swapaxes(k, -1, -2)
        mask = jnp.tril(jnp.ones((SEQ, SEQ)))
        wei = jnp.where(mask == 0, -jnp.inf, wei)
        wei = jax.nn.softmax(wei, axis=-1)
        att = wei @ v
        xa = x + att
        xn2 = ln(xa, a2, g2)
        ff = jnp.maximum((xn2 @ w1 + b1) @ w2 + b2, 0.0)
        return xa + ff


if __name__ == "__main__":
    # Batch is blocked 256-per-grid-step inside the kernel -> 4 grid steps here.
    B, T, D = 1024, SEQ, D_MODEL
    key = jax.random.PRNGKey(0)
    k_x, k_q, k_k, k_v, k_w1, k_b1, k_w2, k_b2 = jax.random.split(key, 8)

    x = jax.random.normal(k_x, (B, T, D), dtype=jnp.float32)

    # Deterministic synthetic parameters (shapes from the module __init__),
    # stored as (in_features, out_features), i.e. pre-transposed from PyTorch.
    scale = 1.0 / jnp.sqrt(jnp.float32(D))
    wq = jax.random.uniform(k_q, (D, HEAD_SIZE), jnp.float32, -scale, scale)
    wk = jax.random.uniform(k_k, (D, HEAD_SIZE), jnp.float32, -scale, scale)
    wv = jax.random.uniform(k_v, (D, HEAD_SIZE), jnp.float32, -scale, scale)
    w1 = jax.random.uniform(k_w1, (D, D), jnp.float32, -scale, scale)
    b1 = jax.random.uniform(k_b1, (D,), jnp.float32, -scale, scale)
    w2 = jax.random.uniform(k_w2, (D, D), jnp.float32, -scale, scale)
    b2 = jax.random.uniform(k_b2, (D,), jnp.float32, -scale, scale)
    ln_params = jnp.ones((4,), jnp.float32)   # alpha1, bias1, alpha2, bias2 (torch.ones(1))

    fwd = jax.jit(block_forward)
    out = jax.block_until_ready(fwd(x, ln_params, wq, wk, wv, w1, b1, w2, b2))

    ref = block_reference(x, ln_params, wq, wk, wv, w1, b1, w2, b2)
    assert out.shape == (B, T, D)
    assert jnp.allclose(out, ref, atol=2e-5, rtol=2e-5), "mismatch vs JAX reference"

    print("KERNEL_OK")
</pallas_src>

<mosaic_0001>
module attributes {stable_mosaic.version = 11 : i64} {
  func.func @_block_kernel(%arg0: i32, %arg1: memref<8x8x256xf32, #tpu.memory_space<vmem>>, %arg2: memref<8x24xf32, #tpu.memory_space<smem>>, %arg3: memref<8x8xf32, #tpu.memory_space<smem>>, %arg4: memref<8xf32, #tpu.memory_space<smem>>, %arg5: memref<8x8xf32, #tpu.memory_space<smem>>, %arg6: memref<8xf32, #tpu.memory_space<smem>>, %arg7: memref<4xf32, #tpu.memory_space<smem>>, %arg8: memref<8x8x256xf32, #tpu.memory_space<vmem>>) attributes {dimension_semantics = [#tpu.dimension_semantics<parallel>], iteration_bounds = array<i64: 4>, scalar_prefetch = 0 : i64, scratch_operands = 0 : i64, tpu.core_type = #tpu.core_type<tc>, window_params = [{transform_indices = @transform_0, window_bounds = array<i64: 8, 8, 256>}, {transform_indices = @transform_1, window_bounds = array<i64: 8, 24>}, {transform_indices = @transform_2, window_bounds = array<i64: 8, 8>}, {transform_indices = @transform_3, window_bounds = array<i64: 8>}, {transform_indices = @transform_4, window_bounds = array<i64: 8, 8>}, {transform_indices = @transform_5, window_bounds = array<i64: 8>}, {transform_indices = @transform_6, window_bounds = array<i64: 4>}, {transform_indices = @transform_7, window_bounds = array<i64: 8, 8, 256>}]} {
    %c0 = arith.constant 0 : index
    %0 = memref.load %arg7[%c0] : memref<4xf32, #tpu.memory_space<smem>>
    %c1 = arith.constant 1 : index
    %1 = memref.load %arg7[%c1] : memref<4xf32, #tpu.memory_space<smem>>
    %c2 = arith.constant 2 : index
    %2 = memref.load %arg7[%c2] : memref<4xf32, #tpu.memory_space<smem>>
    %c3 = arith.constant 3 : index
    %3 = memref.load %arg7[%c3] : memref<4xf32, #tpu.memory_space<smem>>
    %c0_0 = arith.constant 0 : index
    %c0_1 = arith.constant 0 : index
    %c0_2 = arith.constant 0 : index
    %4 = vector.load %arg1[%c0_0, %c0_1, %c0_2] : memref<8x8x256xf32, #tpu.memory_space<vmem>>, vector<1x8x256xf32>
    %5 = vector.shape_cast %4 : vector<1x8x256xf32> to vector<8x256xf32>
    %c1_3 = arith.constant 1 : index
    %c0_4 = arith.constant 0 : index
    %c0_5 = arith.constant 0 : index
    %6 = vector.load %arg1[%c1_3, %c0_4, %c0_5] : memref<8x8x256xf32, #tpu.memory_space<vmem>>, vector<1x8x256xf32>
    %7 = vector.shape_cast %6 : vector<1x8x256xf32> to vector<8x256xf32>
    %c2_6 = arith.constant 2 : index
    %c0_7 = arith.constant 0 : index
    %c0_8 = arith.constant 0 : index
    %8 = vector.load %arg1[%c2_6, %c0_7, %c0_8] : memref<8x8x256xf32, #tpu.memory_space<vmem>>, vector<1x8x256xf32>
    %9 = vector.shape_cast %8 : vector<1x8x256xf32> to vector<8x256xf32>
    %c3_9 = arith.constant 3 : index
    %c0_10 = arith.constant 0 : index
    %c0_11 = arith.constant 0 : index
    %10 = vector.load %arg1[%c3_9, %c0_10, %c0_11] : memref<8x8x256xf32, #tpu.memory_space<vmem>>, vector<1x8x256xf32>
    %11 = vector.shape_cast %10 : vector<1x8x256xf32> to vector<8x256xf32>
    %c4 = arith.constant 4 : index
    %c0_12 = arith.constant 0 : index
    %c0_13 = arith.constant 0 : index
    %12 = vector.load %arg1[%c4, %c0_12, %c0_13] : memref<8x8x256xf32, #tpu.memory_space<vmem>>, vector<1x8x256xf32>
    %13 = vector.shape_cast %12 : vector<1x8x256xf32> to vector<8x256xf32>
    %c5 = arith.constant 5 : index
    %c0_14 = arith.constant 0 : index
    %c0_15 = arith.constant 0 : index
    %14 = vector.load %arg1[%c5, %c0_14, %c0_15] : memref<8x8x256xf32, #tpu.memory_space<vmem>>, vector<1x8x256xf32>
    %15 = vector.shape_cast %14 : vector<1x8x256xf32> to vector<8x256xf32>
    %c6 = arith.constant 6 : index
    %c0_16 = arith.constant 0 : index
    %c0_17 = arith.constant 0 : index
    %16 = vector.load %arg1[%c6, %c0_16, %c0_17] : memref<8x8x256xf32, #tpu.memory_space<vmem>>, vector<1x8x256xf32>
    %17 = vector.shape_cast %16 : vector<1x8x256xf32> to vector<8x256xf32>
    %c7 = arith.constant 7 : index
    %c0_18 = arith.constant 0 : index
    %c0_19 = arith.constant 0 : index
    %18 = vector.load %arg1[%c7, %c0_18, %c0_19] : memref<8x8x256xf32, #tpu.memory_space<vmem>>, vector<1x8x256xf32>
    %19 = vector.shape_cast %18 : vector<1x8x256xf32> to vector<8x256xf32>
    %cst = arith.constant 0.000000e+00 : f32
    %20 = vector.broadcast %cst : f32 to vector<8x256xf32>
    %21 = arith.addf %20, %5 : vector<8x256xf32>
    %22 = arith.addf %21, %7 : vector<8x256xf32>
    %23 = arith.addf %22, %9 : vector<8x256xf32>
    %24 = arith.addf %23, %11 : vector<8x256xf32>
    %25 = arith.addf %24, %13 : vector<8x256xf32>
    %26 = arith.addf %25, %15 : vector<8x256xf32>
    %27 = arith.addf %26, %17 : vector<8x256xf32>
    %28 = arith.addf %27, %19 : vector<8x256xf32>
    %cst_20 = arith.constant 1.250000e-01 : f32
    %29 = vector.broadcast %cst_20 : f32 to vector<8x256xf32>
    %30 = arith.mulf %28, %29 : vector<8x256xf32>
    %31 = arith.subf %5, %30 : vector<8x256xf32>
    %32 = arith.subf %5, %30 : vector<8x256xf32>
    %33 = arith.mulf %31, %32 : vector<8x256xf32>
    %cst_21 = arith.constant 0.000000e+00 : f32
    %34 = vector.broadcast %cst_21 : f32 to vector<8x256xf32>
    %35 = arith.addf %34, %33 : vector<8x256xf32>
    %36 = arith.subf %7, %30 : vector<8x256xf32>
    %37 = arith.subf %7, %30 : vector<8x256xf32>
    %38 = arith.mulf %36, %37 : vector<8x256xf32>
    %39 = arith.addf %35, %38 : vector<8x256xf32>
    %40 = arith.subf %9, %30 : vector<8x256xf32>
    %41 = arith.subf %9, %30 : vector<8x256xf32>
    %42 = arith.mulf %40, %41 : vector<8x256xf32>
    %43 = arith.addf %39, %42 : vector<8x256xf32>
    %44 = arith.subf %11, %30 : vector<8x256xf32>
    %45 = arith.subf %11, %30 : vector<8x256xf32>
    %46 = arith.mulf %44, %45 : vector<8x256xf32>
    %47 = arith.addf %43, %46 : vector<8x256xf32>
    %48 = arith.subf %13, %30 : vector<8x256xf32>
    %49 = arith.subf %13, %30 : vector<8x256xf32>
    %50 = arith.mulf %48, %49 : vector<8x256xf32>
    %51 = arith.addf %47, %50 : vector<8x256xf32>
    %52 = arith.subf %15, %30 : vector<8x256xf32>
    %53 = arith.subf %15, %30 : vector<8x256xf32>
    %54 = arith.mulf %52, %53 : vector<8x256xf32>
    %55 = arith.addf %51, %54 : vector<8x256xf32>
    %56 = arith.subf %17, %30 : vector<8x256xf32>
    %57 = arith.subf %17, %30 : vector<8x256xf32>
    %58 = arith.mulf %56, %57 : vector<8x256xf32>
    %59 = arith.addf %55, %58 : vector<8x256xf32>
    %60 = arith.subf %19, %30 : vector<8x256xf32>
    %61 = arith.subf %19, %30 : vector<8x256xf32>
    %62 = arith.mulf %60, %61 : vector<8x256xf32>
    %63 = arith.addf %59, %62 : vector<8x256xf32>
    %cst_22 = arith.constant 0.142857149 : f32
    %64 = vector.broadcast %cst_22 : f32 to vector<8x256xf32>
    %65 = arith.mulf %63, %64 : vector<8x256xf32>
    %66 = math.sqrt %65 : vector<8x256xf32>
    %cst_23 = arith.constant 9.99999997E-7 : f32
    %67 = vector.broadcast %cst_23 : f32 to vector<8x256xf32>
    %68 = arith.addf %66, %67 : vector<8x256xf32>
    %cst_24 = arith.constant 1.000000e+00 : f32
    %69 = vector.broadcast %cst_24 : f32 to vector<8x256xf32>
    %70 = arith.divf %69, %68 : vector<8x256xf32>
    %71 = arith.subf %5, %30 : vector<8x256xf32>
    %72 = vector.broadcast %0 : f32 to vector<8x256xf32>
    %73 = arith.mulf %72, %71 : vector<8x256xf32>
    %74 = arith.mulf %73, %70 : vector<8x256xf32>
    %75 = vector.broadcast %1 : f32 to vector<8x256xf32>
    %76 = arith.addf %74, %75 : vector<8x256xf32>
    %77 = arith.subf %7, %30 : vector<8x256xf32>
    %78 = vector.broadcast %0 : f32 to vector<8x256xf32>
    %79 = arith.mulf %78, %77 : vector<8x256xf32>
    %80 = arith.mulf %79, %70 : vector<8x256xf32>
    %81 = vector.broadcast %1 : f32 to vector<8x256xf32>
    %82 = arith.addf %80, %81 : vector<8x256xf32>
    %83 = arith.subf %9, %30 : vector<8x256xf32>
    %84 = vector.broadcast %0 : f32 to vector<8x256xf32>
    %85 = arith.mulf %84, %83 : vector<8x256xf32>
    %86 = arith.mulf %85, %70 : vector<8x256xf32>
    %87 = vector.broadcast %1 : f32 to vector<8x256xf32>
    %88 = arith.addf %86, %87 : vector<8x256xf32>
    %89 = arith.subf %11, %30 : vector<8x256xf32>
    %90 = vector.broadcast %0 : f32 to vector<8x256xf32>
    %91 = arith.mulf %90, %89 : vector<8x256xf32>
    %92 = arith.mulf %91, %70 : vector<8x256xf32>
    %93 = vector.broadcast %1 : f32 to vector<8x256xf32>
    %94 = arith.addf %92, %93 : vector<8x256xf32>
    %95 = arith.subf %13, %30 : vector<8x256xf32>
    %96 = vector.broadcast %0 : f32 to vector<8x256xf32>
    %97 = arith.mulf %96, %95 : vector<8x256xf32>
    %98 = arith.mulf %97, %70 : vector<8x256xf32>
    %99 = vector.broadcast %1 : f32 to vector<8x256xf32>
    %100 = arith.addf %98, %99 : vector<8x256xf32>
    %101 = arith.subf %15, %30 : vector<8x256xf32>
    %102 = vector.broadcast %0 : f32 to vector<8x256xf32>
    %103 = arith.mulf %102, %101 : vector<8x256xf32>
    %104 = arith.mulf %103, %70 : vector<8x256xf32>
    %105 = vector.broadcast %1 : f32 to vector<8x256xf32>
    %106 = arith.addf %104, %105 : vector<8x256xf32>
    %107 = arith.subf %17, %30 : vector<8x256xf32>
    %108 = vector.broadcast %0 : f32 to vector<8x256xf32>
    %109 = arith.mulf %108, %107 : vector<8x256xf32>
    %110 = arith.mulf %109, %70 : vector<8x256xf32>
    %111 = vector.broadcast %1 : f32 to vector<8x256xf32>
    %112 = arith.addf %110, %111 : vector<8x256xf32>
    %113 = arith.subf %19, %30 : vector<8x256xf32>
    %114 = vector.broadcast %0 : f32 to vector<8x256xf32>
    %115 = arith.mulf %114, %113 : vector<8x256xf32>
    %116 = arith.mulf %115, %70 : vector<8x256xf32>
    %117 = vector.broadcast %1 : f32 to vector<8x256xf32>
    %118 = arith.addf %116, %117 : vector<8x256xf32>
    %c0_25 = arith.constant 0 : index
    %c0_26 = arith.constant 0 : index
    %119 = memref.load %arg2[%c0_25, %c0_26] : memref<8x24xf32, #tpu.memory_space<smem>>
    %120 = vector.broadcast %119 : f32 to vector<8x256xf32>
    %121 = arith.mulf %76, %120 : vector<8x256xf32>
    %c1_27 = arith.constant 1 : index
    %c0_28 = arith.constant 0 : index
    %122 = memref.load %arg2[%c1_27, %c0_28] : memref<8x24xf32, #tpu.memory_space<smem>>
    %123 = vector.broadcast %122 : f32 to vector<8x256xf32>
    %124 = arith.mulf %82, %123 : vector<8x256xf32>
    %125 = arith.addf %121, %124 : vector<8x256xf32>
    %c2_29 = arith.constant 2 : index
    %c0_30 = arith.constant 0 : index
    %126 = memref.load %arg2[%c2_29, %c0_30] : memref<8x24xf32, #tpu.memory_space<smem>>
    %127 = vector.broadcast %126 : f32 to vector<8x256xf32>
    %128 = arith.mulf %88, %127 : vector<8x256xf32>
    %129 = arith.addf %125, %128 : vector<8x256xf32>
    %c3_31 = arith.constant 3 : index
    %c0_32 = arith.constant 0 : index
    %130 = memref.load %arg2[%c3_31, %c0_32] : memref<8x24xf32, #tpu.memory_space<smem>>
    %131 = vector.broadcast %130 : f32 to vector<8x256xf32>
    %132 = arith.mulf %94, %131 : vector<8x256xf32>
    %133 = arith.addf %129, %132 : vector<8x256xf32>
    %c4_33 = arith.constant 4 : index
    %c0_34 = arith.constant 0 : index
    %134 = memref.load %arg2[%c4_33, %c0_34] : memref<8x24xf32, #tpu.memory_space<smem>>
    %135 = vector.broadcast %134 : f32 to vector<8x256xf32>
    %136 = arith.mulf %100, %135 : vector<8x256xf32>
    %137 = arith.addf %133, %136 : vector<8x256xf32>
    %c5_35 = arith.constant 5 : index
    %c0_36 = arith.constant 0 : index
    %138 = memref.load %arg2[%c5_35, %c0_36] : memref<8x24xf32, #tpu.memory_space<smem>>
    %139 = vector.broadcast %138 : f32 to vector<8x256xf32>
    %140 = arith.mulf %106, %139 : vector<8x256xf32>
    %141 = arith.addf %137, %140 : vector<8x256xf32>
    %c6_37 = arith.constant 6 : index
    %c0_38 = arith.constant 0 : index
    %142 = memref.load %arg2[%c6_37, %c0_38] : memref<8x24xf32, #tpu.memory_space<smem>>
    %143 = vector.broadcast %142 : f32 to vector<8x256xf32>
    %144 = arith.mulf %112, %143 : vector<8x256xf32>
    %145 = arith.addf %141, %144 : vector<8x256xf32>
    %c7_39 = arith.constant 7 : index
    %c0_40 = arith.constant 0 : index
    %146 = memref.load %arg2[%c7_39, %c0_40] : memref<8x24xf32, #tpu.memory_space<smem>>
    %147 = vector.broadcast %146 : f32 to vector<8x256xf32>
    %148 = arith.mulf %118, %147 : vector<8x256xf32>
    %149 = arith.addf %145, %148 : vector<8x256xf32>
    %c0_41 = arith.constant 0 : index
    %c1_42 = arith.constant 1 : index
    %150 = memref.load %arg2[%c0_41, %c1_42] : memref<8x24xf32, #tpu.memory_space<smem>>
    %151 = vector.broadcast %150 : f32 to vector<8x256xf32>
    %152 = arith.mulf %76, %151 : vector<8x256xf32>
    %c1_43 = arith.constant 1 : index
    %c1_44 = arith.constant 1 : index
    %153 = memref.load %arg2[%c1_43, %c1_44] : memref<8x24xf32, #tpu.memory_space<smem>>
    %154 = vector.broadcast %153 : f32 to vector<8x256xf32>
    %155 = arith.mulf %82, %154 : vector<8x256xf32>
    %156 = arith.addf %152, %155 : vector<8x256xf32>
    %c2_45 = arith.constant 2 : index
    %c1_46 = arith.constant 1 : index
    %157 = memref.load %arg2[%c2_45, %c1_46] : memref<8x24xf32, #tpu.memory_space<smem>>
    %158 = vector.broadcast %157 : f32 to vector<8x256xf32>
    %159 = arith.mulf %88, %158 : vector<8x256xf32>
    %160 = arith.addf %156, %159 : vector<8x256xf32>
    %c3_47 = arith.constant 3 : index
    %c1_48 = arith.constant 1 : index
    %161 = memref.load %arg2[%c3_47, %c1_48] : memref<8x24xf32, #tpu.memory_space<smem>>
    %162 = vector.broadcast %161 : f32 to vector<8x256xf32>
    %163 = arith.mulf %94, %162 : vector<8x256xf32>
    %164 = arith.addf %160, %163 : vector<8x256xf32>
    %c4_49 = arith.constant 4 : index
    %c1_50 = arith.constant 1 : index
    %165 = memref.load %arg2[%c4_49, %c1_50] : memref<8x24xf32, #tpu.memory_space<smem>>
    %166 = vector.broadcast %165 : f32 to vector<8x256xf32>
    %167 = arith.mulf %100, %166 : vector<8x256xf32>
    %168 = arith.addf %164, %167 : vector<8x256xf32>
    %c5_51 = arith.constant 5 : index
    %c1_52 = arith.constant 1 : index
    %169 = memref.load %arg2[%c5_51, %c1_52] : memref<8x24xf32, #tpu.memory_space<smem>>
    %170 = vector.broadcast %169 : f32 to vector<8x256xf32>
    %171 = arith.mulf %106, %170 : vector<8x256xf32>
    %172 = arith.addf %168, %171 : vector<8x256xf32>
    %c6_53 = arith.constant 6 : index
    %c1_54 = arith.constant 1 : index
    %173 = memref.load %arg2[%c6_53, %c1_54] : memref<8x24xf32, #tpu.memory_space<smem>>
    %174 = vector.broadcast %173 : f32 to vector<8x256xf32>
    %175 = arith.mulf %112, %174 : vector<8x256xf32>
    %176 = arith.addf %172, %175 : vector<8x256xf32>
    %c7_55 = arith.constant 7 : index
    %c1_56 = arith.constant 1 : index
    %177 = memref.load %arg2[%c7_55, %c1_56] : memref<8x24xf32, #tpu.memory_space<smem>>
    %178 = vector.broadcast %177 : f32 to vector<8x256xf32>
    %179 = arith.mulf %118, %178 : vector<8x256xf32>
    %180 = arith.addf %176, %179 : vector<8x256xf32>
    %c0_57 = arith.constant 0 : index
    %c2_58 = arith.constant 2 : index
    %181 = memref.load %arg2[%c0_57, %c2_58] : memref<8x24xf32, #tpu.memory_space<smem>>
    %182 = vector.broadcast %181 : f32 to vector<8x256xf32>
    %183 = arith.mulf %76, %182 : vector<8x256xf32>
    %c1_59 = arith.constant 1 : index
    %c2_60 = arith.constant 2 : index
    %184 = memref.load %arg2[%c1_59, %c2_60] : memref<8x24xf32, #tpu.memory_space<smem>>
    %185 = vector.broadcast %184 : f32 to vector<8x256xf32>
    %186 = arith.mulf %82, %185 : vector<8x256xf32>
    %187 = arith.addf %183, %186 : vector<8x256xf32>
    %c2_61 = arith.constant 2 : index
    %c2_62 = arith.constant 2 : index
    %188 = memref.load %arg2[%c2_61, %c2_62] : memref<8x24xf32, #tpu.memory_space<smem>>
    %189 = vector.broadcast %188 : f32 to vector<8x256xf32>
    %190 = arith.mulf %88, %189 : vector<8x256xf32>
    %191 = arith.addf %187, %190 : vector<8x256xf32>
    %c3_63 = arith.constant 3 : index
    %c2_64 = arith.constant 2 : index
    %192 = memref.load %arg2[%c3_63, %c2_64] : memref<8x24xf32, #tpu.memory_space<smem>>
    %193 = vector.broadcast %192 : f32 to vector<8x256xf32>
    %194 = arith.mulf %94, %193 : vector<8x256xf32>
    %195 = arith.addf %191, %194 : vector<8x256xf32>
    %c4_65 = arith.constant 4 : index
    %c2_66 = arith.constant 2 : index
    %196 = memref.load %arg2[%c4_65, %c2_66] : memref<8x24xf32, #tpu.memory_space<smem>>
    %197 = vector.broadcast %196 : f32 to vector<8x256xf32>
    %198 = arith.mulf %100, %197 : vector<8x256xf32>
    %199 = arith.addf %195, %198 : vector<8x256xf32>
    %c5_67 = arith.constant 5 : index
    %c2_68 = arith.constant 2 : index
    %200 = memref.load %arg2[%c5_67, %c2_68] : memref<8x24xf32, #tpu.memory_space<smem>>
    %201 = vector.broadcast %200 : f32 to vector<8x256xf32>
    %202 = arith.mulf %106, %201 : vector<8x256xf32>
    %203 = arith.addf %199, %202 : vector<8x256xf32>
    %c6_69 = arith.constant 6 : index
    %c2_70 = arith.constant 2 : index
    %204 = memref.load %arg2[%c6_69, %c2_70] : memref<8x24xf32, #tpu.memory_space<smem>>
    %205 = vector.broadcast %204 : f32 to vector<8x256xf32>
    %206 = arith.mulf %112, %205 : vector<8x256xf32>
    %207 = arith.addf %203, %206 : vector<8x256xf32>
    %c7_71 = arith.constant 7 : index
    %c2_72 = arith.constant 2 : index
    %208 = memref.load %arg2[%c7_71, %c2_72] : memref<8x24xf32, #tpu.memory_space<smem>>
    %209 = vector.broadcast %208 : f32 to vector<8x256xf32>
    %210 = arith.mulf %118, %209 : vector<8x256xf32>
    %211 = arith.addf %207, %210 : vector<8x256xf32>
    %c0_73 = arith.constant 0 : index
    %c3_74 = arith.constant 3 : index
    %212 = memref.load %arg2[%c0_73, %c3_74] : memref<8x24xf32, #tpu.memory_space<smem>>
    %213 = vector.broadcast %212 : f32 to vector<8x256xf32>
    %214 = arith.mulf %76, %213 : vector<8x256xf32>
    %c1_75 = arith.constant 1 : index
    %c3_76 = arith.constant 3 : index
    %215 = memref.load %arg2[%c1_75, %c3_76] : memref<8x24xf32, #tpu.memory_space<smem>>
    %216 = vector.broadcast %215 : f32 to vector<8x256xf32>
    %217 = arith.mulf %82, %216 : vector<8x256xf32>
    %218 = arith.addf %214, %217 : vector<8x256xf32>
    %c2_77 = arith.constant 2 : index
    %c3_78 = arith.constant 3 : index
    %219 = memref.load %arg2[%c2_77, %c3_78] : memref<8x24xf32, #tpu.memory_space<smem>>
    %220 = vector.broadcast %219 : f32 to vector<8x256xf32>
    %221 = arith.mulf %88, %220 : vector<8x256xf32>
    %222 = arith.addf %218, %221 : vector<8x256xf32>
    %c3_79 = arith.constant 3 : index
    %c3_80 = arith.constant 3 : index
    %223 = memref.load %arg2[%c3_79, %c3_80] : memref<8x24xf32, #tpu.memory_space<smem>>
    %224 = vector.broadcast %223 : f32 to vector<8x256xf32>
    %225 = arith.mulf %94, %224 : vector<8x256xf32>
    %226 = arith.addf %222, %225 : vector<8x256xf32>
    %c4_81 = arith.constant 4 : index
    %c3_82 = arith.constant 3 : index
    %227 = memref.load %arg2[%c4_81, %c3_82] : memref<8x24xf32, #tpu.memory_space<smem>>
    %228 = vector.broadcast %227 : f32 to vector<8x256xf32>
    %229 = arith.mulf %100, %228 : vector<8x256xf32>
    %230 = arith.addf %226, %229 : vector<8x256xf32>
    %c5_83 = arith.constant 5 : index
    %c3_84 = arith.constant 3 : index
    %231 = memref.load %arg2[%c5_83, %c3_84] : memref<8x24xf32, #tpu.memory_space<smem>>
    %232 = vector.broadcast %231 : f32 to vector<8x256xf32>
    %233 = arith.mulf %106, %232 : vector<8x256xf32>
    %234 = arith.addf %230, %233 : vector<8x256xf32>
    %c6_85 = arith.constant 6 : index
    %c3_86 = arith.constant 3 : index
    %235 = memref.load %arg2[%c6_85, %c3_86] : memref<8x24xf32, #tpu.memory_space<smem>>
    %236 = vector.broadcast %235 : f32 to vector<8x256xf32>
    %237 = arith.mulf %112, %236 : vector<8x256xf32>
    %238 = arith.addf %234, %237 : vector<8x256xf32>
    %c7_87 = arith.constant 7 : index
    %c3_88 = arith.constant 3 : index
    %239 = memref.load %arg2[%c7_87, %c3_88] : memref<8x24xf32, #tpu.memory_space<smem>>
    %240 = vector.broadcast %239 : f32 to vector<8x256xf32>
    %241 = arith.mulf %118, %240 : vector<8x256xf32>
    %242 = arith.addf %238, %241 : vector<8x256xf32>
    %c0_89 = arith.constant 0 : index
    %c4_90 = arith.constant 4 : index
    %243 = memref.load %arg2[%c0_89, %c4_90] : memref<8x24xf32, #tpu.memory_space<smem>>
    %244 = vector.broadcast %243 : f32 to vector<8x256xf32>
    %245 = arith.mulf %76, %244 : vector<8x256xf32>
    %c1_91 = arith.constant 1 : index
    %c4_92 = arith.constant 4 : index
    %246 = memref.load %arg2[%c1_91, %c4_92] : memref<8x24xf32, #tpu.memory_space<smem>>
    %247 = vector.broadcast %246 : f32 to vector<8x256xf32>
    %248 = arith.mulf %82, %247 : vector<8x256xf32>
    %249 = arith.addf %245, %248 : vector<8x256xf32>
    %c2_93 = arith.constant 2 : index
    %c4_94 = arith.constant 4 : index
    %250 = memref.load %arg2[%c2_93, %c4_94] : memref<8x24xf32, #tpu.memory_space<smem>>
    %251 = vector.broadcast %250 : f32 to vector<8x256xf32>
    %252 = arith.mulf %88, %251 : vector<8x256xf32>
    %253 = arith.addf %249, %252 : vector<8x256xf32>
    %c3_95 = arith.constant 3 : index
    %c4_96 = arith.constant 4 : index
    %254 = memref.load %arg2[%c3_95, %c4_96] : memref<8x24xf32, #tpu.memory_space<smem>>
    %255 = vector.broadcast %254 : f32 to vector<8x256xf32>
    %256 = arith.mulf %94, %255 : vector<8x256xf32>
    %257 = arith.addf %253, %256 : vector<8x256xf32>
    %c4_97 = arith.constant 4 : index
    %c4_98 = arith.constant 4 : index
    %258 = memref.load %arg2[%c4_97, %c4_98] : memref<8x24xf32, #tpu.memory_space<smem>>
    %259 = vector.broadcast %258 : f32 to vector<8x256xf32>
    %260 = arith.mulf %100, %259 : vector<8x256xf32>
    %261 = arith.addf %257, %260 : vector<8x256xf32>
    %c5_99 = arith.constant 5 : index
    %c4_100 = arith.constant 4 : index
    %262 = memref.load %arg2[%c5_99, %c4_100] : memref<8x24xf32, #tpu.memory_space<smem>>
    %263 = vector.broadcast %262 : f32 to vector<8x256xf32>
    %264 = arith.mulf %106, %263 : vector<8x256xf32>
    %265 = arith.addf %261, %264 : vector<8x256xf32>
    %c6_101 = arith.constant 6 : index
    %c4_102 = arith.constant 4 : index
    %266 = memref.load %arg2[%c6_101, %c4_102] : memref<8x24xf32, #tpu.memory_space<smem>>
    %267 = vector.broadcast %266 : f32 to vector<8x256xf32>
    %268 = arith.mulf %112, %267 : vector<8x256xf32>
    %269 = arith.addf %265, %268 : vector<8x256xf32>
    %c7_103 = arith.constant 7 : index
    %c4_104 = arith.constant 4 : index
    %270 = memref.load %arg2[%c7_103, %c4_104] : memref<8x24xf32, #tpu.memory_space<smem>>
    %271 = vector.broadcast %270 : f32 to vector<8x256xf32>
    %272 = arith.mulf %118, %271 : vector<8x256xf32>
    %273 = arith.addf %269, %272 : vector<8x256xf32>
    %c0_105 = arith.constant 0 : index
    %c5_106 = arith.constant 5 : index
    %274 = memref.load %arg2[%c0_105, %c5_106] : memref<8x24xf32, #tpu.memory_space<smem>>
    %275 = vector.broadcast %274 : f32 to vector<8x256xf32>
    %276 = arith.mulf %76, %275 : vector<8x256xf32>
    %c1_107 = arith.constant 1 : index
    %c5_108 = arith.constant 5 : index
    %277 = memref.load %arg2[%c1_107, %c5_108] : memref<8x24xf32, #tpu.memory_space<smem>>
    %278 = vector.broadcast %277 : f32 to vector<8x256xf32>
    %279 = arith.mulf %82, %278 : vector<8x256xf32>
    %280 = arith.addf %276, %279 : vector<8x256xf32>
    %c2_109 = arith.constant 2 : index
    %c5_110 = arith.constant 5 : index
    %281 = memref.load %arg2[%c2_109, %c5_110] : memref<8x24xf32, #tpu.memory_space<smem>>
    %282 = vector.broadcast %281 : f32 to vector<8x256xf32>
    %283 = arith.mulf %88, %282 : vector<8x256xf32>
    %284 = arith.addf %280, %283 : vector<8x256xf32>
    %c3_111 = arith.constant 3 : index
    %c5_112 = arith.constant 5 : index
    %285 = memref.load %arg2[%c3_111, %c5_112] : memref<8x24xf32, #tpu.memory_space<smem>>
    %286 = vector.broadcast %285 : f32 to vector<8x256xf32>
    %287 = arith.mulf %94, %286 : vector<8x256xf32>
    %288 = arith.addf %284, %287 : vector<8x256xf32>
    %c4_113 = arith.constant 4 : index
    %c5_114 = arith.constant 5 : index
    %289 = memref.load %arg2[%c4_113, %c5_114] : memref<8x24xf32, #tpu.memory_space<smem>>
    %290 = vector.broadcast %289 : f32 to vector<8x256xf32>
    %291 = arith.mulf %100, %290 : vector<8x256xf32>
    %292 = arith.addf %288, %291 : vector<8x256xf32>
    %c5_115 = arith.constant 5 : index
    %c5_116 = arith.constant 5 : index
    %293 = memref.load %arg2[%c5_115, %c5_116] : memref<8x24xf32, #tpu.memory_space<smem>>
    %294 = vector.broadcast %293 : f32 to vector<8x256xf32>
    %295 = arith.mulf %106, %294 : vector<8x256xf32>
    %296 = arith.addf %292, %295 : vector<8x256xf32>
    %c6_117 = arith.constant 6 : index
    %c5_118 = arith.constant 5 : index
    %297 = memref.load %arg2[%c6_117, %c5_118] : memref<8x24xf32, #tpu.memory_space<smem>>
    %298 = vector.broadcast %297 : f32 to vector<8x256xf32>
    %299 = arith.mulf %112, %298 : vector<8x256xf32>
    %300 = arith.addf %296, %299 : vector<8x256xf32>
    %c7_119 = arith.constant 7 : index
    %c5_120 = arith.constant 5 : index
    %301 = memref.load %arg2[%c7_119, %c5_120] : memref<8x24xf32, #tpu.memory_space<smem>>
    %302 = vector.broadcast %301 : f32 to vector<8x256xf32>
    %303 = arith.mulf %118, %302 : vector<8x256xf32>
    %304 = arith.addf %300, %303 : vector<8x256xf32>
    %c0_121 = arith.constant 0 : index
    %c6_122 = arith.constant 6 : index
    %305 = memref.load %arg2[%c0_121, %c6_122] : memref<8x24xf32, #tpu.memory_space<smem>>
    %306 = vector.broadcast %305 : f32 to vector<8x256xf32>
    %307 = arith.mulf %76, %306 : vector<8x256xf32>
    %c1_123 = arith.constant 1 : index
    %c6_124 = arith.constant 6 : index
    %308 = memref.load %arg2[%c1_123, %c6_124] : memref<8x24xf32, #tpu.memory_space<smem>>
    %309 = vector.broadcast %308 : f32 to vector<8x256xf32>
    %310 = arith.mulf %82, %309 : vector<8x256xf32>
    %311 = arith.addf %307, %310 : vector<8x256xf32>
    %c2_125 = arith.constant 2 : index
    %c6_126 = arith.constant 6 : index
    %312 = memref.load %arg2[%c2_125, %c6_126] : memref<8x24xf32, #tpu.memory_space<smem>>
    %313 = vector.broadcast %312 : f32 to vector<8x256xf32>
    %314 = arith.mulf %88, %313 : vector<8x256xf32>
    %315 = arith.addf %311, %314 : vector<8x256xf32>
    %c3_127 = arith.constant 3 : index
    %c6_128 = arith.constant 6 : index
    %316 = memref.load %arg2[%c3_127, %c6_128] : memref<8x24xf32, #tpu.memory_space<smem>>
    %317 = vector.broadcast %316 : f32 to vector<8x256xf32>
    %318 = arith.mulf %94, %317 : vector<8x256xf32>
    %319 = arith.addf %315, %318 : vector<8x256xf32>
    %c4_129 = arith.constant 4 : index
    %c6_130 = arith.constant 6 : index
    %320 = memref.load %arg2[%c4_129, %c6_130] : memref<8x24xf32, #tpu.memory_space<smem>>
    %321 = vector.broadcast %320 : f32 to vector<8x256xf32>
    %322 = arith.mulf %100, %321 : vector<8x256xf32>
    %323 = arith.addf %319, %322 : vector<8x256xf32>
    %c5_131 = arith.constant 5 : index
    %c6_132 = arith.constant 6 : index
    %324 = memref.load %arg2[%c5_131, %c6_132] : memref<8x24xf32, #tpu.memory_space<smem>>
    %325 = vector.broadcast %324 : f32 to vector<8x256xf32>
    %326 = arith.mulf %106, %325 : vector<8x256xf32>
    %327 = arith.addf %323, %326 : vector<8x256xf32>
    %c6_133 = arith.constant 6 : index
    %c6_134 = arith.constant 6 : index
    %328 = memref.load %arg2[%c6_133, %c6_134] : memref<8x24xf32, #tpu.memory_space<smem>>
    %329 = vector.broadcast %328 : f32 to vector<8x256xf32>
    %330 = arith.mulf %112, %329 : vector<8x256xf32>
    %331 = arith.addf %327, %330 : vector<8x256xf32>
    %c7_135 = arith.constant 7 : index
    %c6_136 = arith.constant 6 : index
    %332 = memref.load %arg2[%c7_135, %c6_136] : memref<8x24xf32, #tpu.memory_space<smem>>
    %333 = vector.broadcast %332 : f32 to vector<8x256xf32>
    %334 = arith.mulf %118, %333 : vector<8x256xf32>
    %335 = arith.addf %331, %334 : vector<8x256xf32>
    %c0_137 = arith.constant 0 : index
    %c7_138 = arith.constant 7 : index
    %336 = memref.load %arg2[%c0_137, %c7_138] : memref<8x24xf32, #tpu.memory_space<smem>>
    %337 = vector.broadcast %336 : f32 to vector<8x256xf32>
    %338 = arith.mulf %76, %337 : vector<8x256xf32>
    %c1_139 = arith.constant 1 : index
    %c7_140 = arith.constant 7 : index
    %339 = memref.load %arg2[%c1_139, %c7_140] : memref<8x24xf32, #tpu.memory_space<smem>>
    %340 = vector.broadcast %339 : f32 to vector<8x256xf32>
    %341 = arith.mulf %82, %340 : vector<8x256xf32>
    %342 = arith.addf %338, %341 : vector<8x256xf32>
    %c2_141 = arith.constant 2 : index
    %c7_142 = arith.constant 7 : index
    %343 = memref.load %arg2[%c2_141, %c7_142] : memref<8x24xf32, #tpu.memory_space<smem>>
    %344 = vector.broadcast %343 : f32 to vector<8x256xf32>
    %345 = arith.mulf %88, %344 : vector<8x256xf32>
    %346 = arith.addf %342, %345 : vector<8x256xf32>
    %c3_143 = arith.constant 3 : index
    %c7_144 = arith.constant 7 : index
    %347 = memref.load %arg2[%c3_143, %c7_144] : memref<8x24xf32, #tpu.memory_space<smem>>
    %348 = vector.broadcast %347 : f32 to vector<8x256xf32>
    %349 = arith.mulf %94, %348 : vector<8x256xf32>
    %350 = arith.addf %346, %349 : vector<8x256xf32>
    %c4_145 = arith.constant 4 : index
    %c7_146 = arith.constant 7 : index
    %351 = memref.load %arg2[%c4_145, %c7_146] : memref<8x24xf32, #tpu.memory_space<smem>>
    %352 = vector.broadcast %351 : f32 to vector<8x256xf32>
    %353 = arith.mulf %100, %352 : vector<8x256xf32>
    %354 = arith.addf %350, %353 : vector<8x256xf32>
    %c5_147 = arith.constant 5 : index
    %c7_148 = arith.constant 7 : index
    %355 = memref.load %arg2[%c5_147, %c7_148] : memref<8x24xf32, #tpu.memory_space<smem>>
    %356 = vector.broadcast %355 : f32 to vector<8x256xf32>
    %357 = arith.mulf %106, %356 : vector<8x256xf32>
    %358 = arith.addf %354, %357 : vector<8x256xf32>
    %c6_149 = arith.constant 6 : index
    %c7_150 = arith.constant 7 : index
    %359 = memref.load %arg2[%c6_149, %c7_150] : memref<8x24xf32, #tpu.memory_space<smem>>
    %360 = vector.broadcast %359 : f32 to vector<8x256xf32>
    %361 = arith.mulf %112, %360 : vector<8x256xf32>
    %362 = arith.addf %358, %361 : vector<8x256xf32>
    %c7_151 = arith.constant 7 : index
    %c7_152 = arith.constant 7 : index
    %363 = memref.load %arg2[%c7_151, %c7_152] : memref<8x24xf32, #tpu.memory_space<smem>>
    %364 = vector.broadcast %363 : f32 to vector<8x256xf32>
    %365 = arith.mulf %118, %364 : vector<8x256xf32>
    %366 = arith.addf %362, %365 : vector<8x256xf32>
    %c0_153 = arith.constant 0 : index
    %c8 = arith.constant 8 : index
    %367 = memref.load %arg2[%c0_153, %c8] : memref<8x24xf32, #tpu.memory_space<smem>>
    %368 = vector.broadcast %367 : f32 to vector<8x256xf32>
    %369 = arith.mulf %76, %368 : vector<8x256xf32>
    %c1_154 = arith.constant 1 : index
    %c8_155 = arith.constant 8 : index
    %370 = memref.load %arg2[%c1_154, %c8_155] : memref<8x24xf32, #tpu.memory_space<smem>>
    %371 = vector.broadcast %370 : f32 to vector<8x256xf32>
    %372 = arith.mulf %82, %371 : vector<8x256xf32>
    %373 = arith.addf %369, %372 : vector<8x256xf32>
    %c2_156 = arith.constant 2 : index
    %c8_157 = arith.constant 8 : index
    %374 = memref.load %arg2[%c2_156, %c8_157] : memref<8x24xf32, #tpu.memory_space<smem>>
    %375 = vector.broadcast %374 : f32 to vector<8x256xf32>
    %376 = arith.mulf %88, %375 : vector<8x256xf32>
    %377 = arith.addf %373, %376 : vector<8x256xf32>
    %c3_158 = arith.constant 3 : index
    %c8_159 = arith.constant 8 : index
    %378 = memref.load %arg2[%c3_158, %c8_159] : memref<8x24xf32, #tpu.memory_space<smem>>
    %379 = vector.broadcast %378 : f32 to vector<8x256xf32>
    %380 = arith.mulf %94, %379 : vector<8x256xf32>
    %381 = arith.addf %377, %380 : vector<8x256xf32>
    %c4_160 = arith.constant 4 : index
    %c8_161 = arith.constant 8 : index
    %382 = memref.load %arg2[%c4_160, %c8_161] : memref<8x24xf32, #tpu.memory_space<smem>>
    %383 = vector.broadcast %382 : f32 to vector<8x256xf32>
    %384 = arith.mulf %100, %383 : vector<8x256xf32>
    %385 = arith.addf %381, %384 : vector<8x256xf32>
    %c5_162 = arith.constant 5 : index
    %c8_163 = arith.constant 8 : index
    %386 = memref.load %arg2[%c5_162, %c8_163] : memref<8x24xf32, #tpu.memory_space<smem>>
    %387 = vector.broadcast %386 : f32 to vector<8x256xf32>
    %388 = arith.mulf %106, %387 : vector<8x256xf32>
    %389 = arith.addf %385, %388 : vector<8x256xf32>
    %c6_164 = arith.constant 6 : index
    %c8_165 = arith.constant 8 : index
    %390 = memref.load %arg2[%c6_164, %c8_165] : memref<8x24xf32, #tpu.memory_space<smem>>
    %391 = vector.broadcast %390 : f32 to vector<8x256xf32>
    %392 = arith.mulf %112, %391 : vector<8x256xf32>
    %393 = arith.addf %389, %392 : vector<8x256xf32>
    %c7_166 = arith.constant 7 : index
    %c8_167 = arith.constant 8 : index
    %394 = memref.load %arg2[%c7_166, %c8_167] : memref<8x24xf32, #tpu.memory_space<smem>>
    %395 = vector.broadcast %394 : f32 to vector<8x256xf32>
    %396 = arith.mulf %118, %395 : vector<8x256xf32>
    %397 = arith.addf %393, %396 : vector<8x256xf32>
    %c0_168 = arith.constant 0 : index
    %c9 = arith.constant 9 : index
    %398 = memref.load %arg2[%c0_168, %c9] : memref<8x24xf32, #tpu.memory_space<smem>>
    %399 = vector.broadcast %398 : f32 to vector<8x256xf32>
    %400 = arith.mulf %76, %399 : vector<8x256xf32>
    %c1_169 = arith.constant 1 : index
    %c9_170 = arith.constant 9 : index
    %401 = memref.load %arg2[%c1_169, %c9_170] : memref<8x24xf32, #tpu.memory_space<smem>>
    %402 = vector.broadcast %401 : f32 to vector<8x256xf32>
    %403 = arith.mulf %82, %402 : vector<8x256xf32>
    %404 = arith.addf %400, %403 : vector<8x256xf32>
    %c2_171 = arith.constant 2 : index
    %c9_172 = arith.constant 9 : index
    %405 = memref.load %arg2[%c2_171, %c9_172] : memref<8x24xf32, #tpu.memory_space<smem>>
    %406 = vector.broadcast %405 : f32 to vector<8x256xf32>
    %407 = arith.mulf %88, %406 : vector<8x256xf32>
    %408 = arith.addf %404, %407 : vector<8x256xf32>
    %c3_173 = arith.constant 3 : index
    %c9_174 = arith.constant 9 : index
    %409 = memref.load %arg2[%c3_173, %c9_174] : memref<8x24xf32, #tpu.memory_space<smem>>
    %410 = vector.broadcast %409 : f32 to vector<8x256xf32>
    %411 = arith.mulf %94, %410 : vector<8x256xf32>
    %412 = arith.addf %408, %411 : vector<8x256xf32>
    %c4_175 = arith.constant 4 : index
    %c9_176 = arith.constant 9 : index
    %413 = memref.load %arg2[%c4_175, %c9_176] : memref<8x24xf32, #tpu.memory_space<smem>>
    %414 = vector.broadcast %413 : f32 to vector<8x256xf32>
    %415 = arith.mulf %100, %414 : vector<8x256xf32>
    %416 = arith.addf %412, %415 : vector<8x256xf32>
    %c5_177 = arith.constant 5 : index
    %c9_178 = arith.constant 9 : index
    %417 = memref.load %arg2[%c5_177, %c9_178] : memref<8x24xf32, #tpu.memory_space<smem>>
    %418 = vector.broadcast %417 : f32 to vector<8x256xf32>
    %419 = arith.mulf %106, %418 : vector<8x256xf32>
    %420 = arith.addf %416, %419 : vector<8x256xf32>
    %c6_179 = arith.constant 6 : index
    %c9_180 = arith.constant 9 : index
    %421 = memref.load %arg2[%c6_179, %c9_180] : memref<8x24xf32, #tpu.memory_space<smem>>
    %422 = vector.broadcast %421 : f32 to vector<8x256xf32>
    %423 = arith.mulf %112, %422 : vector<8x256xf32>
    %424 = arith.addf %420, %423 : vector<8x256xf32>
    %c7_181 = arith.constant 7 : index
    %c9_182 = arith.constant 9 : index
    %425 = memref.load %arg2[%c7_181, %c9_182] : memref<8x24xf32, #tpu.memory_space<smem>>
    %426 = vector.broadcast %425 : f32 to vector<8x256xf32>
    %427 = arith.mulf %118, %426 : vector<8x256xf32>
    %428 = arith.addf %424, %427 : vector<8x256xf32>
    %c0_183 = arith.constant 0 : index
    %c10 = arith.constant 10 : index
    %429 = memref.load %arg2[%c0_183, %c10] : memref<8x24xf32, #tpu.memory_space<smem>>
    %430 = vector.broadcast %429 : f32 to vector<8x256xf32>
    %431 = arith.mulf %76, %430 : vector<8x256xf32>
    %c1_184 = arith.constant 1 : index
    %c10_185 = arith.constant 10 : index
    %432 = memref.load %arg2[%c1_184, %c10_185] : memref<8x24xf32, #tpu.memory_space<smem>>
    %433 = vector.broadcast %432 : f32 to vector<8x256xf32>
    %434 = arith.mulf %82, %433 : vector<8x256xf32>
    %435 = arith.addf %431, %434 : vector<8x256xf32>
    %c2_186 = arith.constant 2 : index
    %c10_187 = arith.constant 10 : index
    %436 = memref.load %arg2[%c2_186, %c10_187] : memref<8x24xf32, #tpu.memory_space<smem>>
    %437 = vector.broadcast %436 : f32 to vector<8x256xf32>
    %438 = arith.mulf %88, %437 : vector<8x256xf32>
    %439 = arith.addf %435, %438 : vector<8x256xf32>
    %c3_188 = arith.constant 3 : index
    %c10_189 = arith.constant 10 : index
    %440 = memref.load %arg2[%c3_188, %c10_189] : memref<8x24xf32, #tpu.memory_space<smem>>
    %441 = vector.broadcast %440 : f32 to vector<8x256xf32>
    %442 = arith.mulf %94, %441 : vector<8x256xf32>
    %443 = arith.addf %439, %442 : vector<8x256xf32>
    %c4_190 = arith.constant 4 : index
    %c10_191 = arith.constant 10 : index
    %444 = memref.load %arg2[%c4_190, %c10_191] : memref<8x24xf32, #tpu.memory_space<smem>>
    %445 = vector.broadcast %444 : f32 to vector<8x256xf32>
    %446 = arith.mulf %100, %445 : vector<8x256xf32>
    %447 = arith.addf %443, %446 : vector<8x256xf32>
    %c5_192 = arith.constant 5 : index
    %c10_193 = arith.constant 10 : index
    %448 = memref.load %arg2[%c5_192, %c10_193] : memref<8x24xf32, #tpu.memory_space<smem>>
    %449 = vector.broadcast %448 : f32 to vector<8x256xf32>
    %450 = arith.mulf %106, %449 : vector<8x256xf32>
    %451 = arith.addf %447, %450 : vector<8x256xf32>
    %c6_194 = arith.constant 6 : index
    %c10_195 = arith.constant 10 : index
    %452 = memref.load %arg2[%c6_194, %c10_195] : memref<8x24xf32, #tpu.memory_space<smem>>
    %453 = vector.broadcast %452 : f32 to vector<8x256xf32>
    %454 = arith.mulf %112, %453 : vector<8x256xf32>
    %455 = arith.addf %451, %454 : vector<8x256xf32>
    %c7_196 = arith.constant 7 : index
    %c10_197 = arith.constant 10 : index
    %456 = memref.load %arg2[%c7_196, %c10_197] : memref<8x24xf32, #tpu.memory_space<smem>>
    %457 = vector.broadcast %456 : f32 to vector<8x256xf32>
    %458 = arith.mulf %118, %457 : vector<8x256xf32>
    %459 = arith.addf %455, %458 : vector<8x256xf32>
    %c0_198 = arith.constant 0 : index
    %c11 = arith.constant 11 : index
    %460 = memref.load %arg2[%c0_198, %c11] : memref<8x24xf32, #tpu.memory_space<smem>>
    %461 = vector.broadcast %460 : f32 to vector<8x256xf32>
    %462 = arith.mulf %76, %461 : vector<8x256xf32>
    %c1_199 = arith.constant 1 : index
    %c11_200 = arith.constant 11 : index
    %463 = memref.load %arg2[%c1_199, %c11_200] : memref<8x24xf32, #tpu.memory_space<smem>>
    %464 = vector.broadcast %463 : f32 to vector<8x256xf32>
    %465 = arith.mulf %82, %464 : vector<8x256xf32>
    %466 = arith.addf %462, %465 : vector<8x256xf32>
    %c2_201 = arith.constant 2 : index
    %c11_202 = arith.constant 11 : index
    %467 = memref.load %arg2[%c2_201, %c11_202] : memref<8x24xf32, #tpu.memory_space<smem>>
    %468 = vector.broadcast %467 : f32 to vector<8x256xf32>
    %469 = arith.mulf %88, %468 : vector<8x256xf32>
    %470 = arith.addf %466, %469 : vector<8x256xf32>
    %c3_203 = arith.constant 3 : index
    %c11_204 = arith.constant 11 : index
    %471 = memref.load %arg2[%c3_203, %c11_204] : memref<8x24xf32, #tpu.memory_space<smem>>
    %472 = vector.broadcast %471 : f32 to vector<8x256xf32>
    %473 = arith.mulf %94, %472 : vector<8x256xf32>
    %474 = arith.addf %470, %473 : vector<8x256xf32>
    %c4_205 = arith.constant 4 : index
    %c11_206 = arith.constant 11 : index
    %475 = memref.load %arg2[%c4_205, %c11_206] : memref<8x24xf32, #tpu.memory_space<smem>>
    %476 = vector.broadcast %475 : f32 to vector<8x256xf32>
    %477 = arith.mulf %100, %476 : vector<8x256xf32>
    %478 = arith.addf %474, %477 : vector<8x256xf32>
    %c5_207 = arith.constant 5 : index
    %c11_208 = arith.constant 11 : index
    %479 = memref.load %arg2[%c5_207, %c11_208] : memref<8x24xf32, #tpu.memory_space<smem>>
    %480 = vector.broadcast %479 : f32 to vector<8x256xf32>
    %481 = arith.mulf %106, %480 : vector<8x256xf32>
    %482 = arith.addf %478, %481 : vector<8x256xf32>
    %c6_209 = arith.constant 6 : index
    %c11_210 = arith.constant 11 : index
    %483 = memref.load %arg2[%c6_209, %c11_210] : memref<8x24xf32, #tpu.memory_space<smem>>
    %484 = vector.broadcast %483 : f32 to vector<8x256xf32>
    %485 = arith.mulf %112, %484 : vector<8x256xf32>
    %486 = arith.addf %482, %485 : vector<8x256xf32>
    %c7_211 = arith.constant 7 : index
    %c11_212 = arith.constant 11 : index
    %487 = memref.load %arg2[%c7_211, %c11_212] : memref<8x24xf32, #tpu.memory_space<smem>>
    %488 = vector.broadcast %487 : f32 to vector<8x256xf32>
    %489 = arith.mulf %118, %488 : vector<8x256xf32>
    %490 = arith.addf %486, %489 : vector<8x256xf32>
    %c0_213 = arith.constant 0 : index
    %c12 = arith.constant 12 : index
    %491 = memref.load %arg2[%c0_213, %c12] : memref<8x24xf32, #tpu.memory_space<smem>>
    %492 = vector.broadcast %491 : f32 to vector<8x256xf32>
    %493 = arith.mulf %76, %492 : vector<8x256xf32>
    %c1_214 = arith.constant 1 : index
    %c12_215 = arith.constant 12 : index
    %494 = memref.load %arg2[%c1_214, %c12_215] : memref<8x24xf32, #tpu.memory_space<smem>>
    %495 = vector.broadcast %494 : f32 to vector<8x256xf32>
    %496 = arith.mulf %82, %495 : vector<8x256xf32>
    %497 = arith.addf %493, %496 : vector<8x256xf32>
    %c2_216 = arith.constant 2 : index
    %c12_217 = arith.constant 12 : index
    %498 = memref.load %arg2[%c2_216, %c12_217] : memref<8x24xf32, #tpu.memory_space<smem>>
    %499 = vector.broadcast %498 : f32 to vector<8x256xf32>
    %500 = arith.mulf %88, %499 : vector<8x256xf32>
    %501 = arith.addf %497, %500 : vector<8x256xf32>
    %c3_218 = arith.constant 3 : index
    %c12_219 = arith.constant 12 : index
    %502 = memref.load %arg2[%c3_218, %c12_219] : memref<8x24xf32, #tpu.memory_space<smem>>
    %503 = vector.broadcast %502 : f32 to vector<8x256xf32>
    %504 = arith.mulf %94, %503 : vector<8x256xf32>
    %505 = arith.addf %501, %504 : vector<8x256xf32>
    %c4_220 = arith.constant 4 : index
    %c12_221 = arith.constant 12 : index
    %506 = memref.load %arg2[%c4_220, %c12_221] : memref<8x24xf32, #tpu.memory_space<smem>>
    %507 = vector.broadcast %506 : f32 to vector<8x256xf32>
    %508 = arith.mulf %100, %507 : vector<8x256xf32>
    %509 = arith.addf %505, %508 : vector<8x256xf32>
    %c5_222 = arith.constant 5 : index
    %c12_223 = arith.constant 12 : index
    %510 = memref.load %arg2[%c5_222, %c12_223] : memref<8x24xf32, #tpu.memory_space<smem>>
    %511 = vector.broadcast %510 : f32 to vector<8x256xf32>
    %512 = arith.mulf %106, %511 : vector<8x256xf32>
    %513 = arith.addf %509, %512 : vector<8x256xf32>
    %c6_224 = arith.constant 6 : index
    %c12_225 = arith.constant 12 : index
    %514 = memref.load %arg2[%c6_224, %c12_225] : memref<8x24xf32, #tpu.memory_space<smem>>
    %515 = vector.broadcast %514 : f32 to vector<8x256xf32>
    %516 = arith.mulf %112, %515 : vector<8x256xf32>
    %517 = arith.addf %513, %516 : vector<8x256xf32>
    %c7_226 = arith.constant 7 : index
    %c12_227 = arith.constant 12 : index
    %518 = memref.load %arg2[%c7_226, %c12_227] : memref<8x24xf32, #tpu.memory_space<smem>>
    %519 = vector.broadcast %518 : f32 to vector<8x256xf32>
    %520 = arith.mulf %118, %519 : vector<8x256xf32>
    %521 = arith.addf %517, %520 : vector<8x256xf32>
    %c0_228 = arith.constant 0 : index
    %c13 = arith.constant 13 : index
    %522 = memref.load %arg2[%c0_228, %c13] : memref<8x24xf32, #tpu.memory_space<smem>>
    %523 = vector.broadcast %522 : f32 to vector<8x256xf32>
    %524 = arith.mulf %76, %523 : vector<8x256xf32>
    %c1_229 = arith.constant 1 : index
    %c13_230 = arith.constant 13 : index
    %525 = memref.load %arg2[%c1_229, %c13_230] : memref<8x24xf32, #tpu.memory_space<smem>>
    %526 = vector.broadcast %525 : f32 to vector<8x256xf32>
    %527 = arith.mulf %82, %526 : vector<8x256xf32>
    %528 = arith.addf %524, %527 : vector<8x256xf32>
    %c2_231 = arith.constant 2 : index
    %c13_232 = arith.constant 13 : index
    %529 = memref.load %arg2[%c2_231, %c13_232] : memref<8x24xf32, #tpu.memory_space<smem>>
    %530 = vector.broadcast %529 : f32 to vector<8x256xf32>
    %531 = arith.mulf %88, %530 : vector<8x256xf32>
    %532 = arith.addf %528, %531 : vector<8x256xf32>
    %c3_233 = arith.constant 3 : index
    %c13_234 = arith.constant 13 : index
    %533 = memref.load %arg2[%c3_233, %c13_234] : memref<8x24xf32, #tpu.memory_space<smem>>
    %534 = vector.broadcast %533 : f32 to vector<8x256xf32>
    %535 = arith.mulf %94, %534 : vector<8x256xf32>
    %536 = arith.addf %532, %535 : vector<8x256xf32>
    %c4_235 = arith.constant 4 : index
    %c13_236 = arith.constant 13 : index
    %537 = memref.load %arg2[%c4_235, %c13_236] : memref<8x24xf32, #tpu.memory_space<smem>>
    %538 = vector.broadcast %537 : f32 to vector<8x256xf32>
    %539 = arith.mulf %100, %538 : vector<8x256xf32>
    %540 = arith.addf %536, %539 : vector<8x256xf32>
    %c5_237 = arith.constant 5 : index
    %c13_238 = arith.constant 13 : index
    %541 = memref.load %arg2[%c5_237, %c13_238] : memref<8x24xf32, #tpu.memory_space<smem>>
    %542 = vector.broadcast %541 : f32 to vector<8x256xf32>
    %543 = arith.mulf %106, %542 : vector<8x256xf32>
    %544 = arith.addf %540, %543 : vector<8x256xf32>
    %c6_239 = arith.constant 6 : index
    %c13_240 = arith.constant 13 : index
    %545 = memref.load %arg2[%c6_239, %c13_240] : memref<8x24xf32, #tpu.memory_space<smem>>
    %546 = vector.broadcast %545 : f32 to vector<8x256xf32>
    %547 = arith.mulf %112, %546 : vector<8x256xf32>
    %548 = arith.addf %544, %547 : vector<8x256xf32>
    %c7_241 = arith.constant 7 : index
    %c13_242 = arith.constant 13 : index
    %549 = memref.load %arg2[%c7_241, %c13_242] : memref<8x24xf32, #tpu.memory_space<smem>>
    %550 = vector.broadcast %549 : f32 to vector<8x256xf32>
    %551 = arith.mulf %118, %550 : vector<8x256xf32>
    %552 = arith.addf %548, %551 : vector<8x256xf32>
    %c0_243 = arith.constant 0 : index
    %c14 = arith.constant 14 : index
    %553 = memref.load %arg2[%c0_243, %c14] : memref<8x24xf32, #tpu.memory_space<smem>>
    %554 = vector.broadcast %553 : f32 to vector<8x256xf32>
    %555 = arith.mulf %76, %554 : vector<8x256xf32>
    %c1_244 = arith.constant 1 : index
    %c14_245 = arith.constant 14 : index
    %556 = memref.load %arg2[%c1_244, %c14_245] : memref<8x24xf32, #tpu.memory_space<smem>>
    %557 = vector.broadcast %556 : f32 to vector<8x256xf32>
    %558 = arith.mulf %82, %557 : vector<8x256xf32>
    %559 = arith.addf %555, %558 : vector<8x256xf32>
    %c2_246 = arith.constant 2 : index
    %c14_247 = arith.constant 14 : index
    %560 = memref.load %arg2[%c2_246, %c14_247] : memref<8x24xf32, #tpu.memory_space<smem>>
    %561 = vector.broadcast %560 : f32 to vector<8x256xf32>
    %562 = arith.mulf %88, %561 : vector<8x256xf32>
    %563 = arith.addf %559, %562 : vector<8x256xf32>
    %c3_248 = arith.constant 3 : index
    %c14_249 = arith.constant 14 : index
    %564 = memref.load %arg2[%c3_248, %c14_249] : memref<8x24xf32, #tpu.memory_space<smem>>
    %565 = vector.broadcast %564 : f32 to vector<8x256xf32>
    %566 = arith.mulf %94, %565 : vector<8x256xf32>
    %567 = arith.addf %563, %566 : vector<8x256xf32>
    %c4_250 = arith.constant 4 : index
    %c14_251 = arith.constant 14 : index
    %568 = memref.load %arg2[%c4_250, %c14_251] : memref<8x24xf32, #tpu.memory_space<smem>>
    %569 = vector.broadcast %568 : f32 to vector<8x256xf32>
    %570 = arith.mulf %100, %569 : vector<8x256xf32>
    %571 = arith.addf %567, %570 : vector<8x256xf32>
    %c5_252 = arith.constant 5 : index
    %c14_253 = arith.constant 14 : index
    %572 = memref.load %arg2[%c5_252, %c14_253] : memref<8x24xf32, #tpu.memory_space<smem>>
    %573 = vector.broadcast %572 : f32 to vector<8x256xf32>
    %574 = arith.mulf %106, %573 : vector<8x256xf32>
    %575 = arith.addf %571, %574 : vector<8x256xf32>
    %c6_254 = arith.constant 6 : index
    %c14_255 = arith.constant 14 : index
    %576 = memref.load %arg2[%c6_254, %c14_255] : memref<8x24xf32, #tpu.memory_space<smem>>
    %577 = vector.broadcast %576 : f32 to vector<8x256xf32>
    %578 = arith.mulf %112, %577 : vector<8x256xf32>
    %579 = arith.addf %575, %578 : vector<8x256xf32>
    %c7_256 = arith.constant 7 : index
    %c14_257 = arith.constant 14 : index
    %580 = memref.load %arg2[%c7_256, %c14_257] : memref<8x24xf32, #tpu.memory_space<smem>>
    %581 = vector.broadcast %580 : f32 to vector<8x256xf32>
    %582 = arith.mulf %118, %581 : vector<8x256xf32>
    %583 = arith.addf %579, %582 : vector<8x256xf32>
    %c0_258 = arith.constant 0 : index
    %c15 = arith.constant 15 : index
    %584 = memref.load %arg2[%c0_258, %c15] : memref<8x24xf32, #tpu.memory_space<smem>>
    %585 = vector.broadcast %584 : f32 to vector<8x256xf32>
    %586 = arith.mulf %76, %585 : vector<8x256xf32>
    %c1_259 = arith.constant 1 : index
    %c15_260 = arith.constant 15 : index
    %587 = memref.load %arg2[%c1_259, %c15_260] : memref<8x24xf32, #tpu.memory_space<smem>>
    %588 = vector.broadcast %587 : f32 to vector<8x256xf32>
    %589 = arith.mulf %82, %588 : vector<8x256xf32>
    %590 = arith.addf %586, %589 : vector<8x256xf32>
    %c2_261 = arith.constant 2 : index
    %c15_262 = arith.constant 15 : index
    %591 = memref.load %arg2[%c2_261, %c15_262] : memref<8x24xf32, #tpu.memory_space<smem>>
    %592 = vector.broadcast %591 : f32 to vector<8x256xf32>
    %593 = arith.mulf %88, %592 : vector<8x256xf32>
    %594 = arith.addf %590, %593 : vector<8x256xf32>
    %c3_263 = arith.constant 3 : index
    %c15_264 = arith.constant 15 : index
    %595 = memref.load %arg2[%c3_263, %c15_264] : memref<8x24xf32, #tpu.memory_space<smem>>
    %596 = vector.broadcast %595 : f32 to vector<8x256xf32>
    %597 = arith.mulf %94, %596 : vector<8x256xf32>
    %598 = arith.addf %594, %597 : vector<8x256xf32>
    %c4_265 = arith.constant 4 : index
    %c15_266 = arith.constant 15 : index
    %599 = memref.load %arg2[%c4_265, %c15_266] : memref<8x24xf32, #tpu.memory_space<smem>>
    %600 = vector.broadcast %599 : f32 to vector<8x256xf32>
    %601 = arith.mulf %100, %600 : vector<8x256xf32>
    %602 = arith.addf %598, %601 : vector<8x256xf32>
    %c5_267 = arith.constant 5 : index
    %c15_268 = arith.constant 15 : index
    %603 = memref.load %arg2[%c5_267, %c15_268] : memref<8x24xf32, #tpu.memory_space<smem>>
    %604 = vector.broadcast %603 : f32 to vector<8x256xf32>
    %605 = arith.mulf %106, %604 : vector<8x256xf32>
    %606 = arith.addf %602, %605 : vector<8x256xf32>
    %c6_269 = arith.constant 6 : index
    %c15_270 = arith.constant 15 : index
    %607 = memref.load %arg2[%c6_269, %c15_270] : memref<8x24xf32, #tpu.memory_space<smem>>
    %608 = vector.broadcast %607 : f32 to vector<8x256xf32>
    %609 = arith.mulf %112, %608 : vector<8x256xf32>
    %610 = arith.addf %606, %609 : vector<8x256xf32>
    %c7_271 = arith.constant 7 : index
    %c15_272 = arith.constant 15 : index
    %611 = memref.load %arg2[%c7_271, %c15_272] : memref<8x24xf32, #tpu.memory_space<smem>>
    %612 = vector.broadcast %611 : f32 to vector<8x256xf32>
    %613 = arith.mulf %118, %612 : vector<8x256xf32>
    %614 = arith.addf %610, %613 : vector<8x256xf32>
    %c0_273 = arith.constant 0 : index
    %c16 = arith.constant 16 : index
    %615 = memref.load %arg2[%c0_273, %c16] : memref<8x24xf32, #tpu.memory_space<smem>>
    %616 = vector.broadcast %615 : f32 to vector<8x256xf32>
    %617 = arith.mulf %76, %616 : vector<8x256xf32>
    %c1_274 = arith.constant 1 : index
    %c16_275 = arith.constant 16 : index
    %618 = memref.load %arg2[%c1_274, %c16_275] : memref<8x24xf32, #tpu.memory_space<smem>>
    %619 = vector.broadcast %618 : f32 to vector<8x256xf32>
    %620 = arith.mulf %82, %619 : vector<8x256xf32>
    %621 = arith.addf %617, %620 : vector<8x256xf32>
    %c2_276 = arith.constant 2 : index
    %c16_277 = arith.constant 16 : index
    %622 = memref.load %arg2[%c2_276, %c16_277] : memref<8x24xf32, #tpu.memory_space<smem>>
    %623 = vector.broadcast %622 : f32 to vector<8x256xf32>
    %624 = arith.mulf %88, %623 : vector<8x256xf32>
    %625 = arith.addf %621, %624 : vector<8x256xf32>
    %c3_278 = arith.constant 3 : index
    %c16_279 = arith.constant 16 : index
    %626 = memref.load %arg2[%c3_278, %c16_279] : memref<8x24xf32, #tpu.memory_space<smem>>
    %627 = vector.broadcast %626 : f32 to vector<8x256xf32>
    %628 = arith.mulf %94, %627 : vector<8x256xf32>
    %629 = arith.addf %625, %628 : vector<8x256xf32>
    %c4_280 = arith.constant 4 : index
    %c16_281 = arith.constant 16 : index
    %630 = memref.load %arg2[%c4_280, %c16_281] : memref<8x24xf32, #tpu.memory_space<smem>>
    %631 = vector.broadcast %630 : f32 to vector<8x256xf32>
    %632 = arith.mulf %100, %631 : vector<8x256xf32>
    %633 = arith.addf %629, %632 : vector<8x256xf32>
    %c5_282 = arith.constant 5 : index
    %c16_283 = arith.constant 16 : index
    %634 = memref.load %arg2[%c5_282, %c16_283] : memref<8x24xf32, #tpu.memory_space<smem>>
    %635 = vector.broadcast %634 : f32 to vector<8x256xf32>
    %636 = arith.mulf %106, %635 : vector<8x256xf32>
    %637 = arith.addf %633, %636 : vector<8x256xf32>
    %c6_284 = arith.constant 6 : index
    %c16_285 = arith.constant 16 : index
    %638 = memref.load %arg2[%c6_284, %c16_285] : memref<8x24xf32, #tpu.memory_space<smem>>
    %639 = vector.broadcast %638 : f32 to vector<8x256xf32>
    %640 = arith.mulf %112, %639 : vector<8x256xf32>
    %641 = arith.addf %637, %640 : vector<8x256xf32>
    %c7_286 = arith.constant 7 : index
    %c16_287 = arith.constant 16 : index
    %642 = memref.load %arg2[%c7_286, %c16_287] : memref<8x24xf32, #tpu.memory_space<smem>>
    %643 = vector.broadcast %642 : f32 to vector<8x256xf32>
    %644 = arith.mulf %118, %643 : vector<8x256xf32>
    %645 = arith.addf %641, %644 : vector<8x256xf32>
    %c0_288 = arith.constant 0 : index
    %c17 = arith.constant 17 : index
    %646 = memref.load %arg2[%c0_288, %c17] : memref<8x24xf32, #tpu.memory_space<smem>>
    %647 = vector.broadcast %646 : f32 to vector<8x256xf32>
    %648 = arith.mulf %76, %647 : vector<8x256xf32>
    %c1_289 = arith.constant 1 : index
    %c17_290 = arith.constant 17 : index
    %649 = memref.load %arg2[%c1_289, %c17_290] : memref<8x24xf32, #tpu.memory_space<smem>>
    %650 = vector.broadcast %649 : f32 to vector<8x256xf32>
    %651 = arith.mulf %82, %650 : vector<8x256xf32>
    %652 = arith.addf %648, %651 : vector<8x256xf32>
    %c2_291 = arith.constant 2 : index
    %c17_292 = arith.constant 17 : index
    %653 = memref.load %arg2[%c2_291, %c17_292] : memref<8x24xf32, #tpu.memory_space<smem>>
    %654 = vector.broadcast %653 : f32 to vector<8x256xf32>
    %655 = arith.mulf %88, %654 : vector<8x256xf32>
    %656 = arith.addf %652, %655 : vector<8x256xf32>
    %c3_293 = arith.constant 3 : index
    %c17_294 = arith.constant 17 : index
    %657 = memref.load %arg2[%c3_293, %c17_294] : memref<8x24xf32, #tpu.memory_space<smem>>
    %658 = vector.broadcast %657 : f32 to vector<8x256xf32>
    %659 = arith.mulf %94, %658 : vector<8x256xf32>
    %660 = arith.addf %656, %659 : vector<8x256xf32>
    %c4_295 = arith.constant 4 : index
    %c17_296 = arith.constant 17 : index
    %661 = memref.load %arg2[%c4_295, %c17_296] : memref<8x24xf32, #tpu.memory_space<smem>>
    %662 = vector.broadcast %661 : f32 to vector<8x256xf32>
    %663 = arith.mulf %100, %662 : vector<8x256xf32>
    %664 = arith.addf %660, %663 : vector<8x256xf32>
    %c5_297 = arith.constant 5 : index
    %c17_298 = arith.constant 17 : index
    %665 = memref.load %arg2[%c5_297, %c17_298] : memref<8x24xf32, #tpu.memory_space<smem>>
    %666 = vector.broadcast %665 : f32 to vector<8x256xf32>
    %667 = arith.mulf %106, %666 : vector<8x256xf32>
    %668 = arith.addf %664, %667 : vector<8x256xf32>
    %c6_299 = arith.constant 6 : index
    %c17_300 = arith.constant 17 : index
    %669 = memref.load %arg2[%c6_299, %c17_300] : memref<8x24xf32, #tpu.memory_space<smem>>
    %670 = vector.broadcast %669 : f32 to vector<8x256xf32>
    %671 = arith.mulf %112, %670 : vector<8x256xf32>
    %672 = arith.addf %668, %671 : vector<8x256xf32>
    %c7_301 = arith.constant 7 : index
    %c17_302 = arith.constant 17 : index
    %673 = memref.load %arg2[%c7_301, %c17_302] : memref<8x24xf32, #tpu.memory_space<smem>>
    %674 = vector.broadcast %673 : f32 to vector<8x256xf32>
    %675 = arith.mulf %118, %674 : vector<8x256xf32>
    %676 = arith.addf %672, %675 : vector<8x256xf32>
    %c0_303 = arith.constant 0 : index
    %c18 = arith.constant 18 : index
    %677 = memref.load %arg2[%c0_303, %c18] : memref<8x24xf32, #tpu.memory_space<smem>>
    %678 = vector.broadcast %677 : f32 to vector<8x256xf32>
    %679 = arith.mulf %76, %678 : vector<8x256xf32>
    %c1_304 = arith.constant 1 : index
    %c18_305 = arith.constant 18 : index
    %680 = memref.load %arg2[%c1_304, %c18_305] : memref<8x24xf32, #tpu.memory_space<smem>>
    %681 = vector.broadcast %680 : f32 to vector<8x256xf32>
    %682 = arith.mulf %82, %681 : vector<8x256xf32>
    %683 = arith.addf %679, %682 : vector<8x256xf32>
    %c2_306 = arith.constant 2 : index
    %c18_307 = arith.constant 18 : index
    %684 = memref.load %arg2[%c2_306, %c18_307] : memref<8x24xf32, #tpu.memory_space<smem>>
    %685 = vector.broadcast %684 : f32 to vector<8x256xf32>
    %686 = arith.mulf %88, %685 : vector<8x256xf32>
    %687 = arith.addf %683, %686 : vector<8x256xf32>
    %c3_308 = arith.constant 3 : index
    %c18_309 = arith.constant 18 : index
    %688 = memref.load %arg2[%c3_308, %c18_309] : memref<8x24xf32, #tpu.memory_space<smem>>
    %689 = vector.broadcast %688 : f32 to vector<8x256xf32>
    %690 = arith.mulf %94, %689 : vector<8x256xf32>
    %691 = arith.addf %687, %690 : vector<8x256xf32>
    %c4_310 = arith.constant 4 : index
    %c18_311 = arith.constant 18 : index
    %692 = memref.load %arg2[%c4_310, %c18_311] : memref<8x24xf32, #tpu.memory_space<smem>>
    %693 = vector.broadcast %692 : f32 to vector<8x256xf32>
    %694 = arith.mulf %100, %693 : vector<8x256xf32>
    %695 = arith.addf %691, %694 : vector<8x256xf32>
    %c5_312 = arith.constant 5 : index
    %c18_313 = arith.constant 18 : index
    %696 = memref.load %arg2[%c5_312, %c18_313] : memref<8x24xf32, #tpu.memory_space<smem>>
    %697 = vector.broadcast %696 : f32 to vector<8x256xf32>
    %698 = arith.mulf %106, %697 : vector<8x256xf32>
    %699 = arith.addf %695, %698 : vector<8x256xf32>
    %c6_314 = arith.constant 6 : index
    %c18_315 = arith.constant 18 : index
    %700 = memref.load %arg2[%c6_314, %c18_315] : memref<8x24xf32, #tpu.memory_space<smem>>
    %701 = vector.broadcast %700 : f32 to vector<8x256xf32>
    %702 = arith.mulf %112, %701 : vector<8x256xf32>
    %703 = arith.addf %699, %702 : vector<8x256xf32>
    %c7_316 = arith.constant 7 : index
    %c18_317 = arith.constant 18 : index
    %704 = memref.load %arg2[%c7_316, %c18_317] : memref<8x24xf32, #tpu.memory_space<smem>>
    %705 = vector.broadcast %704 : f32 to vector<8x256xf32>
    %706 = arith.mulf %118, %705 : vector<8x256xf32>
    %707 = arith.addf %703, %706 : vector<8x256xf32>
    %c0_318 = arith.constant 0 : index
    %c19 = arith.constant 19 : index
    %708 = memref.load %arg2[%c0_318, %c19] : memref<8x24xf32, #tpu.memory_space<smem>>
    %709 = vector.broadcast %708 : f32 to vector<8x256xf32>
    %710 = arith.mulf %76, %709 : vector<8x256xf32>
    %c1_319 = arith.constant 1 : index
    %c19_320 = arith.constant 19 : index
    %711 = memref.load %arg2[%c1_319, %c19_320] : memref<8x24xf32, #tpu.memory_space<smem>>
    %712 = vector.broadcast %711 : f32 to vector<8x256xf32>
    %713 = arith.mulf %82, %712 : vector<8x256xf32>
    %714 = arith.addf %710, %713 : vector<8x256xf32>
    %c2_321 = arith.constant 2 : index
    %c19_322 = arith.constant 19 : index
    %715 = memref.load %arg2[%c2_321, %c19_322] : memref<8x24xf32, #tpu.memory_space<smem>>
    %716 = vector.broadcast %715 : f32 to vector<8x256xf32>
    %717 = arith.mulf %88, %716 : vector<8x256xf32>
    %718 = arith.addf %714, %717 : vector<8x256xf32>
    %c3_323 = arith.constant 3 : index
    %c19_324 = arith.constant 19 : index
    %719 = memref.load %arg2[%c3_323, %c19_324] : memref<8x24xf32, #tpu.memory_space<smem>>
    %720 = vector.broadcast %719 : f32 to vector<8x256xf32>
    %721 = arith.mulf %94, %720 : vector<8x256xf32>
    %722 = arith.addf %718, %721 : vector<8x256xf32>
    %c4_325 = arith.constant 4 : index
    %c19_326 = arith.constant 19 : index
    %723 = memref.load %arg2[%c4_325, %c19_326] : memref<8x24xf32, #tpu.memory_space<smem>>
    %724 = vector.broadcast %723 : f32 to vector<8x256xf32>
    %725 = arith.mulf %100, %724 : vector<8x256xf32>
    %726 = arith.addf %722, %725 : vector<8x256xf32>
    %c5_327 = arith.constant 5 : index
    %c19_328 = arith.constant 19 : index
    %727 = memref.load %arg2[%c5_327, %c19_328] : memref<8x24xf32, #tpu.memory_space<smem>>
    %728 = vector.broadcast %727 : f32 to vector<8x256xf32>
    %729 = arith.mulf %106, %728 : vector<8x256xf32>
    %730 = arith.addf %726, %729 : vector<8x256xf32>
    %c6_329 = arith.constant 6 : index
    %c19_330 = arith.constant 19 : index
    %731 = memref.load %arg2[%c6_329, %c19_330] : memref<8x24xf32, #tpu.memory_space<smem>>
    %732 = vector.broadcast %731 : f32 to vector<8x256xf32>
    %733 = arith.mulf %112, %732 : vector<8x256xf32>
    %734 = arith.addf %730, %733 : vector<8x256xf32>
    %c7_331 = arith.constant 7 : index
    %c19_332 = arith.constant 19 : index
    %735 = memref.load %arg2[%c7_331, %c19_332] : memref<8x24xf32, #tpu.memory_space<smem>>
    %736 = vector.broadcast %735 : f32 to vector<8x256xf32>
    %737 = arith.mulf %118, %736 : vector<8x256xf32>
    %738 = arith.addf %734, %737 : vector<8x256xf32>
    %c0_333 = arith.constant 0 : index
    %c20 = arith.constant 20 : index
    %739 = memref.load %arg2[%c0_333, %c20] : memref<8x24xf32, #tpu.memory_space<smem>>
    %740 = vector.broadcast %739 : f32 to vector<8x256xf32>
    %741 = arith.mulf %76, %740 : vector<8x256xf32>
    %c1_334 = arith.constant 1 : index
    %c20_335 = arith.constant 20 : index
    %742 = memref.load %arg2[%c1_334, %c20_335] : memref<8x24xf32, #tpu.memory_space<smem>>
    %743 = vector.broadcast %742 : f32 to vector<8x256xf32>
    %744 = arith.mulf %82, %743 : vector<8x256xf32>
    %745 = arith.addf %741, %744 : vector<8x256xf32>
    %c2_336 = arith.constant 2 : index
    %c20_337 = arith.constant 20 : index
    %746 = memref.load %arg2[%c2_336, %c20_337] : memref<8x24xf32, #tpu.memory_space<smem>>
    %747 = vector.broadcast %746 : f32 to vector<8x256xf32>
    %748 = arith.mulf %88, %747 : vector<8x256xf32>
    %749 = arith.addf %745, %748 : vector<8x256xf32>
    %c3_338 = arith.constant 3 : index
    %c20_339 = arith.constant 20 : index
    %750 = memref.load %arg2[%c3_338, %c20_339] : memref<8x24xf32, #tpu.memory_space<smem>>
    %751 = vector.broadcast %750 : f32 to vector<8x256xf32>
    %752 = arith.mulf %94, %751 : vector<8x256xf32>
    %753 = arith.addf %749, %752 : vector<8x256xf32>
    %c4_340 = arith.constant 4 : index
    %c20_341 = arith.constant 20 : index
    %754 = memref.load %arg2[%c4_340, %c20_341] : memref<8x24xf32, #tpu.memory_space<smem>>
    %755 = vector.broadcast %754 : f32 to vector<8x256xf32>
    %756 = arith.mulf %100, %755 : vector<8x256xf32>
    %757 = arith.addf %753, %756 : vector<8x256xf32>
    %c5_342 = arith.constant 5 : index
    %c20_343 = arith.constant 20 : index
    %758 = memref.load %arg2[%c5_342, %c20_343] : memref<8x24xf32, #tpu.memory_space<smem>>
    %759 = vector.broadcast %758 : f32 to vector<8x256xf32>
    %760 = arith.mulf %106, %759 : vector<8x256xf32>
    %761 = arith.addf %757, %760 : vector<8x256xf32>
    %c6_344 = arith.constant 6 : index
    %c20_345 = arith.constant 20 : index
    %762 = memref.load %arg2[%c6_344, %c20_345] : memref<8x24xf32, #tpu.memory_space<smem>>
    %763 = vector.broadcast %762 : f32 to vector<8x256xf32>
    %764 = arith.mulf %112, %763 : vector<8x256xf32>
    %765 = arith.addf %761, %764 : vector<8x256xf32>
    %c7_346 = arith.constant 7 : index
    %c20_347 = arith.constant 20 : index
    %766 = memref.load %arg2[%c7_346, %c20_347] : memref<8x24xf32, #tpu.memory_space<smem>>
    %767 = vector.broadcast %766 : f32 to vector<8x256xf32>
    %768 = arith.mulf %118, %767 : vector<8x256xf32>
    %769 = arith.addf %765, %768 : vector<8x256xf32>
    %c0_348 = arith.constant 0 : index
    %c21 = arith.constant 21 : index
    %770 = memref.load %arg2[%c0_348, %c21] : memref<8x24xf32, #tpu.memory_space<smem>>
    %771 = vector.broadcast %770 : f32 to vector<8x256xf32>
    %772 = arith.mulf %76, %771 : vector<8x256xf32>
    %c1_349 = arith.constant 1 : index
    %c21_350 = arith.constant 21 : index
    %773 = memref.load %arg2[%c1_349, %c21_350] : memref<8x24xf32, #tpu.memory_space<smem>>
    %774 = vector.broadcast %773 : f32 to vector<8x256xf32>
    %775 = arith.mulf %82, %774 : vector<8x256xf32>
    %776 = arith.addf %772, %775 : vector<8x256xf32>
    %c2_351 = arith.constant 2 : index
    %c21_352 = arith.constant 21 : index
    %777 = memref.load %arg2[%c2_351, %c21_352] : memref<8x24xf32, #tpu.memory_space<smem>>
    %778 = vector.broadcast %777 : f32 to vector<8x256xf32>
    %779 = arith.mulf %88, %778 : vector<8x256xf32>
    %780 = arith.addf %776, %779 : vector<8x256xf32>
    %c3_353 = arith.constant 3 : index
    %c21_354 = arith.constant 21 : index
    %781 = memref.load %arg2[%c3_353, %c21_354] : memref<8x24xf32, #tpu.memory_space<smem>>
    %782 = vector.broadcast %781 : f32 to vector<8x256xf32>
    %783 = arith.mulf %94, %782 : vector<8x256xf32>
    %784 = arith.addf %780, %783 : vector<8x256xf32>
    %c4_355 = arith.constant 4 : index
    %c21_356 = arith.constant 21 : index
    %785 = memref.load %arg2[%c4_355, %c21_356] : memref<8x24xf32, #tpu.memory_space<smem>>
    %786 = vector.broadcast %785 : f32 to vector<8x256xf32>
    %787 = arith.mulf %100, %786 : vector<8x256xf32>
    %788 = arith.addf %784, %787 : vector<8x256xf32>
    %c5_357 = arith.constant 5 : index
    %c21_358 = arith.constant 21 : index
    %789 = memref.load %arg2[%c5_357, %c21_358] : memref<8x24xf32, #tpu.memory_space<smem>>
    %790 = vector.broadcast %789 : f32 to vector<8x256xf32>
    %791 = arith.mulf %106, %790 : vector<8x256xf32>
    %792 = arith.addf %788, %791 : vector<8x256xf32>
    %c6_359 = arith.constant 6 : index
    %c21_360 = arith.constant 21 : index
    %793 = memref.load %arg2[%c6_359, %c21_360] : memref<8x24xf32, #tpu.memory_space<smem>>
    %794 = vector.broadcast %793 : f32 to vector<8x256xf32>
    %795 = arith.mulf %112, %794 : vector<8x256xf32>
    %796 = arith.addf %792, %795 : vector<8x256xf32>
    %c7_361 = arith.constant 7 : index
    %c21_362 = arith.constant 21 : index
    %797 = memref.load %arg2[%c7_361, %c21_362] : memref<8x24xf32, #tpu.memory_space<smem>>
    %798 = vector.broadcast %797 : f32 to vector<8x256xf32>
    %799 = arith.mulf %118, %798 : vector<8x256xf32>
    %800 = arith.addf %796, %799 : vector<8x256xf32>
    %c0_363 = arith.constant 0 : index
    %c22 = arith.constant 22 : index
    %801 = memref.load %arg2[%c0_363, %c22] : memref<8x24xf32, #tpu.memory_space<smem>>
    %802 = vector.broadcast %801 : f32 to vector<8x256xf32>
    %803 = arith.mulf %76, %802 : vector<8x256xf32>
    %c1_364 = arith.constant 1 : index
    %c22_365 = arith.constant 22 : index
    %804 = memref.load %arg2[%c1_364, %c22_365] : memref<8x24xf32, #tpu.memory_space<smem>>
    %805 = vector.broadcast %804 : f32 to vector<8x256xf32>
    %806 = arith.mulf %82, %805 : vector<8x256xf32>
    %807 = arith.addf %803, %806 : vector<8x256xf32>
    %c2_366 = arith.constant 2 : index
    %c22_367 = arith.constant 22 : index
    %808 = memref.load %arg2[%c2_366, %c22_367] : memref<8x24xf32, #tpu.memory_space<smem>>
    %809 = vector.broadcast %808 : f32 to vector<8x256xf32>
    %810 = arith.mulf %88, %809 : vector<8x256xf32>
    %811 = arith.addf %807, %810 : vector<8x256xf32>
    %c3_368 = arith.constant 3 : index
    %c22_369 = arith.constant 22 : index
    %812 = memref.load %arg2[%c3_368, %c22_369] : memref<8x24xf32, #tpu.memory_space<smem>>
    %813 = vector.broadcast %812 : f32 to vector<8x256xf32>
    %814 = arith.mulf %94, %813 : vector<8x256xf32>
    %815 = arith.addf %811, %814 : vector<8x256xf32>
    %c4_370 = arith.constant 4 : index
    %c22_371 = arith.constant 22 : index
    %816 = memref.load %arg2[%c4_370, %c22_371] : memref<8x24xf32, #tpu.memory_space<smem>>
    %817 = vector.broadcast %816 : f32 to vector<8x256xf32>
    %818 = arith.mulf %100, %817 : vector<8x256xf32>
    %819 = arith.addf %815, %818 : vector<8x256xf32>
    %c5_372 = arith.constant 5 : index
    %c22_373 = arith.constant 22 : index
    %820 = memref.load %arg2[%c5_372, %c22_373] : memref<8x24xf32, #tpu.memory_space<smem>>
    %821 = vector.broadcast %820 : f32 to vector<8x256xf32>
    %822 = arith.mulf %106, %821 : vector<8x256xf32>
    %823 = arith.addf %819, %822 : vector<8x256xf32>
    %c6_374 = arith.constant 6 : index
    %c22_375 = arith.constant 22 : index
    %824 = memref.load %arg2[%c6_374, %c22_375] : memref<8x24xf32, #tpu.memory_space<smem>>
    %825 = vector.broadcast %824 : f32 to vector<8x256xf32>
    %826 = arith.mulf %112, %825 : vector<8x256xf32>
    %827 = arith.addf %823, %826 : vector<8x256xf32>
    %c7_376 = arith.constant 7 : index
    %c22_377 = arith.constant 22 : index
    %828 = memref.load %arg2[%c7_376, %c22_377] : memref<8x24xf32, #tpu.memory_space<smem>>
    %829 = vector.broadcast %828 : f32 to vector<8x256xf32>
    %830 = arith.mulf %118, %829 : vector<8x256xf32>
    %831 = arith.addf %827, %830 : vector<8x256xf32>
    %c0_378 = arith.constant 0 : index
    %c23 = arith.constant 23 : index
    %832 = memref.load %arg2[%c0_378, %c23] : memref<8x24xf32, #tpu.memory_space<smem>>
    %833 = vector.broadcast %832 : f32 to vector<8x256xf32>
    %834 = arith.mulf %76, %833 : vector<8x256xf32>
    %c1_379 = arith.constant 1 : index
    %c23_380 = arith.constant 23 : index
    %835 = memref.load %arg2[%c1_379, %c23_380] : memref<8x24xf32, #tpu.memory_space<smem>>
    %836 = vector.broadcast %835 : f32 to vector<8x256xf32>
    %837 = arith.mulf %82, %836 : vector<8x256xf32>
    %838 = arith.addf %834, %837 : vector<8x256xf32>
    %c2_381 = arith.constant 2 : index
    %c23_382 = arith.constant 23 : index
    %839 = memref.load %arg2[%c2_381, %c23_382] : memref<8x24xf32, #tpu.memory_space<smem>>
    %840 = vector.broadcast %839 : f32 to vector<8x256xf32>
    %841 = arith.mulf %88, %840 : vector<8x256xf32>
    %842 = arith.addf %838, %841 : vector<8x256xf32>
    %c3_383 = arith.constant 3 : index
    %c23_384 = arith.constant 23 : index
    %843 = memref.load %arg2[%c3_383, %c23_384] : memref<8x24xf32, #tpu.memory_space<smem>>
    %844 = vector.broadcast %843 : f32 to vector<8x256xf32>
    %845 = arith.mulf %94, %844 : vector<8x256xf32>
    %846 = arith.addf %842, %845 : vector<8x256xf32>
    %c4_385 = arith.constant 4 : index
    %c23_386 = arith.constant 23 : index
    %847 = memref.load %arg2[%c4_385, %c23_386] : memref<8x24xf32, #tpu.memory_space<smem>>
    %848 = vector.broadcast %847 : f32 to vector<8x256xf32>
    %849 = arith.mulf %100, %848 : vector<8x256xf32>
    %850 = arith.addf %846, %849 : vector<8x256xf32>
    %c5_387 = arith.constant 5 : index
    %c23_388 = arith.constant 23 : index
    %851 = memref.load %arg2[%c5_387, %c23_388] : memref<8x24xf32, #tpu.memory_space<smem>>
    %852 = vector.broadcast %851 : f32 to vector<8x256xf32>
    %853 = arith.mulf %106, %852 : vector<8x256xf32>
    %854 = arith.addf %850, %853 : vector<8x256xf32>
    %c6_389 = arith.constant 6 : index
    %c23_390 = arith.constant 23 : index
    %855 = memref.load %arg2[%c6_389, %c23_390] : memref<8x24xf32, #tpu.memory_space<smem>>
    %856 = vector.broadcast %855 : f32 to vector<8x256xf32>
    %857 = arith.mulf %112, %856 : vector<8x256xf32>
    %858 = arith.addf %854, %857 : vector<8x256xf32>
    %c7_391 = arith.constant 7 : index
    %c23_392 = arith.constant 23 : index
    %859 = memref.load %arg2[%c7_391, %c23_392] : memref<8x24xf32, #tpu.memory_space<smem>>
    %860 = vector.broadcast %859 : f32 to vector<8x256xf32>
    %861 = arith.mulf %118, %860 : vector<8x256xf32>
    %862 = arith.addf %858, %861 : vector<8x256xf32>
    %863 = tpu.iota {dimensions = array<i32: 0>} : vector<8x1xi32>
    %864 = vector.extract_strided_slice %397 {offsets = [0, 0], sizes = [1, 256], strides = [1, 1]} : vector<8x256xf32> to vector<1x256xf32>
    %865 = vector.broadcast %864 : vector<1x256xf32> to vector<8x256xf32>
    %866 = arith.mulf %149, %865 : vector<8x256xf32>
    %867 = vector.extract_strided_slice %428 {offsets = [0, 0], sizes = [1, 256], strides = [1, 1]} : vector<8x256xf32> to vector<1x256xf32>
    %868 = vector.broadcast %867 : vector<1x256xf32> to vector<8x256xf32>
    %869 = arith.mulf %180, %868 : vector<8x256xf32>
    %870 = arith.addf %866, %869 : vector<8x256xf32>
    %871 = vector.extract_strided_slice %459 {offsets = [0, 0], sizes = [1, 256], strides = [1, 1]} : vector<8x256xf32> to vector<1x256xf32>
    %872 = vector.broadcast %871 : vector<1x256xf32> to vector<8x256xf32>
    %873 = arith.mulf %211, %872 : vector<8x256xf32>
    %874 = arith.addf %870, %873 : vector<8x256xf32>
    %875 = vector.extract_strided_slice %490 {offsets = [0, 0], sizes = [1, 256], strides = [1, 1]} : vector<8x256xf32> to vector<1x256xf32>
    %876 = vector.broadcast %875 : vector<1x256xf32> to vector<8x256xf32>
    %877 = arith.mulf %242, %876 : vector<8x256xf32>
    %878 = arith.addf %874, %877 : vector<8x256xf32>
    %879 = vector.extract_strided_slice %521 {offsets = [0, 0], sizes = [1, 256], strides = [1, 1]} : vector<8x256xf32> to vector<1x256xf32>
    %880 = vector.broadcast %879 : vector<1x256xf32> to vector<8x256xf32>
    %881 = arith.mulf %273, %880 : vector<8x256xf32>
    %882 = arith.addf %878, %881 : vector<8x256xf32>
    %883 = vector.extract_strided_slice %552 {offsets = [0, 0], sizes = [1, 256], strides = [1, 1]} : vector<8x256xf32> to vector<1x256xf32>
    %884 = vector.broadcast %883 : vector<1x256xf32> to vector<8x256xf32>
    %885 = arith.mulf %304, %884 : vector<8x256xf32>
    %886 = arith.addf %882, %885 : vector<8x256xf32>
    %887 = vector.extract_strided_slice %583 {offsets = [0, 0], sizes = [1, 256], strides = [1, 1]} : vector<8x256xf32> to vector<1x256xf32>
    %888 = vector.broadcast %887 : vector<1x256xf32> to vector<8x256xf32>
    %889 = arith.mulf %335, %888 : vector<8x256xf32>
    %890 = arith.addf %886, %889 : vector<8x256xf32>
    %891 = vector.extract_strided_slice %614 {offsets = [0, 0], sizes = [1, 256], strides = [1, 1]} : vector<8x256xf32> to vector<1x256xf32>
    %892 = vector.broadcast %891 : vector<1x256xf32> to vector<8x256xf32>
    %893 = arith.mulf %366, %892 : vector<8x256xf32>
    %894 = arith.addf %890, %893 : vector<8x256xf32>
    %c0_i32 = arith.constant 0 : i32
    %895 = vector.broadcast %c0_i32 : i32 to vector<8x1xi32>
    %896 = arith.cmpi sge, %863, %895 : vector<8x1xi32>
    %cst_393 = arith.constant 0xFF800000 : f32
    %897 = vector.shape_cast %896 : vector<8x1xi1> to vector<8x1xi1>
    %898 = vector.broadcast %897 : vector<8x1xi1> to vector<8x256xi1>
    %899 = vector.broadcast %cst_393 : f32 to vector<8x256xf32>
    %900 = arith.select %898, %894, %899 : vector<8x256xi1>, vector<8x256xf32>
    %901 = vector.extract_strided_slice %397 {offsets = [1, 0], sizes = [1, 256], strides = [1, 1]} : vector<8x256xf32> to vector<1x256xf32>
    %902 = vector.broadcast %901 : vector<1x256xf32> to vector<8x256xf32>
    %903 = arith.mulf %149, %902 : vector<8x256xf32>
    %904 = vector.extract_strided_slice %428 {offsets = [1, 0], sizes = [1, 256], strides = [1, 1]} : vector<8x256xf32> to vector<1x256xf32>
    %905 = vector.broadcast %904 : vector<1x256xf32> to vector<8x256xf32>
    %906 = arith.mulf %180, %905 : vector<8x256xf32>
    %907 = arith.addf %903, %906 : vector<8x256xf32>
    %908 = vector.extract_strided_slice %459 {offsets = [1, 0], sizes = [1, 256], strides = [1, 1]} : vector<8x256xf32> to vector<1x256xf32>
    %909 = vector.broadcast %908 : vector<1x256xf32> to vector<8x256xf32>
    %910 = arith.mulf %211, %909 : vector<8x256xf32>
    %911 = arith.addf %907, %910 : vector<8x256xf32>
    %912 = vector.extract_strided_slice %490 {offsets = [1, 0], sizes = [1, 256], strides = [1, 1]} : vector<8x256xf32> to vector<1x256xf32>
    %913 = vector.broadcast %912 : vector<1x256xf32> to vector<8x256xf32>
    %914 = arith.mulf %242, %913 : vector<8x256xf32>
    %915 = arith.addf %911, %914 : vector<8x256xf32>
    %916 = vector.extract_strided_slice %521 {offsets = [1, 0], sizes = [1, 256], strides = [1, 1]} : vector<8x256xf32> to vector<1x256xf32>
    %917 = vector.broadcast %916 : vector<1x256xf32> to vector<8x256xf32>
    %918 = arith.mulf %273, %917 : vector<8x256xf32>
    %919 = arith.addf %915, %918 : vector<8x256xf32>
    %920 = vector.extract_strided_slice %552 {offsets = [1, 0], sizes = [1, 256], strides = [1, 1]} : vector<8x256xf32> to vector<1x256xf32>
    %921 = vector.broadcast %920 : vector<1x256xf32> to vector<8x256xf32>
    %922 = arith.mulf %304, %921 : vector<8x256xf32>
    %923 = arith.addf %919, %922 : vector<8x256xf32>
    %924 = vector.extract_strided_slice %583 {offsets = [1, 0], sizes = [1, 256], strides = [1, 1]} : vector<8x256xf32> to vector<1x256xf32>
    %925 = vector.broadcast %924 : vector<1x256xf32> to vector<8x256xf32>
    %926 = arith.mulf %335, %925 : vector<8x256xf32>
    %927 = arith.addf %923, %926 : vector<8x256xf32>
    %928 = vector.extract_strided_slice %614 {offsets = [1, 0], sizes = [1, 256], strides = [1, 1]} : vector<8x256xf32> to vector<1x256xf32>
    %929 = vector.broadcast %928 : vector<1x256xf32> to vector<8x256xf32>
    %930 = arith.mulf %366, %929 : vector<8x256xf32>
    %931 = arith.addf %927, %930 : vector<8x256xf32>
    %c1_i32 = arith.constant 1 : i32
    %932 = vector.broadcast %c1_i32 : i32 to vector<8x1xi32>
    %933 = arith.cmpi sge, %863, %932 : vector<8x1xi32>
    %cst_394 = arith.constant 0xFF800000 : f32
    %934 = vector.shape_cast %933 : vector<8x1xi1> to vector<8x1xi1>
    %935 = vector.broadcast %934 : vector<8x1xi1> to vector<8x256xi1>
    %936 = vector.broadcast %cst_394 : f32 to vector<8x256xf32>
    %937 = arith.select %935, %931, %936 : vector<8x256xi1>, vector<8x256xf32>
    %938 = vector.extract_strided_slice %397 {offsets = [2, 0], sizes = [1, 256], strides = [1, 1]} : vector<8x256xf32> to vector<1x256xf32>
    %939 = vector.broadcast %938 : vector<1x256xf32> to vector<8x256xf32>
    %940 = arith.mulf %149, %939 : vector<8x256xf32>
    %941 = vector.extract_strided_slice %428 {offsets = [2, 0], sizes = [1, 256], strides = [1, 1]} : vector<8x256xf32> to vector<1x256xf32>
    %942 = vector.broadcast %941 : vector<1x256xf32> to vector<8x256xf32>
    %943 = arith.mulf %180, %942 : vector<8x256xf32>
    %944 = arith.addf %940, %943 : vector<8x256xf32>
    %945 = vector.extract_strided_slice %459 {offsets = [2, 0], sizes = [1, 256], strides = [1, 1]} : vector<8x256xf32> to vector<1x256xf32>
    %946 = vector.broadcast %945 : vector<1x256xf32> to vector<8x256xf32>
    %947 = arith.mulf %211, %946 : vector<8x256xf32>
    %948 = arith.addf %944, %947 : vector<8x256xf32>
    %949 = vector.extract_strided_slice %490 {offsets = [2, 0], sizes = [1, 256], strides = [1, 1]} : vector<8x256xf32> to vector<1x256xf32>
    %950 = vector.broadcast %949 : vector<1x256xf32> to vector<8x256xf32>
    %951 = arith.mulf %242, %950 : vector<8x256xf32>
    %952 = arith.addf %948, %951 : vector<8x256xf32>
    %953 = vector.extract_strided_slice %521 {offsets = [2, 0], sizes = [1, 256], strides = [1, 1]} : vector<8x256xf32> to vector<1x256xf32>
    %954 = vector.broadcast %953 : vector<1x256xf32> to vector<8x256xf32>
    %955 = arith.mulf %273, %954 : vector<8x256xf32>
    %956 = arith.addf %952, %955 : vector<8x256xf32>
    %957 = vector.extract_strided_slice %552 {offsets = [2, 0], sizes = [1, 256], strides = [1, 1]} : vector<8x256xf32> to vector<1x256xf32>
    %958 = vector.broadcast %957 : vector<1x256xf32> to vector<8x256xf32>
    %959 = arith.mulf %304, %958 : vector<8x256xf32>
    %960 = arith.addf %956, %959 : vector<8x256xf32>
    %961 = vector.extract_strided_slice %583 {offsets = [2, 0], sizes = [1, 256], strides = [1, 1]} : vector<8x256xf32> to vector<1x256xf32>
    %962 = vector.broadcast %961 : vector<1x256xf32> to vector<8x256xf32>
    %963 = arith.mulf %335, %962 : vector<8x256xf32>
    %964 = arith.addf %960, %963 : vector<8x256xf32>
    %965 = vector.extract_strided_slice %614 {offsets = [2, 0], sizes = [1, 256], strides = [1, 1]} : vector<8x256xf32> to vector<1x256xf32>
    %966 = vector.broadcast %965 : vector<1x256xf32> to vector<8x256xf32>
    %967 = arith.mulf %366, %966 : vector<8x256xf32>
    %968 = arith.addf %964, %967 : vector<8x256xf32>
    %c2_i32 = arith.constant 2 : i32
    %969 = vector.broadcast %c2_i32 : i32 to vector<8x1xi32>
    %970 = arith.cmpi sge, %863, %969 : vector<8x1xi32>
    %cst_395 = arith.constant 0xFF800000 : f32
    %971 = vector.shape_cast %970 : vector<8x1xi1> to vector<8x1xi1>
    %972 = vector.broadcast %971 : vector<8x1xi1> to vector<8x256xi1>
    %973 = vector.broadcast %cst_395 : f32 to vector<8x256xf32>
    %974 = arith.select %972, %968, %973 : vector<8x256xi1>, vector<8x256xf32>
    %975 = vector.extract_strided_slice %397 {offsets = [3, 0], sizes = [1, 256], strides = [1, 1]} : vector<8x256xf32> to vector<1x256xf32>
    %976 = vector.broadcast %975 : vector<1x256xf32> to vector<8x256xf32>
    %977 = arith.mulf %149, %976 : vector<8x256xf32>
    %978 = vector.extract_strided_slice %428 {offsets = [3, 0], sizes = [1, 256], strides = [1, 1]} : vector<8x256xf32> to vector<1x256xf32>
    %979 = vector.broadcast %978 : vector<1x256xf32> to vector<8x256xf32>
    %980 = arith.mulf %180, %979 : vector<8x256xf32>
    %981 = arith.addf %977, %980 : vector<8x256xf32>
    %982 = vector.extract_strided_slice %459 {offsets = [3, 0], sizes = [1, 256], strides = [1, 1]} : vector<8x256xf32> to vector<1x256xf32>
    %983 = vector.broadcast %982 : vector<1x256xf32> to vector<8x256xf32>
    %984 = arith.mulf %211, %983 : vector<8x256xf32>
    %985 = arith.addf %981, %984 : vector<8x256xf32>
    %986 = vector.extract_strided_slice %490 {offsets = [3, 0], sizes = [1, 256], strides = [1, 1]} : vector<8x256xf32> to vector<1x256xf32>
    %987 = vector.broadcast %986 : vector<1x256xf32> to vector<8x256xf32>
    %988 = arith.mulf %242, %987 : vector<8x256xf32>
    %989 = arith.addf %985, %988 : vector<8x256xf32>
    %990 = vector.extract_strided_slice %521 {offsets = [3, 0], sizes = [1, 256], strides = [1, 1]} : vector<8x256xf32> to vector<1x256xf32>
    %991 = vector.broadcast %990 : vector<1x256xf32> to vector<8x256xf32>
    %992 = arith.mulf %273, %991 : vector<8x256xf32>
    %993 = arith.addf %989, %992 : vector<8x256xf32>
    %994 = vector.extract_strided_slice %552 {offsets = [3, 0], sizes = [1, 256], strides = [1, 1]} : vector<8x256xf32> to vector<1x256xf32>
    %995 = vector.broadcast %994 : vector<1x256xf32> to vector<8x256xf32>
    %996 = arith.mulf %304, %995 : vector<8x256xf32>
    %997 = arith.addf %993, %996 : vector<8x256xf32>
    %998 = vector.extract_strided_slice %583 {offsets = [3, 0], sizes = [1, 256], strides = [1, 1]} : vector<8x256xf32> to vector<1x256xf32>
    %999 = vector.broadcast %998 : vector<1x256xf32> to vector<8x256xf32>
    %1000 = arith.mulf %335, %999 : vector<8x256xf32>
    %1001 = arith.addf %997, %1000 : vector<8x256xf32>
    %1002 = vector.extract_strided_slice %614 {offsets = [3, 0], sizes = [1, 256], strides = [1, 1]} : vector<8x256xf32> to vector<1x256xf32>
    %1003 = vector.broadcast %1002 : vector<1x256xf32> to vector<8x256xf32>
    %1004 = arith.mulf %366, %1003 : vector<8x256xf32>
    %1005 = arith.addf %1001, %1004 : vector<8x256xf32>
    %c3_i32 = arith.constant 3 : i32
    %1006 = vector.broadcast %c3_i32 : i32 to vector<8x1xi32>
    %1007 = arith.cmpi sge, %863, %1006 : vector<8x1xi32>
    %cst_396 = arith.constant 0xFF800000 : f32
    %1008 = vector.shape_cast %1007 : vector<8x1xi1> to vector<8x1xi1>
    %1009 = vector.broadcast %1008 : vector<8x1xi1> to vector<8x256xi1>
    %1010 = vector.broadcast %cst_396 : f32 to vector<8x256xf32>
    %1011 = arith.select %1009, %1005, %1010 : vector<8x256xi1>, vector<8x256xf32>
    %1012 = vector.extract_strided_slice %397 {offsets = [4, 0], sizes = [1, 256], strides = [1, 1]} : vector<8x256xf32> to vector<1x256xf32>
    %1013 = vector.broadcast %1012 : vector<1x256xf32> to vector<8x256xf32>
    %1014 = arith.mulf %149, %1013 : vector<8x256xf32>
    %1015 = vector.extract_strided_slice %428 {offsets = [4, 0], sizes = [1, 256], strides = [1, 1]} : vector<8x256xf32> to vector<1x256xf32>
    %1016 = vector.broadcast %1015 : vector<1x256xf32> to vector<8x256xf32>
    %1017 = arith.mulf %180, %1016 : vector<8x256xf32>
    %1018 = arith.addf %1014, %1017 : vector<8x256xf32>
    %1019 = vector.extract_strided_slice %459 {offsets = [4, 0], sizes = [1, 256], strides = [1, 1]} : vector<8x256xf32> to vector<1x256xf32>
    %1020 = vector.broadcast %1019 : vector<1x256xf32> to vector<8x256xf32>
    %1021 = arith.mulf %211, %1020 : vector<8x256xf32>
    %1022 = arith.addf %1018, %1021 : vector<8x256xf32>
    %1023 = vector.extract_strided_slice %490 {offsets = [4, 0], sizes = [1, 256], strides = [1, 1]} : vector<8x256xf32> to vector<1x256xf32>
    %1024 = vector.broadcast %1023 : vector<1x256xf32> to vector<8x256xf32>
    %1025 = arith.mulf %242, %1024 : vector<8x256xf32>
    %1026 = arith.addf %1022, %1025 : vector<8x256xf32>
    %1027 = vector.extract_strided_slice %521 {offsets = [4, 0], sizes = [1, 256], strides = [1, 1]} : vector<8x256xf32> to vector<1x256xf32>
    %1028 = vector.broadcast %1027 : vector<1x256xf32> to vector<8x256xf32>
    %1029 = arith.mulf %273, %1028 : vector<8x256xf32>
    %1030 = arith.addf %1026, %1029 : vector<8x256xf32>
    %1031 = vector.extract_strided_slice %552 {offsets = [4, 0], sizes = [1, 256], strides = [1, 1]} : vector<8x256xf32> to vector<1x256xf32>
    %1032 = vector.broadcast %1031 : vector<1x256xf32> to vector<8x256xf32>
    %1033 = arith.mulf %304, %1032 : vector<8x256xf32>
    %1034 = arith.addf %1030, %1033 : vector<8x256xf32>
    %1035 = vector.extract_strided_slice %583 {offsets = [4, 0], sizes = [1, 256], strides = [1, 1]} : vector<8x256xf32> to vector<1x256xf32>
    %1036 = vector.broadcast %1035 : vector<1x256xf32> to vector<8x256xf32>
    %1037 = arith.mulf %335, %1036 : vector<8x256xf32>
    %1038 = arith.addf %1034, %1037 : vector<8x256xf32>
    %1039 = vector.extract_strided_slice %614 {offsets = [4, 0], sizes = [1, 256], strides = [1, 1]} : vector<8x256xf32> to vector<1x256xf32>
    %1040 = vector.broadcast %1039 : vector<1x256xf32> to vector<8x256xf32>
    %1041 = arith.mulf %366, %1040 : vector<8x256xf32>
    %1042 = arith.addf %1038, %1041 : vector<8x256xf32>
    %c4_i32 = arith.constant 4 : i32
    %1043 = vector.broadcast %c4_i32 : i32 to vector<8x1xi32>
    %1044 = arith.cmpi sge, %863, %1043 : vector<8x1xi32>
    %cst_397 = arith.constant 0xFF800000 : f32
    %1045 = vector.shape_cast %1044 : vector<8x1xi1> to vector<8x1xi1>
    %1046 = vector.broadcast %1045 : vector<8x1xi1> to vector<8x256xi1>
    %1047 = vector.broadcast %cst_397 : f32 to vector<8x256xf32>
    %1048 = arith.select %1046, %1042, %1047 : vector<8x256xi1>, vector<8x256xf32>
    %1049 = vector.extract_strided_slice %397 {offsets = [5, 0], sizes = [1, 256], strides = [1, 1]} : vector<8x256xf32> to vector<1x256xf32>
    %1050 = vector.broadcast %1049 : vector<1x256xf32> to vector<8x256xf32>
    %1051 = arith.mulf %149, %1050 : vector<8x256xf32>
    %1052 = vector.extract_strided_slice %428 {offsets = [5, 0], sizes = [1, 256], strides = [1, 1]} : vector<8x256xf32> to vector<1x256xf32>
    %1053 = vector.broadcast %1052 : vector<1x256xf32> to vector<8x256xf32>
    %1054 = arith.mulf %180, %1053 : vector<8x256xf32>
    %1055 = arith.addf %1051, %1054 : vector<8x256xf32>
    %1056 = vector.extract_strided_slice %459 {offsets = [5, 0], sizes = [1, 256], strides = [1, 1]} : vector<8x256xf32> to vector<1x256xf32>
    %1057 = vector.broadcast %1056 : vector<1x256xf32> to vector<8x256xf32>
    %1058 = arith.mulf %211, %1057 : vector<8x256xf32>
    %1059 = arith.addf %1055, %1058 : vector<8x256xf32>
    %1060 = vector.extract_strided_slice %490 {offsets = [5, 0], sizes = [1, 256], strides = [1, 1]} : vector<8x256xf32> to vector<1x256xf32>
    %1061 = vector.broadcast %1060 : vector<1x256xf32> to vector<8x256xf32>
    %1062 = arith.mulf %242, %1061 : vector<8x256xf32>
    %1063 = arith.addf %1059, %1062 : vector<8x256xf32>
    %1064 = vector.extract_strided_slice %521 {offsets = [5, 0], sizes = [1, 256], strides = [1, 1]} : vector<8x256xf32> to vector<1x256xf32>
    %1065 = vector.broadcast %1064 : vector<1x256xf32> to vector<8x256xf32>
    %1066 = arith.mulf %273, %1065 : vector<8x256xf32>
    %1067 = arith.addf %1063, %1066 : vector<8x256xf32>
    %1068 = vector.extract_strided_slice %552 {offsets = [5, 0], sizes = [1, 256], strides = [1, 1]} : vector<8x256xf32> to vector<1x256xf32>
    %1069 = vector.broadcast %1068 : vector<1x256xf32> to vector<8x256xf32>
    %1070 = arith.mulf %304, %1069 : vector<8x256xf32>
    %1071 = arith.addf %1067, %1070 : vector<8x256xf32>
    %1072 = vector.extract_strided_slice %583 {offsets = [5, 0], sizes = [1, 256], strides = [1, 1]} : vector<8x256xf32> to vector<1x256xf32>
    %1073 = vector.broadcast %1072 : vector<1x256xf32> to vector<8x256xf32>
    %1074 = arith.mulf %335, %1073 : vector<8x256xf32>
    %1075 = arith.addf %1071, %1074 : vector<8x256xf32>
    %1076 = vector.extract_strided_slice %614 {offsets = [5, 0], sizes = [1, 256], strides = [1, 1]} : vector<8x256xf32> to vector<1x256xf32>
    %1077 = vector.broadcast %1076 : vector<1x256xf32> to vector<8x256xf32>
    %1078 = arith.mulf %366, %1077 : vector<8x256xf32>
    %1079 = arith.addf %1075, %1078 : vector<8x256xf32>
    %c5_i32 = arith.constant 5 : i32
    %1080 = vector.broadcast %c5_i32 : i32 to vector<8x1xi32>
    %1081 = arith.cmpi sge, %863, %1080 : vector<8x1xi32>
    %cst_398 = arith.constant 0xFF800000 : f32
    %1082 = vector.shape_cast %1081 : vector<8x1xi1> to vector<8x1xi1>
    %1083 = vector.broadcast %1082 : vector<8x1xi1> to vector<8x256xi1>
    %1084 = vector.broadcast %cst_398 : f32 to vector<8x256xf32>
    %1085 = arith.select %1083, %1079, %1084 : vector<8x256xi1>, vector<8x256xf32>
    %1086 = vector.extract_strided_slice %397 {offsets = [6, 0], sizes = [1, 256], strides = [1, 1]} : vector<8x256xf32> to vector<1x256xf32>
    %1087 = vector.broadcast %1086 : vector<1x256xf32> to vector<8x256xf32>
    %1088 = arith.mulf %149, %1087 : vector<8x256xf32>
    %1089 = vector.extract_strided_slice %428 {offsets = [6, 0], sizes = [1, 256], strides = [1, 1]} : vector<8x256xf32> to vector<1x256xf32>
    %1090 = vector.broadcast %1089 : vector<1x256xf32> to vector<8x256xf32>
    %1091 = arith.mulf %180, %1090 : vector<8x256xf32>
    %1092 = arith.addf %1088, %1091 : vector<8x256xf32>
    %1093 = vector.extract_strided_slice %459 {offsets = [6, 0], sizes = [1, 256], strides = [1, 1]} : vector<8x256xf32> to vector<1x256xf32>
    %1094 = vector.broadcast %1093 : vector<1x256xf32> to vector<8x256xf32>
    %1095 = arith.mulf %211, %1094 : vector<8x256xf32>
    %1096 = arith.addf %1092, %1095 : vector<8x256xf32>
    %1097 = vector.extract_strided_slice %490 {offsets = [6, 0], sizes = [1, 256], strides = [1, 1]} : vector<8x256xf32> to vector<1x256xf32>
    %1098 = vector.broadcast %1097 : vector<1x256xf32> to vector<8x256xf32>
    %1099 = arith.mulf %242, %1098 : vector<8x256xf32>
    %1100 = arith.addf %1096, %1099 : vector<8x256xf32>
    %1101 = vector.extract_strided_slice %521 {offsets = [6, 0], sizes = [1, 256], strides = [1, 1]} : vector<8x256xf32> to vector<1x256xf32>
    %1102 = vector.broadcast %1101 : vector<1x256xf32> to vector<8x256xf32>
    %1103 = arith.mulf %273, %1102 : vector<8x256xf32>
    %1104 = arith.addf %1100, %1103 : vector<8x256xf32>
    %1105 = vector.extract_strided_slice %552 {offsets = [6, 0], sizes = [1, 256], strides = [1, 1]} : vector<8x256xf32> to vector<1x256xf32>
    %1106 = vector.broadcast %1105 : vector<1x256xf32> to vector<8x256xf32>
    %1107 = arith.mulf %304, %1106 : vector<8x256xf32>
    %1108 = arith.addf %1104, %1107 : vector<8x256xf32>
    %1109 = vector.extract_strided_slice %583 {offsets = [6, 0], sizes = [1, 256], strides = [1, 1]} : vector<8x256xf32> to vector<1x256xf32>
    %1110 = vector.broadcast %1109 : vector<1x256xf32> to vector<8x256xf32>
    %1111 = arith.mulf %335, %1110 : vector<8x256xf32>
    %1112 = arith.addf %1108, %1111 : vector<8x256xf32>
    %1113 = vector.extract_strided_slice %614 {offsets = [6, 0], sizes = [1, 256], strides = [1, 1]} : vector<8x256xf32> to vector<1x256xf32>
    %1114 = vector.broadcast %1113 : vector<1x256xf32> to vector<8x256xf32>
    %1115 = arith.mulf %366, %1114 : vector<8x256xf32>
    %1116 = arith.addf %1112, %1115 : vector<8x256xf32>
    %c6_i32 = arith.constant 6 : i32
    %1117 = vector.broadcast %c6_i32 : i32 to vector<8x1xi32>
    %1118 = arith.cmpi sge, %863, %1117 : vector<8x1xi32>
    %cst_399 = arith.constant 0xFF800000 : f32
    %1119 = vector.shape_cast %1118 : vector<8x1xi1> to vector<8x1xi1>
    %1120 = vector.broadcast %1119 : vector<8x1xi1> to vector<8x256xi1>
    %1121 = vector.broadcast %cst_399 : f32 to vector<8x256xf32>
    %1122 = arith.select %1120, %1116, %1121 : vector<8x256xi1>, vector<8x256xf32>
    %1123 = vector.extract_strided_slice %397 {offsets = [7, 0], sizes = [1, 256], strides = [1, 1]} : vector<8x256xf32> to vector<1x256xf32>
    %1124 = vector.broadcast %1123 : vector<1x256xf32> to vector<8x256xf32>
    %1125 = arith.mulf %149, %1124 : vector<8x256xf32>
    %1126 = vector.extract_strided_slice %428 {offsets = [7, 0], sizes = [1, 256], strides = [1, 1]} : vector<8x256xf32> to vector<1x256xf32>
    %1127 = vector.broadcast %1126 : vector<1x256xf32> to vector<8x256xf32>
    %1128 = arith.mulf %180, %1127 : vector<8x256xf32>
    %1129 = arith.addf %1125, %1128 : vector<8x256xf32>
    %1130 = vector.extract_strided_slice %459 {offsets = [7, 0], sizes = [1, 256], strides = [1, 1]} : vector<8x256xf32> to vector<1x256xf32>
    %1131 = vector.broadcast %1130 : vector<1x256xf32> to vector<8x256xf32>
    %1132 = arith.mulf %211, %1131 : vector<8x256xf32>
    %1133 = arith.addf %1129, %1132 : vector<8x256xf32>
    %1134 = vector.extract_strided_slice %490 {offsets = [7, 0], sizes = [1, 256], strides = [1, 1]} : vector<8x256xf32> to vector<1x256xf32>
    %1135 = vector.broadcast %1134 : vector<1x256xf32> to vector<8x256xf32>
    %1136 = arith.mulf %242, %1135 : vector<8x256xf32>
    %1137 = arith.addf %1133, %1136 : vector<8x256xf32>
    %1138 = vector.extract_strided_slice %521 {offsets = [7, 0], sizes = [1, 256], strides = [1, 1]} : vector<8x256xf32> to vector<1x256xf32>
    %1139 = vector.broadcast %1138 : vector<1x256xf32> to vector<8x256xf32>
    %1140 = arith.mulf %273, %1139 : vector<8x256xf32>
    %1141 = arith.addf %1137, %1140 : vector<8x256xf32>
    %1142 = vector.extract_strided_slice %552 {offsets = [7, 0], sizes = [1, 256], strides = [1, 1]} : vector<8x256xf32> to vector<1x256xf32>
    %1143 = vector.broadcast %1142 : vector<1x256xf32> to vector<8x256xf32>
    %1144 = arith.mulf %304, %1143 : vector<8x256xf32>
    %1145 = arith.addf %1141, %1144 : vector<8x256xf32>
    %1146 = vector.extract_strided_slice %583 {offsets = [7, 0], sizes = [1, 256], strides = [1, 1]} : vector<8x256xf32> to vector<1x256xf32>
    %1147 = vector.broadcast %1146 : vector<1x256xf32> to vector<8x256xf32>
    %1148 = arith.mulf %335, %1147 : vector<8x256xf32>
    %1149 = arith.addf %1145, %1148 : vector<8x256xf32>
    %1150 = vector.extract_strided_slice %614 {offsets = [7, 0], sizes = [1, 256], strides = [1, 1]} : vector<8x256xf32> to vector<1x256xf32>
    %1151 = vector.broadcast %1150 : vector<1x256xf32> to vector<8x256xf32>
    %1152 = arith.mulf %366, %1151 : vector<8x256xf32>
    %1153 = arith.addf %1149, %1152 : vector<8x256xf32>
    %c7_i32 = arith.constant 7 : i32
    %1154 = vector.broadcast %c7_i32 : i32 to vector<8x1xi32>
    %1155 = arith.cmpi sge, %863, %1154 : vector<8x1xi32>
    %cst_400 = arith.constant 0xFF800000 : f32
    %1156 = vector.shape_cast %1155 : vector<8x1xi1> to vector<8x1xi1>
    %1157 = vector.broadcast %1156 : vector<8x1xi1> to vector<8x256xi1>
    %1158 = vector.broadcast %cst_400 : f32 to vector<8x256xf32>
    %1159 = arith.select %1157, %1153, %1158 : vector<8x256xi1>, vector<8x256xf32>
    %1160 = arith.maximumf %900, %937 : vector<8x256xf32>
    %1161 = arith.maximumf %1160, %974 : vector<8x256xf32>
    %1162 = arith.maximumf %1161, %1011 : vector<8x256xf32>
    %1163 = arith.maximumf %1162, %1048 : vector<8x256xf32>
    %1164 = arith.maximumf %1163, %1085 : vector<8x256xf32>
    %1165 = arith.maximumf %1164, %1122 : vector<8x256xf32>
    %1166 = arith.maximumf %1165, %1159 : vector<8x256xf32>
    %1167 = arith.subf %900, %1166 : vector<8x256xf32>
    %1168 = math.exp %1167 : vector<8x256xf32>
    %1169 = arith.subf %937, %1166 : vector<8x256xf32>
    %1170 = math.exp %1169 : vector<8x256xf32>
    %1171 = arith.subf %974, %1166 : vector<8x256xf32>
    %1172 = math.exp %1171 : vector<8x256xf32>
    %1173 = arith.subf %1011, %1166 : vector<8x256xf32>
    %1174 = math.exp %1173 : vector<8x256xf32>
    %1175 = arith.subf %1048, %1166 : vector<8x256xf32>
    %1176 = math.exp %1175 : vector<8x256xf32>
    %1177 = arith.subf %1085, %1166 : vector<8x256xf32>
    %1178 = math.exp %1177 : vector<8x256xf32>
    %1179 = arith.subf %1122, %1166 : vector<8x256xf32>
    %1180 = math.exp %1179 : vector<8x256xf32>
    %1181 = arith.subf %1159, %1166 : vector<8x256xf32>
    %1182 = math.exp %1181 : vector<8x256xf32>
    %cst_401 = arith.constant 0.000000e+00 : f32
    %1183 = vector.broadcast %cst_401 : f32 to vector<8x256xf32>
    %1184 = arith.addf %1183, %1168 : vector<8x256xf32>
    %1185 = arith.addf %1184, %1170 : vector<8x256xf32>
    %1186 = arith.addf %1185, %1172 : vector<8x256xf32>
    %1187 = arith.addf %1186, %1174 : vector<8x256xf32>
    %1188 = arith.addf %1187, %1176 : vector<8x256xf32>
    %1189 = arith.addf %1188, %1178 : vector<8x256xf32>
    %1190 = arith.addf %1189, %1180 : vector<8x256xf32>
    %1191 = arith.addf %1190, %1182 : vector<8x256xf32>
    %1192 = tpu.reciprocal %1191 : vector<8x256xf32> -> vector<8x256xf32>
    %1193 = arith.mulf %1168, %1192 : vector<8x256xf32>
    %1194 = arith.mulf %1170, %1192 : vector<8x256xf32>
    %1195 = arith.mulf %1172, %1192 : vector<8x256xf32>
    %1196 = arith.mulf %1174, %1192 : vector<8x256xf32>
    %1197 = arith.mulf %1176, %1192 : vector<8x256xf32>
    %1198 = arith.mulf %1178, %1192 : vector<8x256xf32>
    %1199 = arith.mulf %1180, %1192 : vector<8x256xf32>
    %1200 = arith.mulf %1182, %1192 : vector<8x256xf32>
    %1201 = vector.extract_strided_slice %645 {offsets = [0, 0], sizes = [1, 256], strides = [1, 1]} : vector<8x256xf32> to vector<1x256xf32>
    %1202 = vector.broadcast %1201 : vector<1x256xf32> to vector<8x256xf32>
    %1203 = arith.mulf %1193, %1202 : vector<8x256xf32>
    %1204 = vector.extract_strided_slice %645 {offsets = [1, 0], sizes = [1, 256], strides = [1, 1]} : vector<8x256xf32> to vector<1x256xf32>
    %1205 = vector.broadcast %1204 : vector<1x256xf32> to vector<8x256xf32>
    %1206 = arith.mulf %1194, %1205 : vector<8x256xf32>
    %1207 = arith.addf %1203, %1206 : vector<8x256xf32>
    %1208 = vector.extract_strided_slice %645 {offsets = [2, 0], sizes = [1, 256], strides = [1, 1]} : vector<8x256xf32> to vector<1x256xf32>
    %1209 = vector.broadcast %1208 : vector<1x256xf32> to vector<8x256xf32>
    %1210 = arith.mulf %1195, %1209 : vector<8x256xf32>
    %1211 = arith.addf %1207, %1210 : vector<8x256xf32>
    %1212 = vector.extract_strided_slice %645 {offsets = [3, 0], sizes = [1, 256], strides = [1, 1]} : vector<8x256xf32> to vector<1x256xf32>
    %1213 = vector.broadcast %1212 : vector<1x256xf32> to vector<8x256xf32>
    %1214 = arith.mulf %1196, %1213 : vector<8x256xf32>
    %1215 = arith.addf %1211, %1214 : vector<8x256xf32>
    %1216 = vector.extract_strided_slice %645 {offsets = [4, 0], sizes = [1, 256], strides = [1, 1]} : vector<8x256xf32> to vector<1x256xf32>
    %1217 = vector.broadcast %1216 : vector<1x256xf32> to vector<8x256xf32>
    %1218 = arith.mulf %1197, %1217 : vector<8x256xf32>
    %1219 = arith.addf %1215, %1218 : vector<8x256xf32>
    %1220 = vector.extract_strided_slice %645 {offsets = [5, 0], sizes = [1, 256], strides = [1, 1]} : vector<8x256xf32> to vector<1x256xf32>
    %1221 = vector.broadcast %1220 : vector<1x256xf32> to vector<8x256xf32>
    %1222 = arith.mulf %1198, %1221 : vector<8x256xf32>
    %1223 = arith.addf %1219, %1222 : vector<8x256xf32>
    %1224 = vector.extract_strided_slice %645 {offsets = [6, 0], sizes = [1, 256], strides = [1, 1]} : vector<8x256xf32> to vector<1x256xf32>
    %1225 = vector.broadcast %1224 : vector<1x256xf32> to vector<8x256xf32>
    %1226 = arith.mulf %1199, %1225 : vector<8x256xf32>
    %1227 = arith.addf %1223, %1226 : vector<8x256xf32>
    %1228 = vector.extract_strided_slice %645 {offsets = [7, 0], sizes = [1, 256], strides = [1, 1]} : vector<8x256xf32> to vector<1x256xf32>
    %1229 = vector.broadcast %1228 : vector<1x256xf32> to vector<8x256xf32>
    %1230 = arith.mulf %1200, %1229 : vector<8x256xf32>
    %1231 = arith.addf %1227, %1230 : vector<8x256xf32>
    %1232 = vector.extract_strided_slice %676 {offsets = [0, 0], sizes = [1, 256], strides = [1, 1]} : vector<8x256xf32> to vector<1x256xf32>
    %1233 = vector.broadcast %1232 : vector<1x256xf32> to vector<8x256xf32>
    %1234 = arith.mulf %1193, %1233 : vector<8x256xf32>
    %1235 = vector.extract_strided_slice %676 {offsets = [1, 0], sizes = [1, 256], strides = [1, 1]} : vector<8x256xf32> to vector<1x256xf32>
    %1236 = vector.broadcast %1235 : vector<1x256xf32> to vector<8x256xf32>
    %1237 = arith.mulf %1194, %1236 : vector<8x256xf32>
    %1238 = arith.addf %1234, %1237 : vector<8x256xf32>
    %1239 = vector.extract_strided_slice %676 {offsets = [2, 0], sizes = [1, 256], strides = [1, 1]} : vector<8x256xf32> to vector<1x256xf32>
    %1240 = vector.broadcast %1239 : vector<1x256xf32> to vector<8x256xf32>
    %1241 = arith.mulf %1195, %1240 : vector<8x256xf32>
    %1242 = arith.addf %1238, %1241 : vector<8x256xf32>
    %1243 = vector.extract_strided_slice %676 {offsets = [3, 0], sizes = [1, 256], strides = [1, 1]} : vector<8x256xf32> to vector<1x256xf32>
    %1244 = vector.broadcast %1243 : vector<1x256xf32> to vector<8x256xf32>
    %1245 = arith.mulf %1196, %1244 : vector<8x256xf32>
    %1246 = arith.addf %1242, %1245 : vector<8x256xf32>
    %1247 = vector.extract_strided_slice %676 {offsets = [4, 0], sizes = [1, 256], strides = [1, 1]} : vector<8x256xf32> to vector<1x256xf32>
    %1248 = vector.broadcast %1247 : vector<1x256xf32> to vector<8x256xf32>
    %1249 = arith.mulf %1197, %1248 : vector<8x256xf32>
    %1250 = arith.addf %1246, %1249 : vector<8x256xf32>
    %1251 = vector.extract_strided_slice %676 {offsets = [5, 0], sizes = [1, 256], strides = [1, 1]} : vector<8x256xf32> to vector<1x256xf32>
    %1252 = vector.broadcast %1251 : vector<1x256xf32> to vector<8x256xf32>
    %1253 = arith.mulf %1198, %1252 : vector<8x256xf32>
    %1254 = arith.addf %1250, %1253 : vector<8x256xf32>
    %1255 = vector.extract_strided_slice %676 {offsets = [6, 0], sizes = [1, 256], strides = [1, 1]} : vector<8x256xf32> to vector<1x256xf32>
    %1256 = vector.broadcast %1255 : vector<1x256xf32> to vector<8x256xf32>
    %1257 = arith.mulf %1199, %1256 : vector<8x256xf32>
    %1258 = arith.addf %1254, %1257 : vector<8x256xf32>
    %1259 = vector.extract_strided_slice %676 {offsets = [7, 0], sizes = [1, 256], strides = [1, 1]} : vector<8x256xf32> to vector<1x256xf32>
    %1260 = vector.broadcast %1259 : vector<1x256xf32> to vector<8x256xf32>
    %1261 = arith.mulf %1200, %1260 : vector<8x256xf32>
    %1262 = arith.addf %1258, %1261 : vector<8x256xf32>
    %1263 = vector.extract_strided_slice %707 {offsets = [0, 0], sizes = [1, 256], strides = [1, 1]} : vector<8x256xf32> to vector<1x256xf32>
    %1264 = vector.broadcast %1263 : vector<1x256xf32> to vector<8x256xf32>
    %1265 = arith.mulf %1193, %1264 : vector<8x256xf32>
    %1266 = vector.extract_strided_slice %707 {offsets = [1, 0], sizes = [1, 256], strides = [1, 1]} : vector<8x256xf32> to vector<1x256xf32>
    %1267 = vector.broadcast %1266 : vector<1x256xf32> to vector<8x256xf32>
    %1268 = arith.mulf %1194, %1267 : vector<8x256xf32>
    %1269 = arith.addf %1265, %1268 : vector<8x256xf32>
    %1270 = vector.extract_strided_slice %707 {offsets = [2, 0], sizes = [1, 256], strides = [1, 1]} : vector<8x256xf32> to vector<1x256xf32>
    %1271 = vector.broadcast %1270 : vector<1x256xf32> to vector<8x256xf32>
    %1272 = arith.mulf %1195, %1271 : vector<8x256xf32>
    %1273 = arith.addf %1269, %1272 : vector<8x256xf32>
    %1274 = vector.extract_strided_slice %707 {offsets = [3, 0], sizes = [1, 256], strides = [1, 1]} : vector<8x256xf32> to vector<1x256xf32>
    %1275 = vector.broadcast %1274 : vector<1x256xf32> to vector<8x256xf32>
    %1276 = arith.mulf %1196, %1275 : vector<8x256xf32>
    %1277 = arith.addf %1273, %1276 : vector<8x256xf32>
    %1278 = vector.extract_strided_slice %707 {offsets = [4, 0], sizes = [1, 256], strides = [1, 1]} : vector<8x256xf32> to vector<1x256xf32>
    %1279 = vector.broadcast %1278 : vector<1x256xf32> to vector<8x256xf32>
    %1280 = arith.mulf %1197, %1279 : vector<8x256xf32>
    %1281 = arith.addf %1277, %1280 : vector<8x256xf32>
    %1282 = vector.extract_strided_slice %707 {offsets = [5, 0], sizes = [1, 256], strides = [1, 1]} : vector<8x256xf32> to vector<1x256xf32>
    %1283 = vector.broadcast %1282 : vector<1x256xf32> to vector<8x256xf32>
    %1284 = arith.mulf %1198, %1283 : vector<8x256xf32>
    %1285 = arith.addf %1281, %1284 : vector<8x256xf32>
    %1286 = vector.extract_strided_slice %707 {offsets = [6, 0], sizes = [1, 256], strides = [1, 1]} : vector<8x256xf32> to vector<1x256xf32>
    %1287 = vector.broadcast %1286 : vector<1x256xf32> to vector<8x256xf32>
    %1288 = arith.mulf %1199, %1287 : vector<8x256xf32>
    %1289 = arith.addf %1285, %1288 : vector<8x256xf32>
    %1290 = vector.extract_strided_slice %707 {offsets = [7, 0], sizes = [1, 256], strides = [1, 1]} : vector<8x256xf32> to vector<1x256xf32>
    %1291 = vector.broadcast %1290 : vector<1x256xf32> to vector<8x256xf32>
    %1292 = arith.mulf %1200, %1291 : vector<8x256xf32>
    %1293 = arith.addf %1289, %1292 : vector<8x256xf32>
    %1294 = vector.extract_strided_slice %738 {offsets = [0, 0], sizes = [1, 256], strides = [1, 1]} : vector<8x256xf32> to vector<1x256xf32>
    %1295 = vector.broadcast %1294 : vector<1x256xf32> to vector<8x256xf32>
    %1296 = arith.mulf %1193, %1295 : vector<8x256xf32>
    %1297 = vector.extract_strided_slice %738 {offsets = [1, 0], sizes = [1, 256], strides = [1, 1]} : vector<8x256xf32> to vector<1x256xf32>
    %1298 = vector.broadcast %1297 : vector<1x256xf32> to vector<8x256xf32>
    %1299 = arith.mulf %1194, %1298 : vector<8x256xf32>
    %1300 = arith.addf %1296, %1299 : vector<8x256xf32>
    %1301 = vector.extract_strided_slice %738 {offsets = [2, 0], sizes = [1, 256], strides = [1, 1]} : vector<8x256xf32> to vector<1x256xf32>
    %1302 = vector.broadcast %1301 : vector<1x256xf32> to vector<8x256xf32>
    %1303 = arith.mulf %1195, %1302 : vector<8x256xf32>
    %1304 = arith.addf %1300, %1303 : vector<8x256xf32>
    %1305 = vector.extract_strided_slice %738 {offsets = [3, 0], sizes = [1, 256], strides = [1, 1]} : vector<8x256xf32> to vector<1x256xf32>
    %1306 = vector.broadcast %1305 : vector<1x256xf32> to vector<8x256xf32>
    %1307 = arith.mulf %1196, %1306 : vector<8x256xf32>
    %1308 = arith.addf %1304, %1307 : vector<8x256xf32>
    %1309 = vector.extract_strided_slice %738 {offsets = [4, 0], sizes = [1, 256], strides = [1, 1]} : vector<8x256xf32> to vector<1x256xf32>
    %1310 = vector.broadcast %1309 : vector<1x256xf32> to vector<8x256xf32>
    %1311 = arith.mulf %1197, %1310 : vector<8x256xf32>
    %1312 = arith.addf %1308, %1311 : vector<8x256xf32>
    %1313 = vector.extract_strided_slice %738 {offsets = [5, 0], sizes = [1, 256], strides = [1, 1]} : vector<8x256xf32> to vector<1x256xf32>
    %1314 = vector.broadcast %1313 : vector<1x256xf32> to vector<8x256xf32>
    %1315 = arith.mulf %1198, %1314 : vector<8x256xf32>
    %1316 = arith.addf %1312, %1315 : vector<8x256xf32>
    %1317 = vector.extract_strided_slice %738 {offsets = [6, 0], sizes = [1, 256], strides = [1, 1]} : vector<8x256xf32> to vector<1x256xf32>
    %1318 = vector.broadcast %1317 : vector<1x256xf32> to vector<8x256xf32>
    %1319 = arith.mulf %1199, %1318 : vector<8x256xf32>
    %1320 = arith.addf %1316, %1319 : vector<8x256xf32>
    %1321 = vector.extract_strided_slice %738 {offsets = [7, 0], sizes = [1, 256], strides = [1, 1]} : vector<8x256xf32> to vector<1x256xf32>
    %1322 = vector.broadcast %1321 : vector<1x256xf32> to vector<8x256xf32>
    %1323 = arith.mulf %1200, %1322 : vector<8x256xf32>
    %1324 = arith.addf %1320, %1323 : vector<8x256xf32>
    %1325 = vector.extract_strided_slice %769 {offsets = [0, 0], sizes = [1, 256], strides = [1, 1]} : vector<8x256xf32> to vector<1x256xf32>
    %1326 = vector.broadcast %1325 : vector<1x256xf32> to vector<8x256xf32>
    %1327 = arith.mulf %1193, %1326 : vector<8x256xf32>
    %1328 = vector.extract_strided_slice %769 {offsets = [1, 0], sizes = [1, 256], strides = [1, 1]} : vector<8x256xf32> to vector<1x256xf32>
    %1329 = vector.broadcast %1328 : vector<1x256xf32> to vector<8x256xf32>
    %1330 = arith.mulf %1194, %1329 : vector<8x256xf32>
    %1331 = arith.addf %1327, %1330 : vector<8x256xf32>
    %1332 = vector.extract_strided_slice %769 {offsets = [2, 0], sizes = [1, 256], strides = [1, 1]} : vector<8x256xf32> to vector<1x256xf32>
    %1333 = vector.broadcast %1332 : vector<1x256xf32> to vector<8x256xf32>
    %1334 = arith.mulf %1195, %1333 : vector<8x256xf32>
    %1335 = arith.addf %1331, %1334 : vector<8x256xf32>
    %1336 = vector.extract_strided_slice %769 {offsets = [3, 0], sizes = [1, 256], strides = [1, 1]} : vector<8x256xf32> to vector<1x256xf32>
    %1337 = vector.broadcast %1336 : vector<1x256xf32> to vector<8x256xf32>
    %1338 = arith.mulf %1196, %1337 : vector<8x256xf32>
    %1339 = arith.addf %1335, %1338 : vector<8x256xf32>
    %1340 = vector.extract_strided_slice %769 {offsets = [4, 0], sizes = [1, 256], strides = [1, 1]} : vector<8x256xf32> to vector<1x256xf32>
    %1341 = vector.broadcast %1340 : vector<1x256xf32> to vector<8x256xf32>
    %1342 = arith.mulf %1197, %1341 : vector<8x256xf32>
    %1343 = arith.addf %1339, %1342 : vector<8x256xf32>
    %1344 = vector.extract_strided_slice %769 {offsets = [5, 0], sizes = [1, 256], strides = [1, 1]} : vector<8x256xf32> to vector<1x256xf32>
    %1345 = vector.broadcast %1344 : vector<1x256xf32> to vector<8x256xf32>
    %1346 = arith.mulf %1198, %1345 : vector<8x256xf32>
    %1347 = arith.addf %1343, %1346 : vector<8x256xf32>
    %1348 = vector.extract_strided_slice %769 {offsets = [6, 0], sizes = [1, 256], strides = [1, 1]} : vector<8x256xf32> to vector<1x256xf32>
    %1349 = vector.broadcast %1348 : vector<1x256xf32> to vector<8x256xf32>
    %1350 = arith.mulf %1199, %1349 : vector<8x256xf32>
    %1351 = arith.addf %1347, %1350 : vector<8x256xf32>
    %1352 = vector.extract_strided_slice %769 {offsets = [7, 0], sizes = [1, 256], strides = [1, 1]} : vector<8x256xf32> to vector<1x256xf32>
    %1353 = vector.broadcast %1352 : vector<1x256xf32> to vector<8x256xf32>
    %1354 = arith.mulf %1200, %1353 : vector<8x256xf32>
    %1355 = arith.addf %1351, %1354 : vector<8x256xf32>
    %1356 = vector.extract_strided_slice %800 {offsets = [0, 0], sizes = [1, 256], strides = [1, 1]} : vector<8x256xf32> to vector<1x256xf32>
    %1357 = vector.broadcast %1356 : vector<1x256xf32> to vector<8x256xf32>
    %1358 = arith.mulf %1193, %1357 : vector<8x256xf32>
    %1359 = vector.extract_strided_slice %800 {offsets = [1, 0], sizes = [1, 256], strides = [1, 1]} : vector<8x256xf32> to vector<1x256xf32>
    %1360 = vector.broadcast %1359 : vector<1x256xf32> to vector<8x256xf32>
    %1361 = arith.mulf %1194, %1360 : vector<8x256xf32>
    %1362 = arith.addf %1358, %1361 : vector<8x256xf32>
    %1363 = vector.extract_strided_slice %800 {offsets = [2, 0], sizes = [1, 256], strides = [1, 1]} : vector<8x256xf32> to vector<1x256xf32>
    %1364 = vector.broadcast %1363 : vector<1x256xf32> to vector<8x256xf32>
    %1365 = arith.mulf %1195, %1364 : vector<8x256xf32>
    %1366 = arith.addf %1362, %1365 : vector<8x256xf32>
    %1367 = vector.extract_strided_slice %800 {offsets = [3, 0], sizes = [1, 256], strides = [1, 1]} : vector<8x256xf32> to vector<1x256xf32>
    %1368 = vector.broadcast %1367 : vector<1x256xf32> to vector<8x256xf32>
    %1369 = arith.mulf %1196, %1368 : vector<8x256xf32>
    %1370 = arith.addf %1366, %1369 : vector<8x256xf32>
    %1371 = vector.extract_strided_slice %800 {offsets = [4, 0], sizes = [1, 256], strides = [1, 1]} : vector<8x256xf32> to vector<1x256xf32>
    %1372 = vector.broadcast %1371 : vector<1x256xf32> to vector<8x256xf32>
    %1373 = arith.mulf %1197, %1372 : vector<8x256xf32>
    %1374 = arith.addf %1370, %1373 : vector<8x256xf32>
    %1375 = vector.extract_strided_slice %800 {offsets = [5, 0], sizes = [1, 256], strides = [1, 1]} : vector<8x256xf32> to vector<1x256xf32>
    %1376 = vector.broadcast %1375 : vector<1x256xf32> to vector<8x256xf32>
    %1377 = arith.mulf %1198, %1376 : vector<8x256xf32>
    %1378 = arith.addf %1374, %1377 : vector<8x256xf32>
    %1379 = vector.extract_strided_slice %800 {offsets = [6, 0], sizes = [1, 256], strides = [1, 1]} : vector<8x256xf32> to vector<1x256xf32>
    %1380 = vector.broadcast %1379 : vector<1x256xf32> to vector<8x256xf32>
    %1381 = arith.mulf %1199, %1380 : vector<8x256xf32>
    %1382 = arith.addf %1378, %1381 : vector<8x256xf32>
    %1383 = vector.extract_strided_slice %800 {offsets = [7, 0], sizes = [1, 256], strides = [1, 1]} : vector<8x256xf32> to vector<1x256xf32>
    %1384 = vector.broadcast %1383 : vector<1x256xf32> to vector<8x256xf32>
    %1385 = arith.mulf %1200, %1384 : vector<8x256xf32>
    %1386 = arith.addf %1382, %1385 : vector<8x256xf32>
    %1387 = vector.extract_strided_slice %831 {offsets = [0, 0], sizes = [1, 256], strides = [1, 1]} : vector<8x256xf32> to vector<1x256xf32>
    %1388 = vector.broadcast %1387 : vector<1x256xf32> to vector<8x256xf32>
    %1389 = arith.mulf %1193, %1388 : vector<8x256xf32>
    %1390 = vector.extract_strided_slice %831 {offsets = [1, 0], sizes = [1, 256], strides = [1, 1]} : vector<8x256xf32> to vector<1x256xf32>
    %1391 = vector.broadcast %1390 : vector<1x256xf32> to vector<8x256xf32>
    %1392 = arith.mulf %1194, %1391 : vector<8x256xf32>
    %1393 = arith.addf %1389, %1392 : vector<8x256xf32>
    %1394 = vector.extract_strided_slice %831 {offsets = [2, 0], sizes = [1, 256], strides = [1, 1]} : vector<8x256xf32> to vector<1x256xf32>
    %1395 = vector.broadcast %1394 : vector<1x256xf32> to vector<8x256xf32>
    %1396 = arith.mulf %1195, %1395 : vector<8x256xf32>
    %1397 = arith.addf %1393, %1396 : vector<8x256xf32>
    %1398 = vector.extract_strided_slice %831 {offsets = [3, 0], sizes = [1, 256], strides = [1, 1]} : vector<8x256xf32> to vector<1x256xf32>
    %1399 = vector.broadcast %1398 : vector<1x256xf32> to vector<8x256xf32>
    %1400 = arith.mulf %1196, %1399 : vector<8x256xf32>
    %1401 = arith.addf %1397, %1400 : vector<8x256xf32>
    %1402 = vector.extract_strided_slice %831 {offsets = [4, 0], sizes = [1, 256], strides = [1, 1]} : vector<8x256xf32> to vector<1x256xf32>
    %1403 = vector.broadcast %1402 : vector<1x256xf32> to vector<8x256xf32>
    %1404 = arith.mulf %1197, %1403 : vector<8x256xf32>
    %1405 = arith.addf %1401, %1404 : vector<8x256xf32>
    %1406 = vector.extract_strided_slice %831 {offsets = [5, 0], sizes = [1, 256], strides = [1, 1]} : vector<8x256xf32> to vector<1x256xf32>
    %1407 = vector.broadcast %1406 : vector<1x256xf32> to vector<8x256xf32>
    %1408 = arith.mulf %1198, %1407 : vector<8x256xf32>
    %1409 = arith.addf %1405, %1408 : vector<8x256xf32>
    %1410 = vector.extract_strided_slice %831 {offsets = [6, 0], sizes = [1, 256], strides = [1, 1]} : vector<8x256xf32> to vector<1x256xf32>
    %1411 = vector.broadcast %1410 : vector<1x256xf32> to vector<8x256xf32>
    %1412 = arith.mulf %1199, %1411 : vector<8x256xf32>
    %1413 = arith.addf %1409, %1412 : vector<8x256xf32>
    %1414 = vector.extract_strided_slice %831 {offsets = [7, 0], sizes = [1, 256], strides = [1, 1]} : vector<8x256xf32> to vector<1x256xf32>
    %1415 = vector.broadcast %1414 : vector<1x256xf32> to vector<8x256xf32>
    %1416 = arith.mulf %1200, %1415 : vector<8x256xf32>
    %1417 = arith.addf %1413, %1416 : vector<8x256xf32>
    %1418 = vector.extract_strided_slice %862 {offsets = [0, 0], sizes = [1, 256], strides = [1, 1]} : vector<8x256xf32> to vector<1x256xf32>
    %1419 = vector.broadcast %1418 : vector<1x256xf32> to vector<8x256xf32>
    %1420 = arith.mulf %1193, %1419 : vector<8x256xf32>
    %1421 = vector.extract_strided_slice %862 {offsets = [1, 0], sizes = [1, 256], strides = [1, 1]} : vector<8x256xf32> to vector<1x256xf32>
    %1422 = vector.broadcast %1421 : vector<1x256xf32> to vector<8x256xf32>
    %1423 = arith.mulf %1194, %1422 : vector<8x256xf32>
    %1424 = arith.addf %1420, %1423 : vector<8x256xf32>
    %1425 = vector.extract_strided_slice %862 {offsets = [2, 0], sizes = [1, 256], strides = [1, 1]} : vector<8x256xf32> to vector<1x256xf32>
    %1426 = vector.broadcast %1425 : vector<1x256xf32> to vector<8x256xf32>
    %1427 = arith.mulf %1195, %1426 : vector<8x256xf32>
    %1428 = arith.addf %1424, %1427 : vector<8x256xf32>
    %1429 = vector.extract_strided_slice %862 {offsets = [3, 0], sizes = [1, 256], strides = [1, 1]} : vector<8x256xf32> to vector<1x256xf32>
    %1430 = vector.broadcast %1429 : vector<1x256xf32> to vector<8x256xf32>
    %1431 = arith.mulf %1196, %1430 : vector<8x256xf32>
    %1432 = arith.addf %1428, %1431 : vector<8x256xf32>
    %1433 = vector.extract_strided_slice %862 {offsets = [4, 0], sizes = [1, 256], strides = [1, 1]} : vector<8x256xf32> to vector<1x256xf32>
    %1434 = vector.broadcast %1433 : vector<1x256xf32> to vector<8x256xf32>
    %1435 = arith.mulf %1197, %1434 : vector<8x256xf32>
    %1436 = arith.addf %1432, %1435 : vector<8x256xf32>
    %1437 = vector.extract_strided_slice %862 {offsets = [5, 0], sizes = [1, 256], strides = [1, 1]} : vector<8x256xf32> to vector<1x256xf32>
    %1438 = vector.broadcast %1437 : vector<1x256xf32> to vector<8x256xf32>
    %1439 = arith.mulf %1198, %1438 : vector<8x256xf32>
    %1440 = arith.addf %1436, %1439 : vector<8x256xf32>
    %1441 = vector.extract_strided_slice %862 {offsets = [6, 0], sizes = [1, 256], strides = [1, 1]} : vector<8x256xf32> to vector<1x256xf32>
    %1442 = vector.broadcast %1441 : vector<1x256xf32> to vector<8x256xf32>
    %1443 = arith.mulf %1199, %1442 : vector<8x256xf32>
    %1444 = arith.addf %1440, %1443 : vector<8x256xf32>
    %1445 = vector.extract_strided_slice %862 {offsets = [7, 0], sizes = [1, 256], strides = [1, 1]} : vector<8x256xf32> to vector<1x256xf32>
    %1446 = vector.broadcast %1445 : vector<1x256xf32> to vector<8x256xf32>
    %1447 = arith.mulf %1200, %1446 : vector<8x256xf32>
    %1448 = arith.addf %1444, %1447 : vector<8x256xf32>
    %1449 = arith.addf %5, %1231 : vector<8x256xf32>
    %1450 = arith.addf %7, %1262 : vector<8x256xf32>
    %1451 = arith.addf %9, %1293 : vector<8x256xf32>
    %1452 = arith.addf %11, %1324 : vector<8x256xf32>
    %1453 = arith.addf %13, %1355 : vector<8x256xf32>
    %1454 = arith.addf %15, %1386 : vector<8x256xf32>
    %1455 = arith.addf %17, %1417 : vector<8x256xf32>
    %1456 = arith.addf %19, %1448 : vector<8x256xf32>
    %cst_402 = arith.constant 0.000000e+00 : f32
    %1457 = vector.broadcast %cst_402 : f32 to vector<8x256xf32>
    %1458 = arith.addf %1457, %1449 : vector<8x256xf32>
    %1459 = arith.addf %1458, %1450 : vector<8x256xf32>
    %1460 = arith.addf %1459, %1451 : vector<8x256xf32>
    %1461 = arith.addf %1460, %1452 : vector<8x256xf32>
    %1462 = arith.addf %1461, %1453 : vector<8x256xf32>
    %1463 = arith.addf %1462, %1454 : vector<8x256xf32>
    %1464 = arith.addf %1463, %1455 : vector<8x256xf32>
    %1465 = arith.addf %1464, %1456 : vector<8x256xf32>
    %cst_403 = arith.constant 1.250000e-01 : f32
    %1466 = vector.broadcast %cst_403 : f32 to vector<8x256xf32>
    %1467 = arith.mulf %1465, %1466 : vector<8x256xf32>
    %1468 = arith.subf %1449, %1467 : vector<8x256xf32>
    %1469 = arith.subf %1449, %1467 : vector<8x256xf32>
    %1470 = arith.mulf %1468, %1469 : vector<8x256xf32>
    %cst_404 = arith.constant 0.000000e+00 : f32
    %1471 = vector.broadcast %cst_404 : f32 to vector<8x256xf32>
    %1472 = arith.addf %1471, %1470 : vector<8x256xf32>
    %1473 = arith.subf %1450, %1467 : vector<8x256xf32>
    %1474 = arith.subf %1450, %1467 : vector<8x256xf32>
    %1475 = arith.mulf %1473, %1474 : vector<8x256xf32>
    %1476 = arith.addf %1472, %1475 : vector<8x256xf32>
    %1477 = arith.subf %1451, %1467 : vector<8x256xf32>
    %1478 = arith.subf %1451, %1467 : vector<8x256xf32>
    %1479 = arith.mulf %1477, %1478 : vector<8x256xf32>
    %1480 = arith.addf %1476, %1479 : vector<8x256xf32>
    %1481 = arith.subf %1452, %1467 : vector<8x256xf32>
    %1482 = arith.subf %1452, %1467 : vector<8x256xf32>
    %1483 = arith.mulf %1481, %1482 : vector<8x256xf32>
    %1484 = arith.addf %1480, %1483 : vector<8x256xf32>
    %1485 = arith.subf %1453, %1467 : vector<8x256xf32>
    %1486 = arith.subf %1453, %1467 : vector<8x256xf32>
    %1487 = arith.mulf %1485, %1486 : vector<8x256xf32>
    %1488 = arith.addf %1484, %1487 : vector<8x256xf32>
    %1489 = arith.subf %1454, %1467 : vector<8x256xf32>
    %1490 = arith.subf %1454, %1467 : vector<8x256xf32>
    %1491 = arith.mulf %1489, %1490 : vector<8x256xf32>
    %1492 = arith.addf %1488, %1491 : vector<8x256xf32>
    %1493 = arith.subf %1455, %1467 : vector<8x256xf32>
    %1494 = arith.subf %1455, %1467 : vector<8x256xf32>
    %1495 = arith.mulf %1493, %1494 : vector<8x256xf32>
    %1496 = arith.addf %1492, %1495 : vector<8x256xf32>
    %1497 = arith.subf %1456, %1467 : vector<8x256xf32>
    %1498 = arith.subf %1456, %1467 : vector<8x256xf32>
    %1499 = arith.mulf %1497, %1498 : vector<8x256xf32>
    %1500 = arith.addf %1496, %1499 : vector<8x256xf32>
    %cst_405 = arith.constant 0.142857149 : f32
    %1501 = vector.broadcast %cst_405 : f32 to vector<8x256xf32>
    %1502 = arith.mulf %1500, %1501 : vector<8x256xf32>
    %1503 = math.sqrt %1502 : vector<8x256xf32>
    %cst_406 = arith.constant 9.99999997E-7 : f32
    %1504 = vector.broadcast %cst_406 : f32 to vector<8x256xf32>
    %1505 = arith.addf %1503, %1504 : vector<8x256xf32>
    %cst_407 = arith.constant 1.000000e+00 : f32
    %1506 = vector.broadcast %cst_407 : f32 to vector<8x256xf32>
    %1507 = arith.divf %1506, %1505 : vector<8x256xf32>
    %1508 = arith.subf %1449, %1467 : vector<8x256xf32>
    %1509 = vector.broadcast %2 : f32 to vector<8x256xf32>
    %1510 = arith.mulf %1509, %1508 : vector<8x256xf32>
    %1511 = arith.mulf %1510, %1507 : vector<8x256xf32>
    %1512 = vector.broadcast %3 : f32 to vector<8x256xf32>
    %1513 = arith.addf %1511, %1512 : vector<8x256xf32>
    %1514 = arith.subf %1450, %1467 : vector<8x256xf32>
    %1515 = vector.broadcast %2 : f32 to vector<8x256xf32>
    %1516 = arith.mulf %1515, %1514 : vector<8x256xf32>
    %1517 = arith.mulf %1516, %1507 : vector<8x256xf32>
    %1518 = vector.broadcast %3 : f32 to vector<8x256xf32>
    %1519 = arith.addf %1517, %1518 : vector<8x256xf32>
    %1520 = arith.subf %1451, %1467 : vector<8x256xf32>
    %1521 = vector.broadcast %2 : f32 to vector<8x256xf32>
    %1522 = arith.mulf %1521, %1520 : vector<8x256xf32>
    %1523 = arith.mulf %1522, %1507 : vector<8x256xf32>
    %1524 = vector.broadcast %3 : f32 to vector<8x256xf32>
    %1525 = arith.addf %1523, %1524 : vector<8x256xf32>
    %1526 = arith.subf %1452, %1467 : vector<8x256xf32>
    %1527 = vector.broadcast %2 : f32 to vector<8x256xf32>
    %1528 = arith.mulf %1527, %1526 : vector<8x256xf32>
    %1529 = arith.mulf %1528, %1507 : vector<8x256xf32>
    %1530 = vector.broadcast %3 : f32 to vector<8x256xf32>
    %1531 = arith.addf %1529, %1530 : vector<8x256xf32>
    %1532 = arith.subf %1453, %1467 : vector<8x256xf32>
    %1533 = vector.broadcast %2 : f32 to vector<8x256xf32>
    %1534 = arith.mulf %1533, %1532 : vector<8x256xf32>
    %1535 = arith.mulf %1534, %1507 : vector<8x256xf32>
    %1536 = vector.broadcast %3 : f32 to vector<8x256xf32>
    %1537 = arith.addf %1535, %1536 : vector<8x256xf32>
    %1538 = arith.subf %1454, %1467 : vector<8x256xf32>
    %1539 = vector.broadcast %2 : f32 to vector<8x256xf32>
    %1540 = arith.mulf %1539, %1538 : vector<8x256xf32>
    %1541 = arith.mulf %1540, %1507 : vector<8x256xf32>
    %1542 = vector.broadcast %3 : f32 to vector<8x256xf32>
    %1543 = arith.addf %1541, %1542 : vector<8x256xf32>
    %1544 = arith.subf %1455, %1467 : vector<8x256xf32>
    %1545 = vector.broadcast %2 : f32 to vector<8x256xf32>
    %1546 = arith.mulf %1545, %1544 : vector<8x256xf32>
    %1547 = arith.mulf %1546, %1507 : vector<8x256xf32>
    %1548 = vector.broadcast %3 : f32 to vector<8x256xf32>
    %1549 = arith.addf %1547, %1548 : vector<8x256xf32>
    %1550 = arith.subf %1456, %1467 : vector<8x256xf32>
    %1551 = vector.broadcast %2 : f32 to vector<8x256xf32>
    %1552 = arith.mulf %1551, %1550 : vector<8x256xf32>
    %1553 = arith.mulf %1552, %1507 : vector<8x256xf32>
    %1554 = vector.broadcast %3 : f32 to vector<8x256xf32>
    %1555 = arith.addf %1553, %1554 : vector<8x256xf32>
    %c0_408 = arith.constant 0 : index
    %c0_409 = arith.constant 0 : index
    %1556 = memref.load %arg3[%c0_408, %c0_409] : memref<8x8xf32, #tpu.memory_space<smem>>
    %1557 = vector.broadcast %1556 : f32 to vector<8x256xf32>
    %1558 = arith.mulf %1513, %1557 : vector<8x256xf32>
    %c1_410 = arith.constant 1 : index
    %c0_411 = arith.constant 0 : index
    %1559 = memref.load %arg3[%c1_410, %c0_411] : memref<8x8xf32, #tpu.memory_space<smem>>
    %1560 = vector.broadcast %1559 : f32 to vector<8x256xf32>
    %1561 = arith.mulf %1519, %1560 : vector<8x256xf32>
    %1562 = arith.addf %1558, %1561 : vector<8x256xf32>
    %c2_412 = arith.constant 2 : index
    %c0_413 = arith.constant 0 : index
    %1563 = memref.load %arg3[%c2_412, %c0_413] : memref<8x8xf32, #tpu.memory_space<smem>>
    %1564 = vector.broadcast %1563 : f32 to vector<8x256xf32>
    %1565 = arith.mulf %1525, %1564 : vector<8x256xf32>
    %1566 = arith.addf %1562, %1565 : vector<8x256xf32>
    %c3_414 = arith.constant 3 : index
    %c0_415 = arith.constant 0 : index
    %1567 = memref.load %arg3[%c3_414, %c0_415] : memref<8x8xf32, #tpu.memory_space<smem>>
    %1568 = vector.broadcast %1567 : f32 to vector<8x256xf32>
    %1569 = arith.mulf %1531, %1568 : vector<8x256xf32>
    %1570 = arith.addf %1566, %1569 : vector<8x256xf32>
    %c4_416 = arith.constant 4 : index
    %c0_417 = arith.constant 0 : index
    %1571 = memref.load %arg3[%c4_416, %c0_417] : memref<8x8xf32, #tpu.memory_space<smem>>
    %1572 = vector.broadcast %1571 : f32 to vector<8x256xf32>
    %1573 = arith.mulf %1537, %1572 : vector<8x256xf32>
    %1574 = arith.addf %1570, %1573 : vector<8x256xf32>
    %c5_418 = arith.constant 5 : index
    %c0_419 = arith.constant 0 : index
    %1575 = memref.load %arg3[%c5_418, %c0_419] : memref<8x8xf32, #tpu.memory_space<smem>>
    %1576 = vector.broadcast %1575 : f32 to vector<8x256xf32>
    %1577 = arith.mulf %1543, %1576 : vector<8x256xf32>
    %1578 = arith.addf %1574, %1577 : vector<8x256xf32>
    %c6_420 = arith.constant 6 : index
    %c0_421 = arith.constant 0 : index
    %1579 = memref.load %arg3[%c6_420, %c0_421] : memref<8x8xf32, #tpu.memory_space<smem>>
    %1580 = vector.broadcast %1579 : f32 to vector<8x256xf32>
    %1581 = arith.mulf %1549, %1580 : vector<8x256xf32>
    %1582 = arith.addf %1578, %1581 : vector<8x256xf32>
    %c7_422 = arith.constant 7 : index
    %c0_423 = arith.constant 0 : index
    %1583 = memref.load %arg3[%c7_422, %c0_423] : memref<8x8xf32, #tpu.memory_space<smem>>
    %1584 = vector.broadcast %1583 : f32 to vector<8x256xf32>
    %1585 = arith.mulf %1555, %1584 : vector<8x256xf32>
    %1586 = arith.addf %1582, %1585 : vector<8x256xf32>
    %c0_424 = arith.constant 0 : index
    %1587 = memref.load %arg4[%c0_424] : memref<8xf32, #tpu.memory_space<smem>>
    %1588 = vector.broadcast %1587 : f32 to vector<8x256xf32>
    %1589 = arith.addf %1586, %1588 : vector<8x256xf32>
    %c0_425 = arith.constant 0 : index
    %c1_426 = arith.constant 1 : index
    %1590 = memref.load %arg3[%c0_425, %c1_426] : memref<8x8xf32, #tpu.memory_space<smem>>
    %1591 = vector.broadcast %1590 : f32 to vector<8x256xf32>
    %1592 = arith.mulf %1513, %1591 : vector<8x256xf32>
    %c1_427 = arith.constant 1 : index
    %c1_428 = arith.constant 1 : index
    %1593 = memref.load %arg3[%c1_427, %c1_428] : memref<8x8xf32, #tpu.memory_space<smem>>
    %1594 = vector.broadcast %1593 : f32 to vector<8x256xf32>
    %1595 = arith.mulf %1519, %1594 : vector<8x256xf32>
    %1596 = arith.addf %1592, %1595 : vector<8x256xf32>
    %c2_429 = arith.constant 2 : index
    %c1_430 = arith.constant 1 : index
    %1597 = memref.load %arg3[%c2_429, %c1_430] : memref<8x8xf32, #tpu.memory_space<smem>>
    %1598 = vector.broadcast %1597 : f32 to vector<8x256xf32>
    %1599 = arith.mulf %1525, %1598 : vector<8x256xf32>
    %1600 = arith.addf %1596, %1599 : vector<8x256xf32>
    %c3_431 = arith.constant 3 : index
    %c1_432 = arith.constant 1 : index
    %1601 = memref.load %arg3[%c3_431, %c1_432] : memref<8x8xf32, #tpu.memory_space<smem>>
    %1602 = vector.broadcast %1601 : f32 to vector<8x256xf32>
    %1603 = arith.mulf %1531, %1602 : vector<8x256xf32>
    %1604 = arith.addf %1600, %1603 : vector<8x256xf32>
    %c4_433 = arith.constant 4 : index
    %c1_434 = arith.constant 1 : index
    %1605 = memref.load %arg3[%c4_433, %c1_434] : memref<8x8xf32, #tpu.memory_space<smem>>
    %1606 = vector.broadcast %1605 : f32 to vector<8x256xf32>
    %1607 = arith.mulf %1537, %1606 : vector<8x256xf32>
    %1608 = arith.addf %1604, %1607 : vector<8x256xf32>
    %c5_435 = arith.constant 5 : index
    %c1_436 = arith.constant 1 : index
    %1609 = memref.load %arg3[%c5_435, %c1_436] : memref<8x8xf32, #tpu.memory_space<smem>>
    %1610 = vector.broadcast %1609 : f32 to vector<8x256xf32>
    %1611 = arith.mulf %1543, %1610 : vector<8x256xf32>
    %1612 = arith.addf %1608, %1611 : vector<8x256xf32>
    %c6_437 = arith.constant 6 : index
    %c1_438 = arith.constant 1 : index
    %1613 = memref.load %arg3[%c6_437, %c1_438] : memref<8x8xf32, #tpu.memory_space<smem>>
    %1614 = vector.broadcast %1613 : f32 to vector<8x256xf32>
    %1615 = arith.mulf %1549, %1614 : vector<8x256xf32>
    %1616 = arith.addf %1612, %1615 : vector<8x256xf32>
    %c7_439 = arith.constant 7 : index
    %c1_440 = arith.constant 1 : index
    %1617 = memref.load %arg3[%c7_439, %c1_440] : memref<8x8xf32, #tpu.memory_space<smem>>
    %1618 = vector.broadcast %1617 : f32 to vector<8x256xf32>
    %1619 = arith.mulf %1555, %1618 : vector<8x256xf32>
    %1620 = arith.addf %1616, %1619 : vector<8x256xf32>
    %c1_441 = arith.constant 1 : index
    %1621 = memref.load %arg4[%c1_441] : memref<8xf32, #tpu.memory_space<smem>>
    %1622 = vector.broadcast %1621 : f32 to vector<8x256xf32>
    %1623 = arith.addf %1620, %1622 : vector<8x256xf32>
    %c0_442 = arith.constant 0 : index
    %c2_443 = arith.constant 2 : index
    %1624 = memref.load %arg3[%c0_442, %c2_443] : memref<8x8xf32, #tpu.memory_space<smem>>
    %1625 = vector.broadcast %1624 : f32 to vector<8x256xf32>
    %1626 = arith.mulf %1513, %1625 : vector<8x256xf32>
    %c1_444 = arith.constant 1 : index
    %c2_445 = arith.constant 2 : index
    %1627 = memref.load %arg3[%c1_444, %c2_445] : memref<8x8xf32, #tpu.memory_space<smem>>
    %1628 = vector.broadcast %1627 : f32 to vector<8x256xf32>
    %1629 = arith.mulf %1519, %1628 : vector<8x256xf32>
    %1630 = arith.addf %1626, %1629 : vector<8x256xf32>
    %c2_446 = arith.constant 2 : index
    %c2_447 = arith.constant 2 : index
    %1631 = memref.load %arg3[%c2_446, %c2_447] : memref<8x8xf32, #tpu.memory_space<smem>>
    %1632 = vector.broadcast %1631 : f32 to vector<8x256xf32>
    %1633 = arith.mulf %1525, %1632 : vector<8x256xf32>
    %1634 = arith.addf %1630, %1633 : vector<8x256xf32>
    %c3_448 = arith.constant 3 : index
    %c2_449 = arith.constant 2 : index
    %1635 = memref.load %arg3[%c3_448, %c2_449] : memref<8x8xf32, #tpu.memory_space<smem>>
    %1636 = vector.broadcast %1635 : f32 to vector<8x256xf32>
    %1637 = arith.mulf %1531, %1636 : vector<8x256xf32>
    %1638 = arith.addf %1634, %1637 : vector<8x256xf32>
    %c4_450 = arith.constant 4 : index
    %c2_451 = arith.constant 2 : index
    %1639 = memref.load %arg3[%c4_450, %c2_451] : memref<8x8xf32, #tpu.memory_space<smem>>
    %1640 = vector.broadcast %1639 : f32 to vector<8x256xf32>
    %1641 = arith.mulf %1537, %1640 : vector<8x256xf32>
    %1642 = arith.addf %1638, %1641 : vector<8x256xf32>
    %c5_452 = arith.constant 5 : index
    %c2_453 = arith.constant 2 : index
    %1643 = memref.load %arg3[%c5_452, %c2_453] : memref<8x8xf32, #tpu.memory_space<smem>>
    %1644 = vector.broadcast %1643 : f32 to vector<8x256xf32>
    %1645 = arith.mulf %1543, %1644 : vector<8x256xf32>
    %1646 = arith.addf %1642, %1645 : vector<8x256xf32>
    %c6_454 = arith.constant 6 : index
    %c2_455 = arith.constant 2 : index
    %1647 = memref.load %arg3[%c6_454, %c2_455] : memref<8x8xf32, #tpu.memory_space<smem>>
    %1648 = vector.broadcast %1647 : f32 to vector<8x256xf32>
    %1649 = arith.mulf %1549, %1648 : vector<8x256xf32>
    %1650 = arith.addf %1646, %1649 : vector<8x256xf32>
    %c7_456 = arith.constant 7 : index
    %c2_457 = arith.constant 2 : index
    %1651 = memref.load %arg3[%c7_456, %c2_457] : memref<8x8xf32, #tpu.memory_space<smem>>
    %1652 = vector.broadcast %1651 : f32 to vector<8x256xf32>
    %1653 = arith.mulf %1555, %1652 : vector<8x256xf32>
    %1654 = arith.addf %1650, %1653 : vector<8x256xf32>
    %c2_458 = arith.constant 2 : index
    %1655 = memref.load %arg4[%c2_458] : memref<8xf32, #tpu.memory_space<smem>>
    %1656 = vector.broadcast %1655 : f32 to vector<8x256xf32>
    %1657 = arith.addf %1654, %1656 : vector<8x256xf32>
    %c0_459 = arith.constant 0 : index
    %c3_460 = arith.constant 3 : index
    %1658 = memref.load %arg3[%c0_459, %c3_460] : memref<8x8xf32, #tpu.memory_space<smem>>
    %1659 = vector.broadcast %1658 : f32 to vector<8x256xf32>
    %1660 = arith.mulf %1513, %1659 : vector<8x256xf32>
    %c1_461 = arith.constant 1 : index
    %c3_462 = arith.constant 3 : index
    %1661 = memref.load %arg3[%c1_461, %c3_462] : memref<8x8xf32, #tpu.memory_space<smem>>
    %1662 = vector.broadcast %1661 : f32 to vector<8x256xf32>
    %1663 = arith.mulf %1519, %1662 : vector<8x256xf32>
    %1664 = arith.addf %1660, %1663 : vector<8x256xf32>
    %c2_463 = arith.constant 2 : index
    %c3_464 = arith.constant 3 : index
    %1665 = memref.load %arg3[%c2_463, %c3_464] : memref<8x8xf32, #tpu.memory_space<smem>>
    %1666 = vector.broadcast %1665 : f32 to vector<8x256xf32>
    %1667 = arith.mulf %1525, %1666 : vector<8x256xf32>
    %1668 = arith.addf %1664, %1667 : vector<8x256xf32>
    %c3_465 = arith.constant 3 : index
    %c3_466 = arith.constant 3 : index
    %1669 = memref.load %arg3[%c3_465, %c3_466] : memref<8x8xf32, #tpu.memory_space<smem>>
    %1670 = vector.broadcast %1669 : f32 to vector<8x256xf32>
    %1671 = arith.mulf %1531, %1670 : vector<8x256xf32>
    %1672 = arith.addf %1668, %1671 : vector<8x256xf32>
    %c4_467 = arith.constant 4 : index
    %c3_468 = arith.constant 3 : index
    %1673 = memref.load %arg3[%c4_467, %c3_468] : memref<8x8xf32, #tpu.memory_space<smem>>
    %1674 = vector.broadcast %1673 : f32 to vector<8x256xf32>
    %1675 = arith.mulf %1537, %1674 : vector<8x256xf32>
    %1676 = arith.addf %1672, %1675 : vector<8x256xf32>
    %c5_469 = arith.constant 5 : index
    %c3_470 = arith.constant 3 : index
    %1677 = memref.load %arg3[%c5_469, %c3_470] : memref<8x8xf32, #tpu.memory_space<smem>>
    %1678 = vector.broadcast %1677 : f32 to vector<8x256xf32>
    %1679 = arith.mulf %1543, %1678 : vector<8x256xf32>
    %1680 = arith.addf %1676, %1679 : vector<8x256xf32>
    %c6_471 = arith.constant 6 : index
    %c3_472 = arith.constant 3 : index
    %1681 = memref.load %arg3[%c6_471, %c3_472] : memref<8x8xf32, #tpu.memory_space<smem>>
    %1682 = vector.broadcast %1681 : f32 to vector<8x256xf32>
    %1683 = arith.mulf %1549, %1682 : vector<8x256xf32>
    %1684 = arith.addf %1680, %1683 : vector<8x256xf32>
    %c7_473 = arith.constant 7 : index
    %c3_474 = arith.constant 3 : index
    %1685 = memref.load %arg3[%c7_473, %c3_474] : memref<8x8xf32, #tpu.memory_space<smem>>
    %1686 = vector.broadcast %1685 : f32 to vector<8x256xf32>
    %1687 = arith.mulf %1555, %1686 : vector<8x256xf32>
    %1688 = arith.addf %1684, %1687 : vector<8x256xf32>
    %c3_475 = arith.constant 3 : index
    %1689 = memref.load %arg4[%c3_475] : memref<8xf32, #tpu.memory_space<smem>>
    %1690 = vector.broadcast %1689 : f32 to vector<8x256xf32>
    %1691 = arith.addf %1688, %1690 : vector<8x256xf32>
    %c0_476 = arith.constant 0 : index
    %c4_477 = arith.constant 4 : index
    %1692 = memref.load %arg3[%c0_476, %c4_477] : memref<8x8xf32, #tpu.memory_space<smem>>
    %1693 = vector.broadcast %1692 : f32 to vector<8x256xf32>
    %1694 = arith.mulf %1513, %1693 : vector<8x256xf32>
    %c1_478 = arith.constant 1 : index
    %c4_479 = arith.constant 4 : index
    %1695 = memref.load %arg3[%c1_478, %c4_479] : memref<8x8xf32, #tpu.memory_space<smem>>
    %1696 = vector.broadcast %1695 : f32 to vector<8x256xf32>
    %1697 = arith.mulf %1519, %1696 : vector<8x256xf32>
    %1698 = arith.addf %1694, %1697 : vector<8x256xf32>
    %c2_480 = arith.constant 2 : index
    %c4_481 = arith.constant 4 : index
    %1699 = memref.load %arg3[%c2_480, %c4_481] : memref<8x8xf32, #tpu.memory_space<smem>>
    %1700 = vector.broadcast %1699 : f32 to vector<8x256xf32>
    %1701 = arith.mulf %1525, %1700 : vector<8x256xf32>
    %1702 = arith.addf %1698, %1701 : vector<8x256xf32>
    %c3_482 = arith.constant 3 : index
    %c4_483 = arith.constant 4 : index
    %1703 = memref.load %arg3[%c3_482, %c4_483] : memref<8x8xf32, #tpu.memory_space<smem>>
    %1704 = vector.broadcast %1703 : f32 to vector<8x256xf32>
    %1705 = arith.mulf %1531, %1704 : vector<8x256xf32>
    %1706 = arith.addf %1702, %1705 : vector<8x256xf32>
    %c4_484 = arith.constant 4 : index
    %c4_485 = arith.constant 4 : index
    %1707 = memref.load %arg3[%c4_484, %c4_485] : memref<8x8xf32, #tpu.memory_space<smem>>
    %1708 = vector.broadcast %1707 : f32 to vector<8x256xf32>
    %1709 = arith.mulf %1537, %1708 : vector<8x256xf32>
    %1710 = arith.addf %1706, %1709 : vector<8x256xf32>
    %c5_486 = arith.constant 5 : index
    %c4_487 = arith.constant 4 : index
    %1711 = memref.load %arg3[%c5_486, %c4_487] : memref<8x8xf32, #tpu.memory_space<smem>>
    %1712 = vector.broadcast %1711 : f32 to vector<8x256xf32>
    %1713 = arith.mulf %1543, %1712 : vector<8x256xf32>
    %1714 = arith.addf %1710, %1713 : vector<8x256xf32>
    %c6_488 = arith.constant 6 : index
    %c4_489 = arith.constant 4 : index
    %1715 = memref.load %arg3[%c6_488, %c4_489] : memref<8x8xf32, #tpu.memory_space<smem>>
    %1716 = vector.broadcast %1715 : f32 to vector<8x256xf32>
    %1717 = arith.mulf %1549, %1716 : vector<8x256xf32>
    %1718 = arith.addf %1714, %1717 : vector<8x256xf32>
    %c7_490 = arith.constant 7 : index
    %c4_491 = arith.constant 4 : index
    %1719 = memref.load %arg3[%c7_490, %c4_491] : memref<8x8xf32, #tpu.memory_space<smem>>
    %1720 = vector.broadcast %1719 : f32 to vector<8x256xf32>
    %1721 = arith.mulf %1555, %1720 : vector<8x256xf32>
    %1722 = arith.addf %1718, %1721 : vector<8x256xf32>
    %c4_492 = arith.constant 4 : index
    %1723 = memref.load %arg4[%c4_492] : memref<8xf32, #tpu.memory_space<smem>>
    %1724 = vector.broadcast %1723 : f32 to vector<8x256xf32>
    %1725 = arith.addf %1722, %1724 : vector<8x256xf32>
    %c0_493 = arith.constant 0 : index
    %c5_494 = arith.constant 5 : index
    %1726 = memref.load %arg3[%c0_493, %c5_494] : memref<8x8xf32, #tpu.memory_space<smem>>
    %1727 = vector.broadcast %1726 : f32 to vector<8x256xf32>
    %1728 = arith.mulf %1513, %1727 : vector<8x256xf32>
    %c1_495 = arith.constant 1 : index
    %c5_496 = arith.constant 5 : index
    %1729 = memref.load %arg3[%c1_495, %c5_496] : memref<8x8xf32, #tpu.memory_space<smem>>
    %1730 = vector.broadcast %1729 : f32 to vector<8x256xf32>
    %1731 = arith.mulf %1519, %1730 : vector<8x256xf32>
    %1732 = arith.addf %1728, %1731 : vector<8x256xf32>
    %c2_497 = arith.constant 2 : index
    %c5_498 = arith.constant 5 : index
    %1733 = memref.load %arg3[%c2_497, %c5_498] : memref<8x8xf32, #tpu.memory_space<smem>>
    %1734 = vector.broadcast %1733 : f32 to vector<8x256xf32>
    %1735 = arith.mulf %1525, %1734 : vector<8x256xf32>
    %1736 = arith.addf %1732, %1735 : vector<8x256xf32>
    %c3_499 = arith.constant 3 : index
    %c5_500 = arith.constant 5 : index
    %1737 = memref.load %arg3[%c3_499, %c5_500] : memref<8x8xf32, #tpu.memory_space<smem>>
    %1738 = vector.broadcast %1737 : f32 to vector<8x256xf32>
    %1739 = arith.mulf %1531, %1738 : vector<8x256xf32>
    %1740 = arith.addf %1736, %1739 : vector<8x256xf32>
    %c4_501 = arith.constant 4 : index
    %c5_502 = arith.constant 5 : index
    %1741 = memref.load %arg3[%c4_501, %c5_502] : memref<8x8xf32, #tpu.memory_space<smem>>
    %1742 = vector.broadcast %1741 : f32 to vector<8x256xf32>
    %1743 = arith.mulf %1537, %1742 : vector<8x256xf32>
    %1744 = arith.addf %1740, %1743 : vector<8x256xf32>
    %c5_503 = arith.constant 5 : index
    %c5_504 = arith.constant 5 : index
    %1745 = memref.load %arg3[%c5_503, %c5_504] : memref<8x8xf32, #tpu.memory_space<smem>>
    %1746 = vector.broadcast %1745 : f32 to vector<8x256xf32>
    %1747 = arith.mulf %1543, %1746 : vector<8x256xf32>
    %1748 = arith.addf %1744, %1747 : vector<8x256xf32>
    %c6_505 = arith.constant 6 : index
    %c5_506 = arith.constant 5 : index
    %1749 = memref.load %arg3[%c6_505, %c5_506] : memref<8x8xf32, #tpu.memory_space<smem>>
    %1750 = vector.broadcast %1749 : f32 to vector<8x256xf32>
    %1751 = arith.mulf %1549, %1750 : vector<8x256xf32>
    %1752 = arith.addf %1748, %1751 : vector<8x256xf32>
    %c7_507 = arith.constant 7 : index
    %c5_508 = arith.constant 5 : index
    %1753 = memref.load %arg3[%c7_507, %c5_508] : memref<8x8xf32, #tpu.memory_space<smem>>
    %1754 = vector.broadcast %1753 : f32 to vector<8x256xf32>
    %1755 = arith.mulf %1555, %1754 : vector<8x256xf32>
    %1756 = arith.addf %1752, %1755 : vector<8x256xf32>
    %c5_509 = arith.constant 5 : index
    %1757 = memref.load %arg4[%c5_509] : memref<8xf32, #tpu.memory_space<smem>>
    %1758 = vector.broadcast %1757 : f32 to vector<8x256xf32>
    %1759 = arith.addf %1756, %1758 : vector<8x256xf32>
    %c0_510 = arith.constant 0 : index
    %c6_511 = arith.constant 6 : index
    %1760 = memref.load %arg3[%c0_510, %c6_511] : memref<8x8xf32, #tpu.memory_space<smem>>
    %1761 = vector.broadcast %1760 : f32 to vector<8x256xf32>
    %1762 = arith.mulf %1513, %1761 : vector<8x256xf32>
    %c1_512 = arith.constant 1 : index
    %c6_513 = arith.constant 6 : index
    %1763 = memref.load %arg3[%c1_512, %c6_513] : memref<8x8xf32, #tpu.memory_space<smem>>
    %1764 = vector.broadcast %1763 : f32 to vector<8x256xf32>
    %1765 = arith.mulf %1519, %1764 : vector<8x256xf32>
    %1766 = arith.addf %1762, %1765 : vector<8x256xf32>
    %c2_514 = arith.constant 2 : index
    %c6_515 = arith.constant 6 : index
    %1767 = memref.load %arg3[%c2_514, %c6_515] : memref<8x8xf32, #tpu.memory_space<smem>>
    %1768 = vector.broadcast %1767 : f32 to vector<8x256xf32>
    %1769 = arith.mulf %1525, %1768 : vector<8x256xf32>
    %1770 = arith.addf %1766, %1769 : vector<8x256xf32>
    %c3_516 = arith.constant 3 : index
    %c6_517 = arith.constant 6 : index
    %1771 = memref.load %arg3[%c3_516, %c6_517] : memref<8x8xf32, #tpu.memory_space<smem>>
    %1772 = vector.broadcast %1771 : f32 to vector<8x256xf32>
    %1773 = arith.mulf %1531, %1772 : vector<8x256xf32>
    %1774 = arith.addf %1770, %1773 : vector<8x256xf32>
    %c4_518 = arith.constant 4 : index
    %c6_519 = arith.constant 6 : index
    %1775 = memref.load %arg3[%c4_518, %c6_519] : memref<8x8xf32, #tpu.memory_space<smem>>
    %1776 = vector.broadcast %1775 : f32 to vector<8x256xf32>
    %1777 = arith.mulf %1537, %1776 : vector<8x256xf32>
    %1778 = arith.addf %1774, %1777 : vector<8x256xf32>
    %c5_520 = arith.constant 5 : index
    %c6_521 = arith.constant 6 : index
    %1779 = memref.load %arg3[%c5_520, %c6_521] : memref<8x8xf32, #tpu.memory_space<smem>>
    %1780 = vector.broadcast %1779 : f32 to vector<8x256xf32>
    %1781 = arith.mulf %1543, %1780 : vector<8x256xf32>
    %1782 = arith.addf %1778, %1781 : vector<8x256xf32>
    %c6_522 = arith.constant 6 : index
    %c6_523 = arith.constant 6 : index
    %1783 = memref.load %arg3[%c6_522, %c6_523] : memref<8x8xf32, #tpu.memory_space<smem>>
    %1784 = vector.broadcast %1783 : f32 to vector<8x256xf32>
    %1785 = arith.mulf %1549, %1784 : vector<8x256xf32>
    %1786 = arith.addf %1782, %1785 : vector<8x256xf32>
    %c7_524 = arith.constant 7 : index
    %c6_525 = arith.constant 6 : index
    %1787 = memref.load %arg3[%c7_524, %c6_525] : memref<8x8xf32, #tpu.memory_space<smem>>
    %1788 = vector.broadcast %1787 : f32 to vector<8x256xf32>
    %1789 = arith.mulf %1555, %1788 : vector<8x256xf32>
    %1790 = arith.addf %1786, %1789 : vector<8x256xf32>
    %c6_526 = arith.constant 6 : index
    %1791 = memref.load %arg4[%c6_526] : memref<8xf32, #tpu.memory_space<smem>>
    %1792 = vector.broadcast %1791 : f32 to vector<8x256xf32>
    %1793 = arith.addf %1790, %1792 : vector<8x256xf32>
    %c0_527 = arith.constant 0 : index
    %c7_528 = arith.constant 7 : index
    %1794 = memref.load %arg3[%c0_527, %c7_528] : memref<8x8xf32, #tpu.memory_space<smem>>
    %1795 = vector.broadcast %1794 : f32 to vector<8x256xf32>
    %1796 = arith.mulf %1513, %1795 : vector<8x256xf32>
    %c1_529 = arith.constant 1 : index
    %c7_530 = arith.constant 7 : index
    %1797 = memref.load %arg3[%c1_529, %c7_530] : memref<8x8xf32, #tpu.memory_space<smem>>
    %1798 = vector.broadcast %1797 : f32 to vector<8x256xf32>
    %1799 = arith.mulf %1519, %1798 : vector<8x256xf32>
    %1800 = arith.addf %1796, %1799 : vector<8x256xf32>
    %c2_531 = arith.constant 2 : index
    %c7_532 = arith.constant 7 : index
    %1801 = memref.load %arg3[%c2_531, %c7_532] : memref<8x8xf32, #tpu.memory_space<smem>>
    %1802 = vector.broadcast %1801 : f32 to vector<8x256xf32>
    %1803 = arith.mulf %1525, %1802 : vector<8x256xf32>
    %1804 = arith.addf %1800, %1803 : vector<8x256xf32>
    %c3_533 = arith.constant 3 : index
    %c7_534 = arith.constant 7 : index
    %1805 = memref.load %arg3[%c3_533, %c7_534] : memref<8x8xf32, #tpu.memory_space<smem>>
    %1806 = vector.broadcast %1805 : f32 to vector<8x256xf32>
    %1807 = arith.mulf %1531, %1806 : vector<8x256xf32>
    %1808 = arith.addf %1804, %1807 : vector<8x256xf32>
    %c4_535 = arith.constant 4 : index
    %c7_536 = arith.constant 7 : index
    %1809 = memref.load %arg3[%c4_535, %c7_536] : memref<8x8xf32, #tpu.memory_space<smem>>
    %1810 = vector.broadcast %1809 : f32 to vector<8x256xf32>
    %1811 = arith.mulf %1537, %1810 : vector<8x256xf32>
    %1812 = arith.addf %1808, %1811 : vector<8x256xf32>
    %c5_537 = arith.constant 5 : index
    %c7_538 = arith.constant 7 : index
    %1813 = memref.load %arg3[%c5_537, %c7_538] : memref<8x8xf32, #tpu.memory_space<smem>>
    %1814 = vector.broadcast %1813 : f32 to vector<8x256xf32>
    %1815 = arith.mulf %1543, %1814 : vector<8x256xf32>
    %1816 = arith.addf %1812, %1815 : vector<8x256xf32>
    %c6_539 = arith.constant 6 : index
    %c7_540 = arith.constant 7 : index
    %1817 = memref.load %arg3[%c6_539, %c7_540] : memref<8x8xf32, #tpu.memory_space<smem>>
    %1818 = vector.broadcast %1817 : f32 to vector<8x256xf32>
    %1819 = arith.mulf %1549, %1818 : vector<8x256xf32>
    %1820 = arith.addf %1816, %1819 : vector<8x256xf32>
    %c7_541 = arith.constant 7 : index
    %c7_542 = arith.constant 7 : index
    %1821 = memref.load %arg3[%c7_541, %c7_542] : memref<8x8xf32, #tpu.memory_space<smem>>
    %1822 = vector.broadcast %1821 : f32 to vector<8x256xf32>
    %1823 = arith.mulf %1555, %1822 : vector<8x256xf32>
    %1824 = arith.addf %1820, %1823 : vector<8x256xf32>
    %c7_543 = arith.constant 7 : index
    %1825 = memref.load %arg4[%c7_543] : memref<8xf32, #tpu.memory_space<smem>>
    %1826 = vector.broadcast %1825 : f32 to vector<8x256xf32>
    %1827 = arith.addf %1824, %1826 : vector<8x256xf32>
    %c0_544 = arith.constant 0 : index
    %c0_545 = arith.constant 0 : index
    %1828 = memref.load %arg5[%c0_544, %c0_545] : memref<8x8xf32, #tpu.memory_space<smem>>
    %1829 = vector.broadcast %1828 : f32 to vector<8x256xf32>
    %1830 = arith.mulf %1589, %1829 : vector<8x256xf32>
    %c1_546 = arith.constant 1 : index
    %c0_547 = arith.constant 0 : index
    %1831 = memref.load %arg5[%c1_546, %c0_547] : memref<8x8xf32, #tpu.memory_space<smem>>
    %1832 = vector.broadcast %1831 : f32 to vector<8x256xf32>
    %1833 = arith.mulf %1623, %1832 : vector<8x256xf32>
    %1834 = arith.addf %1830, %1833 : vector<8x256xf32>
    %c2_548 = arith.constant 2 : index
    %c0_549 = arith.constant 0 : index
    %1835 = memref.load %arg5[%c2_548, %c0_549] : memref<8x8xf32, #tpu.memory_space<smem>>
    %1836 = vector.broadcast %1835 : f32 to vector<8x256xf32>
    %1837 = arith.mulf %1657, %1836 : vector<8x256xf32>
    %1838 = arith.addf %1834, %1837 : vector<8x256xf32>
    %c3_550 = arith.constant 3 : index
    %c0_551 = arith.constant 0 : index
    %1839 = memref.load %arg5[%c3_550, %c0_551] : memref<8x8xf32, #tpu.memory_space<smem>>
    %1840 = vector.broadcast %1839 : f32 to vector<8x256xf32>
    %1841 = arith.mulf %1691, %1840 : vector<8x256xf32>
    %1842 = arith.addf %1838, %1841 : vector<8x256xf32>
    %c4_552 = arith.constant 4 : index
    %c0_553 = arith.constant 0 : index
    %1843 = memref.load %arg5[%c4_552, %c0_553] : memref<8x8xf32, #tpu.memory_space<smem>>
    %1844 = vector.broadcast %1843 : f32 to vector<8x256xf32>
    %1845 = arith.mulf %1725, %1844 : vector<8x256xf32>
    %1846 = arith.addf %1842, %1845 : vector<8x256xf32>
    %c5_554 = arith.constant 5 : index
    %c0_555 = arith.constant 0 : index
    %1847 = memref.load %arg5[%c5_554, %c0_555] : memref<8x8xf32, #tpu.memory_space<smem>>
    %1848 = vector.broadcast %1847 : f32 to vector<8x256xf32>
    %1849 = arith.mulf %1759, %1848 : vector<8x256xf32>
    %1850 = arith.addf %1846, %1849 : vector<8x256xf32>
    %c6_556 = arith.constant 6 : index
    %c0_557 = arith.constant 0 : index
    %1851 = memref.load %arg5[%c6_556, %c0_557] : memref<8x8xf32, #tpu.memory_space<smem>>
    %1852 = vector.broadcast %1851 : f32 to vector<8x256xf32>
    %1853 = arith.mulf %1793, %1852 : vector<8x256xf32>
    %1854 = arith.addf %1850, %1853 : vector<8x256xf32>
    %c7_558 = arith.constant 7 : index
    %c0_559 = arith.constant 0 : index
    %1855 = memref.load %arg5[%c7_558, %c0_559] : memref<8x8xf32, #tpu.memory_space<smem>>
    %1856 = vector.broadcast %1855 : f32 to vector<8x256xf32>
    %1857 = arith.mulf %1827, %1856 : vector<8x256xf32>
    %1858 = arith.addf %1854, %1857 : vector<8x256xf32>
    %c0_560 = arith.constant 0 : index
    %1859 = memref.load %arg6[%c0_560] : memref<8xf32, #tpu.memory_space<smem>>
    %1860 = vector.broadcast %1859 : f32 to vector<8x256xf32>
    %1861 = arith.addf %1858, %1860 : vector<8x256xf32>
    %c0_561 = arith.constant 0 : index
    %c1_562 = arith.constant 1 : index
    %1862 = memref.load %arg5[%c0_561, %c1_562] : memref<8x8xf32, #tpu.memory_space<smem>>
    %1863 = vector.broadcast %1862 : f32 to vector<8x256xf32>
    %1864 = arith.mulf %1589, %1863 : vector<8x256xf32>
    %c1_563 = arith.constant 1 : index
    %c1_564 = arith.constant 1 : index
    %1865 = memref.load %arg5[%c1_563, %c1_564] : memref<8x8xf32, #tpu.memory_space<smem>>
    %1866 = vector.broadcast %1865 : f32 to vector<8x256xf32>
    %1867 = arith.mulf %1623, %1866 : vector<8x256xf32>
    %1868 = arith.addf %1864, %1867 : vector<8x256xf32>
    %c2_565 = arith.constant 2 : index
    %c1_566 = arith.constant 1 : index
    %1869 = memref.load %arg5[%c2_565, %c1_566] : memref<8x8xf32, #tpu.memory_space<smem>>
    %1870 = vector.broadcast %1869 : f32 to vector<8x256xf32>
    %1871 = arith.mulf %1657, %1870 : vector<8x256xf32>
    %1872 = arith.addf %1868, %1871 : vector<8x256xf32>
    %c3_567 = arith.constant 3 : index
    %c1_568 = arith.constant 1 : index
    %1873 = memref.load %arg5[%c3_567, %c1_568] : memref<8x8xf32, #tpu.memory_space<smem>>
    %1874 = vector.broadcast %1873 : f32 to vector<8x256xf32>
    %1875 = arith.mulf %1691, %1874 : vector<8x256xf32>
    %1876 = arith.addf %1872, %1875 : vector<8x256xf32>
    %c4_569 = arith.constant 4 : index
    %c1_570 = arith.constant 1 : index
    %1877 = memref.load %arg5[%c4_569, %c1_570] : memref<8x8xf32, #tpu.memory_space<smem>>
    %1878 = vector.broadcast %1877 : f32 to vector<8x256xf32>
    %1879 = arith.mulf %1725, %1878 : vector<8x256xf32>
    %1880 = arith.addf %1876, %1879 : vector<8x256xf32>
    %c5_571 = arith.constant 5 : index
    %c1_572 = arith.constant 1 : index
    %1881 = memref.load %arg5[%c5_571, %c1_572] : memref<8x8xf32, #tpu.memory_space<smem>>
    %1882 = vector.broadcast %1881 : f32 to vector<8x256xf32>
    %1883 = arith.mulf %1759, %1882 : vector<8x256xf32>
    %1884 = arith.addf %1880, %1883 : vector<8x256xf32>
    %c6_573 = arith.constant 6 : index
    %c1_574 = arith.constant 1 : index
    %1885 = memref.load %arg5[%c6_573, %c1_574] : memref<8x8xf32, #tpu.memory_space<smem>>
    %1886 = vector.broadcast %1885 : f32 to vector<8x256xf32>
    %1887 = arith.mulf %1793, %1886 : vector<8x256xf32>
    %1888 = arith.addf %1884, %1887 : vector<8x256xf32>
    %c7_575 = arith.constant 7 : index
    %c1_576 = arith.constant 1 : index
    %1889 = memref.load %arg5[%c7_575, %c1_576] : memref<8x8xf32, #tpu.memory_space<smem>>
    %1890 = vector.broadcast %1889 : f32 to vector<8x256xf32>
    %1891 = arith.mulf %1827, %1890 : vector<8x256xf32>
    %1892 = arith.addf %1888, %1891 : vector<8x256xf32>
    %c1_577 = arith.constant 1 : index
    %1893 = memref.load %arg6[%c1_577] : memref<8xf32, #tpu.memory_space<smem>>
    %1894 = vector.broadcast %1893 : f32 to vector<8x256xf32>
    %1895 = arith.addf %1892, %1894 : vector<8x256xf32>
    %c0_578 = arith.constant 0 : index
    %c2_579 = arith.constant 2 : index
    %1896 = memref.load %arg5[%c0_578, %c2_579] : memref<8x8xf32, #tpu.memory_space<smem>>
    %1897 = vector.broadcast %1896 : f32 to vector<8x256xf32>
    %1898 = arith.mulf %1589, %1897 : vector<8x256xf32>
    %c1_580 = arith.constant 1 : index
    %c2_581 = arith.constant 2 : index
    %1899 = memref.load %arg5[%c1_580, %c2_581] : memref<8x8xf32, #tpu.memory_space<smem>>
    %1900 = vector.broadcast %1899 : f32 to vector<8x256xf32>
    %1901 = arith.mulf %1623, %1900 : vector<8x256xf32>
    %1902 = arith.addf %1898, %1901 : vector<8x256xf32>
    %c2_582 = arith.constant 2 : index
    %c2_583 = arith.constant 2 : index
    %1903 = memref.load %arg5[%c2_582, %c2_583] : memref<8x8xf32, #tpu.memory_space<smem>>
    %1904 = vector.broadcast %1903 : f32 to vector<8x256xf32>
    %1905 = arith.mulf %1657, %1904 : vector<8x256xf32>
    %1906 = arith.addf %1902, %1905 : vector<8x256xf32>
    %c3_584 = arith.constant 3 : index
    %c2_585 = arith.constant 2 : index
    %1907 = memref.load %arg5[%c3_584, %c2_585] : memref<8x8xf32, #tpu.memory_space<smem>>
    %1908 = vector.broadcast %1907 : f32 to vector<8x256xf32>
    %1909 = arith.mulf %1691, %1908 : vector<8x256xf32>
    %1910 = arith.addf %1906, %1909 : vector<8x256xf32>
    %c4_586 = arith.constant 4 : index
    %c2_587 = arith.constant 2 : index
    %1911 = memref.load %arg5[%c4_586, %c2_587] : memref<8x8xf32, #tpu.memory_space<smem>>
    %1912 = vector.broadcast %1911 : f32 to vector<8x256xf32>
    %1913 = arith.mulf %1725, %1912 : vector<8x256xf32>
    %1914 = arith.addf %1910, %1913 : vector<8x256xf32>
    %c5_588 = arith.constant 5 : index
    %c2_589 = arith.constant 2 : index
    %1915 = memref.load %arg5[%c5_588, %c2_589] : memref<8x8xf32, #tpu.memory_space<smem>>
    %1916 = vector.broadcast %1915 : f32 to vector<8x256xf32>
    %1917 = arith.mulf %1759, %1916 : vector<8x256xf32>
    %1918 = arith.addf %1914, %1917 : vector<8x256xf32>
    %c6_590 = arith.constant 6 : index
    %c2_591 = arith.constant 2 : index
    %1919 = memref.load %arg5[%c6_590, %c2_591] : memref<8x8xf32, #tpu.memory_space<smem>>
    %1920 = vector.broadcast %1919 : f32 to vector<8x256xf32>
    %1921 = arith.mulf %1793, %1920 : vector<8x256xf32>
    %1922 = arith.addf %1918, %1921 : vector<8x256xf32>
    %c7_592 = arith.constant 7 : index
    %c2_593 = arith.constant 2 : index
    %1923 = memref.load %arg5[%c7_592, %c2_593] : memref<8x8xf32, #tpu.memory_space<smem>>
    %1924 = vector.broadcast %1923 : f32 to vector<8x256xf32>
    %1925 = arith.mulf %1827, %1924 : vector<8x256xf32>
    %1926 = arith.addf %1922, %1925 : vector<8x256xf32>
    %c2_594 = arith.constant 2 : index
    %1927 = memref.load %arg6[%c2_594] : memref<8xf32, #tpu.memory_space<smem>>
    %1928 = vector.broadcast %1927 : f32 to vector<8x256xf32>
    %1929 = arith.addf %1926, %1928 : vector<8x256xf32>
    %c0_595 = arith.constant 0 : index
    %c3_596 = arith.constant 3 : index
    %1930 = memref.load %arg5[%c0_595, %c3_596] : memref<8x8xf32, #tpu.memory_space<smem>>
    %1931 = vector.broadcast %1930 : f32 to vector<8x256xf32>
    %1932 = arith.mulf %1589, %1931 : vector<8x256xf32>
    %c1_597 = arith.constant 1 : index
    %c3_598 = arith.constant 3 : index
    %1933 = memref.load %arg5[%c1_597, %c3_598] : memref<8x8xf32, #tpu.memory_space<smem>>
    %1934 = vector.broadcast %1933 : f32 to vector<8x256xf32>
    %1935 = arith.mulf %1623, %1934 : vector<8x256xf32>
    %1936 = arith.addf %1932, %1935 : vector<8x256xf32>
    %c2_599 = arith.constant 2 : index
    %c3_600 = arith.constant 3 : index
    %1937 = memref.load %arg5[%c2_599, %c3_600] : memref<8x8xf32, #tpu.memory_space<smem>>
    %1938 = vector.broadcast %1937 : f32 to vector<8x256xf32>
    %1939 = arith.mulf %1657, %1938 : vector<8x256xf32>
    %1940 = arith.addf %1936, %1939 : vector<8x256xf32>
    %c3_601 = arith.constant 3 : index
    %c3_602 = arith.constant 3 : index
    %1941 = memref.load %arg5[%c3_601, %c3_602] : memref<8x8xf32, #tpu.memory_space<smem>>
    %1942 = vector.broadcast %1941 : f32 to vector<8x256xf32>
    %1943 = arith.mulf %1691, %1942 : vector<8x256xf32>
    %1944 = arith.addf %1940, %1943 : vector<8x256xf32>
    %c4_603 = arith.constant 4 : index
    %c3_604 = arith.constant 3 : index
    %1945 = memref.load %arg5[%c4_603, %c3_604] : memref<8x8xf32, #tpu.memory_space<smem>>
    %1946 = vector.broadcast %1945 : f32 to vector<8x256xf32>
    %1947 = arith.mulf %1725, %1946 : vector<8x256xf32>
    %1948 = arith.addf %1944, %1947 : vector<8x256xf32>
    %c5_605 = arith.constant 5 : index
    %c3_606 = arith.constant 3 : index
    %1949 = memref.load %arg5[%c5_605, %c3_606] : memref<8x8xf32, #tpu.memory_space<smem>>
    %1950 = vector.broadcast %1949 : f32 to vector<8x256xf32>
    %1951 = arith.mulf %1759, %1950 : vector<8x256xf32>
    %1952 = arith.addf %1948, %1951 : vector<8x256xf32>
    %c6_607 = arith.constant 6 : index
    %c3_608 = arith.constant 3 : index
    %1953 = memref.load %arg5[%c6_607, %c3_608] : memref<8x8xf32, #tpu.memory_space<smem>>
    %1954 = vector.broadcast %1953 : f32 to vector<8x256xf32>
    %1955 = arith.mulf %1793, %1954 : vector<8x256xf32>
    %1956 = arith.addf %1952, %1955 : vector<8x256xf32>
    %c7_609 = arith.constant 7 : index
    %c3_610 = arith.constant 3 : index
    %1957 = memref.load %arg5[%c7_609, %c3_610] : memref<8x8xf32, #tpu.memory_space<smem>>
    %1958 = vector.broadcast %1957 : f32 to vector<8x256xf32>
    %1959 = arith.mulf %1827, %1958 : vector<8x256xf32>
    %1960 = arith.addf %1956, %1959 : vector<8x256xf32>
    %c3_611 = arith.constant 3 : index
    %1961 = memref.load %arg6[%c3_611] : memref<8xf32, #tpu.memory_space<smem>>
    %1962 = vector.broadcast %1961 : f32 to vector<8x256xf32>
    %1963 = arith.addf %1960, %1962 : vector<8x256xf32>
    %c0_612 = arith.constant 0 : index
    %c4_613 = arith.constant 4 : index
    %1964 = memref.load %arg5[%c0_612, %c4_613] : memref<8x8xf32, #tpu.memory_space<smem>>
    %1965 = vector.broadcast %1964 : f32 to vector<8x256xf32>
    %1966 = arith.mulf %1589, %1965 : vector<8x256xf32>
    %c1_614 = arith.constant 1 : index
    %c4_615 = arith.constant 4 : index
    %1967 = memref.load %arg5[%c1_614, %c4_615] : memref<8x8xf32, #tpu.memory_space<smem>>
    %1968 = vector.broadcast %1967 : f32 to vector<8x256xf32>
    %1969 = arith.mulf %1623, %1968 : vector<8x256xf32>
    %1970 = arith.addf %1966, %1969 : vector<8x256xf32>
    %c2_616 = arith.constant 2 : index
    %c4_617 = arith.constant 4 : index
    %1971 = memref.load %arg5[%c2_616, %c4_617] : memref<8x8xf32, #tpu.memory_space<smem>>
    %1972 = vector.broadcast %1971 : f32 to vector<8x256xf32>
    %1973 = arith.mulf %1657, %1972 : vector<8x256xf32>
    %1974 = arith.addf %1970, %1973 : vector<8x256xf32>
    %c3_618 = arith.constant 3 : index
    %c4_619 = arith.constant 4 : index
    %1975 = memref.load %arg5[%c3_618, %c4_619] : memref<8x8xf32, #tpu.memory_space<smem>>
    %1976 = vector.broadcast %1975 : f32 to vector<8x256xf32>
    %1977 = arith.mulf %1691, %1976 : vector<8x256xf32>
    %1978 = arith.addf %1974, %1977 : vector<8x256xf32>
    %c4_620 = arith.constant 4 : index
    %c4_621 = arith.constant 4 : index
    %1979 = memref.load %arg5[%c4_620, %c4_621] : memref<8x8xf32, #tpu.memory_space<smem>>
    %1980 = vector.broadcast %1979 : f32 to vector<8x256xf32>
    %1981 = arith.mulf %1725, %1980 : vector<8x256xf32>
    %1982 = arith.addf %1978, %1981 : vector<8x256xf32>
    %c5_622 = arith.constant 5 : index
    %c4_623 = arith.constant 4 : index
    %1983 = memref.load %arg5[%c5_622, %c4_623] : memref<8x8xf32, #tpu.memory_space<smem>>
    %1984 = vector.broadcast %1983 : f32 to vector<8x256xf32>
    %1985 = arith.mulf %1759, %1984 : vector<8x256xf32>
    %1986 = arith.addf %1982, %1985 : vector<8x256xf32>
    %c6_624 = arith.constant 6 : index
    %c4_625 = arith.constant 4 : index
    %1987 = memref.load %arg5[%c6_624, %c4_625] : memref<8x8xf32, #tpu.memory_space<smem>>
    %1988 = vector.broadcast %1987 : f32 to vector<8x256xf32>
    %1989 = arith.mulf %1793, %1988 : vector<8x256xf32>
    %1990 = arith.addf %1986, %1989 : vector<8x256xf32>
    %c7_626 = arith.constant 7 : index
    %c4_627 = arith.constant 4 : index
    %1991 = memref.load %arg5[%c7_626, %c4_627] : memref<8x8xf32, #tpu.memory_space<smem>>
    %1992 = vector.broadcast %1991 : f32 to vector<8x256xf32>
    %1993 = arith.mulf %1827, %1992 : vector<8x256xf32>
    %1994 = arith.addf %1990, %1993 : vector<8x256xf32>
    %c4_628 = arith.constant 4 : index
    %1995 = memref.load %arg6[%c4_628] : memref<8xf32, #tpu.memory_space<smem>>
    %1996 = vector.broadcast %1995 : f32 to vector<8x256xf32>
    %1997 = arith.addf %1994, %1996 : vector<8x256xf32>
    %c0_629 = arith.constant 0 : index
    %c5_630 = arith.constant 5 : index
    %1998 = memref.load %arg5[%c0_629, %c5_630] : memref<8x8xf32, #tpu.memory_space<smem>>
    %1999 = vector.broadcast %1998 : f32 to vector<8x256xf32>
    %2000 = arith.mulf %1589, %1999 : vector<8x256xf32>
    %c1_631 = arith.constant 1 : index
    %c5_632 = arith.constant 5 : index
    %2001 = memref.load %arg5[%c1_631, %c5_632] : memref<8x8xf32, #tpu.memory_space<smem>>
    %2002 = vector.broadcast %2001 : f32 to vector<8x256xf32>
    %2003 = arith.mulf %1623, %2002 : vector<8x256xf32>
    %2004 = arith.addf %2000, %2003 : vector<8x256xf32>
    %c2_633 = arith.constant 2 : index
    %c5_634 = arith.constant 5 : index
    %2005 = memref.load %arg5[%c2_633, %c5_634] : memref<8x8xf32, #tpu.memory_space<smem>>
    %2006 = vector.broadcast %2005 : f32 to vector<8x256xf32>
    %2007 = arith.mulf %1657, %2006 : vector<8x256xf32>
    %2008 = arith.addf %2004, %2007 : vector<8x256xf32>
    %c3_635 = arith.constant 3 : index
    %c5_636 = arith.constant 5 : index
    %2009 = memref.load %arg5[%c3_635, %c5_636] : memref<8x8xf32, #tpu.memory_space<smem>>
    %2010 = vector.broadcast %2009 : f32 to vector<8x256xf32>
    %2011 = arith.mulf %1691, %2010 : vector<8x256xf32>
    %2012 = arith.addf %2008, %2011 : vector<8x256xf32>
    %c4_637 = arith.constant 4 : index
    %c5_638 = arith.constant 5 : index
    %2013 = memref.load %arg5[%c4_637, %c5_638] : memref<8x8xf32, #tpu.memory_space<smem>>
    %2014 = vector.broadcast %2013 : f32 to vector<8x256xf32>
    %2015 = arith.mulf %1725, %2014 : vector<8x256xf32>
    %2016 = arith.addf %2012, %2015 : vector<8x256xf32>
    %c5_639 = arith.constant 5 : index
    %c5_640 = arith.constant 5 : index
    %2017 = memref.load %arg5[%c5_639, %c5_640] : memref<8x8xf32, #tpu.memory_space<smem>>
    %2018 = vector.broadcast %2017 : f32 to vector<8x256xf32>
    %2019 = arith.mulf %1759, %2018 : vector<8x256xf32>
    %2020 = arith.addf %2016, %2019 : vector<8x256xf32>
    %c6_641 = arith.constant 6 : index
    %c5_642 = arith.constant 5 : index
    %2021 = memref.load %arg5[%c6_641, %c5_642] : memref<8x8xf32, #tpu.memory_space<smem>>
    %2022 = vector.broadcast %2021 : f32 to vector<8x256xf32>
    %2023 = arith.mulf %1793, %2022 : vector<8x256xf32>
    %2024 = arith.addf %2020, %2023 : vector<8x256xf32>
    %c7_643 = arith.constant 7 : index
    %c5_644 = arith.constant 5 : index
    %2025 = memref.load %arg5[%c7_643, %c5_644] : memref<8x8xf32, #tpu.memory_space<smem>>
    %2026 = vector.broadcast %2025 : f32 to vector<8x256xf32>
    %2027 = arith.mulf %1827, %2026 : vector<8x256xf32>
    %2028 = arith.addf %2024, %2027 : vector<8x256xf32>
    %c5_645 = arith.constant 5 : index
    %2029 = memref.load %arg6[%c5_645] : memref<8xf32, #tpu.memory_space<smem>>
    %2030 = vector.broadcast %2029 : f32 to vector<8x256xf32>
    %2031 = arith.addf %2028, %2030 : vector<8x256xf32>
    %c0_646 = arith.constant 0 : index
    %c6_647 = arith.constant 6 : index
    %2032 = memref.load %arg5[%c0_646, %c6_647] : memref<8x8xf32, #tpu.memory_space<smem>>
    %2033 = vector.broadcast %2032 : f32 to vector<8x256xf32>
    %2034 = arith.mulf %1589, %2033 : vector<8x256xf32>
    %c1_648 = arith.constant 1 : index
    %c6_649 = arith.constant 6 : index
    %2035 = memref.load %arg5[%c1_648, %c6_649] : memref<8x8xf32, #tpu.memory_space<smem>>
    %2036 = vector.broadcast %2035 : f32 to vector<8x256xf32>
    %2037 = arith.mulf %1623, %2036 : vector<8x256xf32>
    %2038 = arith.addf %2034, %2037 : vector<8x256xf32>
    %c2_650 = arith.constant 2 : index
    %c6_651 = arith.constant 6 : index
    %2039 = memref.load %arg5[%c2_650, %c6_651] : memref<8x8xf32, #tpu.memory_space<smem>>
    %2040 = vector.broadcast %2039 : f32 to vector<8x256xf32>
    %2041 = arith.mulf %1657, %2040 : vector<8x256xf32>
    %2042 = arith.addf %2038, %2041 : vector<8x256xf32>
    %c3_652 = arith.constant 3 : index
    %c6_653 = arith.constant 6 : index
    %2043 = memref.load %arg5[%c3_652, %c6_653] : memref<8x8xf32, #tpu.memory_space<smem>>
    %2044 = vector.broadcast %2043 : f32 to vector<8x256xf32>
    %2045 = arith.mulf %1691, %2044 : vector<8x256xf32>
    %2046 = arith.addf %2042, %2045 : vector<8x256xf32>
    %c4_654 = arith.constant 4 : index
    %c6_655 = arith.constant 6 : index
    %2047 = memref.load %arg5[%c4_654, %c6_655] : memref<8x8xf32, #tpu.memory_space<smem>>
    %2048 = vector.broadcast %2047 : f32 to vector<8x256xf32>
    %2049 = arith.mulf %1725, %2048 : vector<8x256xf32>
    %2050 = arith.addf %2046, %2049 : vector<8x256xf32>
    %c5_656 = arith.constant 5 : index
    %c6_657 = arith.constant 6 : index
    %2051 = memref.load %arg5[%c5_656, %c6_657] : memref<8x8xf32, #tpu.memory_space<smem>>
    %2052 = vector.broadcast %2051 : f32 to vector<8x256xf32>
    %2053 = arith.mulf %1759, %2052 : vector<8x256xf32>
    %2054 = arith.addf %2050, %2053 : vector<8x256xf32>
    %c6_658 = arith.constant 6 : index
    %c6_659 = arith.constant 6 : index
    %2055 = memref.load %arg5[%c6_658, %c6_659] : memref<8x8xf32, #tpu.memory_space<smem>>
    %2056 = vector.broadcast %2055 : f32 to vector<8x256xf32>
    %2057 = arith.mulf %1793, %2056 : vector<8x256xf32>
    %2058 = arith.addf %2054, %2057 : vector<8x256xf32>
    %c7_660 = arith.constant 7 : index
    %c6_661 = arith.constant 6 : index
    %2059 = memref.load %arg5[%c7_660, %c6_661] : memref<8x8xf32, #tpu.memory_space<smem>>
    %2060 = vector.broadcast %2059 : f32 to vector<8x256xf32>
    %2061 = arith.mulf %1827, %2060 : vector<8x256xf32>
    %2062 = arith.addf %2058, %2061 : vector<8x256xf32>
    %c6_662 = arith.constant 6 : index
    %2063 = memref.load %arg6[%c6_662] : memref<8xf32, #tpu.memory_space<smem>>
    %2064 = vector.broadcast %2063 : f32 to vector<8x256xf32>
    %2065 = arith.addf %2062, %2064 : vector<8x256xf32>
    %c0_663 = arith.constant 0 : index
    %c7_664 = arith.constant 7 : index
    %2066 = memref.load %arg5[%c0_663, %c7_664] : memref<8x8xf32, #tpu.memory_space<smem>>
    %2067 = vector.broadcast %2066 : f32 to vector<8x256xf32>
    %2068 = arith.mulf %1589, %2067 : vector<8x256xf32>
    %c1_665 = arith.constant 1 : index
    %c7_666 = arith.constant 7 : index
    %2069 = memref.load %arg5[%c1_665, %c7_666] : memref<8x8xf32, #tpu.memory_space<smem>>
    %2070 = vector.broadcast %2069 : f32 to vector<8x256xf32>
    %2071 = arith.mulf %1623, %2070 : vector<8x256xf32>
    %2072 = arith.addf %2068, %2071 : vector<8x256xf32>
    %c2_667 = arith.constant 2 : index
    %c7_668 = arith.constant 7 : index
    %2073 = memref.load %arg5[%c2_667, %c7_668] : memref<8x8xf32, #tpu.memory_space<smem>>
    %2074 = vector.broadcast %2073 : f32 to vector<8x256xf32>
    %2075 = arith.mulf %1657, %2074 : vector<8x256xf32>
    %2076 = arith.addf %2072, %2075 : vector<8x256xf32>
    %c3_669 = arith.constant 3 : index
    %c7_670 = arith.constant 7 : index
    %2077 = memref.load %arg5[%c3_669, %c7_670] : memref<8x8xf32, #tpu.memory_space<smem>>
    %2078 = vector.broadcast %2077 : f32 to vector<8x256xf32>
    %2079 = arith.mulf %1691, %2078 : vector<8x256xf32>
    %2080 = arith.addf %2076, %2079 : vector<8x256xf32>
    %c4_671 = arith.constant 4 : index
    %c7_672 = arith.constant 7 : index
    %2081 = memref.load %arg5[%c4_671, %c7_672] : memref<8x8xf32, #tpu.memory_space<smem>>
    %2082 = vector.broadcast %2081 : f32 to vector<8x256xf32>
    %2083 = arith.mulf %1725, %2082 : vector<8x256xf32>
    %2084 = arith.addf %2080, %2083 : vector<8x256xf32>
    %c5_673 = arith.constant 5 : index
    %c7_674 = arith.constant 7 : index
    %2085 = memref.load %arg5[%c5_673, %c7_674] : memref<8x8xf32, #tpu.memory_space<smem>>
    %2086 = vector.broadcast %2085 : f32 to vector<8x256xf32>
    %2087 = arith.mulf %1759, %2086 : vector<8x256xf32>
    %2088 = arith.addf %2084, %2087 : vector<8x256xf32>
    %c6_675 = arith.constant 6 : index
    %c7_676 = arith.constant 7 : index
    %2089 = memref.load %arg5[%c6_675, %c7_676] : memref<8x8xf32, #tpu.memory_space<smem>>
    %2090 = vector.broadcast %2089 : f32 to vector<8x256xf32>
    %2091 = arith.mulf %1793, %2090 : vector<8x256xf32>
    %2092 = arith.addf %2088, %2091 : vector<8x256xf32>
    %c7_677 = arith.constant 7 : index
    %c7_678 = arith.constant 7 : index
    %2093 = memref.load %arg5[%c7_677, %c7_678] : memref<8x8xf32, #tpu.memory_space<smem>>
    %2094 = vector.broadcast %2093 : f32 to vector<8x256xf32>
    %2095 = arith.mulf %1827, %2094 : vector<8x256xf32>
    %2096 = arith.addf %2092, %2095 : vector<8x256xf32>
    %c7_679 = arith.constant 7 : index
    %2097 = memref.load %arg6[%c7_679] : memref<8xf32, #tpu.memory_space<smem>>
    %2098 = vector.broadcast %2097 : f32 to vector<8x256xf32>
    %2099 = arith.addf %2096, %2098 : vector<8x256xf32>
    %cst_680 = arith.constant 0.000000e+00 : f32
    %2100 = vector.broadcast %cst_680 : f32 to vector<8x256xf32>
    %2101 = arith.maximumf %1861, %2100 : vector<8x256xf32>
    %2102 = arith.addf %1449, %2101 : vector<8x256xf32>
    %c0_681 = arith.constant 0 : index
    %c0_682 = arith.constant 0 : index
    %c0_683 = arith.constant 0 : index
    %2103 = vector.load %arg8[%c0_681, %c0_682, %c0_683] : memref<8x8x256xf32, #tpu.memory_space<vmem>>, vector<1x8x256xf32>
    %2104 = vector.shape_cast %2103 : vector<1x8x256xf32> to vector<8x256xf32>
    %2105 = vector.shape_cast %2102 : vector<8x256xf32> to vector<1x8x256xf32>
    tpu.vector_store %arg8[%c0_681, %c0_682, %c0_683], %2105 {strides = array<i32>} : memref<8x8x256xf32, #tpu.memory_space<vmem>>, vector<1x8x256xf32>,
    %cst_684 = arith.constant 0.000000e+00 : f32
    %2106 = vector.broadcast %cst_684 : f32 to vector<8x256xf32>
    %2107 = arith.maximumf %1895, %2106 : vector<8x256xf32>
    %2108 = arith.addf %1450, %2107 : vector<8x256xf32>
    %c1_685 = arith.constant 1 : index
    %c0_686 = arith.constant 0 : index
    %c0_687 = arith.constant 0 : index
    %2109 = vector.load %arg8[%c1_685, %c0_686, %c0_687] : memref<8x8x256xf32, #tpu.memory_space<vmem>>, vector<1x8x256xf32>
    %2110 = vector.shape_cast %2109 : vector<1x8x256xf32> to vector<8x256xf32>
    %2111 = vector.shape_cast %2108 : vector<8x256xf32> to vector<1x8x256xf32>
    tpu.vector_store %arg8[%c1_685, %c0_686, %c0_687], %2111 {strides = array<i32>} : memref<8x8x256xf32, #tpu.memory_space<vmem>>, vector<1x8x256xf32>,
    %cst_688 = arith.constant 0.000000e+00 : f32
    %2112 = vector.broadcast %cst_688 : f32 to vector<8x256xf32>
    %2113 = arith.maximumf %1929, %2112 : vector<8x256xf32>
    %2114 = arith.addf %1451, %2113 : vector<8x256xf32>
    %c2_689 = arith.constant 2 : index
    %c0_690 = arith.constant 0 : index
    %c0_691 = arith.constant 0 : index
    %2115 = vector.load %arg8[%c2_689, %c0_690, %c0_691] : memref<8x8x256xf32, #tpu.memory_space<vmem>>, vector<1x8x256xf32>
    %2116 = vector.shape_cast %2115 : vector<1x8x256xf32> to vector<8x256xf32>
    %2117 = vector.shape_cast %2114 : vector<8x256xf32> to vector<1x8x256xf32>
    tpu.vector_store %arg8[%c2_689, %c0_690, %c0_691], %2117 {strides = array<i32>} : memref<8x8x256xf32, #tpu.memory_space<vmem>>, vector<1x8x256xf32>,
    %cst_692 = arith.constant 0.000000e+00 : f32
    %2118 = vector.broadcast %cst_692 : f32 to vector<8x256xf32>
    %2119 = arith.maximumf %1963, %2118 : vector<8x256xf32>
    %2120 = arith.addf %1452, %2119 : vector<8x256xf32>
    %c3_693 = arith.constant 3 : index
    %c0_694 = arith.constant 0 : index
    %c0_695 = arith.constant 0 : index
    %2121 = vector.load %arg8[%c3_693, %c0_694, %c0_695] : memref<8x8x256xf32, #tpu.memory_space<vmem>>, vector<1x8x256xf32>
    %2122 = vector.shape_cast %2121 : vector<1x8x256xf32> to vector<8x256xf32>
    %2123 = vector.shape_cast %2120 : vector<8x256xf32> to vector<1x8x256xf32>
    tpu.vector_store %arg8[%c3_693, %c0_694, %c0_695], %2123 {strides = array<i32>} : memref<8x8x256xf32, #tpu.memory_space<vmem>>, vector<1x8x256xf32>,
    %cst_696 = arith.constant 0.000000e+00 : f32
    %2124 = vector.broadcast %cst_696 : f32 to vector<8x256xf32>
    %2125 = arith.maximumf %1997, %2124 : vector<8x256xf32>
    %2126 = arith.addf %1453, %2125 : vector<8x256xf32>
    %c4_697 = arith.constant 4 : index
    %c0_698 = arith.constant 0 : index
    %c0_699 = arith.constant 0 : index
    %2127 = vector.load %arg8[%c4_697, %c0_698, %c0_699] : memref<8x8x256xf32, #tpu.memory_space<vmem>>, vector<1x8x256xf32>
    %2128 = vector.shape_cast %2127 : vector<1x8x256xf32> to vector<8x256xf32>
    %2129 = vector.shape_cast %2126 : vector<8x256xf32> to vector<1x8x256xf32>
    tpu.vector_store %arg8[%c4_697, %c0_698, %c0_699], %2129 {strides = array<i32>} : memref<8x8x256xf32, #tpu.memory_space<vmem>>, vector<1x8x256xf32>,
    %cst_700 = arith.constant 0.000000e+00 : f32
    %2130 = vector.broadcast %cst_700 : f32 to vector<8x256xf32>
    %2131 = arith.maximumf %2031, %2130 : vector<8x256xf32>
    %2132 = arith.addf %1454, %2131 : vector<8x256xf32>
    %c5_701 = arith.constant 5 : index
    %c0_702 = arith.constant 0 : index
    %c0_703 = arith.constant 0 : index
    %2133 = vector.load %arg8[%c5_701, %c0_702, %c0_703] : memref<8x8x256xf32, #tpu.memory_space<vmem>>, vector<1x8x256xf32>
    %2134 = vector.shape_cast %2133 : vector<1x8x256xf32> to vector<8x256xf32>
    %2135 = vector.shape_cast %2132 : vector<8x256xf32> to vector<1x8x256xf32>
    tpu.vector_store %arg8[%c5_701, %c0_702, %c0_703], %2135 {strides = array<i32>} : memref<8x8x256xf32, #tpu.memory_space<vmem>>, vector<1x8x256xf32>,
    %cst_704 = arith.constant 0.000000e+00 : f32
    %2136 = vector.broadcast %cst_704 : f32 to vector<8x256xf32>
    %2137 = arith.maximumf %2065, %2136 : vector<8x256xf32>
    %2138 = arith.addf %1455, %2137 : vector<8x256xf32>
    %c6_705 = arith.constant 6 : index
    %c0_706 = arith.constant 0 : index
    %c0_707 = arith.constant 0 : index
    %2139 = vector.load %arg8[%c6_705, %c0_706, %c0_707] : memref<8x8x256xf32, #tpu.memory_space<vmem>>, vector<1x8x256xf32>
    %2140 = vector.shape_cast %2139 : vector<1x8x256xf32> to vector<8x256xf32>
    %2141 = vector.shape_cast %2138 : vector<8x256xf32> to vector<1x8x256xf32>
    tpu.vector_store %arg8[%c6_705, %c0_706, %c0_707], %2141 {strides = array<i32>} : memref<8x8x256xf32, #tpu.memory_space<vmem>>, vector<1x8x256xf32>,
    %cst_708 = arith.constant 0.000000e+00 : f32
    %2142 = vector.broadcast %cst_708 : f32 to vector<8x256xf32>
    %2143 = arith.maximumf %2099, %2142 : vector<8x256xf32>
    %2144 = arith.addf %1456, %2143 : vector<8x256xf32>
    %c7_709 = arith.constant 7 : index
    %c0_710 = arith.constant 0 : index
    %c0_711 = arith.constant 0 : index
    %2145 = vector.load %arg8[%c7_709, %c0_710, %c0_711] : memref<8x8x256xf32, #tpu.memory_space<vmem>>, vector<1x8x256xf32>
    %2146 = vector.shape_cast %2145 : vector<1x8x256xf32> to vector<8x256xf32>
    %2147 = vector.shape_cast %2144 : vector<8x256xf32> to vector<1x8x256xf32>
    tpu.vector_store %arg8[%c7_709, %c0_710, %c0_711], %2147 {strides = array<i32>} : memref<8x8x256xf32, #tpu.memory_space<vmem>>, vector<1x8x256xf32>,
    return
  }
  func.func @transform_0(%arg0: i32) -> (i32, i32, i32) {
    %c0_i32 = arith.constant 0 : i32
    %c0_i32_0 = arith.constant 0 : i32
    %c0_i32_1 = arith.constant 0 : i32
    return %c0_i32, %c0_i32_0, %arg0 : i32, i32, i32
  }
  func.func @transform_1(%arg0: i32) -> (i32, i32) {
    %c0_i32 = arith.constant 0 : i32
    %c0_i32_0 = arith.constant 0 : i32
    %c0_i32_1 = arith.constant 0 : i32
    return %c0_i32, %c0_i32_0 : i32, i32
  }
  func.func @transform_2(%arg0: i32) -> (i32, i32) {
    %c0_i32 = arith.constant 0 : i32
    %c0_i32_0 = arith.constant 0 : i32
    %c0_i32_1 = arith.constant 0 : i32
    return %c0_i32, %c0_i32_0 : i32, i32
  }
  func.func @transform_3(%arg0: i32) -> i32 {
    %c0_i32 = arith.constant 0 : i32
    %c0_i32_0 = arith.constant 0 : i32
    return %c0_i32 : i32
  }
  func.func @transform_4(%arg0: i32) -> (i32, i32) {
    %c0_i32 = arith.constant 0 : i32
    %c0_i32_0 = arith.constant 0 : i32
    %c0_i32_1 = arith.constant 0 : i32
    return %c0_i32, %c0_i32_0 : i32, i32
  }
  func.func @transform_5(%arg0: i32) -> i32 {
    %c0_i32 = arith.constant 0 : i32
    %c0_i32_0 = arith.constant 0 : i32
    return %c0_i32 : i32
  }
  func.func @transform_6(%arg0: i32) -> i32 {
    %c0_i32 = arith.constant 0 : i32
    %c0_i32_0 = arith.constant 0 : i32
    return %c0_i32 : i32
  }
  func.func @transform_7(%arg0: i32) -> (i32, i32, i32) {
    %c0_i32 = arith.constant 0 : i32
    %c0_i32_0 = arith.constant 0 : i32
    %c0_i32_1 = arith.constant 0 : i32
    return %c0_i32, %c0_i32_0, %arg0 : i32, i32, i32
  }
}

</mosaic_0001>

<llo_original>
// kernel: block_forward.1
$region0: #{block_forward.1}
  #allocation0 [shape = 'u32[]', space=smem, size = 0x4, offset = 0x4, fixed_abs, tag = 'smem constant byte address 0x4 - core index']
  #allocation1 [shape = 'u32[72,128]{1,0:T(1,128)}', space=vmem, size = 0x9000, scoped, tag = 'internal scratch']
  %s0 = inlined_call_operand.vmem [shape: f32[8,8,1024], index: 0, kind: input, shape index: {}]
  %s1 = inlined_call_operand.vmem [shape: f32[8,24], index: 1, kind: input, shape index: {}]
  %s2 = inlined_call_operand.vmem [shape: f32[8,8], index: 2, kind: input, shape index: {}]
  %s3 = inlined_call_operand.vmem [shape: f32[8], index: 3, kind: input, shape index: {}]
  %s4 = inlined_call_operand.vmem [shape: f32[8,8], index: 4, kind: input, shape index: {}]
  %s5 = inlined_call_operand.vmem [shape: f32[8], index: 5, kind: input, shape index: {}]
  %s6 = inlined_call_operand.vmem [shape: f32[4], index: 6, kind: input, shape index: {}]
  %s7 = inlined_call_operand.vmem [shape: f32[8,8,1024], index: 7, kind: output, shape index: {}]
  %s8 = sld [smem:[#allocation0]]
  $region127: #{block_forward.1} parent=0
    _
  %s10 = ssub.s32 1, %s8
  %s11 = scalar_select 0, %s10, %s8
  $region1: #{block_forward.1} parent=0
    #allocation2 [shape = 'u8[131072]{0}', space=vmem, size = 0x20000, scoped, tag = 'input window, operand 0']
    #allocation3 [shape = 'u8[4096]{0}', space=smem, size = 0x1000, scoped, tag = 'input window, operand 1, single buffered']
    #allocation4 [shape = 's32[2]{0}', space=sflag, size = 0x8, scoped, tag = 'scoped memory for block_forward.1']
    #allocation5 [shape = 'u8[4096]{0}', space=smem, size = 0x1000, scoped, tag = 'input window, operand 2, single buffered']
    #allocation6 [shape = 's32[1]{0}', space=sflag, size = 0x4, scoped, tag = 'scoped memory for block_forward.1']
    #allocation7 [shape = 'u8[512]{0}', space=smem, size = 0x200, scoped, tag = 'input window, operand 3, single buffered']
    #allocation8 [shape = 'u8[4096]{0}', space=smem, size = 0x1000, scoped, tag = 'input window, operand 4, single buffered']
    #allocation9 [shape = 's32[1]{0}', space=sflag, size = 0x4, scoped, tag = 'scoped memory for block_forward.1']
    #allocation10 [shape = 'u8[512]{0}', space=smem, size = 0x200, scoped, tag = 'input window, operand 5, single buffered']
    #allocation11 [shape = 'u8[512]{0}', space=smem, size = 0x200, scoped, tag = 'input window, operand 6, single buffered']
    #allocation12 [shape = 's32[1]{0}', space=sflag, size = 0x4, scoped, tag = 'scoped memory for block_forward.1']
    #allocation13 [shape = 'u8[131072]{0}', space=vmem, size = 0x20000, scoped, tag = 'output window, operand 0']
    %12 = vsyncpa [#allocation4], 0
    %13 = vsyncpa [#allocation6], 0
    %14 = vsyncpa [#allocation9], 0
    %15 = vsyncpa [#allocation12], 0
    loop: start=0, step=1, limit=6
    $region2: #{block_forward.1} parent=1 // loop_pre_header
      _
    $region3: #{block_forward.1} parent=1 // loop_header
      %s17 = sphi 0, %s21
      %p18 = scmp.ge.s32.totalorder %s17, 6
      %s27 = sphi 0, %s29
      %s30 = sphi 0, %s27
      %s31 = sphi 0, %s30
      %s47 = sphi 0, %s31
      %s51 = sphi 0, %s51
      %s53 = sphi 0, %s51
      %s54 = sphi 0, %s53
      %s68 = sphi 0, %s54
      %s72 = sphi 0, %s72
      %s74 = sphi 0, %s72
      %s75 = sphi 0, %s74
      %s89 = sphi 0, %s75
      %s93 = sphi 0, %s93
      %s95 = sphi 0, %s93
      %s96 = sphi 0, %s95
      %s110 = sphi 0, %s96
      %s114 = sphi 0, %s114
      %s116 = sphi 0, %s114
      %s117 = sphi 0, %s116
      %s131 = sphi 0, %s117
      %s135 = sphi 0, %s135
      %s137 = sphi 0, %s135
      %s138 = sphi 0, %s137
      %s152 = sphi 0, %s138
      %s156 = sphi 0, %s156
      %s158 = sphi 0, %s156
      %s159 = sphi 0, %s158
      %s173 = sphi 0, %s159
      %s179 = sphi 0, %s181
      %s182 = sphi 0, %s179
      %s183 = sphi 0, %s182
      %s199 = sphi 0, %s183
    $region4: #{block_forward.1} parent=1 // loop_header_branch
      %20 = sbr.rel (%p18) target = $region8
    $region5: #{block_forward.1} parent=1 // loop_body
      %s22 = ssub.s32 %s17, 1
      %s23 = ssub.s32 %s17, 2
      %s24 = sadd.s32 %s17, 1
      %s25 = ssub.s32 %s17, %s24
      %p26 = scmp.eq.s32.totalorder %s25, 0
      %s28 = sadd.s32 %s27, 1
      %s29 = scalar_select %p26, %s27, %s28
      %p32 = pneg %p26
      %p33 = scmp.eq.s32.totalorder %s17, 3
      %p34 = por %p32, %p33
      %p35 = scmp.ne.s32.totalorder %s27, %s30
      %p36 = scmp.eq.s32.totalorder %s17, 0
      %p37 = por %p35, %p36
      %p38 = scmp.ne.s32.totalorder %s27, %s30
      %p39 = scmp.eq.s32.totalorder %s22, 3
      %p40 = por %p38, %p39
      %p41 = scmp.ne.s32.totalorder %s30, %s31
      %p42 = scmp.eq.s32.totalorder %s22, 0
      %p43 = por %p41, %p42
      %p44 = scmp.ne.s32.totalorder %s30, %s31
      %p45 = scmp.eq.s32.totalorder %s23, 3
      %p46 = por %p44, %p45
      %p48 = scmp.ne.s32.totalorder %s31, %s47
      %p49 = scmp.eq.s32.totalorder %s23, 0
      %p50 = por %p48, %p49
      %s52 = sadd.s32 %s51, 1
      %p55 = scmp.eq.s32.totalorder %s17, 3
      %p56 = scmp.ne.s32.totalorder %s51, %s53
      %p57 = scmp.eq.s32.totalorder %s17, 0
      %p58 = por %p56, %p57
      %p59 = scmp.ne.s32.totalorder %s51, %s53
      %p60 = scmp.eq.s32.totalorder %s22, 3
      %p61 = por %p59, %p60
      %p62 = scmp.ne.s32.totalorder %s53, %s54
      %p63 = scmp.eq.s32.totalorder %s22, 0
      %p64 = por %p62, %p63
      %p65 = scmp.ne.s32.totalorder %s53, %s54
      %p66 = scmp.eq.s32.totalorder %s23, 3
      %p67 = por %p65, %p66
      %p69 = scmp.ne.s32.totalorder %s54, %s68
      %p70 = scmp.eq.s32.totalorder %s23, 0
      %p71 = por %p69, %p70
      %s73 = sadd.s32 %s72, 1
      %p76 = scmp.eq.s32.totalorder %s17, 3
      %p77 = scmp.ne.s32.totalorder %s72, %s74
      %p78 = scmp.eq.s32.totalorder %s17, 0
      %p79 = por %p77, %p78
      %p80 = scmp.ne.s32.totalorder %s72, %s74
      %p81 = scmp.eq.s32.totalorder %s22, 3
      %p82 = por %p80, %p81
      %p83 = scmp.ne.s32.totalorder %s74, %s75
      %p84 = scmp.eq.s32.totalorder %s22, 0
      %p85 = por %p83, %p84
      %p86 = scmp.ne.s32.totalorder %s74, %s75
      %p87 = scmp.eq.s32.totalorder %s23, 3
      %p88 = por %p86, %p87
      %p90 = scmp.ne.s32.totalorder %s75, %s89
      %p91 = scmp.eq.s32.totalorder %s23, 0
      %p92 = por %p90, %p91
      %s94 = sadd.s32 %s93, 1
      %p97 = scmp.eq.s32.totalorder %s17, 3
      %p98 = scmp.ne.s32.totalorder %s93, %s95
      %p99 = scmp.eq.s32.totalorder %s17, 0
      %p100 = por %p98, %p99
      %p101 = scmp.ne.s32.totalorder %s93, %s95
      %p102 = scmp.eq.s32.totalorder %s22, 3
      %p103 = por %p101, %p102
      %p104 = scmp.ne.s32.totalorder %s95, %s96
      %p105 = scmp.eq.s32.totalorder %s22, 0
      %p106 = por %p104, %p105
      %p107 = scmp.ne.s32.totalorder %s95, %s96
      %p108 = scmp.eq.s32.totalorder %s23, 3
      %p109 = por %p107, %p108
      %p111 = scmp.ne.s32.totalorder %s96, %s110
      %p112 = scmp.eq.s32.totalorder %s23, 0
      %p113 = por %p111, %p112
      %s115 = sadd.s32 %s114, 1
      %p118 = scmp.eq.s32.totalorder %s17, 3
      %p119 = scmp.ne.s32.totalorder %s114, %s116
      %p120 = scmp.eq.s32.totalorder %s17, 0
      %p121 = por %p119, %p120
      %p122 = scmp.ne.s32.totalorder %s114, %s116
      %p123 = scmp.eq.s32.totalorder %s22, 3
      %p124 = por %p122, %p123
      %p125 = scmp.ne.s32.totalorder %s116, %s117
      %p126 = scmp.eq.s32.totalorder %s22, 0
      %p127 = por %p125, %p126
      %p128 = scmp.ne.s32.totalorder %s116, %s117
      %p129 = scmp.eq.s32.totalorder %s23, 3
      %p130 = por %p128, %p129
      %p132 = scmp.ne.s32.totalorder %s117, %s131
      %p133 = scmp.eq.s32.totalorder %s23, 0
      %p134 = por %p132, %p133
      %s136 = sadd.s32 %s135, 1
      %p139 = scmp.eq.s32.totalorder %s17, 3
      %p140 = scmp.ne.s32.totalorder %s135, %s137
      %p141 = scmp.eq.s32.totalorder %s17, 0
      %p142 = por %p140, %p141
      %p143 = scmp.ne.s32.totalorder %s135, %s137
      %p144 = scmp.eq.s32.totalorder %s22, 3
      %p145 = por %p143, %p144
      %p146 = scmp.ne.s32.totalorder %s137, %s138
      %p147 = scmp.eq.s32.totalorder %s22, 0
      %p148 = por %p146, %p147
      %p149 = scmp.ne.s32.totalorder %s137, %s138
      %p150 = scmp.eq.s32.totalorder %s23, 3
      %p151 = por %p149, %p150
      %p153 = scmp.ne.s32.totalorder %s138, %s152
      %p154 = scmp.eq.s32.totalorder %s23, 0
      %p155 = por %p153, %p154
      %s157 = sadd.s32 %s156, 1
      %p160 = scmp.eq.s32.totalorder %s17, 3
      %p161 = scmp.ne.s32.totalorder %s156, %s158
      %p162 = scmp.eq.s32.totalorder %s17, 0
      %p163 = por %p161, %p162
      %p164 = scmp.ne.s32.totalorder %s156, %s158
      %p165 = scmp.eq.s32.totalorder %s22, 3
      %p166 = por %p164, %p165
      %p167 = scmp.ne.s32.totalorder %s158, %s159
      %p168 = scmp.eq.s32.totalorder %s22, 0
      %p169 = por %p167, %p168
      %p170 = scmp.ne.s32.totalorder %s158, %s159
      %p171 = scmp.eq.s32.totalorder %s23, 3
      %p172 = por %p170, %p171
      %p174 = scmp.ne.s32.totalorder %s159, %s173
      %p175 = scmp.eq.s32.totalorder %s23, 0
      %p176 = por %p174, %p175
      %s177 = ssub.s32 %s17, %s24
      %p178 = scmp.eq.s32.totalorder %s177, 0
      %s180 = sadd.s32 %s179, 1
      %s181 = scalar_select %p178, %s179, %s180
      %p184 = pneg %p178
      %p185 = scmp.eq.s32.totalorder %s17, 3
      %p186 = por %p184, %p185
      %p187 = scmp.ne.s32.totalorder %s179, %s182
      %p188 = scmp.eq.s32.totalorder %s17, 0
      %p189 = por %p187, %p188
      %p190 = scmp.ne.s32.totalorder %s179, %s182
      %p191 = scmp.eq.s32.totalorder %s22, 3
      %p192 = por %p190, %p191
      %p193 = scmp.ne.s32.totalorder %s182, %s183
      %p194 = scmp.eq.s32.totalorder %s22, 0
      %p195 = por %p193, %p194
      %p196 = scmp.ne.s32.totalorder %s182, %s183
      %p197 = scmp.eq.s32.totalorder %s23, 3
      %p198 = por %p196, %p197
      %p200 = scmp.ne.s32.totalorder %s183, %s199
      %p201 = scmp.eq.s32.totalorder %s23, 0
      %p202 = por %p200, %p201
      %p203 = scmp.le.s32.totalorder 1, %s17
      %p204 = scmp.lt.s32.totalorder %s17, 5
      %p205 = pnand %p203, %p204
      %p206 = pneg %p205
      // Predicated region
      $region9: #{block_forward.1} parent=5 // pred_check
        _
      $region10: #{block_forward.1} parent=5 // pred_check_branch
        %208 = sbr.rel (%p205) target = $region12
      $region11: #{block_forward.1} parent=5 // pred_region
        %s209 = ssub.s32 %s17, 1
        // Predicated region
        $region13: #{block_forward.1} parent=11 // pred_check
          %p210 = pneg %p64
        $region14: #{block_forward.1} parent=11 // pred_check_branch
          %212 = sbr.rel (%p210) target = $region16
        $region15: #{block_forward.1} parent=11 // pred_region
          %214 = vsyncadd [#allocation4], 0
          %s216 = sshll.u32 %s1, 4
          %s217 = int_to_ptr.vmem [resolvable:$true] %s216
          %219 = dma.vmem_to_smem %s217, 128, [#allocation3], [#allocation4]
        $region16: #{block_forward.1} parent=11 // pred_fallthru
          _
        // Predicated region
        $region17: #{block_forward.1} parent=11 // pred_check
          %p220 = pneg %p85
        $region18: #{block_forward.1} parent=11 // pred_check_branch
          %222 = sbr.rel (%p220) target = $region20
        $region19: #{block_forward.1} parent=11 // pred_region
          %224 = vsyncadd [#allocation6], 0
          %s226 = sshll.u32 %s2, 4
          %s227 = int_to_ptr.vmem [resolvable:$true] %s226
          %229 = dma.vmem_to_smem %s227, 128, [#allocation5], [#allocation6]
        $region20: #{block_forward.1} parent=11 // pred_fallthru
          _
        // Predicated region
        $region21: #{block_forward.1} parent=11 // pred_check
          %p230 = pneg %p106
        $region22: #{block_forward.1} parent=11 // pred_check_branch
          %232 = sbr.rel (%p230) target = $region24
        $region23: #{block_forward.1} parent=11 // pred_region
          %234 = vsyncadd [#allocation6], 0
          %s236 = sshll.u32 %s3, 4
          %s237 = int_to_ptr.vmem [resolvable:$true] %s236
          %239 = dma.vmem_to_smem %s237, 16, [#allocation7], [#allocation6]
        $region24: #{block_forward.1} parent=11 // pred_fallthru
          _
        // Predicated region
        $region25: #{block_forward.1} parent=11 // pred_check
          %p240 = pneg %p127
        $region26: #{block_forward.1} parent=11 // pred_check_branch
          %242 = sbr.rel (%p240) target = $region28
        $region27: #{block_forward.1} parent=11 // pred_region
          %244 = vsyncadd [#allocation9], 0
          %s246 = sshll.u32 %s4, 4
          %s247 = int_to_ptr.vmem [resolvable:$true] %s246
          %249 = dma.vmem_to_smem %s247, 128, [#allocation8], [#allocation9]
        $region28: #{block_forward.1} parent=11 // pred_fallthru
          _
        // Predicated region
        $region29: #{block_forward.1} parent=11 // pred_check
          %p250 = pneg %p148
        $region30: #{block_forward.1} parent=11 // pred_check_branch
          %252 = sbr.rel (%p250) target = $region32
        $region31: #{block_forward.1} parent=11 // pred_region
          %254 = vsyncadd [#allocation9], 0
          %s256 = sshll.u32 %s5, 4
          %s257 = int_to_ptr.vmem [resolvable:$true] %s256
          %259 = dma.vmem_to_smem %s257, 16, [#allocation10], [#allocation9]
        $region32: #{block_forward.1} parent=11 // pred_fallthru
          _
        // Predicated region
        $region33: #{block_forward.1} parent=11 // pred_check
          %p260 = pneg %p169
        $region34: #{block_forward.1} parent=11 // pred_check_branch
          %262 = sbr.rel (%p260) target = $region36
        $region35: #{block_forward.1} parent=11 // pred_region
          %264 = vsyncadd [#allocation12], 0
          %s266 = sshll.u32 %s6, 4
          %s267 = int_to_ptr.vmem [resolvable:$true] %s266
          %269 = dma.vmem_to_smem %s267, 16, [#allocation11], [#allocation12]
        $region36: #{block_forward.1} parent=11 // pred_fallthru
          _
      $region12: #{block_forward.1} parent=5 // pred_fallthru
        _
      %p270 = scmp.lt.s32.totalorder %s17, 4
      // Predicated region
      $region37: #{block_forward.1} parent=5 // pred_check
        %p271 = pneg %p270
      $region38: #{block_forward.1} parent=5 // pred_check_branch
        %273 = sbr.rel (%p271) target = $region40
      $region39: #{block_forward.1} parent=5 // pred_region
        // Predicated region
        $region41: #{block_forward.1} parent=39 // pred_check
          %p274 = pneg %p37
        $region42: #{block_forward.1} parent=39 // pred_check_branch
          %276 = sbr.rel (%p274) target = $region44
        $region43: #{block_forward.1} parent=39 // pred_region
          %s277 = sand.u32 %s27, 1
          %s278 = sand.u32 %s27, 1
          %s279 = smul.addr %s278, 128
          %s280 = scalar_lea.vmem [#allocation2], %s279
          %s281 = smul.u32 2, %s17
          %s282 = smul.addr %s281, 8
          %s283 = scalar_lea.vmem %s0, %s282
          // Predicated region
          $region45: #{block_forward.1} parent=43 // pred_check
            _
          $region46: #{block_forward.1} parent=43 // pred_check_branch
            %285 = sbr.rel (0) target = $region48
          $region47: #{block_forward.1} parent=43 // pred_region
            // Predicated region
            $region49: #{block_forward.1} parent=47 // pred_check
              _
            $region50: #{block_forward.1} parent=47 // pred_check_branch
              %287 = sbr.rel (0) target = $region52
            $region51: #{block_forward.1} parent=47 // pred_region
              loop: start=0, step=1, limit=1
              $region53: #{block_forward.1} parent=51 // loop_pre_header
                _
              $region54: #{block_forward.1} parent=51 // loop_header
                %s289 = sphi 0, %s293
                %p290 = scmp.ge.s32.totalorder %s289, 1
                %s294 = sphi %s283, %s283
                %s295 = sphi %s280, %s280
              $region55: #{block_forward.1} parent=51 // loop_header_branch
                %292 = sbr.rel (%p290) target = $region59
              $region56: #{block_forward.1} parent=51 // loop_body
                %v296 = vld [vmem:[%s294] sm:$0xff]
                %297 = vst [vmem:[%s295] sm:$0xff] %v296
                %v298 = vld [vmem:[%s294 + $0x8] sm:$0xff]
                %299 = vst [vmem:[%s295 + $0x8] sm:$0xff] %v298
                %v300 = vld [vmem:[%s294 + $0x40] sm:$0xff]
                %301 = vst [vmem:[%s295 + $0x10] sm:$0xff] %v300
                %v302 = vld [vmem:[%s294 + $0x48] sm:$0xff]
                %303 = vst [vmem:[%s295 + $0x18] sm:$0xff] %v302
                %v304 = vld [vmem:[%s294 + $0x80] sm:$0xff]
                %305 = vst [vmem:[%s295 + $0x20] sm:$0xff] %v304
                %v306 = vld [vmem:[%s294 + $0x88] sm:$0xff]
                %307 = vst [vmem:[%s295 + $0x28] sm:$0xff] %v306
                %v308 = vld [vmem:[%s294 + $0xc0] sm:$0xff]
                %309 = vst [vmem:[%s295 + $0x30] sm:$0xff] %v308
                %v310 = vld [vmem:[%s294 + $0xc8] sm:$0xff]
                %311 = vst [vmem:[%s295 + $0x38] sm:$0xff] %v310
                %v312 = vld [vmem:[%s294 + $0x100] sm:$0xff]
                %313 = vst [vmem:[%s295 + $0x40] sm:$0xff] %v312
                %v314 = vld [vmem:[%s294 + $0x108] sm:$0xff]
                %315 = vst [vmem:[%s295 + $0x48] sm:$0xff] %v314
                %v316 = vld [vmem:[%s294 + $0x140] sm:$0xff]
                %317 = vst [vmem:[%s295 + $0x50] sm:$0xff] %v316
                %v318 = vld [vmem:[%s294 + $0x148] sm:$0xff]
                %319 = vst [vmem:[%s295 + $0x58] sm:$0xff] %v318
                %v320 = vld [vmem:[%s294 + $0x180] sm:$0xff]
                %321 = vst [vmem:[%s295 + $0x60] sm:$0xff] %v320
                %v322 = vld [vmem:[%s294 + $0x188] sm:$0xff]
                %323 = vst [vmem:[%s295 + $0x68] sm:$0xff] %v322
                %v324 = vld [vmem:[%s294 + $0x1c0] sm:$0xff]
                %325 = vst [vmem:[%s295 + $0x70] sm:$0xff] %v324
                %v326 = vld [vmem:[%s294 + $0x1c8] sm:$0xff]
                %327 = vst [vmem:[%s295 + $0x78] sm:$0xff] %v326
              $region57: #{block_forward.1} parent=51 // loop_footer
                %s293 = sadd.s32 1, %s289
              $region58: #{block_forward.1} parent=51 // loop_footer_branch
                %288 = sbr.rel target = $region54
              $region59: #{block_forward.1} parent=51 // loop_exit
                _
            $region52: #{block_forward.1} parent=47 // pred_fallthru
              _
            // Predicated region
            $region60: #{block_forward.1} parent=47 // pred_check
              _
            $region61: #{block_forward.1} parent=47 // pred_check_branch
              %329 = sbr.rel target = $region63
            $region62: #{block_forward.1} parent=47 // pred_region
              _
            $region63: #{block_forward.1} parent=47 // pred_fallthru
              _
          $region48: #{block_forward.1} parent=43 // pred_fallthru
            _
          %330 = vnop
        $region44: #{block_forward.1} parent=39 // pred_fallthru
          _
      $region40: #{block_forward.1} parent=5 // pred_fallthru
        _
      %p331 = scmp.le.s32.totalorder 1, %s17
      %p332 = scmp.lt.s32.totalorder %s17, 5
      %p333 = pnand %p331, %p332
      %p334 = pneg %p333
      // Predicated region
      $region64: #{block_forward.1} parent=5 // pred_check
        _
      $region65: #{block_forward.1} parent=5 // pred_check_branch
        %336 = sbr.rel (%p333) target = $region67
      $region66: #{block_forward.1} parent=5 // pred_region
        %s337 = ssub.s32 %s17, 1
        %s338 = sand.u32 %s30, 1
        %s339 = sand.u32 %s30, 1
        %s340 = smul.addr %s339, 128
        %s341 = scalar_lea.vmem [#allocation2], %s340
        // Predicated region
        $region68: #{block_forward.1} parent=66 // pred_check
          %p342 = pneg %p43
        $region69: #{block_forward.1} parent=66 // pred_check_branch
          %344 = sbr.rel (%p342) target = $region71
        $region70: #{block_forward.1} parent=66 // pred_region
          _
        $region71: #{block_forward.1} parent=66 // pred_fallthru
          _
        // Predicated region
        $region72: #{block_forward.1} parent=66 // pred_check
          %p345 = pneg %p64
        $region73: #{block_forward.1} parent=66 // pred_check_branch
          %347 = sbr.rel (%p345) target = $region75
        $region74: #{block_forward.1} parent=66 // pred_region
          %349 = dma.done [#allocation4], 128
        $region75: #{block_forward.1} parent=66 // pred_fallthru
          _
        // Predicated region
        $region76: #{block_forward.1} parent=66 // pred_check
          %p350 = pneg %p85
        $region77: #{block_forward.1} parent=66 // pred_check_branch
          %352 = sbr.rel (%p350) target = $region79
        $region78: #{block_forward.1} parent=66 // pred_region
          %354 = dma.done [#allocation6], 128
        $region79: #{block_forward.1} parent=66 // pred_fallthru
          _
        // Predicated region
        $region80: #{block_forward.1} parent=66 // pred_check
          %p355 = pneg %p106
        $region81: #{block_forward.1} parent=66 // pred_check_branch
          %357 = sbr.rel (%p355) target = $region83
        $region82: #{block_forward.1} parent=66 // pred_region
          %359 = dma.done [#allocation6], 16
        $region83: #{block_forward.1} parent=66 // pred_fallthru
          _
        // Predicated region
        $region84: #{block_forward.1} parent=66 // pred_check
          %p360 = pneg %p127
        $region85: #{block_forward.1} parent=66 // pred_check_branch
          %362 = sbr.rel (%p360) target = $region87
        $region86: #{block_forward.1} parent=66 // pred_region
          %364 = dma.done [#allocation9], 128
        $region87: #{block_forward.1} parent=66 // pred_fallthru
          _
        // Predicated region
        $region88: #{block_forward.1} parent=66 // pred_check
          %p365 = pneg %p148
        $region89: #{block_forward.1} parent=66 // pred_check_branch
          %367 = sbr.rel (%p365) target = $region91
        $region90: #{block_forward.1} parent=66 // pred_region
          %369 = dma.done [#allocation9], 16
        $region91: #{block_forward.1} parent=66 // pred_fallthru
          _
        // Predicated region
        $region92: #{block_forward.1} parent=66 // pred_check
          %p370 = pneg %p169
        $region93: #{block_forward.1} parent=66 // pred_check_branch
          %372 = sbr.rel (%p370) target = $region95
        $region94: #{block_forward.1} parent=66 // pred_region
          %374 = dma.done [#allocation12], 16
        $region95: #{block_forward.1} parent=66 // pred_fallthru
          _
        %375 = sfence
        %s376 = sand.u32 %s30, 1
        %s377 = sand.u32 %s30, 1
        %s378 = smul.addr %s377, 128
        %s379 = scalar_lea.vmem [#allocation2], %s378
        %p380 = pneg %p43
        %p381 = pneg %p40
        %p382 = pneg %p64
        %p383 = pneg %p61
        %p384 = pneg %p85
        %p385 = pneg %p82
        %p386 = pneg %p106
        %p387 = pneg %p103
        %p388 = pneg %p127
        %p389 = pneg %p124
        %p390 = pneg %p148
        %p391 = pneg %p145
        %p392 = pneg %p169
        %p393 = pneg %p166
        %p394 = pneg %p195
        %p395 = pneg %p192
        %s396 = sand.u32 %s182, 1
        %s397 = sand.u32 %s182, 1
        %s398 = smul.addr %s397, 128
        %s399 = scalar_lea.vmem [#allocation13], %s398
        %s400 = smul.u32 2, %s22
        %s401 = smul.u32 2, %s22
        %s402 = sld [smem:[#allocation11]]
        %s403 = sld [smem:[#allocation11 + $0x1]]
        %s404 = sld [smem:[#allocation11 + $0x2]]
        %s405 = sld [smem:[#allocation11 + $0x3]]
        %v406 = vld [vmem:[%s341] sm:$0xff]
        %v407 = vld [vmem:[%s341 + $0x8] sm:$0xff]
        %s408 = scalar_lea.vmem %s341, 16 [#allocation2]
        %v409 = vld [vmem:[%s408] sm:$0xff]
        %v410 = vld [vmem:[%s408 + $0x8] sm:$0xff]
        %s411 = scalar_lea.vmem %s341, 32 [#allocation2]
        %v412 = vld [vmem:[%s411] sm:$0xff]
        %v413 = vld [vmem:[%s411 + $0x8] sm:$0xff]
        %s414 = scalar_lea.vmem %s341, 48 [#allocation2]
        %v415 = vld [vmem:[%s414] sm:$0xff]
        %v416 = vld [vmem:[%s414 + $0x8] sm:$0xff]
        %s417 = scalar_lea.vmem %s341, 64 [#allocation2]
        %v418 = vld [vmem:[%s417] sm:$0xff]
        %v419 = vld [vmem:[%s417 + $0x8] sm:$0xff]
        %s420 = scalar_lea.vmem %s341, 80 [#allocation2]
        %v421 = vld [vmem:[%s420] sm:$0xff]
        %v422 = vld [vmem:[%s420 + $0x8] sm:$0xff]
        %s423 = scalar_lea.vmem %s341, 96 [#allocation2]
        %v424 = vld [vmem:[%s423] sm:$0xff]
        %v425 = vld [vmem:[%s423 + $0x8] sm:$0xff]
        %s426 = scalar_lea.vmem %s341, 112 [#allocation2]
        %v427 = vld [vmem:[%s426] sm:$0xff]
        %v428 = vld [vmem:[%s426 + $0x8] sm:$0xff]
        %v429 = vadd.f32 %v406, 0.0
        %v430 = vadd.f32 %v407, 0.0
        %v431 = vadd.f32 %v429, %v409
        %v432 = vadd.f32 %v430, %v410
        %v433 = vadd.f32 %v431, %v412
        %v434 = vadd.f32 %v432, %v413
        %v435 = vadd.f32 %v433, %v415
        %v436 = vadd.f32 %v434, %v416
        %v437 = vadd.f32 %v435, %v418
        %v438 = vadd.f32 %v436, %v419
        %v439 = vadd.f32 %v437, %v421
        %v440 = vadd.f32 %v438, %v422
        %v441 = vadd.f32 %v439, %v424
        %v442 = vadd.f32 %v440, %v425
        %v443 = vadd.f32 %v441, %v427
        %v444 = vadd.f32 %v442, %v428
        %v445 = vmul.f32 %v443, 0.125
        %v446 = vmul.f32 %v444, 0.125
        %v447 = vsub.f32 %v406, %v445
        %v448 = vsub.f32 %v407, %v446
        %v449 = vmul.f32 %v447, %v447
        %v450 = vmul.f32 %v448, %v448
        %v451 = vadd.f32 %v449, 0.0
        %v452 = vadd.f32 %v450, 0.0
        %v453 = vsub.f32 %v409, %v445
        %v454 = vsub.f32 %v410, %v446
        %v455 = vmul.f32 %v453, %v453
        %v456 = vmul.f32 %v454, %v454
        %v457 = vadd.f32 %v451, %v455
        %v458 = vadd.f32 %v452, %v456
        %v459 = vsub.f32 %v412, %v445
        %v460 = vsub.f32 %v413, %v446
        %v461 = vmul.f32 %v459, %v459
        %v462 = vmul.f32 %v460, %v460
        %v463 = vadd.f32 %v457, %v461
        %v464 = vadd.f32 %v458, %v462
        %v465 = vsub.f32 %v415, %v445
        %v466 = vsub.f32 %v416, %v446
        %v467 = vmul.f32 %v465, %v465
        %v468 = vmul.f32 %v466, %v466
        %v469 = vadd.f32 %v463, %v467
        %v470 = vadd.f32 %v464, %v468
        %v471 = vsub.f32 %v418, %v445
        %v472 = vsub.f32 %v419, %v446
        %v473 = vmul.f32 %v471, %v471
        %v474 = vmul.f32 %v472, %v472
        %v475 = vadd.f32 %v469, %v473
        %v476 = vadd.f32 %v470, %v474
        %v477 = vsub.f32 %v421, %v445
        %v478 = vsub.f32 %v422, %v446
        %v479 = vmul.f32 %v477, %v477
        %v480 = vmul.f32 %v478, %v478
        %v481 = vadd.f32 %v475, %v479
        %v482 = vadd.f32 %v476, %v480
        %v483 = vsub.f32 %v424, %v445
        %v484 = vsub.f32 %v425, %v446
        %v485 = vmul.f32 %v483, %v483
        %v486 = vmul.f32 %v484, %v484
        %v487 = vadd.f32 %v481, %v485
        %v488 = vadd.f32 %v482, %v486
        %v489 = vsub.f32 %v427, %v445
        %v490 = vsub.f32 %v428, %v446
        %v491 = vmul.f32 %v489, %v489
        %v492 = vmul.f32 %v490, %v490
        %v493 = vadd.f32 %v487, %v491
        %v494 = vadd.f32 %v488, %v492
        %v495 = vmul.f32 %v493, 0.14285715
        %v496 = vmul.f32 %v494, 0.14285715
        %v497 = vrsqrt.pop %v495
        %v498 = vmul.f32 %v497, %v495
        %v499 = vmul.f32 %v498, %v497
        %v500 = vmul.f32 0.5, %v499
        %v501 = vsub.f32 1.5, %v500
        %v502 = vmul.f32 %v497, %v501
        %v503 = vmul.f32 %v495, %v502
        %vm504 = vcmp.eq.f32.partialorder %v495, inf
        %v505 = vsel %vm504, %v495, %v503
        %vm506 = vcmp.eq.f32.partialorder %v495, 0.0
        %v507 = vand.u32 %v495, 2147483648
        %v508 = vsel %vm506, %v507, %v505
        %v509 = vrsqrt.pop %v496
        %v510 = vmul.f32 %v509, %v496
        %v511 = vmul.f32 %v510, %v509
        %v512 = vmul.f32 0.5, %v511
        %v513 = vsub.f32 1.5, %v512
        %v514 = vmul.f32 %v509, %v513
        %v515 = vmul.f32 %v496, %v514
        %vm516 = vcmp.eq.f32.partialorder %v496, inf
        %v517 = vsel %vm516, %v496, %v515
        %vm518 = vcmp.eq.f32.partialorder %v496, 0.0
        %v519 = vand.u32 %v496, 2147483648
        %v520 = vsel %vm518, %v519, %v517
        %v521 = vadd.f32 %v508, 1e-06
        %v522 = vadd.f32 %v520, 1e-06
        %v523 = vrcp.pop %v521
        %v524 = vmul.f32 %v521, %v523
        %v525 = vsub.f32 1.0, %v524
        %v526 = vmul.f32 %v523, %v525
        %v527 = vadd.f32 %v523, %v526
        %vm528 = vweird.f32 %v521
        %vm529 = vweird.f32 %v523
        %vm530 = vmor %vm528, %vm529
        %v531 = vsel %vm530, %v523, %v527
        %v532 = vand.u32 2147483647, %v521
        %vm533 = vcmp.eq.f32.partialorder %v532, 8.507059e+37
        %v534 = vand.u32 %v521, 2147483648
        %v535 = vor.u32 1.1754944e-38, %v534
        %v536 = vsel %vm533, %v535, %v531
        %v537 = vmul.f32 1.0, %v536
        %v538 = vrcp.pop %v522
        %v539 = vmul.f32 %v522, %v538
        %v540 = vsub.f32 1.0, %v539
        %v541 = vmul.f32 %v538, %v540
        %v542 = vadd.f32 %v538, %v541
        %vm543 = vweird.f32 %v522
        %vm544 = vweird.f32 %v538
        %vm545 = vmor %vm543, %vm544
        %v546 = vsel %vm545, %v538, %v542
        %v547 = vand.u32 2147483647, %v522
        %vm548 = vcmp.eq.f32.partialorder %v547, 8.507059e+37
        %v549 = vand.u32 %v522, 2147483648
        %v550 = vor.u32 1.1754944e-38, %v549
        %v551 = vsel %vm548, %v550, %v546
        %v552 = vmul.f32 1.0, %v551
        %v553 = vstv %s402
        %v554 = vmul.f32 %v553, %v447
        %v555 = vmul.f32 %v553, %v448
        %v556 = vmul.f32 %v554, %v537
        %v557 = vmul.f32 %v555, %v552
        %v558 = vstv %s403
        %v559 = vadd.f32 %v556, %v558
        %v560 = vadd.f32 %v557, %v558
        %v561 = vmul.f32 %v553, %v453
        %v562 = vmul.f32 %v553, %v454
        %v563 = vmul.f32 %v561, %v537
        %v564 = vmul.f32 %v562, %v552
        %v565 = vadd.f32 %v563, %v558
        %v566 = vadd.f32 %v564, %v558
        %v567 = vmul.f32 %v553, %v459
        %v568 = vmul.f32 %v553, %v460
        %v569 = vmul.f32 %v567, %v537
        %v570 = vmul.f32 %v568, %v552
        %v571 = vadd.f32 %v569, %v558
        %v572 = vadd.f32 %v570, %v558
        %v573 = vmul.f32 %v553, %v465
        %v574 = vmul.f32 %v553, %v466
        %v575 = vmul.f32 %v573, %v537
        %v576 = vmul.f32 %v574, %v552
        %v577 = vadd.f32 %v575, %v558
        %v578 = vadd.f32 %v576, %v558
        %v579 = vmul.f32 %v553, %v471
        %v580 = vmul.f32 %v553, %v472
        %v581 = vmul.f32 %v579, %v537
        %v582 = vmul.f32 %v580, %v552
        %v583 = vadd.f32 %v581, %v558
        %v584 = vadd.f32 %v582, %v558
        %v585 = vmul.f32 %v553, %v477
        %v586 = vmul.f32 %v553, %v478
        %v587 = vmul.f32 %v585, %v537
        %v588 = vmul.f32 %v586, %v552
        %v589 = vadd.f32 %v587, %v558
        %v590 = vadd.f32 %v588, %v558
        %v591 = vmul.f32 %v553, %v483
        %v592 = vmul.f32 %v553, %v484
        %v593 = vmul.f32 %v591, %v537
        %v594 = vmul.f32 %v592, %v552
        %v595 = vadd.f32 %v593, %v558
        %v596 = vadd.f32 %v594, %v558
        %v597 = vmul.f32 %v553, %v489
        %v598 = vmul.f32 %v553, %v490
        %v599 = vmul.f32 %v597, %v537
        %v600 = vmul.f32 %v598, %v552
        %v601 = vadd.f32 %v599, %v558
        %v602 = vadd.f32 %v600, %v558
        %s603 = sld [smem:[#allocation3]]
        %v604 = vstv %s603
        %v605 = vmul.f32 %v559, %v604
        %v606 = vmul.f32 %v560, %v604
        %s607 = sld [smem:[#allocation3 + $0x80]]
        %v608 = vstv %s607
        %v609 = vmul.f32 %v565, %v608
        %v610 = vmul.f32 %v566, %v608
        %v611 = vadd.f32 %v605, %v609
        %v612 = vadd.f32 %v606, %v610
        %s613 = sld [smem:[#allocation3 + $0x100]]
        %v614 = vstv %s613
        %v615 = vmul.f32 %v571, %v614
        %v616 = vmul.f32 %v572, %v614
        %v617 = vadd.f32 %v611, %v615
        %v618 = vadd.f32 %v612, %v616
        %s619 = sld [smem:[#allocation3 + $0x180]]
        %v620 = vstv %s619
        %v621 = vmul.f32 %v577, %v620
        %v622 = vmul.f32 %v578, %v620
        %v623 = vadd.f32 %v617, %v621
        %v624 = vadd.f32 %v618, %v622
        %s625 = sld [smem:[#allocation3 + $0x200]]
        %v626 = vstv %s625
        %v627 = vmul.f32 %v583, %v626
        %v628 = vmul.f32 %v584, %v626
        %v629 = vadd.f32 %v623, %v627
        %v630 = vadd.f32 %v624, %v628
        %s631 = sld [smem:[#allocation3 + $0x280]]
        %v632 = vstv %s631
        %v633 = vmul.f32 %v589, %v632
        %v634 = vmul.f32 %v590, %v632
        %v635 = vadd.f32 %v629, %v633
        %v636 = vadd.f32 %v630, %v634
        %s637 = sld [smem:[#allocation3 + $0x300]]
        %v638 = vstv %s637
        %v639 = vmul.f32 %v595, %v638
        %v640 = vmul.f32 %v596, %v638
        %v641 = vadd.f32 %v635, %v639
        %v642 = vadd.f32 %v636, %v640
        %s643 = sld [smem:[#allocation3 + $0x380]]
        %v644 = vstv %s643
        %v645 = vmul.f32 %v601, %v644
        %v646 = vmul.f32 %v602, %v644
        %v647 = vadd.f32 %v641, %v645
        %v648 = vadd.f32 %v642, %v646
        %s649 = sld [smem:[#allocation3 + $0x1]]
        %v650 = vstv %s649
        %v651 = vmul.f32 %v559, %v650
        %v652 = vmul.f32 %v560, %v650
        %s653 = sld [smem:[#allocation3 + $0x81]]
        %v654 = vstv %s653
        %v655 = vmul.f32 %v565, %v654
        %v656 = vmul.f32 %v566, %v654
        %v657 = vadd.f32 %v651, %v655
        %v658 = vadd.f32 %v652, %v656
        %s659 = sld [smem:[#allocation3 + $0x101]]
        %v660 = vstv %s659
        %v661 = vmul.f32 %v571, %v660
        %v662 = vmul.f32 %v572, %v660
        %v663 = vadd.f32 %v657, %v661
        %v664 = vadd.f32 %v658, %v662
        %s665 = sld [smem:[#allocation3 + $0x181]]
        %v666 = vstv %s665
        %v667 = vmul.f32 %v577, %v666
        %v668 = vmul.f32 %v578, %v666
        %v669 = vadd.f32 %v663, %v667
        %v670 = vadd.f32 %v664, %v668
        %s671 = sld [smem:[#allocation3 + $0x201]]
        %v672 = vstv %s671
        %v673 = vmul.f32 %v583, %v672
        %v674 = vmul.f32 %v584, %v672
        %v675 = vadd.f32 %v669, %v673
        %v676 = vadd.f32 %v670, %v674
        %s677 = sld [smem:[#allocation3 + $0x281]]
        %v678 = vstv %s677
        %v679 = vmul.f32 %v589, %v678
        %v680 = vmul.f32 %v590, %v678
        %v681 = vadd.f32 %v675, %v679
        %v682 = vadd.f32 %v676, %v680
        %s683 = sld [smem:[#allocation3 + $0x301]]
        %v684 = vstv %s683
        %v685 = vmul.f32 %v595, %v684
        %v686 = vmul.f32 %v596, %v684
        %v687 = vadd.f32 %v681, %v685
        %v688 = vadd.f32 %v682, %v686
        %s689 = sld [smem:[#allocation3 + $0x381]]
        %v690 = vstv %s689
        %v691 = vmul.f32 %v601, %v690
        %v692 = vmul.f32 %v602, %v690
        %v693 = vadd.f32 %v687, %v691
        %v694 = vadd.f32 %v688, %v692
        %s695 = sld [smem:[#allocation3 + $0x2]]
        %v696 = vstv %s695
        %v697 = vmul.f32 %v559, %v696
        %v698 = vmul.f32 %v560, %v696
        %s699 = sld [smem:[#allocation3 + $0x82]]
        %v700 = vstv %s699
        %v701 = vmul.f32 %v565, %v700
        %v702 = vmul.f32 %v566, %v700
        %v703 = vadd.f32 %v697, %v701
        %v704 = vadd.f32 %v698, %v702
        %s705 = sld [smem:[#allocation3 + $0x102]]
        %v706 = vstv %s705
        %v707 = vmul.f32 %v571, %v706
        %v708 = vmul.f32 %v572, %v706
        %v709 = vadd.f32 %v703, %v707
        %v710 = vadd.f32 %v704, %v708
        %s711 = sld [smem:[#allocation3 + $0x182]]
        %v712 = vstv %s711
        %v713 = vmul.f32 %v577, %v712
        %v714 = vmul.f32 %v578, %v712
        %v715 = vadd.f32 %v709, %v713
        %v716 = vadd.f32 %v710, %v714
        %s717 = sld [smem:[#allocation3 + $0x202]]
        %v718 = vstv %s717
        %v719 = vmul.f32 %v583, %v718
        %v720 = vmul.f32 %v584, %v718
        %v721 = vadd.f32 %v715, %v719
        %v722 = vadd.f32 %v716, %v720
        %s723 = sld [smem:[#allocation3 + $0x282]]
        %v724 = vstv %s723
        %v725 = vmul.f32 %v589, %v724
        %v726 = vmul.f32 %v590, %v724
        %v727 = vadd.f32 %v721, %v725
        %v728 = vadd.f32 %v722, %v726
        %s729 = sld [smem:[#allocation3 + $0x302]]
        %v730 = vstv %s729
        %v731 = vmul.f32 %v595, %v730
        %v732 = vmul.f32 %v596, %v730
        %v733 = vadd.f32 %v727, %v731
        %v734 = vadd.f32 %v728, %v732
        %s735 = sld [smem:[#allocation3 + $0x382]]
        %v736 = vstv %s735
        %v737 = vmul.f32 %v601, %v736
        %v738 = vmul.f32 %v602, %v736
        %v739 = vadd.f32 %v733, %v737
        %v740 = vadd.f32 %v734, %v738
        %s741 = sld [smem:[#allocation3 + $0x3]]
        %v742 = vstv %s741
        %v743 = vmul.f32 %v559, %v742
        %v744 = vmul.f32 %v560, %v742
        %s745 = sld [smem:[#allocation3 + $0x83]]
        %v746 = vstv %s745
        %v747 = vmul.f32 %v565, %v746
        %v748 = vmul.f32 %v566, %v746
        %v749 = vadd.f32 %v743, %v747
        %v750 = vadd.f32 %v744, %v748
        %s751 = sld [smem:[#allocation3 + $0x103]]
        %v752 = vstv %s751
        %v753 = vmul.f32 %v571, %v752
        %v754 = vmul.f32 %v572, %v752
        %v755 = vadd.f32 %v749, %v753
        %v756 = vadd.f32 %v750, %v754
        %s757 = sld [smem:[#allocation3 + $0x183]]
        %v758 = vstv %s757
        %v759 = vmul.f32 %v577, %v758
        %v760 = vmul.f32 %v578, %v758
        %v761 = vadd.f32 %v755, %v759
        %v762 = vadd.f32 %v756, %v760
        %s763 = sld [smem:[#allocation3 + $0x203]]
        %v764 = vstv %s763
        %v765 = vmul.f32 %v583, %v764
        %v766 = vmul.f32 %v584, %v764
        %v767 = vadd.f32 %v761, %v765
        %v768 = vadd.f32 %v762, %v766
        %s769 = sld [smem:[#allocation3 + $0x283]]
        %v770 = vstv %s769
        %v771 = vmul.f32 %v589, %v770
        %v772 = vmul.f32 %v590, %v770
        %v773 = vadd.f32 %v767, %v771
        %v774 = vadd.f32 %v768, %v772
        %s775 = sld [smem:[#allocation3 + $0x303]]
        %v776 = vstv %s775
        %v777 = vmul.f32 %v595, %v776
        %v778 = vmul.f32 %v596, %v776
        %v779 = vadd.f32 %v773, %v777
        %v780 = vadd.f32 %v774, %v778
        %s781 = sld [smem:[#allocation3 + $0x383]]
        %v782 = vstv %s781
        %v783 = vmul.f32 %v601, %v782
        %v784 = vmul.f32 %v602, %v782
        %v785 = vadd.f32 %v779, %v783
        %v786 = vadd.f32 %v780, %v784
        %s787 = sld [smem:[#allocation3 + $0x4]]
        %v788 = vstv %s787
        %v789 = vmul.f32 %v559, %v788
        %v790 = vmul.f32 %v560, %v788
        %s791 = sld [smem:[#allocation3 + $0x84]]
        %v792 = vstv %s791
        %v793 = vmul.f32 %v565, %v792
        %v794 = vmul.f32 %v566, %v792
        %v795 = vadd.f32 %v789, %v793
        %v796 = vadd.f32 %v790, %v794
        %s797 = sld [smem:[#allocation3 + $0x104]]
        %v798 = vstv %s797
        %v799 = vmul.f32 %v571, %v798
        %v800 = vmul.f32 %v572, %v798
        %v801 = vadd.f32 %v795, %v799
        %v802 = vadd.f32 %v796, %v800
        %s803 = sld [smem:[#allocation3 + $0x184]]
        %v804 = vstv %s803
        %v805 = vmul.f32 %v577, %v804
        %v806 = vmul.f32 %v578, %v804
        %v807 = vadd.f32 %v801, %v805
        %v808 = vadd.f32 %v802, %v806
        %s809 = sld [smem:[#allocation3 + $0x204]]
        %v810 = vstv %s809
        %v811 = vmul.f32 %v583, %v810
        %v812 = vmul.f32 %v584, %v810
        %v813 = vadd.f32 %v807, %v811
        %v814 = vadd.f32 %v808, %v812
        %s815 = sld [smem:[#allocation3 + $0x284]]
        %v816 = vstv %s815
        %v817 = vmul.f32 %v589, %v816
        %v818 = vmul.f32 %v590, %v816
        %v819 = vadd.f32 %v813, %v817
        %v820 = vadd.f32 %v814, %v818
        %s821 = sld [smem:[#allocation3 + $0x304]]
        %v822 = vstv %s821
        %v823 = vmul.f32 %v595, %v822
        %v824 = vmul.f32 %v596, %v822
        %v825 = vadd.f32 %v819, %v823
        %v826 = vadd.f32 %v820, %v824
        %s827 = sld [smem:[#allocation3 + $0x384]]
        %v828 = vstv %s827
        %v829 = vmul.f32 %v601, %v828
        %v830 = vmul.f32 %v602, %v828
        %v831 = vadd.f32 %v825, %v829
        %v832 = vadd.f32 %v826, %v830
        %s833 = sld [smem:[#allocation3 + $0x5]]
        %v834 = vstv %s833
        %v835 = vmul.f32 %v559, %v834
        %v836 = vmul.f32 %v560, %v834
        %s837 = sld [smem:[#allocation3 + $0x85]]
        %v838 = vstv %s837
        %v839 = vmul.f32 %v565, %v838
        %v840 = vmul.f32 %v566, %v838
        %v841 = vadd.f32 %v835, %v839
        %v842 = vadd.f32 %v836, %v840
        %s843 = sld [smem:[#allocation3 + $0x105]]
        %v844 = vstv %s843
        %v845 = vmul.f32 %v571, %v844
        %v846 = vmul.f32 %v572, %v844
        %v847 = vadd.f32 %v841, %v845
        %v848 = vadd.f32 %v842, %v846
        %s849 = sld [smem:[#allocation3 + $0x185]]
        %v850 = vstv %s849
        %v851 = vmul.f32 %v577, %v850
        %v852 = vmul.f32 %v578, %v850
        %v853 = vadd.f32 %v847, %v851
        %v854 = vadd.f32 %v848, %v852
        %s855 = sld [smem:[#allocation3 + $0x205]]
        %v856 = vstv %s855
        %v857 = vmul.f32 %v583, %v856
        %v858 = vmul.f32 %v584, %v856
        %v859 = vadd.f32 %v853, %v857
        %v860 = vadd.f32 %v854, %v858
        %s861 = sld [smem:[#allocation3 + $0x285]]
        %v862 = vstv %s861
        %v863 = vmul.f32 %v589, %v862
        %v864 = vmul.f32 %v590, %v862
        %v865 = vadd.f32 %v859, %v863
        %v866 = vadd.f32 %v860, %v864
        %s867 = sld [smem:[#allocation3 + $0x305]]
        %v868 = vstv %s867
        %v869 = vmul.f32 %v595, %v868
        %v870 = vmul.f32 %v596, %v868
        %v871 = vadd.f32 %v865, %v869
        %v872 = vadd.f32 %v866, %v870
        %s873 = sld [smem:[#allocation3 + $0x385]]
        %v874 = vstv %s873
        %v875 = vmul.f32 %v601, %v874
        %v876 = vmul.f32 %v602, %v874
        %v877 = vadd.f32 %v871, %v875
        %v878 = vadd.f32 %v872, %v876
        %s879 = sld [smem:[#allocation3 + $0x6]]
        %v880 = vstv %s879
        %v881 = vmul.f32 %v559, %v880
        %v882 = vmul.f32 %v560, %v880
        %s883 = sld [smem:[#allocation3 + $0x86]]
        %v884 = vstv %s883
        %v885 = vmul.f32 %v565, %v884
        %v886 = vmul.f32 %v566, %v884
        %v887 = vadd.f32 %v881, %v885
        %v888 = vadd.f32 %v882, %v886
        %s889 = sld [smem:[#allocation3 + $0x106]]
        %v890 = vstv %s889
        %v891 = vmul.f32 %v571, %v890
        %v892 = vmul.f32 %v572, %v890
        %v893 = vadd.f32 %v887, %v891
        %v894 = vadd.f32 %v888, %v892
        %s895 = sld [smem:[#allocation3 + $0x186]]
        %v896 = vstv %s895
        %v897 = vmul.f32 %v577, %v896
        %v898 = vmul.f32 %v578, %v896
        %v899 = vadd.f32 %v893, %v897
        %v900 = vadd.f32 %v894, %v898
        %s901 = sld [smem:[#allocation3 + $0x206]]
        %v902 = vstv %s901
        %v903 = vmul.f32 %v583, %v902
        %v904 = vmul.f32 %v584, %v902
        %v905 = vadd.f32 %v899, %v903
        %v906 = vadd.f32 %v900, %v904
        %s907 = sld [smem:[#allocation3 + $0x286]]
        %v908 = vstv %s907
        %v909 = vmul.f32 %v589, %v908
        %v910 = vmul.f32 %v590, %v908
        %v911 = vadd.f32 %v905, %v909
        %v912 = vadd.f32 %v906, %v910
        %s913 = sld [smem:[#allocation3 + $0x306]]
        %v914 = vstv %s913
        %v915 = vmul.f32 %v595, %v914
        %v916 = vmul.f32 %v596, %v914
        %v917 = vadd.f32 %v911, %v915
        %v918 = vadd.f32 %v912, %v916
        %s919 = sld [smem:[#allocation3 + $0x386]]
        %v920 = vstv %s919
        %v921 = vmul.f32 %v601, %v920
        %v922 = vmul.f32 %v602, %v920
        %v923 = vadd.f32 %v917, %v921
        %v924 = vadd.f32 %v918, %v922
        %s925 = sld [smem:[#allocation3 + $0x7]]
        %v926 = vstv %s925
        %v927 = vmul.f32 %v559, %v926
        %v928 = vmul.f32 %v560, %v926
        %s929 = sld [smem:[#allocation3 + $0x87]]
        %v930 = vstv %s929
        %v931 = vmul.f32 %v565, %v930
        %v932 = vmul.f32 %v566, %v930
        %v933 = vadd.f32 %v927, %v931
        %v934 = vadd.f32 %v928, %v932
        %s935 = sld [smem:[#allocation3 + $0x107]]
        %v936 = vstv %s935
        %v937 = vmul.f32 %v571, %v936
        %v938 = vmul.f32 %v572, %v936
        %v939 = vadd.f32 %v933, %v937
        %v940 = vadd.f32 %v934, %v938
        %s941 = sld [smem:[#allocation3 + $0x187]]
        %v942 = vstv %s941
        %v943 = vmul.f32 %v577, %v942
        %v944 = vmul.f32 %v578, %v942
        %v945 = vadd.f32 %v939, %v943
        %v946 = vadd.f32 %v940, %v944
        %s947 = sld [smem:[#allocation3 + $0x207]]
        %v948 = vstv %s947
        %v949 = vmul.f32 %v583, %v948
        %v950 = vmul.f32 %v584, %v948
        %v951 = vadd.f32 %v945, %v949
        %v952 = vadd.f32 %v946, %v950
        %s953 = sld [smem:[#allocation3 + $0x287]]
        %v954 = vstv %s953
        %v955 = vmul.f32 %v589, %v954
        %v956 = vmul.f32 %v590, %v954
        %v957 = vadd.f32 %v951, %v955
        %v958 = vadd.f32 %v952, %v956
        %s959 = sld [smem:[#allocation3 + $0x307]]
        %v960 = vstv %s959
        %v961 = vmul.f32 %v595, %v960
        %v962 = vmul.f32 %v596, %v960
        %v963 = vadd.f32 %v957, %v961
        %v964 = vadd.f32 %v958, %v962
        %s965 = sld [smem:[#allocation3 + $0x387]]
        %v966 = vstv %s965
        %v967 = vmul.f32 %v601, %v966
        %v968 = vmul.f32 %v602, %v966
        %v969 = vadd.f32 %v963, %v967
        %v970 = vadd.f32 %v964, %v968
        %s971 = sld [smem:[#allocation3 + $0x8]]
        %v972 = vstv %s971
        %v973 = vmul.f32 %v559, %v972
        %v974 = vmul.f32 %v560, %v972
        %s975 = sld [smem:[#allocation3 + $0x88]]
        %v976 = vstv %s975
        %v977 = vmul.f32 %v565, %v976
        %v978 = vmul.f32 %v566, %v976
        %v979 = vadd.f32 %v973, %v977
        %v980 = vadd.f32 %v974, %v978
        %s981 = sld [smem:[#allocation3 + $0x108]]
        %v982 = vstv %s981
        %v983 = vmul.f32 %v571, %v982
        %v984 = vmul.f32 %v572, %v982
        %v985 = vadd.f32 %v979, %v983
        %v986 = vadd.f32 %v980, %v984
        %s987 = sld [smem:[#allocation3 + $0x188]]
        %v988 = vstv %s987
        %v989 = vmul.f32 %v577, %v988
        %v990 = vmul.f32 %v578, %v988
        %v991 = vadd.f32 %v985, %v989
        %v992 = vadd.f32 %v986, %v990
        %s993 = sld [smem:[#allocation3 + $0x208]]
        %v994 = vstv %s993
        %v995 = vmul.f32 %v583, %v994
        %v996 = vmul.f32 %v584, %v994
        %v997 = vadd.f32 %v991, %v995
        %v998 = vadd.f32 %v992, %v996
        %s999 = sld [smem:[#allocation3 + $0x288]]
        %v1000 = vstv %s999
        %v1001 = vmul.f32 %v589, %v1000
        %v1002 = vmul.f32 %v590, %v1000
        %v1003 = vadd.f32 %v997, %v1001
        %v1004 = vadd.f32 %v998, %v1002
        %s1005 = sld [smem:[#allocation3 + $0x308]]
        %v1006 = vstv %s1005
        %v1007 = vmul.f32 %v595, %v1006
        %v1008 = vmul.f32 %v596, %v1006
        %v1009 = vadd.f32 %v1003, %v1007
        %v1010 = vadd.f32 %v1004, %v1008
        %s1011 = sld [smem:[#allocation3 + $0x388]]
        %v1012 = vstv %s1011
        %v1013 = vmul.f32 %v601, %v1012
        %v1014 = vmul.f32 %v602, %v1012
        %v1015 = vadd.f32 %v1009, %v1013
        %v1016 = vadd.f32 %v1010, %v1014
        %s1017 = sld [smem:[#allocation3 + $0x9]]
        %v1018 = vstv %s1017
        %v1019 = vmul.f32 %v559, %v1018
        %v1020 = vmul.f32 %v560, %v1018
        %s1021 = sld [smem:[#allocation3 + $0x89]]
        %v1022 = vstv %s1021
        %v1023 = vmul.f32 %v565, %v1022
        %v1024 = vmul.f32 %v566, %v1022
        %v1025 = vadd.f32 %v1019, %v1023
        %v1026 = vadd.f32 %v1020, %v1024
        %s1027 = sld [smem:[#allocation3 + $0x109]]
        %v1028 = vstv %s1027
        %v1029 = vmul.f32 %v571, %v1028
        %v1030 = vmul.f32 %v572, %v1028
        %v1031 = vadd.f32 %v1025, %v1029
        %v1032 = vadd.f32 %v1026, %v1030
        %s1033 = sld [smem:[#allocation3 + $0x189]]
        %v1034 = vstv %s1033
        %v1035 = vmul.f32 %v577, %v1034
        %v1036 = vmul.f32 %v578, %v1034
        %v1037 = vadd.f32 %v1031, %v1035
        %v1038 = vadd.f32 %v1032, %v1036
        %s1039 = sld [smem:[#allocation3 + $0x209]]
        %v1040 = vstv %s1039
        %v1041 = vmul.f32 %v583, %v1040
        %v1042 = vmul.f32 %v584, %v1040
        %v1043 = vadd.f32 %v1037, %v1041
        %v1044 = vadd.f32 %v1038, %v1042
        %s1045 = sld [smem:[#allocation3 + $0x289]]
        %v1046 = vstv %s1045
        %v1047 = vmul.f32 %v589, %v1046
        %v1048 = vmul.f32 %v590, %v1046
        %v1049 = vadd.f32 %v1043, %v1047
        %v1050 = vadd.f32 %v1044, %v1048
        %s1051 = sld [smem:[#allocation3 + $0x309]]
        %v1052 = vstv %s1051
        %v1053 = vmul.f32 %v595, %v1052
        %v1054 = vmul.f32 %v596, %v1052
        %v1055 = vadd.f32 %v1049, %v1053
        %v1056 = vadd.f32 %v1050, %v1054
        %s1057 = sld [smem:[#allocation3 + $0x389]]
        %v1058 = vstv %s1057
        %v1059 = vmul.f32 %v601, %v1058
        %v1060 = vmul.f32 %v602, %v1058
        %v1061 = vadd.f32 %v1055, %v1059
        %v1062 = vadd.f32 %v1056, %v1060
        %s1063 = sld [smem:[#allocation3 + $0xa]]
        %v1064 = vstv %s1063
        %v1065 = vmul.f32 %v559, %v1064
        %v1066 = vmul.f32 %v560, %v1064
        %s1067 = sld [smem:[#allocation3 + $0x8a]]
        %v1068 = vstv %s1067
        %v1069 = vmul.f32 %v565, %v1068
        %v1070 = vmul.f32 %v566, %v1068
        %v1071 = vadd.f32 %v1065, %v1069
        %v1072 = vadd.f32 %v1066, %v1070
        %s1073 = sld [smem:[#allocation3 + $0x10a]]
        %v1074 = vstv %s1073
        %v1075 = vmul.f32 %v571, %v1074
        %v1076 = vmul.f32 %v572, %v1074
        %v1077 = vadd.f32 %v1071, %v1075
        %v1078 = vadd.f32 %v1072, %v1076
        %s1079 = sld [smem:[#allocation3 + $0x18a]]
        %v1080 = vstv %s1079
        %v1081 = vmul.f32 %v577, %v1080
        %v1082 = vmul.f32 %v578, %v1080
        %v1083 = vadd.f32 %v1077, %v1081
        %v1084 = vadd.f32 %v1078, %v1082
        %s1085 = sld [smem:[#allocation3 + $0x20a]]
        %v1086 = vstv %s1085
        %v1087 = vmul.f32 %v583, %v1086
        %v1088 = vmul.f32 %v584, %v1086
        %v1089 = vadd.f32 %v1083, %v1087
        %v1090 = vadd.f32 %v1084, %v1088
        %s1091 = sld [smem:[#allocation3 + $0x28a]]
        %v1092 = vstv %s1091
        %v1093 = vmul.f32 %v589, %v1092
        %v1094 = vmul.f32 %v590, %v1092
        %v1095 = vadd.f32 %v1089, %v1093
        %v1096 = vadd.f32 %v1090, %v1094
        %s1097 = sld [smem:[#allocation3 + $0x30a]]
        %v1098 = vstv %s1097
        %v1099 = vmul.f32 %v595, %v1098
        %v1100 = vmul.f32 %v596, %v1098
        %v1101 = vadd.f32 %v1095, %v1099
        %v1102 = vadd.f32 %v1096, %v1100
        %s1103 = sld [smem:[#allocation3 + $0x38a]]
        %v1104 = vstv %s1103
        %v1105 = vmul.f32 %v601, %v1104
        %v1106 = vmul.f32 %v602, %v1104
        %v1107 = vadd.f32 %v1101, %v1105
        %v1108 = vadd.f32 %v1102, %v1106
        %s1109 = sld [smem:[#allocation3 + $0xb]]
        %v1110 = vstv %s1109
        %v1111 = vmul.f32 %v559, %v1110
        %v1112 = vmul.f32 %v560, %v1110
        %s1113 = sld [smem:[#allocation3 + $0x8b]]
        %v1114 = vstv %s1113
        %v1115 = vmul.f32 %v565, %v1114
        %v1116 = vmul.f32 %v566, %v1114
        %v1117 = vadd.f32 %v1111, %v1115
        %v1118 = vadd.f32 %v1112, %v1116
        %s1119 = sld [smem:[#allocation3 + $0x10b]]
        %v1120 = vstv %s1119
        %v1121 = vmul.f32 %v571, %v1120
        %v1122 = vmul.f32 %v572, %v1120
        %v1123 = vadd.f32 %v1117, %v1121
        %v1124 = vadd.f32 %v1118, %v1122
        %s1125 = sld [smem:[#allocation3 + $0x18b]]
        %v1126 = vstv %s1125
        %v1127 = vmul.f32 %v577, %v1126
        %v1128 = vmul.f32 %v578, %v1126
        %v1129 = vadd.f32 %v1123, %v1127
        %v1130 = vadd.f32 %v1124, %v1128
        %s1131 = sld [smem:[#allocation3 + $0x20b]]
        %v1132 = vstv %s1131
        %v1133 = vmul.f32 %v583, %v1132
        %v1134 = vmul.f32 %v584, %v1132
        %v1135 = vadd.f32 %v1129, %v1133
        %v1136 = vadd.f32 %v1130, %v1134
        %s1137 = sld [smem:[#allocation3 + $0x28b]]
        %v1138 = vstv %s1137
        %v1139 = vmul.f32 %v589, %v1138
        %v1140 = vmul.f32 %v590, %v1138
        %v1141 = vadd.f32 %v1135, %v1139
        %v1142 = vadd.f32 %v1136, %v1140
        %s1143 = sld [smem:[#allocation3 + $0x30b]]
        %v1144 = vstv %s1143
        %v1145 = vmul.f32 %v595, %v1144
        %v1146 = vmul.f32 %v596, %v1144
        %v1147 = vadd.f32 %v1141, %v1145
        %v1148 = vadd.f32 %v1142, %v1146
        %s1149 = sld [smem:[#allocation3 + $0x38b]]
        %v1150 = vstv %s1149
        %v1151 = vmul.f32 %v601, %v1150
        %v1152 = vmul.f32 %v602, %v1150
        %v1153 = vadd.f32 %v1147, %v1151
        %v1154 = vadd.f32 %v1148, %v1152
        %s1155 = sld [smem:[#allocation3 + $0xc]]
        %v1156 = vstv %s1155
        %v1157 = vmul.f32 %v559, %v1156
        %v1158 = vmul.f32 %v560, %v1156
        %s1159 = sld [smem:[#allocation3 + $0x8c]]
        %v1160 = vstv %s1159
        %v1161 = vmul.f32 %v565, %v1160
        %v1162 = vmul.f32 %v566, %v1160
        %v1163 = vadd.f32 %v1157, %v1161
        %v1164 = vadd.f32 %v1158, %v1162
        %s1165 = sld [smem:[#allocation3 + $0x10c]]
        %v1166 = vstv %s1165
        %v1167 = vmul.f32 %v571, %v1166
        %v1168 = vmul.f32 %v572, %v1166
        %v1169 = vadd.f32 %v1163, %v1167
        %v1170 = vadd.f32 %v1164, %v1168
        %s1171 = sld [smem:[#allocation3 + $0x18c]]
        %v1172 = vstv %s1171
        %v1173 = vmul.f32 %v577, %v1172
        %v1174 = vmul.f32 %v578, %v1172
        %v1175 = vadd.f32 %v1169, %v1173
        %v1176 = vadd.f32 %v1170, %v1174
        %s1177 = sld [smem:[#allocation3 + $0x20c]]
        %v1178 = vstv %s1177
        %v1179 = vmul.f32 %v583, %v1178
        %v1180 = vmul.f32 %v584, %v1178
        %v1181 = vadd.f32 %v1175, %v1179
        %v1182 = vadd.f32 %v1176, %v1180
        %s1183 = sld [smem:[#allocation3 + $0x28c]]
        %v1184 = vstv %s1183
        %v1185 = vmul.f32 %v589, %v1184
        %v1186 = vmul.f32 %v590, %v1184
        %v1187 = vadd.f32 %v1181, %v1185
        %v1188 = vadd.f32 %v1182, %v1186
        %s1189 = sld [smem:[#allocation3 + $0x30c]]
        %v1190 = vstv %s1189
        %v1191 = vmul.f32 %v595, %v1190
        %v1192 = vmul.f32 %v596, %v1190
        %v1193 = vadd.f32 %v1187, %v1191
        %v1194 = vadd.f32 %v1188, %v1192
        %s1195 = sld [smem:[#allocation3 + $0x38c]]
        %v1196 = vstv %s1195
        %v1197 = vmul.f32 %v601, %v1196
        %v1198 = vmul.f32 %v602, %v1196
        %v1199 = vadd.f32 %v1193, %v1197
        %v1200 = vadd.f32 %v1194, %v1198
        %s1201 = sld [smem:[#allocation3 + $0xd]]
        %v1202 = vstv %s1201
        %v1203 = vmul.f32 %v559, %v1202
        %v1204 = vmul.f32 %v560, %v1202
        %s1205 = sld [smem:[#allocation3 + $0x8d]]
        %v1206 = vstv %s1205
        %v1207 = vmul.f32 %v565, %v1206
        %v1208 = vmul.f32 %v566, %v1206
        %v1209 = vadd.f32 %v1203, %v1207
        %v1210 = vadd.f32 %v1204, %v1208
        %s1211 = sld [smem:[#allocation3 + $0x10d]]
        %v1212 = vstv %s1211
        %v1213 = vmul.f32 %v571, %v1212
        %v1214 = vmul.f32 %v572, %v1212
        %v1215 = vadd.f32 %v1209, %v1213
        %v1216 = vadd.f32 %v1210, %v1214
        %s1217 = sld [smem:[#allocation3 + $0x18d]]
        %v1218 = vstv %s1217
        %v1219 = vmul.f32 %v577, %v1218
        %v1220 = vmul.f32 %v578, %v1218
        %v1221 = vadd.f32 %v1215, %v1219
        %v1222 = vadd.f32 %v1216, %v1220
        %s1223 = sld [smem:[#allocation3 + $0x20d]]
        %v1224 = vstv %s1223
        %v1225 = vmul.f32 %v583, %v1224
        %v1226 = vmul.f32 %v584, %v1224
        %v1227 = vadd.f32 %v1221, %v1225
        %v1228 = vadd.f32 %v1222, %v1226
        %s1229 = sld [smem:[#allocation3 + $0x28d]]
        %v1230 = vstv %s1229
        %v1231 = vmul.f32 %v589, %v1230
        %v1232 = vmul.f32 %v590, %v1230
        %v1233 = vadd.f32 %v1227, %v1231
        %v1234 = vadd.f32 %v1228, %v1232
        %s1235 = sld [smem:[#allocation3 + $0x30d]]
        %v1236 = vstv %s1235
        %v1237 = vmul.f32 %v595, %v1236
        %v1238 = vmul.f32 %v596, %v1236
        %v1239 = vadd.f32 %v1233, %v1237
        %v1240 = vadd.f32 %v1234, %v1238
        %s1241 = sld [smem:[#allocation3 + $0x38d]]
        %v1242 = vstv %s1241
        %v1243 = vmul.f32 %v601, %v1242
        %v1244 = vmul.f32 %v602, %v1242
        %v1245 = vadd.f32 %v1239, %v1243
        %v1246 = vadd.f32 %v1240, %v1244
        %s1247 = sld [smem:[#allocation3 + $0xe]]
        %v1248 = vstv %s1247
        %v1249 = vmul.f32 %v559, %v1248
        %v1250 = vmul.f32 %v560, %v1248
        %s1251 = sld [smem:[#allocation3 + $0x8e]]
        %v1252 = vstv %s1251
        %v1253 = vmul.f32 %v565, %v1252
        %v1254 = vmul.f32 %v566, %v1252
        %v1255 = vadd.f32 %v1249, %v1253
        %v1256 = vadd.f32 %v1250, %v1254
        %s1257 = sld [smem:[#allocation3 + $0x10e]]
        %v1258 = vstv %s1257
        %v1259 = vmul.f32 %v571, %v1258
        %v1260 = vmul.f32 %v572, %v1258
        %v1261 = vadd.f32 %v1255, %v1259
        %v1262 = vadd.f32 %v1256, %v1260
        %s1263 = sld [smem:[#allocation3 + $0x18e]]
        %v1264 = vstv %s1263
        %v1265 = vmul.f32 %v577, %v1264
        %v1266 = vmul.f32 %v578, %v1264
        %v1267 = vadd.f32 %v1261, %v1265
        %v1268 = vadd.f32 %v1262, %v1266
        %s1269 = sld [smem:[#allocation3 + $0x20e]]
        %v1270 = vstv %s1269
        %v1271 = vmul.f32 %v583, %v1270
        %v1272 = vmul.f32 %v584, %v1270
        %v1273 = vadd.f32 %v1267, %v1271
        %v1274 = vadd.f32 %v1268, %v1272
        %s1275 = sld [smem:[#allocation3 + $0x28e]]
        %v1276 = vstv %s1275
        %v1277 = vmul.f32 %v589, %v1276
        %v1278 = vmul.f32 %v590, %v1276
        %v1279 = vadd.f32 %v1273, %v1277
        %v1280 = vadd.f32 %v1274, %v1278
        %s1281 = sld [smem:[#allocation3 + $0x30e]]
        %v1282 = vstv %s1281
        %v1283 = vmul.f32 %v595, %v1282
        %v1284 = vmul.f32 %v596, %v1282
        %v1285 = vadd.f32 %v1279, %v1283
        %v1286 = vadd.f32 %v1280, %v1284
        %s1287 = sld [smem:[#allocation3 + $0x38e]]
        %v1288 = vstv %s1287
        %v1289 = vmul.f32 %v601, %v1288
        %v1290 = vmul.f32 %v602, %v1288
        %v1291 = vadd.f32 %v1285, %v1289
        %v1292 = vadd.f32 %v1286, %v1290
        %s1293 = sld [smem:[#allocation3 + $0xf]]
        %v1294 = vstv %s1293
        %v1295 = vmul.f32 %v559, %v1294
        %v1296 = vmul.f32 %v560, %v1294
        %s1297 = sld [smem:[#allocation3 + $0x8f]]
        %v1298 = vstv %s1297
        %v1299 = vmul.f32 %v565, %v1298
        %v1300 = vmul.f32 %v566, %v1298
        %v1301 = vadd.f32 %v1295, %v1299
        %v1302 = vadd.f32 %v1296, %v1300
        %s1303 = sld [smem:[#allocation3 + $0x10f]]
        %v1304 = vstv %s1303
        %v1305 = vmul.f32 %v571, %v1304
        %v1306 = vmul.f32 %v572, %v1304
        %v1307 = vadd.f32 %v1301, %v1305
        %v1308 = vadd.f32 %v1302, %v1306
        %s1309 = sld [smem:[#allocation3 + $0x18f]]
        %v1310 = vstv %s1309
        %v1311 = vmul.f32 %v577, %v1310
        %v1312 = vmul.f32 %v578, %v1310
        %v1313 = vadd.f32 %v1307, %v1311
        %v1314 = vadd.f32 %v1308, %v1312
        %s1315 = sld [smem:[#allocation3 + $0x20f]]
        %v1316 = vstv %s1315
        %v1317 = vmul.f32 %v583, %v1316
        %v1318 = vmul.f32 %v584, %v1316
        %v1319 = vadd.f32 %v1313, %v1317
        %v1320 = vadd.f32 %v1314, %v1318
        %s1321 = sld [smem:[#allocation3 + $0x28f]]
        %v1322 = vstv %s1321
        %v1323 = vmul.f32 %v589, %v1322
        %v1324 = vmul.f32 %v590, %v1322
        %v1325 = vadd.f32 %v1319, %v1323
        %v1326 = vadd.f32 %v1320, %v1324
        %s1327 = sld [smem:[#allocation3 + $0x30f]]
        %v1328 = vstv %s1327
        %v1329 = vmul.f32 %v595, %v1328
        %v1330 = vmul.f32 %v596, %v1328
        %v1331 = vadd.f32 %v1325, %v1329
        %v1332 = vadd.f32 %v1326, %v1330
        %s1333 = sld [smem:[#allocation3 + $0x38f]]
        %v1334 = vstv %s1333
        %v1335 = vmul.f32 %v601, %v1334
        %v1336 = vmul.f32 %v602, %v1334
        %v1337 = vadd.f32 %v1331, %v1335
        %v1338 = vadd.f32 %v1332, %v1336
        %s1339 = sld [smem:[#allocation3 + $0x10]]
        %v1340 = vstv %s1339
        %v1341 = vmul.f32 %v559, %v1340
        %v1342 = vmul.f32 %v560, %v1340
        %s1343 = sld [smem:[#allocation3 + $0x90]]
        %v1344 = vstv %s1343
        %v1345 = vmul.f32 %v565, %v1344
        %v1346 = vmul.f32 %v566, %v1344
        %v1347 = vadd.f32 %v1341, %v1345
        %v1348 = vadd.f32 %v1342, %v1346
        %s1349 = sld [smem:[#allocation3 + $0x110]]
        %v1350 = vstv %s1349
        %v1351 = vmul.f32 %v571, %v1350
        %v1352 = vmul.f32 %v572, %v1350
        %v1353 = vadd.f32 %v1347, %v1351
        %v1354 = vadd.f32 %v1348, %v1352
        %s1355 = sld [smem:[#allocation3 + $0x190]]
        %v1356 = vstv %s1355
        %v1357 = vmul.f32 %v577, %v1356
        %v1358 = vmul.f32 %v578, %v1356
        %v1359 = vadd.f32 %v1353, %v1357
        %v1360 = vadd.f32 %v1354, %v1358
        %s1361 = sld [smem:[#allocation3 + $0x210]]
        %v1362 = vstv %s1361
        %v1363 = vmul.f32 %v583, %v1362
        %v1364 = vmul.f32 %v584, %v1362
        %v1365 = vadd.f32 %v1359, %v1363
        %v1366 = vadd.f32 %v1360, %v1364
        %s1367 = sld [smem:[#allocation3 + $0x290]]
        %v1368 = vstv %s1367
        %v1369 = vmul.f32 %v589, %v1368
        %v1370 = vmul.f32 %v590, %v1368
        %v1371 = vadd.f32 %v1365, %v1369
        %v1372 = vadd.f32 %v1366, %v1370
        %s1373 = sld [smem:[#allocation3 + $0x310]]
        %v1374 = vstv %s1373
        %v1375 = vmul.f32 %v595, %v1374
        %v1376 = vmul.f32 %v596, %v1374
        %v1377 = vadd.f32 %v1371, %v1375
        %v1378 = vadd.f32 %v1372, %v1376
        %s1379 = sld [smem:[#allocation3 + $0x390]]
        %v1380 = vstv %s1379
        %v1381 = vmul.f32 %v601, %v1380
        %v1382 = vmul.f32 %v602, %v1380
        %v1383 = vadd.f32 %v1377, %v1381
        %v1384 = vadd.f32 %v1378, %v1382
        %s1385 = sld [smem:[#allocation3 + $0x11]]
        %v1386 = vstv %s1385
        %v1387 = vmul.f32 %v559, %v1386
        %v1388 = vmul.f32 %v560, %v1386
        %s1389 = sld [smem:[#allocation3 + $0x91]]
        %v1390 = vstv %s1389
        %v1391 = vmul.f32 %v565, %v1390
        %v1392 = vmul.f32 %v566, %v1390
        %v1393 = vadd.f32 %v1387, %v1391
        %v1394 = vadd.f32 %v1388, %v1392
        %s1395 = sld [smem:[#allocation3 + $0x111]]
        %v1396 = vstv %s1395
        %v1397 = vmul.f32 %v571, %v1396
        %v1398 = vmul.f32 %v572, %v1396
        %v1399 = vadd.f32 %v1393, %v1397
        %v1400 = vadd.f32 %v1394, %v1398
        %s1401 = sld [smem:[#allocation3 + $0x191]]
        %v1402 = vstv %s1401
        %v1403 = vmul.f32 %v577, %v1402
        %v1404 = vmul.f32 %v578, %v1402
        %v1405 = vadd.f32 %v1399, %v1403
        %v1406 = vadd.f32 %v1400, %v1404
        %s1407 = sld [smem:[#allocation3 + $0x211]]
        %v1408 = vstv %s1407
        %v1409 = vmul.f32 %v583, %v1408
        %v1410 = vmul.f32 %v584, %v1408
        %v1411 = vadd.f32 %v1405, %v1409
        %v1412 = vadd.f32 %v1406, %v1410
        %s1413 = sld [smem:[#allocation3 + $0x291]]
        %v1414 = vstv %s1413
        %v1415 = vmul.f32 %v589, %v1414
        %v1416 = vmul.f32 %v590, %v1414
        %v1417 = vadd.f32 %v1411, %v1415
        %v1418 = vadd.f32 %v1412, %v1416
        %s1419 = sld [smem:[#allocation3 + $0x311]]
        %v1420 = vstv %s1419
        %v1421 = vmul.f32 %v595, %v1420
        %v1422 = vmul.f32 %v596, %v1420
        %v1423 = vadd.f32 %v1417, %v1421
        %v1424 = vadd.f32 %v1418, %v1422
        %s1425 = sld [smem:[#allocation3 + $0x391]]
        %v1426 = vstv %s1425
        %v1427 = vmul.f32 %v601, %v1426
        %v1428 = vmul.f32 %v602, %v1426
        %v1429 = vadd.f32 %v1423, %v1427
        %v1430 = vadd.f32 %v1424, %v1428
        %s1431 = sld [smem:[#allocation3 + $0x12]]
        %v1432 = vstv %s1431
        %v1433 = vmul.f32 %v559, %v1432
        %v1434 = vmul.f32 %v560, %v1432
        %s1435 = sld [smem:[#allocation3 + $0x92]]
        %v1436 = vstv %s1435
        %v1437 = vmul.f32 %v565, %v1436
        %v1438 = vmul.f32 %v566, %v1436
        %v1439 = vadd.f32 %v1433, %v1437
        %v1440 = vadd.f32 %v1434, %v1438
        %s1441 = sld [smem:[#allocation3 + $0x112]]
        %v1442 = vstv %s1441
        %v1443 = vmul.f32 %v571, %v1442
        %v1444 = vmul.f32 %v572, %v1442
        %v1445 = vadd.f32 %v1439, %v1443
        %v1446 = vadd.f32 %v1440, %v1444
        %s1447 = sld [smem:[#allocation3 + $0x192]]
        %v1448 = vstv %s1447
        %v1449 = vmul.f32 %v577, %v1448
        %v1450 = vmul.f32 %v578, %v1448
        %v1451 = vadd.f32 %v1445, %v1449
        %v1452 = vadd.f32 %v1446, %v1450
        %s1453 = sld [smem:[#allocation3 + $0x212]]
        %v1454 = vstv %s1453
        %v1455 = vmul.f32 %v583, %v1454
        %v1456 = vmul.f32 %v584, %v1454
        %v1457 = vadd.f32 %v1451, %v1455
        %v1458 = vadd.f32 %v1452, %v1456
        %s1459 = sld [smem:[#allocation3 + $0x292]]
        %v1460 = vstv %s1459
        %v1461 = vmul.f32 %v589, %v1460
        %v1462 = vmul.f32 %v590, %v1460
        %v1463 = vadd.f32 %v1457, %v1461
        %v1464 = vadd.f32 %v1458, %v1462
        %s1465 = sld [smem:[#allocation3 + $0x312]]
        %v1466 = vstv %s1465
        %v1467 = vmul.f32 %v595, %v1466
        %v1468 = vmul.f32 %v596, %v1466
        %v1469 = vadd.f32 %v1463, %v1467
        %v1470 = vadd.f32 %v1464, %v1468
        %s1471 = sld [smem:[#allocation3 + $0x392]]
        %v1472 = vstv %s1471
        %v1473 = vmul.f32 %v601, %v1472
        %v1474 = vmul.f32 %v602, %v1472
        %v1475 = vadd.f32 %v1469, %v1473
        %v1476 = vadd.f32 %v1470, %v1474
        %s1477 = sld [smem:[#allocation3 + $0x13]]
        %v1478 = vstv %s1477
        %v1479 = vmul.f32 %v559, %v1478
        %v1480 = vmul.f32 %v560, %v1478
        %s1481 = sld [smem:[#allocation3 + $0x93]]
        %v1482 = vstv %s1481
        %v1483 = vmul.f32 %v565, %v1482
        %v1484 = vmul.f32 %v566, %v1482
        %v1485 = vadd.f32 %v1479, %v1483
        %v1486 = vadd.f32 %v1480, %v1484
        %s1487 = sld [smem:[#allocation3 + $0x113]]
        %v1488 = vstv %s1487
        %v1489 = vmul.f32 %v571, %v1488
        %v1490 = vmul.f32 %v572, %v1488
        %v1491 = vadd.f32 %v1485, %v1489
        %v1492 = vadd.f32 %v1486, %v1490
        %s1493 = sld [smem:[#allocation3 + $0x193]]
        %v1494 = vstv %s1493
        %v1495 = vmul.f32 %v577, %v1494
        %v1496 = vmul.f32 %v578, %v1494
        %v1497 = vadd.f32 %v1491, %v1495
        %v1498 = vadd.f32 %v1492, %v1496
        %s1499 = sld [smem:[#allocation3 + $0x213]]
        %v1500 = vstv %s1499
        %v1501 = vmul.f32 %v583, %v1500
        %v1502 = vmul.f32 %v584, %v1500
        %v1503 = vadd.f32 %v1497, %v1501
        %v1504 = vadd.f32 %v1498, %v1502
        %s1505 = sld [smem:[#allocation3 + $0x293]]
        %v1506 = vstv %s1505
        %v1507 = vmul.f32 %v589, %v1506
        %v1508 = vmul.f32 %v590, %v1506
        %v1509 = vadd.f32 %v1503, %v1507
        %v1510 = vadd.f32 %v1504, %v1508
        %s1511 = sld [smem:[#allocation3 + $0x313]]
        %v1512 = vstv %s1511
        %v1513 = vmul.f32 %v595, %v1512
        %v1514 = vmul.f32 %v596, %v1512
        %v1515 = vadd.f32 %v1509, %v1513
        %v1516 = vadd.f32 %v1510, %v1514
        %s1517 = sld [smem:[#allocation3 + $0x393]]
        %v1518 = vstv %s1517
        %v1519 = vmul.f32 %v601, %v1518
        %v1520 = vmul.f32 %v602, %v1518
        %v1521 = vadd.f32 %v1515, %v1519
        %v1522 = vadd.f32 %v1516, %v1520
        %s1523 = sld [smem:[#allocation3 + $0x14]]
        %v1524 = vstv %s1523
        %v1525 = vmul.f32 %v559, %v1524
        %v1526 = vmul.f32 %v560, %v1524
        %s1527 = sld [smem:[#allocation3 + $0x94]]
        %v1528 = vstv %s1527
        %v1529 = vmul.f32 %v565, %v1528
        %v1530 = vmul.f32 %v566, %v1528
        %v1531 = vadd.f32 %v1525, %v1529
        %v1532 = vadd.f32 %v1526, %v1530
        %s1533 = sld [smem:[#allocation3 + $0x114]]
        %v1534 = vstv %s1533
        %v1535 = vmul.f32 %v571, %v1534
        %v1536 = vmul.f32 %v572, %v1534
        %v1537 = vadd.f32 %v1531, %v1535
        %v1538 = vadd.f32 %v1532, %v1536
        %s1539 = sld [smem:[#allocation3 + $0x194]]
        %v1540 = vstv %s1539
        %v1541 = vmul.f32 %v577, %v1540
        %v1542 = vmul.f32 %v578, %v1540
        %v1543 = vadd.f32 %v1537, %v1541
        %v1544 = vadd.f32 %v1538, %v1542
        %s1545 = sld [smem:[#allocation3 + $0x214]]
        %v1546 = vstv %s1545
        %v1547 = vmul.f32 %v583, %v1546
        %v1548 = vmul.f32 %v584, %v1546
        %v1549 = vadd.f32 %v1543, %v1547
        %v1550 = vadd.f32 %v1544, %v1548
        %s1551 = sld [smem:[#allocation3 + $0x294]]
        %v1552 = vstv %s1551
        %v1553 = vmul.f32 %v589, %v1552
        %v1554 = vmul.f32 %v590, %v1552
        %v1555 = vadd.f32 %v1549, %v1553
        %v1556 = vadd.f32 %v1550, %v1554
        %s1557 = sld [smem:[#allocation3 + $0x314]]
        %v1558 = vstv %s1557
        %v1559 = vmul.f32 %v595, %v1558
        %v1560 = vmul.f32 %v596, %v1558
        %v1561 = vadd.f32 %v1555, %v1559
        %v1562 = vadd.f32 %v1556, %v1560
        %s1563 = sld [smem:[#allocation3 + $0x394]]
        %v1564 = vstv %s1563
        %v1565 = vmul.f32 %v601, %v1564
        %v1566 = vmul.f32 %v602, %v1564
        %v1567 = vadd.f32 %v1561, %v1565
        %v1568 = vadd.f32 %v1562, %v1566
        %s1569 = sld [smem:[#allocation3 + $0x15]]
        %v1570 = vstv %s1569
        %v1571 = vmul.f32 %v559, %v1570
        %v1572 = vmul.f32 %v560, %v1570
        %s1573 = sld [smem:[#allocation3 + $0x95]]
        %v1574 = vstv %s1573
        %v1575 = vmul.f32 %v565, %v1574
        %v1576 = vmul.f32 %v566, %v1574
        %v1577 = vadd.f32 %v1571, %v1575
        %v1578 = vadd.f32 %v1572, %v1576
        %s1579 = sld [smem:[#allocation3 + $0x115]]
        %v1580 = vstv %s1579
        %v1581 = vmul.f32 %v571, %v1580
        %v1582 = vmul.f32 %v572, %v1580
        %v1583 = vadd.f32 %v1577, %v1581
        %v1584 = vadd.f32 %v1578, %v1582
        %s1585 = sld [smem:[#allocation3 + $0x195]]
        %v1586 = vstv %s1585
        %v1587 = vmul.f32 %v577, %v1586
        %v1588 = vmul.f32 %v578, %v1586
        %v1589 = vadd.f32 %v1583, %v1587
        %v1590 = vadd.f32 %v1584, %v1588
        %s1591 = sld [smem:[#allocation3 + $0x215]]
        %v1592 = vstv %s1591
        %v1593 = vmul.f32 %v583, %v1592
        %v1594 = vmul.f32 %v584, %v1592
        %v1595 = vadd.f32 %v1589, %v1593
        %v1596 = vadd.f32 %v1590, %v1594
        %s1597 = sld [smem:[#allocation3 + $0x295]]
        %v1598 = vstv %s1597
        %v1599 = vmul.f32 %v589, %v1598
        %v1600 = vmul.f32 %v590, %v1598
        %v1601 = vadd.f32 %v1595, %v1599
        %v1602 = vadd.f32 %v1596, %v1600
        %s1603 = sld [smem:[#allocation3 + $0x315]]
        %v1604 = vstv %s1603
        %v1605 = vmul.f32 %v595, %v1604
        %v1606 = vmul.f32 %v596, %v1604
        %v1607 = vadd.f32 %v1601, %v1605
        %v1608 = vadd.f32 %v1602, %v1606
        %s1609 = sld [smem:[#allocation3 + $0x395]]
        %v1610 = vstv %s1609
        %v1611 = vmul.f32 %v601, %v1610
        %v1612 = vmul.f32 %v602, %v1610
        %v1613 = vadd.f32 %v1607, %v1611
        %v1614 = vadd.f32 %v1608, %v1612
        %s1615 = sld [smem:[#allocation3 + $0x16]]
        %v1616 = vstv %s1615
        %v1617 = vmul.f32 %v559, %v1616
        %v1618 = vmul.f32 %v560, %v1616
        %s1619 = sld [smem:[#allocation3 + $0x96]]
        %v1620 = vstv %s1619
        %v1621 = vmul.f32 %v565, %v1620
        %v1622 = vmul.f32 %v566, %v1620
        %v1623 = vadd.f32 %v1617, %v1621
        %v1624 = vadd.f32 %v1618, %v1622
        %s1625 = sld [smem:[#allocation3 + $0x116]]
        %v1626 = vstv %s1625
        %v1627 = vmul.f32 %v571, %v1626
        %v1628 = vmul.f32 %v572, %v1626
        %v1629 = vadd.f32 %v1623, %v1627
        %v1630 = vadd.f32 %v1624, %v1628
        %s1631 = sld [smem:[#allocation3 + $0x196]]
        %v1632 = vstv %s1631
        %v1633 = vmul.f32 %v577, %v1632
        %v1634 = vmul.f32 %v578, %v1632
        %v1635 = vadd.f32 %v1629, %v1633
        %v1636 = vadd.f32 %v1630, %v1634
        %s1637 = sld [smem:[#allocation3 + $0x216]]
        %v1638 = vstv %s1637
        %v1639 = vmul.f32 %v583, %v1638
        %v1640 = vmul.f32 %v584, %v1638
        %v1641 = vadd.f32 %v1635, %v1639
        %v1642 = vadd.f32 %v1636, %v1640
        %s1643 = sld [smem:[#allocation3 + $0x296]]
        %v1644 = vstv %s1643
        %v1645 = vmul.f32 %v589, %v1644
        %v1646 = vmul.f32 %v590, %v1644
        %v1647 = vadd.f32 %v1641, %v1645
        %v1648 = vadd.f32 %v1642, %v1646
        %s1649 = sld [smem:[#allocation3 + $0x316]]
        %v1650 = vstv %s1649
        %v1651 = vmul.f32 %v595, %v1650
        %v1652 = vmul.f32 %v596, %v1650
        %v1653 = vadd.f32 %v1647, %v1651
        %v1654 = vadd.f32 %v1648, %v1652
        %s1655 = sld [smem:[#allocation3 + $0x396]]
        %v1656 = vstv %s1655
        %v1657 = vmul.f32 %v601, %v1656
        %v1658 = vmul.f32 %v602, %v1656
        %v1659 = vadd.f32 %v1653, %v1657
        %v1660 = vadd.f32 %v1654, %v1658
        %s1661 = sld [smem:[#allocation3 + $0x17]]
        %v1662 = vstv %s1661
        %v1663 = vmul.f32 %v559, %v1662
        %v1664 = vmul.f32 %v560, %v1662
        %s1665 = sld [smem:[#allocation3 + $0x97]]
        %v1666 = vstv %s1665
        %v1667 = vmul.f32 %v565, %v1666
        %v1668 = vmul.f32 %v566, %v1666
        %v1669 = vadd.f32 %v1663, %v1667
        %v1670 = vadd.f32 %v1664, %v1668
        %s1671 = sld [smem:[#allocation3 + $0x117]]
        %v1672 = vstv %s1671
        %v1673 = vmul.f32 %v571, %v1672
        %v1674 = vmul.f32 %v572, %v1672
        %v1675 = vadd.f32 %v1669, %v1673
        %v1676 = vadd.f32 %v1670, %v1674
        %s1677 = sld [smem:[#allocation3 + $0x197]]
        %v1678 = vstv %s1677
        %v1679 = vmul.f32 %v577, %v1678
        %v1680 = vmul.f32 %v578, %v1678
        %v1681 = vadd.f32 %v1675, %v1679
        %v1682 = vadd.f32 %v1676, %v1680
        %s1683 = sld [smem:[#allocation3 + $0x217]]
        %v1684 = vstv %s1683
        %v1685 = vmul.f32 %v583, %v1684
        %v1686 = vmul.f32 %v584, %v1684
        %v1687 = vadd.f32 %v1681, %v1685
        %v1688 = vadd.f32 %v1682, %v1686
        %s1689 = sld [smem:[#allocation3 + $0x297]]
        %v1690 = vstv %s1689
        %v1691 = vmul.f32 %v589, %v1690
        %v1692 = vmul.f32 %v590, %v1690
        %v1693 = vadd.f32 %v1687, %v1691
        %v1694 = vadd.f32 %v1688, %v1692
        %s1695 = sld [smem:[#allocation3 + $0x317]]
        %v1696 = vstv %s1695
        %v1697 = vmul.f32 %v595, %v1696
        %v1698 = vmul.f32 %v596, %v1696
        %v1699 = vadd.f32 %v1693, %v1697
        %v1700 = vadd.f32 %v1694, %v1698
        %s1701 = sld [smem:[#allocation3 + $0x397]]
        %v1702 = vstv %s1701
        %v1703 = vmul.f32 %v601, %v1702
        %v1704 = vmul.f32 %v602, %v1702
        %v1705 = vadd.f32 %v1699, %v1703
        %v1706 = vadd.f32 %v1700, %v1704
        %v1707 = vlaneseq
        %v1708 = vshrl.u32 %v1707, 7
        %v1709 = vperm.slane %v1015, 0
        %v1710 = vperm.slane %v1016, 0
        %v1711 = vmul.f32 %v647, %v1709
        %v1712 = vmul.f32 %v648, %v1710
        %v1713 = vperm.slane %v1061, 0
        %v1714 = vperm.slane %v1062, 0
        %v1715 = vmul.f32 %v693, %v1713
        %v1716 = vmul.f32 %v694, %v1714
        %v1717 = vadd.f32 %v1711, %v1715
        %v1718 = vadd.f32 %v1712, %v1716
        %v1719 = vperm.slane %v1107, 0
        %v1720 = vperm.slane %v1108, 0
        %v1721 = vmul.f32 %v739, %v1719
        %v1722 = vmul.f32 %v740, %v1720
        %v1723 = vadd.f32 %v1717, %v1721
        %v1724 = vadd.f32 %v1718, %v1722
        %v1725 = vperm.slane %v1153, 0
        %v1726 = vperm.slane %v1154, 0
        %v1727 = vmul.f32 %v785, %v1725
        %v1728 = vmul.f32 %v786, %v1726
        %v1729 = vadd.f32 %v1723, %v1727
        %v1730 = vadd.f32 %v1724, %v1728
        %v1731 = vperm.slane %v1199, 0
        %v1732 = vperm.slane %v1200, 0
        %v1733 = vmul.f32 %v831, %v1731
        %v1734 = vmul.f32 %v832, %v1732
        %v1735 = vadd.f32 %v1729, %v1733
        %v1736 = vadd.f32 %v1730, %v1734
        %v1737 = vperm.slane %v1245, 0
        %v1738 = vperm.slane %v1246, 0
        %v1739 = vmul.f32 %v877, %v1737
        %v1740 = vmul.f32 %v878, %v1738
        %v1741 = vadd.f32 %v1735, %v1739
        %v1742 = vadd.f32 %v1736, %v1740
        %v1743 = vperm.slane %v1291, 0
        %v1744 = vperm.slane %v1292, 0
        %v1745 = vmul.f32 %v923, %v1743
        %v1746 = vmul.f32 %v924, %v1744
        %v1747 = vadd.f32 %v1741, %v1745
        %v1748 = vadd.f32 %v1742, %v1746
        %v1749 = vperm.slane %v1337, 0
        %v1750 = vperm.slane %v1338, 0
        %v1751 = vmul.f32 %v969, %v1749
        %v1752 = vmul.f32 %v970, %v1750
        %v1753 = vadd.f32 %v1747, %v1751
        %v1754 = vadd.f32 %v1748, %v1752
        %vm1755 = vcmp.ge.s32.totalorder %v1708, 0
        %v1756 = vsel %vm1755, 1, 0
        %vm1757 = vcmp.eq.s32.totalorder %v1756, 1
        %v1758 = vsel %vm1757, %v1753, -inf
        %v1759 = vsel %vm1757, %v1754, -inf
        %v1760 = vperm.slane %v1015, 1
        %v1761 = vperm.slane %v1016, 1
        %v1762 = vmul.f32 %v647, %v1760
        %v1763 = vmul.f32 %v648, %v1761
        %v1764 = vperm.slane %v1061, 1
        %v1765 = vperm.slane %v1062, 1
        %v1766 = vmul.f32 %v693, %v1764
        %v1767 = vmul.f32 %v694, %v1765
        %v1768 = vadd.f32 %v1762, %v1766
        %v1769 = vadd.f32 %v1763, %v1767
        %v1770 = vperm.slane %v1107, 1
        %v1771 = vperm.slane %v1108, 1
        %v1772 = vmul.f32 %v739, %v1770
        %v1773 = vmul.f32 %v740, %v1771
        %v1774 = vadd.f32 %v1768, %v1772
        %v1775 = vadd.f32 %v1769, %v1773
        %v1776 = vperm.slane %v1153, 1
        %v1777 = vperm.slane %v1154, 1
        %v1778 = vmul.f32 %v785, %v1776
        %v1779 = vmul.f32 %v786, %v1777
        %v1780 = vadd.f32 %v1774, %v1778
        %v1781 = vadd.f32 %v1775, %v1779
        %v1782 = vperm.slane %v1199, 1
        %v1783 = vperm.slane %v1200, 1
        %v1784 = vmul.f32 %v831, %v1782
        %v1785 = vmul.f32 %v832, %v1783
        %v1786 = vadd.f32 %v1780, %v1784
        %v1787 = vadd.f32 %v1781, %v1785
        %v1788 = vperm.slane %v1245, 1
        %v1789 = vperm.slane %v1246, 1
        %v1790 = vmul.f32 %v877, %v1788
        %v1791 = vmul.f32 %v878, %v1789
        %v1792 = vadd.f32 %v1786, %v1790
        %v1793 = vadd.f32 %v1787, %v1791
        %v1794 = vperm.slane %v1291, 1
        %v1795 = vperm.slane %v1292, 1
        %v1796 = vmul.f32 %v923, %v1794
        %v1797 = vmul.f32 %v924, %v1795
        %v1798 = vadd.f32 %v1792, %v1796
        %v1799 = vadd.f32 %v1793, %v1797
        %v1800 = vperm.slane %v1337, 1
        %v1801 = vperm.slane %v1338, 1
        %v1802 = vmul.f32 %v969, %v1800
        %v1803 = vmul.f32 %v970, %v1801
        %v1804 = vadd.f32 %v1798, %v1802
        %v1805 = vadd.f32 %v1799, %v1803
        %vm1806 = vcmp.ge.s32.totalorder %v1708, 1
        %v1807 = vsel %vm1806, 1, 0
        %vm1808 = vcmp.eq.s32.totalorder %v1807, 1
        %v1809 = vsel %vm1808, %v1804, -inf
        %v1810 = vsel %vm1808, %v1805, -inf
        %v1811 = vperm.slane %v1015, 2
        %v1812 = vperm.slane %v1016, 2
        %v1813 = vmul.f32 %v647, %v1811
        %v1814 = vmul.f32 %v648, %v1812
        %v1815 = vperm.slane %v1061, 2
        %v1816 = vperm.slane %v1062, 2
        %v1817 = vmul.f32 %v693, %v1815
        %v1818 = vmul.f32 %v694, %v1816
        %v1819 = vadd.f32 %v1813, %v1817
        %v1820 = vadd.f32 %v1814, %v1818
        %v1821 = vperm.slane %v1107, 2
        %v1822 = vperm.slane %v1108, 2
        %v1823 = vmul.f32 %v739, %v1821
        %v1824 = vmul.f32 %v740, %v1822
        %v1825 = vadd.f32 %v1819, %v1823
        %v1826 = vadd.f32 %v1820, %v1824
        %v1827 = vperm.slane %v1153, 2
        %v1828 = vperm.slane %v1154, 2
        %v1829 = vmul.f32 %v785, %v1827
        %v1830 = vmul.f32 %v786, %v1828
        %v1831 = vadd.f32 %v1825, %v1829
        %v1832 = vadd.f32 %v1826, %v1830
        %v1833 = vperm.slane %v1199, 2
        %v1834 = vperm.slane %v1200, 2
        %v1835 = vmul.f32 %v831, %v1833
        %v1836 = vmul.f32 %v832, %v1834
        %v1837 = vadd.f32 %v1831, %v1835
        %v1838 = vadd.f32 %v1832, %v1836
        %v1839 = vperm.slane %v1245, 2
        %v1840 = vperm.slane %v1246, 2
        %v1841 = vmul.f32 %v877, %v1839
        %v1842 = vmul.f32 %v878, %v1840
        %v1843 = vadd.f32 %v1837, %v1841
        %v1844 = vadd.f32 %v1838, %v1842
        %v1845 = vperm.slane %v1291, 2
        %v1846 = vperm.slane %v1292, 2
        %v1847 = vmul.f32 %v923, %v1845
        %v1848 = vmul.f32 %v924, %v1846
        %v1849 = vadd.f32 %v1843, %v1847
        %v1850 = vadd.f32 %v1844, %v1848
        %v1851 = vperm.slane %v1337, 2
        %v1852 = vperm.slane %v1338, 2
        %v1853 = vmul.f32 %v969, %v1851
        %v1854 = vmul.f32 %v970, %v1852
        %v1855 = vadd.f32 %v1849, %v1853
        %v1856 = vadd.f32 %v1850, %v1854
        %vm1857 = vcmp.ge.s32.totalorder %v1708, 2
        %v1858 = vsel %vm1857, 1, 0
        %vm1859 = vcmp.eq.s32.totalorder %v1858, 1
        %v1860 = vsel %vm1859, %v1855, -inf
        %v1861 = vsel %vm1859, %v1856, -inf
        %v1862 = vperm.slane %v1015, 3
        %v1863 = vperm.slane %v1016, 3
        %v1864 = vmul.f32 %v647, %v1862
        %v1865 = vmul.f32 %v648, %v1863
        %v1866 = vperm.slane %v1061, 3
        %v1867 = vperm.slane %v1062, 3
        %v1868 = vmul.f32 %v693, %v1866
        %v1869 = vmul.f32 %v694, %v1867
        %v1870 = vadd.f32 %v1864, %v1868
        %v1871 = vadd.f32 %v1865, %v1869
        %v1872 = vperm.slane %v1107, 3
        %v1873 = vperm.slane %v1108, 3
        %v1874 = vmul.f32 %v739, %v1872
        %v1875 = vmul.f32 %v740, %v1873
        %v1876 = vadd.f32 %v1870, %v1874
        %v1877 = vadd.f32 %v1871, %v1875
        %v1878 = vperm.slane %v1153, 3
        %v1879 = vperm.slane %v1154, 3
        %v1880 = vmul.f32 %v785, %v1878
        %v1881 = vmul.f32 %v786, %v1879
        %v1882 = vadd.f32 %v1876, %v1880
        %v1883 = vadd.f32 %v1877, %v1881
        %v1884 = vperm.slane %v1199, 3
        %v1885 = vperm.slane %v1200, 3
        %v1886 = vmul.f32 %v831, %v1884
        %v1887 = vmul.f32 %v832, %v1885
        %v1888 = vadd.f32 %v1882, %v1886
        %v1889 = vadd.f32 %v1883, %v1887
        %v1890 = vperm.slane %v1245, 3
        %v1891 = vperm.slane %v1246, 3
        %v1892 = vmul.f32 %v877, %v1890
        %v1893 = vmul.f32 %v878, %v1891
        %v1894 = vadd.f32 %v1888, %v1892
        %v1895 = vadd.f32 %v1889, %v1893
        %v1896 = vperm.slane %v1291, 3
        %v1897 = vperm.slane %v1292, 3
        %v1898 = vmul.f32 %v923, %v1896
        %v1899 = vmul.f32 %v924, %v1897
        %v1900 = vadd.f32 %v1894, %v1898
        %v1901 = vadd.f32 %v1895, %v1899
        %v1902 = vperm.slane %v1337, 3
        %v1903 = vperm.slane %v1338, 3
        %v1904 = vmul.f32 %v969, %v1902
        %v1905 = vmul.f32 %v970, %v1903
        %v1906 = vadd.f32 %v1900, %v1904
        %v1907 = vadd.f32 %v1901, %v1905
        %vm1908 = vcmp.ge.s32.totalorder %v1708, 3
        %v1909 = vsel %vm1908, 1, 0
        %vm1910 = vcmp.eq.s32.totalorder %v1909, 1
        %v1911 = vsel %vm1910, %v1906, -inf
        %v1912 = vsel %vm1910, %v1907, -inf
        %v1913 = vperm.slane %v1015, 4
        %v1914 = vperm.slane %v1016, 4
        %v1915 = vmul.f32 %v647, %v1913
        %v1916 = vmul.f32 %v648, %v1914
        %v1917 = vperm.slane %v1061, 4
        %v1918 = vperm.slane %v1062, 4
        %v1919 = vmul.f32 %v693, %v1917
        %v1920 = vmul.f32 %v694, %v1918
        %v1921 = vadd.f32 %v1915, %v1919
        %v1922 = vadd.f32 %v1916, %v1920
        %v1923 = vperm.slane %v1107, 4
        %v1924 = vperm.slane %v1108, 4
        %v1925 = vmul.f32 %v739, %v1923
        %v1926 = vmul.f32 %v740, %v1924
        %v1927 = vadd.f32 %v1921, %v1925
        %v1928 = vadd.f32 %v1922, %v1926
        %v1929 = vperm.slane %v1153, 4
        %v1930 = vperm.slane %v1154, 4
        %v1931 = vmul.f32 %v785, %v1929
        %v1932 = vmul.f32 %v786, %v1930
        %v1933 = vadd.f32 %v1927, %v1931
        %v1934 = vadd.f32 %v1928, %v1932
        %v1935 = vperm.slane %v1199, 4
        %v1936 = vperm.slane %v1200, 4
        %v1937 = vmul.f32 %v831, %v1935
        %v1938 = vmul.f32 %v832, %v1936
        %v1939 = vadd.f32 %v1933, %v1937
        %v1940 = vadd.f32 %v1934, %v1938
        %v1941 = vperm.slane %v1245, 4
        %v1942 = vperm.slane %v1246, 4
        %v1943 = vmul.f32 %v877, %v1941
        %v1944 = vmul.f32 %v878, %v1942
        %v1945 = vadd.f32 %v1939, %v1943
        %v1946 = vadd.f32 %v1940, %v1944
        %v1947 = vperm.slane %v1291, 4
        %v1948 = vperm.slane %v1292, 4
        %v1949 = vmul.f32 %v923, %v1947
        %v1950 = vmul.f32 %v924, %v1948
        %v1951 = vadd.f32 %v1945, %v1949
        %v1952 = vadd.f32 %v1946, %v1950
        %v1953 = vperm.slane %v1337, 4
        %v1954 = vperm.slane %v1338, 4
        %v1955 = vmul.f32 %v969, %v1953
        %v1956 = vmul.f32 %v970, %v1954
        %v1957 = vadd.f32 %v1951, %v1955
        %v1958 = vadd.f32 %v1952, %v1956
        %vm1959 = vcmp.ge.s32.totalorder %v1708, 4
        %v1960 = vsel %vm1959, 1, 0
        %vm1961 = vcmp.eq.s32.totalorder %v1960, 1
        %v1962 = vsel %vm1961, %v1957, -inf
        %v1963 = vsel %vm1961, %v1958, -inf
        %v1964 = vperm.slane %v1015, 5
        %v1965 = vperm.slane %v1016, 5
        %v1966 = vmul.f32 %v647, %v1964
        %v1967 = vmul.f32 %v648, %v1965
        %v1968 = vperm.slane %v1061, 5
        %v1969 = vperm.slane %v1062, 5
        %v1970 = vmul.f32 %v693, %v1968
        %v1971 = vmul.f32 %v694, %v1969
        %v1972 = vadd.f32 %v1966, %v1970
        %v1973 = vadd.f32 %v1967, %v1971
        %v1974 = vperm.slane %v1107, 5
        %v1975 = vperm.slane %v1108, 5
        %v1976 = vmul.f32 %v739, %v1974
        %v1977 = vmul.f32 %v740, %v1975
        %v1978 = vadd.f32 %v1972, %v1976
        %v1979 = vadd.f32 %v1973, %v1977
        %v1980 = vperm.slane %v1153, 5
        %v1981 = vperm.slane %v1154, 5
        %v1982 = vmul.f32 %v785, %v1980
        %v1983 = vmul.f32 %v786, %v1981
        %v1984 = vadd.f32 %v1978, %v1982
        %v1985 = vadd.f32 %v1979, %v1983
        %v1986 = vperm.slane %v1199, 5
        %v1987 = vperm.slane %v1200, 5
        %v1988 = vmul.f32 %v831, %v1986
        %v1989 = vmul.f32 %v832, %v1987
        %v1990 = vadd.f32 %v1984, %v1988
        %v1991 = vadd.f32 %v1985, %v1989
        %v1992 = vperm.slane %v1245, 5
        %v1993 = vperm.slane %v1246, 5
        %v1994 = vmul.f32 %v877, %v1992
        %v1995 = vmul.f32 %v878, %v1993
        %v1996 = vadd.f32 %v1990, %v1994
        %v1997 = vadd.f32 %v1991, %v1995
        %v1998 = vperm.slane %v1291, 5
        %v1999 = vperm.slane %v1292, 5
        %v2000 = vmul.f32 %v923, %v1998
        %v2001 = vmul.f32 %v924, %v1999
        %v2002 = vadd.f32 %v1996, %v2000
        %v2003 = vadd.f32 %v1997, %v2001
        %v2004 = vperm.slane %v1337, 5
        %v2005 = vperm.slane %v1338, 5
        %v2006 = vmul.f32 %v969, %v2004
        %v2007 = vmul.f32 %v970, %v2005
        %v2008 = vadd.f32 %v2002, %v2006
        %v2009 = vadd.f32 %v2003, %v2007
        %vm2010 = vcmp.ge.s32.totalorder %v1708, 5
        %v2011 = vsel %vm2010, 1, 0
        %vm2012 = vcmp.eq.s32.totalorder %v2011, 1
        %v2013 = vsel %vm2012, %v2008, -inf
        %v2014 = vsel %vm2012, %v2009, -inf
        %v2015 = vperm.slane %v1015, 6
        %v2016 = vperm.slane %v1016, 6
        %v2017 = vmul.f32 %v647, %v2015
        %v2018 = vmul.f32 %v648, %v2016
        %v2019 = vperm.slane %v1061, 6
        %v2020 = vperm.slane %v1062, 6
        %v2021 = vmul.f32 %v693, %v2019
        %v2022 = vmul.f32 %v694, %v2020
        %v2023 = vadd.f32 %v2017, %v2021
        %v2024 = vadd.f32 %v2018, %v2022
        %v2025 = vperm.slane %v1107, 6
        %v2026 = vperm.slane %v1108, 6
        %v2027 = vmul.f32 %v739, %v2025
        %v2028 = vmul.f32 %v740, %v2026
        %v2029 = vadd.f32 %v2023, %v2027
        %v2030 = vadd.f32 %v2024, %v2028
        %v2031 = vperm.slane %v1153, 6
        %v2032 = vperm.slane %v1154, 6
        %v2033 = vmul.f32 %v785, %v2031
        %v2034 = vmul.f32 %v786, %v2032
        %v2035 = vadd.f32 %v2029, %v2033
        %v2036 = vadd.f32 %v2030, %v2034
        %v2037 = vperm.slane %v1199, 6
        %v2038 = vperm.slane %v1200, 6
        %v2039 = vmul.f32 %v831, %v2037
        %v2040 = vmul.f32 %v832, %v2038
        %v2041 = vadd.f32 %v2035, %v2039
        %v2042 = vadd.f32 %v2036, %v2040
        %v2043 = vperm.slane %v1245, 6
        %v2044 = vperm.slane %v1246, 6
        %v2045 = vmul.f32 %v877, %v2043
        %v2046 = vmul.f32 %v878, %v2044
        %v2047 = vadd.f32 %v2041, %v2045
        %v2048 = vadd.f32 %v2042, %v2046
        %v2049 = vperm.slane %v1291, 6
        %v2050 = vperm.slane %v1292, 6
        %v2051 = vmul.f32 %v923, %v2049
        %v2052 = vmul.f32 %v924, %v2050
        %v2053 = vadd.f32 %v2047, %v2051
        %v2054 = vadd.f32 %v2048, %v2052
        %v2055 = vperm.slane %v1337, 6
        %v2056 = vperm.slane %v1338, 6
        %v2057 = vmul.f32 %v969, %v2055
        %v2058 = vmul.f32 %v970, %v2056
        %v2059 = vadd.f32 %v2053, %v2057
        %v2060 = vadd.f32 %v2054, %v2058
        %vm2061 = vcmp.ge.s32.totalorder %v1708, 6
        %v2062 = vsel %vm2061, 1, 0
        %vm2063 = vcmp.eq.s32.totalorder %v2062, 1
        %v2064 = vsel %vm2063, %v2059, -inf
        %v2065 = vsel %vm2063, %v2060, -inf
        %v2066 = vperm.slane %v1015, 7
        %v2067 = vperm.slane %v1016, 7
        %v2068 = vmul.f32 %v647, %v2066
        %v2069 = vmul.f32 %v648, %v2067
        %v2070 = vperm.slane %v1061, 7
        %v2071 = vperm.slane %v1062, 7
        %v2072 = vmul.f32 %v693, %v2070
        %v2073 = vmul.f32 %v694, %v2071
        %v2074 = vadd.f32 %v2068, %v2072
        %v2075 = vadd.f32 %v2069, %v2073
        %v2076 = vperm.slane %v1107, 7
        %v2077 = vperm.slane %v1108, 7
        %v2078 = vmul.f32 %v739, %v2076
        %v2079 = vmul.f32 %v740, %v2077
        %v2080 = vadd.f32 %v2074, %v2078
        %v2081 = vadd.f32 %v2075, %v2079
        %v2082 = vperm.slane %v1153, 7
        %v2083 = vperm.slane %v1154, 7
        %v2084 = vmul.f32 %v785, %v2082
        %v2085 = vmul.f32 %v786, %v2083
        %v2086 = vadd.f32 %v2080, %v2084
        %v2087 = vadd.f32 %v2081, %v2085
        %v2088 = vperm.slane %v1199, 7
        %v2089 = vperm.slane %v1200, 7
        %v2090 = vmul.f32 %v831, %v2088
        %v2091 = vmul.f32 %v832, %v2089
        %v2092 = vadd.f32 %v2086, %v2090
        %v2093 = vadd.f32 %v2087, %v2091
        %v2094 = vperm.slane %v1245, 7
        %v2095 = vperm.slane %v1246, 7
        %v2096 = vmul.f32 %v877, %v2094
        %v2097 = vmul.f32 %v878, %v2095
        %v2098 = vadd.f32 %v2092, %v2096
        %v2099 = vadd.f32 %v2093, %v2097
        %v2100 = vperm.slane %v1291, 7
        %v2101 = vperm.slane %v1292, 7
        %v2102 = vmul.f32 %v923, %v2100
        %v2103 = vmul.f32 %v924, %v2101
        %v2104 = vadd.f32 %v2098, %v2102
        %v2105 = vadd.f32 %v2099, %v2103
        %v2106 = vperm.slane %v1337, 7
        %v2107 = vperm.slane %v1338, 7
        %v2108 = vmul.f32 %v969, %v2106
        %v2109 = vmul.f32 %v970, %v2107
        %v2110 = vadd.f32 %v2104, %v2108
        %v2111 = vadd.f32 %v2105, %v2109
        %vm2112 = vcmp.ge.s32.totalorder %v1708, 7
        %v2113 = vsel %vm2112, 1, 0
        %vm2114 = vcmp.eq.s32.totalorder %v2113, 1
        %v2115 = vsel %vm2114, %v2110, -inf
        %v2116 = vsel %vm2114, %v2111, -inf
        %v2117 = vmax.f32 %v1758, %v1809
        %v2118 = vmax.f32 %v1759, %v1810
        %v2119 = vmax.f32 %v2117, %v1860
        %v2120 = vmax.f32 %v2118, %v1861
        %v2121 = vmax.f32 %v2119, %v1911
        %v2122 = vmax.f32 %v2120, %v1912
        %v2123 = vmax.f32 %v2121, %v1962
        %v2124 = vmax.f32 %v2122, %v1963
        %v2125 = vmax.f32 %v2123, %v2013
        %v2126 = vmax.f32 %v2124, %v2014
        %v2127 = vmax.f32 %v2125, %v2064
        %v2128 = vmax.f32 %v2126, %v2065
        %v2129 = vmax.f32 %v2127, %v2115
        %v2130 = vmax.f32 %v2128, %v2116
        %v2131 = vsub.f32 %v1758, %v2129
        %v2132 = vsub.f32 %v1759, %v2130
        %v2133 = vmul.f32 %v2131, 1.442695
        %v2134 = vpow.pop %v2133
        %v2135 = vmul.f32 %v2132, 1.442695
        %v2136 = vpow.pop %v2135
        %v2137 = vsub.f32 %v1809, %v2129
        %v2138 = vsub.f32 %v1810, %v2130
        %v2139 = vmul.f32 %v2137, 1.442695
        %v2140 = vpow.pop %v2139
        %v2141 = vmul.f32 %v2138, 1.442695
        %v2142 = vpow.pop %v2141
        %v2143 = vsub.f32 %v1860, %v2129
        %v2144 = vsub.f32 %v1861, %v2130
        %v2145 = vmul.f32 %v2143, 1.442695
        %v2146 = vpow.pop %v2145
        %v2147 = vmul.f32 %v2144, 1.442695
        %v2148 = vpow.pop %v2147
        %v2149 = vsub.f32 %v1911, %v2129
        %v2150 = vsub.f32 %v1912, %v2130
        %v2151 = vmul.f32 %v2149, 1.442695
        %v2152 = vpow.pop %v2151
        %v2153 = vmul.f32 %v2150, 1.442695
        %v2154 = vpow.pop %v2153
        %v2155 = vsub.f32 %v1962, %v2129
        %v2156 = vsub.f32 %v1963, %v2130
        %v2157 = vmul.f32 %v2155, 1.442695
        %v2158 = vpow.pop %v2157
        %v2159 = vmul.f32 %v2156, 1.442695
        %v2160 = vpow.pop %v2159
        %v2161 = vsub.f32 %v2013, %v2129
        %v2162 = vsub.f32 %v2014, %v2130
        %v2163 = vmul.f32 %v2161, 1.442695
        %v2164 = vpow.pop %v2163
        %v2165 = vmul.f32 %v2162, 1.442695
        %v2166 = vpow.pop %v2165
        %v2167 = vsub.f32 %v2064, %v2129
        %v2168 = vsub.f32 %v2065, %v2130
        %v2169 = vmul.f32 %v2167, 1.442695
        %v2170 = vpow.pop %v2169
        %v2171 = vmul.f32 %v2168, 1.442695
        %v2172 = vpow.pop %v2171
        %v2173 = vsub.f32 %v2115, %v2129
        %v2174 = vsub.f32 %v2116, %v2130
        %v2175 = vmul.f32 %v2173, 1.442695
        %v2176 = vpow.pop %v2175
        %v2177 = vmul.f32 %v2174, 1.442695
        %v2178 = vpow.pop %v2177
        %v2179 = vadd.f32 %v2134, 0.0
        %v2180 = vadd.f32 %v2136, 0.0
        %v2181 = vadd.f32 %v2179, %v2140
        %v2182 = vadd.f32 %v2180, %v2142
        %v2183 = vadd.f32 %v2181, %v2146
        %v2184 = vadd.f32 %v2182, %v2148
        %v2185 = vadd.f32 %v2183, %v2152
        %v2186 = vadd.f32 %v2184, %v2154
        %v2187 = vadd.f32 %v2185, %v2158
        %v2188 = vadd.f32 %v2186, %v2160
        %v2189 = vadd.f32 %v2187, %v2164
        %v2190 = vadd.f32 %v2188, %v2166
        %v2191 = vadd.f32 %v2189, %v2170
        %v2192 = vadd.f32 %v2190, %v2172
        %v2193 = vadd.f32 %v2191, %v2176
        %v2194 = vadd.f32 %v2192, %v2178
        %v2195 = vrcp.pop %v2193
        %v2196 = vmul.f32 %v2193, %v2195
        %v2197 = vsub.f32 1.0, %v2196
        %v2198 = vmul.f32 %v2195, %v2197
        %v2199 = vadd.f32 %v2195, %v2198
        %vm2200 = vweird.f32 %v2193
        %vm2201 = vweird.f32 %v2195
        %vm2202 = vmor %vm2200, %vm2201
        %v2203 = vsel %vm2202, %v2195, %v2199
        %v2204 = vand.u32 2147483647, %v2193
        %vm2205 = vcmp.eq.f32.partialorder %v2204, 8.507059e+37
        %v2206 = vand.u32 %v2193, 2147483648
        %v2207 = vor.u32 1.1754944e-38, %v2206
        %v2208 = vsel %vm2205, %v2207, %v2203
        %v2209 = vrcp.pop %v2194
        %v2210 = vmul.f32 %v2194, %v2209
        %v2211 = vsub.f32 1.0, %v2210
        %v2212 = vmul.f32 %v2209, %v2211
        %v2213 = vadd.f32 %v2209, %v2212
        %vm2214 = vweird.f32 %v2194
        %vm2215 = vweird.f32 %v2209
        %vm2216 = vmor %vm2214, %vm2215
        %v2217 = vsel %vm2216, %v2209, %v2213
        %v2218 = vand.u32 2147483647, %v2194
        %vm2219 = vcmp.eq.f32.partialorder %v2218, 8.507059e+37
        %v2220 = vand.u32 %v2194, 2147483648
        %v2221 = vor.u32 1.1754944e-38, %v2220
        %v2222 = vsel %vm2219, %v2221, %v2217
        %v2223 = vmul.f32 %v2134, %v2208
        %v2224 = vmul.f32 %v2136, %v2222
        %v2225 = vmul.f32 %v2140, %v2208
        %v2226 = vmul.f32 %v2142, %v2222
        %v2227 = vmul.f32 %v2146, %v2208
        %v2228 = vmul.f32 %v2148, %v2222
        %v2229 = vmul.f32 %v2152, %v2208
        %v2230 = vmul.f32 %v2154, %v2222
        %v2231 = vmul.f32 %v2158, %v2208
        %v2232 = vmul.f32 %v2160, %v2222
        %v2233 = vmul.f32 %v2164, %v2208
        %v2234 = vmul.f32 %v2166, %v2222
        %v2235 = vmul.f32 %v2170, %v2208
        %v2236 = vmul.f32 %v2172, %v2222
        %v2237 = vmul.f32 %v2176, %v2208
        %v2238 = vmul.f32 %v2178, %v2222
        %v2239 = vperm.slane %v1383, 0
        %v2240 = vperm.slane %v1384, 0
        %v2241 = vmul.f32 %v2223, %v2239
        %v2242 = vmul.f32 %v2224, %v2240
        %v2243 = vperm.slane %v1383, 1
        %v2244 = vperm.slane %v1384, 1
        %v2245 = vmul.f32 %v2225, %v2243
        %v2246 = vmul.f32 %v2226, %v2244
        %v2247 = vadd.f32 %v2241, %v2245
        %v2248 = vadd.f32 %v2242, %v2246
        %v2249 = vperm.slane %v1383, 2
        %v2250 = vperm.slane %v1384, 2
        %v2251 = vmul.f32 %v2227, %v2249
        %v2252 = vmul.f32 %v2228, %v2250
        %v2253 = vadd.f32 %v2247, %v2251
        %v2254 = vadd.f32 %v2248, %v2252
        %v2255 = vperm.slane %v1383, 3
        %v2256 = vperm.slane %v1384, 3
        %v2257 = vmul.f32 %v2229, %v2255
        %v2258 = vmul.f32 %v2230, %v2256
        %v2259 = vadd.f32 %v2253, %v2257
        %v2260 = vadd.f32 %v2254, %v2258
        %v2261 = vperm.slane %v1383, 4
        %v2262 = vperm.slane %v1384, 4
        %v2263 = vmul.f32 %v2231, %v2261
        %v2264 = vmul.f32 %v2232, %v2262
        %v2265 = vadd.f32 %v2259, %v2263
        %v2266 = vadd.f32 %v2260, %v2264
        %v2267 = vperm.slane %v1383, 5
        %v2268 = vperm.slane %v1384, 5
        %v2269 = vmul.f32 %v2233, %v2267
        %v2270 = vmul.f32 %v2234, %v2268
        %v2271 = vadd.f32 %v2265, %v2269
        %v2272 = vadd.f32 %v2266, %v2270
        %v2273 = vperm.slane %v1383, 6
        %v2274 = vperm.slane %v1384, 6
        %v2275 = vmul.f32 %v2235, %v2273
        %v2276 = vmul.f32 %v2236, %v2274
        %v2277 = vadd.f32 %v2271, %v2275
        %v2278 = vadd.f32 %v2272, %v2276
        %v2279 = vperm.slane %v1383, 7
        %v2280 = vperm.slane %v1384, 7
        %v2281 = vmul.f32 %v2237, %v2279
        %v2282 = vmul.f32 %v2238, %v2280
        %v2283 = vadd.f32 %v2277, %v2281
        %v2284 = vadd.f32 %v2278, %v2282
        %v2285 = vperm.slane %v1429, 0
        %v2286 = vperm.slane %v1430, 0
        %v2287 = vmul.f32 %v2223, %v2285
        %v2288 = vmul.f32 %v2224, %v2286
        %v2289 = vperm.slane %v1429, 1
        %v2290 = vperm.slane %v1430, 1
        %v2291 = vmul.f32 %v2225, %v2289
        %v2292 = vmul.f32 %v2226, %v2290
        %v2293 = vadd.f32 %v2287, %v2291
        %v2294 = vadd.f32 %v2288, %v2292
        %v2295 = vperm.slane %v1429, 2
        %v2296 = vperm.slane %v1430, 2
        %v2297 = vmul.f32 %v2227, %v2295
        %v2298 = vmul.f32 %v2228, %v2296
        %v2299 = vadd.f32 %v2293, %v2297
        %v2300 = vadd.f32 %v2294, %v2298
        %v2301 = vperm.slane %v1429, 3
        %v2302 = vperm.slane %v1430, 3
        %v2303 = vmul.f32 %v2229, %v2301
        %v2304 = vmul.f32 %v2230, %v2302
        %v2305 = vadd.f32 %v2299, %v2303
        %v2306 = vadd.f32 %v2300, %v2304
        %v2307 = vperm.slane %v1429, 4
        %v2308 = vperm.slane %v1430, 4
        %v2309 = vmul.f32 %v2231, %v2307
        %v2310 = vmul.f32 %v2232, %v2308
        %v2311 = vadd.f32 %v2305, %v2309
        %v2312 = vadd.f32 %v2306, %v2310
        %v2313 = vperm.slane %v1429, 5
        %v2314 = vperm.slane %v1430, 5
        %v2315 = vmul.f32 %v2233, %v2313
        %v2316 = vmul.f32 %v2234, %v2314
        %v2317 = vadd.f32 %v2311, %v2315
        %v2318 = vadd.f32 %v2312, %v2316
        %v2319 = vperm.slane %v1429, 6
        %v2320 = vperm.slane %v1430, 6
        %v2321 = vmul.f32 %v2235, %v2319
        %v2322 = vmul.f32 %v2236, %v2320
        %v2323 = vadd.f32 %v2317, %v2321
        %v2324 = vadd.f32 %v2318, %v2322
        %v2325 = vperm.slane %v1429, 7
        %v2326 = vperm.slane %v1430, 7
        %v2327 = vmul.f32 %v2237, %v2325
        %v2328 = vmul.f32 %v2238, %v2326
        %v2329 = vadd.f32 %v2323, %v2327
        %v2330 = vadd.f32 %v2324, %v2328
        %v2331 = vperm.slane %v1475, 0
        %v2332 = vperm.slane %v1476, 0
        %v2333 = vmul.f32 %v2223, %v2331
        %v2334 = vmul.f32 %v2224, %v2332
        %v2335 = vperm.slane %v1475, 1
        %v2336 = vperm.slane %v1476, 1
        %v2337 = vmul.f32 %v2225, %v2335
        %v2338 = vmul.f32 %v2226, %v2336
        %v2339 = vadd.f32 %v2333, %v2337
        %v2340 = vadd.f32 %v2334, %v2338
        %v2341 = vperm.slane %v1475, 2
        %v2342 = vperm.slane %v1476, 2
        %v2343 = vmul.f32 %v2227, %v2341
        %v2344 = vmul.f32 %v2228, %v2342
        %v2345 = vadd.f32 %v2339, %v2343
        %v2346 = vadd.f32 %v2340, %v2344
        %v2347 = vperm.slane %v1475, 3
        %v2348 = vperm.slane %v1476, 3
        %v2349 = vmul.f32 %v2229, %v2347
        %v2350 = vmul.f32 %v2230, %v2348
        %v2351 = vadd.f32 %v2345, %v2349
        %v2352 = vadd.f32 %v2346, %v2350
        %v2353 = vperm.slane %v1475, 4
        %v2354 = vperm.slane %v1476, 4
        %v2355 = vmul.f32 %v2231, %v2353
        %v2356 = vmul.f32 %v2232, %v2354
        %v2357 = vadd.f32 %v2351, %v2355
        %v2358 = vadd.f32 %v2352, %v2356
        %v2359 = vperm.slane %v1475, 5
        %v2360 = vperm.slane %v1476, 5
        %v2361 = vmul.f32 %v2233, %v2359
        %v2362 = vmul.f32 %v2234, %v2360
        %v2363 = vadd.f32 %v2357, %v2361
        %v2364 = vadd.f32 %v2358, %v2362
        %v2365 = vperm.slane %v1475, 6
        %v2366 = vperm.slane %v1476, 6
        %v2367 = vmul.f32 %v2235, %v2365
        %v2368 = vmul.f32 %v2236, %v2366
        %v2369 = vadd.f32 %v2363, %v2367
        %v2370 = vadd.f32 %v2364, %v2368
        %v2371 = vperm.slane %v1475, 7
        %v2372 = vperm.slane %v1476, 7
        %v2373 = vmul.f32 %v2237, %v2371
        %v2374 = vmul.f32 %v2238, %v2372
        %v2375 = vadd.f32 %v2369, %v2373
        %v2376 = vadd.f32 %v2370, %v2374
        %v2377 = vperm.slane %v1521, 0
        %v2378 = vperm.slane %v1522, 0
        %v2379 = vmul.f32 %v2223, %v2377
        %v2380 = vmul.f32 %v2224, %v2378
        %v2381 = vperm.slane %v1521, 1
        %v2382 = vperm.slane %v1522, 1
        %v2383 = vmul.f32 %v2225, %v2381
        %v2384 = vmul.f32 %v2226, %v2382
        %v2385 = vadd.f32 %v2379, %v2383
        %v2386 = vadd.f32 %v2380, %v2384
        %v2387 = vperm.slane %v1521, 2
        %v2388 = vperm.slane %v1522, 2
        %v2389 = vmul.f32 %v2227, %v2387
        %v2390 = vmul.f32 %v2228, %v2388
        %v2391 = vadd.f32 %v2385, %v2389
        %v2392 = vadd.f32 %v2386, %v2390
        %v2393 = vperm.slane %v1521, 3
        %v2394 = vperm.slane %v1522, 3
        %v2395 = vmul.f32 %v2229, %v2393
        %v2396 = vmul.f32 %v2230, %v2394
        %v2397 = vadd.f32 %v2391, %v2395
        %v2398 = vadd.f32 %v2392, %v2396
        %v2399 = vperm.slane %v1521, 4
        %v2400 = vperm.slane %v1522, 4
        %v2401 = vmul.f32 %v2231, %v2399
        %v2402 = vmul.f32 %v2232, %v2400
        %v2403 = vadd.f32 %v2397, %v2401
        %v2404 = vadd.f32 %v2398, %v2402
        %v2405 = vperm.slane %v1521, 5
        %v2406 = vperm.slane %v1522, 5
        %v2407 = vmul.f32 %v2233, %v2405
        %v2408 = vmul.f32 %v2234, %v2406
        %v2409 = vadd.f32 %v2403, %v2407
        %v2410 = vadd.f32 %v2404, %v2408
        %v2411 = vperm.slane %v1521, 6
        %v2412 = vperm.slane %v1522, 6
        %v2413 = vmul.f32 %v2235, %v2411
        %v2414 = vmul.f32 %v2236, %v2412
        %v2415 = vadd.f32 %v2409, %v2413
        %v2416 = vadd.f32 %v2410, %v2414
        %v2417 = vperm.slane %v1521, 7
        %v2418 = vperm.slane %v1522, 7
        %v2419 = vmul.f32 %v2237, %v2417
        %v2420 = vmul.f32 %v2238, %v2418
        %v2421 = vadd.f32 %v2415, %v2419
        %v2422 = vadd.f32 %v2416, %v2420
        %v2423 = vperm.slane %v1567, 0
        %v2424 = vperm.slane %v1568, 0
        %v2425 = vmul.f32 %v2223, %v2423
        %v2426 = vmul.f32 %v2224, %v2424
        %v2427 = vperm.slane %v1567, 1
        %v2428 = vperm.slane %v1568, 1
        %v2429 = vmul.f32 %v2225, %v2427
        %v2430 = vmul.f32 %v2226, %v2428
        %v2431 = vadd.f32 %v2425, %v2429
        %v2432 = vadd.f32 %v2426, %v2430
        %v2433 = vperm.slane %v1567, 2
        %v2434 = vperm.slane %v1568, 2
        %v2435 = vmul.f32 %v2227, %v2433
        %v2436 = vmul.f32 %v2228, %v2434
        %v2437 = vadd.f32 %v2431, %v2435
        %v2438 = vadd.f32 %v2432, %v2436
        %v2439 = vperm.slane %v1567, 3
        %v2440 = vperm.slane %v1568, 3
        %v2441 = vmul.f32 %v2229, %v2439
        %v2442 = vmul.f32 %v2230, %v2440
        %v2443 = vadd.f32 %v2437, %v2441
        %v2444 = vadd.f32 %v2438, %v2442
        %v2445 = vperm.slane %v1567, 4
        %v2446 = vperm.slane %v1568, 4
        %v2447 = vmul.f32 %v2231, %v2445
        %v2448 = vmul.f32 %v2232, %v2446
        %v2449 = vadd.f32 %v2443, %v2447
        %v2450 = vadd.f32 %v2444, %v2448
        %v2451 = vperm.slane %v1567, 5
        %v2452 = vperm.slane %v1568, 5
        %v2453 = vmul.f32 %v2233, %v2451
        %v2454 = vmul.f32 %v2234, %v2452
        %v2455 = vadd.f32 %v2449, %v2453
        %v2456 = vadd.f32 %v2450, %v2454
        %v2457 = vperm.slane %v1567, 6
        %v2458 = vperm.slane %v1568, 6
        %v2459 = vmul.f32 %v2235, %v2457
        %v2460 = vmul.f32 %v2236, %v2458
        %v2461 = vadd.f32 %v2455, %v2459
        %v2462 = vadd.f32 %v2456, %v2460
        %v2463 = vperm.slane %v1567, 7
        %v2464 = vperm.slane %v1568, 7
        %v2465 = vmul.f32 %v2237, %v2463
        %v2466 = vmul.f32 %v2238, %v2464
        %v2467 = vadd.f32 %v2461, %v2465
        %v2468 = vadd.f32 %v2462, %v2466
        %v2469 = vperm.slane %v1613, 0
        %v2470 = vperm.slane %v1614, 0
        %v2471 = vmul.f32 %v2223, %v2469
        %v2472 = vmul.f32 %v2224, %v2470
        %v2473 = vperm.slane %v1613, 1
        %v2474 = vperm.slane %v1614, 1
        %v2475 = vmul.f32 %v2225, %v2473
        %v2476 = vmul.f32 %v2226, %v2474
        %v2477 = vadd.f32 %v2471, %v2475
        %v2478 = vadd.f32 %v2472, %v2476
        %v2479 = vperm.slane %v1613, 2
        %v2480 = vperm.slane %v1614, 2
        %v2481 = vmul.f32 %v2227, %v2479
        %v2482 = vmul.f32 %v2228, %v2480
        %v2483 = vadd.f32 %v2477, %v2481
        %v2484 = vadd.f32 %v2478, %v2482
        %v2485 = vperm.slane %v1613, 3
        %v2486 = vperm.slane %v1614, 3
        %v2487 = vmul.f32 %v2229, %v2485
        %v2488 = vmul.f32 %v2230, %v2486
        %v2489 = vadd.f32 %v2483, %v2487
        %v2490 = vadd.f32 %v2484, %v2488
        %v2491 = vperm.slane %v1613, 4
        %v2492 = vperm.slane %v1614, 4
        %v2493 = vmul.f32 %v2231, %v2491
        %v2494 = vmul.f32 %v2232, %v2492
        %v2495 = vadd.f32 %v2489, %v2493
        %v2496 = vadd.f32 %v2490, %v2494
        %v2497 = vperm.slane %v1613, 5
        %v2498 = vperm.slane %v1614, 5
        %v2499 = vmul.f32 %v2233, %v2497
        %v2500 = vmul.f32 %v2234, %v2498
        %v2501 = vadd.f32 %v2495, %v2499
        %v2502 = vadd.f32 %v2496, %v2500
        %v2503 = vperm.slane %v1613, 6
        %v2504 = vperm.slane %v1614, 6
        %v2505 = vmul.f32 %v2235, %v2503
        %v2506 = vmul.f32 %v2236, %v2504
        %v2507 = vadd.f32 %v2501, %v2505
        %v2508 = vadd.f32 %v2502, %v2506
        %v2509 = vperm.slane %v1613, 7
        %v2510 = vperm.slane %v1614, 7
        %v2511 = vmul.f32 %v2237, %v2509
        %v2512 = vmul.f32 %v2238, %v2510
        %v2513 = vadd.f32 %v2507, %v2511
        %v2514 = vadd.f32 %v2508, %v2512
        %v2515 = vperm.slane %v1659, 0
        %v2516 = vperm.slane %v1660, 0
        %v2517 = vmul.f32 %v2223, %v2515
        %v2518 = vmul.f32 %v2224, %v2516
        %v2519 = vperm.slane %v1659, 1
        %v2520 = vperm.slane %v1660, 1
        %v2521 = vmul.f32 %v2225, %v2519
        %v2522 = vmul.f32 %v2226, %v2520
        %v2523 = vadd.f32 %v2517, %v2521
        %v2524 = vadd.f32 %v2518, %v2522
        %v2525 = vperm.slane %v1659, 2
        %v2526 = vperm.slane %v1660, 2
        %v2527 = vmul.f32 %v2227, %v2525
        %v2528 = vmul.f32 %v2228, %v2526
        %v2529 = vadd.f32 %v2523, %v2527
        %v2530 = vadd.f32 %v2524, %v2528
        %v2531 = vperm.slane %v1659, 3
        %v2532 = vperm.slane %v1660, 3
        %v2533 = vmul.f32 %v2229, %v2531
        %v2534 = vmul.f32 %v2230, %v2532
        %v2535 = vadd.f32 %v2529, %v2533
        %v2536 = vadd.f32 %v2530, %v2534
        %v2537 = vperm.slane %v1659, 4
        %v2538 = vperm.slane %v1660, 4
        %v2539 = vmul.f32 %v2231, %v2537
        %v2540 = vmul.f32 %v2232, %v2538
        %v2541 = vadd.f32 %v2535, %v2539
        %v2542 = vadd.f32 %v2536, %v2540
        %v2543 = vperm.slane %v1659, 5
        %v2544 = vperm.slane %v1660, 5
        %v2545 = vmul.f32 %v2233, %v2543
        %v2546 = vmul.f32 %v2234, %v2544
        %v2547 = vadd.f32 %v2541, %v2545
        %v2548 = vadd.f32 %v2542, %v2546
        %v2549 = vperm.slane %v1659, 6
        %v2550 = vperm.slane %v1660, 6
        %v2551 = vmul.f32 %v2235, %v2549
        %v2552 = vmul.f32 %v2236, %v2550
        %v2553 = vadd.f32 %v2547, %v2551
        %v2554 = vadd.f32 %v2548, %v2552
        %v2555 = vperm.slane %v1659, 7
        %v2556 = vperm.slane %v1660, 7
        %v2557 = vmul.f32 %v2237, %v2555
        %v2558 = vmul.f32 %v2238, %v2556
        %v2559 = vadd.f32 %v2553, %v2557
        %v2560 = vadd.f32 %v2554, %v2558
        %v2561 = vperm.slane %v1705, 0
        %v2562 = vperm.slane %v1706, 0
        %v2563 = vmul.f32 %v2223, %v2561
        %v2564 = vmul.f32 %v2224, %v2562
        %v2565 = vperm.slane %v1705, 1
        %v2566 = vperm.slane %v1706, 1
        %v2567 = vmul.f32 %v2225, %v2565
        %v2568 = vmul.f32 %v2226, %v2566
        %v2569 = vadd.f32 %v2563, %v2567
        %v2570 = vadd.f32 %v2564, %v2568
        %v2571 = vperm.slane %v1705, 2
        %v2572 = vperm.slane %v1706, 2
        %v2573 = vmul.f32 %v2227, %v2571
        %v2574 = vmul.f32 %v2228, %v2572
        %v2575 = vadd.f32 %v2569, %v2573
        %v2576 = vadd.f32 %v2570, %v2574
        %v2577 = vperm.slane %v1705, 3
        %v2578 = vperm.slane %v1706, 3
        %v2579 = vmul.f32 %v2229, %v2577
        %v2580 = vmul.f32 %v2230, %v2578
        %v2581 = vadd.f32 %v2575, %v2579
        %v2582 = vadd.f32 %v2576, %v2580
        %v2583 = vperm.slane %v1705, 4
        %v2584 = vperm.slane %v1706, 4
        %v2585 = vmul.f32 %v2231, %v2583
        %v2586 = vmul.f32 %v2232, %v2584
        %v2587 = vadd.f32 %v2581, %v2585
        %v2588 = vadd.f32 %v2582, %v2586
        %v2589 = vperm.slane %v1705, 5
        %v2590 = vperm.slane %v1706, 5
        %v2591 = vmul.f32 %v2233, %v2589
        %v2592 = vmul.f32 %v2234, %v2590
        %v2593 = vadd.f32 %v2587, %v2591
        %v2594 = vadd.f32 %v2588, %v2592
        %v2595 = vperm.slane %v1705, 6
        %v2596 = vperm.slane %v1706, 6
        %v2597 = vmul.f32 %v2235, %v2595
        %v2598 = vmul.f32 %v2236, %v2596
        %v2599 = vadd.f32 %v2593, %v2597
        %v2600 = vadd.f32 %v2594, %v2598
        %v2601 = vperm.slane %v1705, 7
        %v2602 = vperm.slane %v1706, 7
        %v2603 = vmul.f32 %v2237, %v2601
        %v2604 = vmul.f32 %v2238, %v2602
        %v2605 = vadd.f32 %v2599, %v2603
        %v2606 = vadd.f32 %v2600, %v2604
        %v2607 = vadd.f32 %v406, %v2283
        %v2608 = vadd.f32 %v407, %v2284
        %v2609 = vadd.f32 %v409, %v2329
        %v2610 = vadd.f32 %v410, %v2330
        %v2611 = vadd.f32 %v412, %v2375
        %v2612 = vadd.f32 %v413, %v2376
        %v2613 = vadd.f32 %v415, %v2421
        %v2614 = vadd.f32 %v416, %v2422
        %v2615 = vadd.f32 %v418, %v2467
        %v2616 = vadd.f32 %v419, %v2468
        %v2617 = vadd.f32 %v421, %v2513
        %v2618 = vadd.f32 %v422, %v2514
        %v2619 = vadd.f32 %v424, %v2559
        %v2620 = vadd.f32 %v425, %v2560
        %v2621 = vadd.f32 %v427, %v2605
        %v2622 = vadd.f32 %v428, %v2606
        %v2623 = vadd.f32 %v2607, 0.0
        %v2624 = vadd.f32 %v2608, 0.0
        %v2625 = vadd.f32 %v2623, %v2609
        %v2626 = vadd.f32 %v2624, %v2610
        %v2627 = vadd.f32 %v2625, %v2611
        %v2628 = vadd.f32 %v2626, %v2612
        %v2629 = vadd.f32 %v2627, %v2613
        %v2630 = vadd.f32 %v2628, %v2614
        %v2631 = vadd.f32 %v2629, %v2615
        %v2632 = vadd.f32 %v2630, %v2616
        %v2633 = vadd.f32 %v2631, %v2617
        %v2634 = vadd.f32 %v2632, %v2618
        %v2635 = vadd.f32 %v2633, %v2619
        %v2636 = vadd.f32 %v2634, %v2620
        %v2637 = vadd.f32 %v2635, %v2621
        %v2638 = vadd.f32 %v2636, %v2622
        %v2639 = vmul.f32 %v2637, 0.125
        %v2640 = vmul.f32 %v2638, 0.125
        %v2641 = vsub.f32 %v2607, %v2639
        %v2642 = vsub.f32 %v2608, %v2640
        %v2643 = vmul.f32 %v2641, %v2641
        %v2644 = vmul.f32 %v2642, %v2642
        %v2645 = vadd.f32 %v2643, 0.0
        %v2646 = vadd.f32 %v2644, 0.0
        %v2647 = vsub.f32 %v2609, %v2639
        %v2648 = vsub.f32 %v2610, %v2640
        %v2649 = vmul.f32 %v2647, %v2647
        %v2650 = vmul.f32 %v2648, %v2648
        %v2651 = vadd.f32 %v2645, %v2649
        %v2652 = vadd.f32 %v2646, %v2650
        %v2653 = vsub.f32 %v2611, %v2639
        %v2654 = vsub.f32 %v2612, %v2640
        %v2655 = vmul.f32 %v2653, %v2653
        %v2656 = vmul.f32 %v2654, %v2654
        %v2657 = vadd.f32 %v2651, %v2655
        %v2658 = vadd.f32 %v2652, %v2656
        %v2659 = vsub.f32 %v2613, %v2639
        %v2660 = vsub.f32 %v2614, %v2640
        %v2661 = vmul.f32 %v2659, %v2659
        %v2662 = vmul.f32 %v2660, %v2660
        %v2663 = vadd.f32 %v2657, %v2661
        %v2664 = vadd.f32 %v2658, %v2662
        %v2665 = vsub.f32 %v2615, %v2639
        %v2666 = vsub.f32 %v2616, %v2640
        %v2667 = vmul.f32 %v2665, %v2665
        %v2668 = vmul.f32 %v2666, %v2666
        %v2669 = vadd.f32 %v2663, %v2667
        %v2670 = vadd.f32 %v2664, %v2668
        %v2671 = vsub.f32 %v2617, %v2639
        %v2672 = vsub.f32 %v2618, %v2640
        %v2673 = vmul.f32 %v2671, %v2671
        %v2674 = vmul.f32 %v2672, %v2672
        %v2675 = vadd.f32 %v2669, %v2673
        %v2676 = vadd.f32 %v2670, %v2674
        %v2677 = vsub.f32 %v2619, %v2639
        %v2678 = vsub.f32 %v2620, %v2640
        %v2679 = vmul.f32 %v2677, %v2677
        %v2680 = vmul.f32 %v2678, %v2678
        %v2681 = vadd.f32 %v2675, %v2679
        %v2682 = vadd.f32 %v2676, %v2680
        %v2683 = vsub.f32 %v2621, %v2639
        %v2684 = vsub.f32 %v2622, %v2640
        %v2685 = vmul.f32 %v2683, %v2683
        %v2686 = vmul.f32 %v2684, %v2684
        %v2687 = vadd.f32 %v2681, %v2685
        %v2688 = vadd.f32 %v2682, %v2686
        %v2689 = vmul.f32 %v2687, 0.14285715
        %v2690 = vmul.f32 %v2688, 0.14285715
        %v2691 = vrsqrt.pop %v2689
        %v2692 = vmul.f32 %v2691, %v2689
        %v2693 = vmul.f32 %v2692, %v2691
        %v2694 = vmul.f32 0.5, %v2693
        %v2695 = vsub.f32 1.5, %v2694
        %v2696 = vmul.f32 %v2691, %v2695
        %v2697 = vmul.f32 %v2689, %v2696
        %vm2698 = vcmp.eq.f32.partialorder %v2689, inf
        %v2699 = vsel %vm2698, %v2689, %v2697
        %vm2700 = vcmp.eq.f32.partialorder %v2689, 0.0
        %v2701 = vand.u32 %v2689, 2147483648
        %v2702 = vsel %vm2700, %v2701, %v2699
        %v2703 = vrsqrt.pop %v2690
        %v2704 = vmul.f32 %v2703, %v2690
        %v2705 = vmul.f32 %v2704, %v2703
        %v2706 = vmul.f32 0.5, %v2705
        %v2707 = vsub.f32 1.5, %v2706
        %v2708 = vmul.f32 %v2703, %v2707
        %v2709 = vmul.f32 %v2690, %v2708
        %vm2710 = vcmp.eq.f32.partialorder %v2690, inf
        %v2711 = vsel %vm2710, %v2690, %v2709
        %vm2712 = vcmp.eq.f32.partialorder %v2690, 0.0
        %v2713 = vand.u32 %v2690, 2147483648
        %v2714 = vsel %vm2712, %v2713, %v2711
        %v2715 = vadd.f32 %v2702, 1e-06
        %v2716 = vadd.f32 %v2714, 1e-06
        %v2717 = vrcp.pop %v2715
        %v2718 = vmul.f32 %v2715, %v2717
        %v2719 = vsub.f32 1.0, %v2718
        %v2720 = vmul.f32 %v2717, %v2719
        %v2721 = vadd.f32 %v2717, %v2720
        %vm2722 = vweird.f32 %v2715
        %vm2723 = vweird.f32 %v2717
        %vm2724 = vmor %vm2722, %vm2723
        %v2725 = vsel %vm2724, %v2717, %v2721
        %v2726 = vand.u32 2147483647, %v2715
        %vm2727 = vcmp.eq.f32.partialorder %v2726, 8.507059e+37
        %v2728 = vand.u32 %v2715, 2147483648
        %v2729 = vor.u32 1.1754944e-38, %v2728
        %v2730 = vsel %vm2727, %v2729, %v2725
        %v2731 = vmul.f32 1.0, %v2730
        %v2732 = vrcp.pop %v2716
        %v2733 = vmul.f32 %v2716, %v2732
        %v2734 = vsub.f32 1.0, %v2733
        %v2735 = vmul.f32 %v2732, %v2734
        %v2736 = vadd.f32 %v2732, %v2735
        %vm2737 = vweird.f32 %v2716
        %vm2738 = vweird.f32 %v2732
        %vm2739 = vmor %vm2737, %vm2738
        %v2740 = vsel %vm2739, %v2732, %v2736
        %v2741 = vand.u32 2147483647, %v2716
        %vm2742 = vcmp.eq.f32.partialorder %v2741, 8.507059e+37
        %v2743 = vand.u32 %v2716, 2147483648
        %v2744 = vor.u32 1.1754944e-38, %v2743
        %v2745 = vsel %vm2742, %v2744, %v2740
        %v2746 = vmul.f32 1.0, %v2745
        %v2747 = vstv %s404
        %v2748 = vmul.f32 %v2747, %v2641
        %v2749 = vmul.f32 %v2747, %v2642
        %v2750 = vmul.f32 %v2748, %v2731
        %v2751 = vmul.f32 %v2749, %v2746
        %v2752 = vstv %s405
        %v2753 = vadd.f32 %v2750, %v2752
        %v2754 = vadd.f32 %v2751, %v2752
        %v2755 = vmul.f32 %v2747, %v2647
        %v2756 = vmul.f32 %v2747, %v2648
        %v2757 = vmul.f32 %v2755, %v2731
        %v2758 = vmul.f32 %v2756, %v2746
        %v2759 = vadd.f32 %v2757, %v2752
        %v2760 = vadd.f32 %v2758, %v2752
        %v2761 = vmul.f32 %v2747, %v2653
        %v2762 = vmul.f32 %v2747, %v2654
        %v2763 = vmul.f32 %v2761, %v2731
        %v2764 = vmul.f32 %v2762, %v2746
        %v2765 = vadd.f32 %v2763, %v2752
        %v2766 = vadd.f32 %v2764, %v2752
        %v2767 = vmul.f32 %v2747, %v2659
        %v2768 = vmul.f32 %v2747, %v2660
        %v2769 = vmul.f32 %v2767, %v2731
        %v2770 = vmul.f32 %v2768, %v2746
        %v2771 = vadd.f32 %v2769, %v2752
        %v2772 = vadd.f32 %v2770, %v2752
        %v2773 = vmul.f32 %v2747, %v2665
        %v2774 = vmul.f32 %v2747, %v2666
        %v2775 = vmul.f32 %v2773, %v2731
        %v2776 = vmul.f32 %v2774, %v2746
        %v2777 = vadd.f32 %v2775, %v2752
        %v2778 = vadd.f32 %v2776, %v2752
        %v2779 = vmul.f32 %v2747, %v2671
        %v2780 = vmul.f32 %v2747, %v2672
        %v2781 = vmul.f32 %v2779, %v2731
        %v2782 = vmul.f32 %v2780, %v2746
        %v2783 = vadd.f32 %v2781, %v2752
        %v2784 = vadd.f32 %v2782, %v2752
        %v2785 = vmul.f32 %v2747, %v2677
        %v2786 = vmul.f32 %v2747, %v2678
        %v2787 = vmul.f32 %v2785, %v2731
        %v2788 = vmul.f32 %v2786, %v2746
        %v2789 = vadd.f32 %v2787, %v2752
        %v2790 = vadd.f32 %v2788, %v2752
        %v2791 = vmul.f32 %v2747, %v2683
        %v2792 = vmul.f32 %v2747, %v2684
        %v2793 = vmul.f32 %v2791, %v2731
        %v2794 = vmul.f32 %v2792, %v2746
        %v2795 = vadd.f32 %v2793, %v2752
        %v2796 = vadd.f32 %v2794, %v2752
        %s2797 = sld [smem:[#allocation5]]
        %v2798 = vstv %s2797
        %v2799 = vmul.f32 %v2753, %v2798
        %v2800 = vmul.f32 %v2754, %v2798
        %s2801 = sld [smem:[#allocation5 + $0x80]]
        %v2802 = vstv %s2801
        %v2803 = vmul.f32 %v2759, %v2802
        %v2804 = vmul.f32 %v2760, %v2802
        %v2805 = vadd.f32 %v2799, %v2803
        %v2806 = vadd.f32 %v2800, %v2804
        %s2807 = sld [smem:[#allocation5 + $0x100]]
        %v2808 = vstv %s2807
        %v2809 = vmul.f32 %v2765, %v2808
        %v2810 = vmul.f32 %v2766, %v2808
        %v2811 = vadd.f32 %v2805, %v2809
        %v2812 = vadd.f32 %v2806, %v2810
        %s2813 = sld [smem:[#allocation5 + $0x180]]
        %v2814 = vstv %s2813
        %v2815 = vmul.f32 %v2771, %v2814
        %v2816 = vmul.f32 %v2772, %v2814
        %v2817 = vadd.f32 %v2811, %v2815
        %v2818 = vadd.f32 %v2812, %v2816
        %s2819 = sld [smem:[#allocation5 + $0x200]]
        %v2820 = vstv %s2819
        %v2821 = vmul.f32 %v2777, %v2820
        %v2822 = vmul.f32 %v2778, %v2820
        %v2823 = vadd.f32 %v2817, %v2821
        %v2824 = vadd.f32 %v2818, %v2822
        %s2825 = sld [smem:[#allocation5 + $0x280]]
        %v2826 = vstv %s2825
        %v2827 = vmul.f32 %v2783, %v2826
        %v2828 = vmul.f32 %v2784, %v2826
        %v2829 = vadd.f32 %v2823, %v2827
        %v2830 = vadd.f32 %v2824, %v2828
        %s2831 = sld [smem:[#allocation5 + $0x300]]
        %v2832 = vstv %s2831
        %v2833 = vmul.f32 %v2789, %v2832
        %v2834 = vmul.f32 %v2790, %v2832
        %v2835 = vadd.f32 %v2829, %v2833
        %v2836 = vadd.f32 %v2830, %v2834
        %s2837 = sld [smem:[#allocation5 + $0x380]]
        %v2838 = vstv %s2837
        %v2839 = vmul.f32 %v2795, %v2838
        %v2840 = vmul.f32 %v2796, %v2838
        %v2841 = vadd.f32 %v2835, %v2839
        %v2842 = vadd.f32 %v2836, %v2840
        %s2843 = sld [smem:[#allocation7]]
        %v2844 = vstv %s2843
        %v2845 = vadd.f32 %v2841, %v2844
        %v2846 = vadd.f32 %v2842, %v2844
        %s2847 = sld [smem:[#allocation5 + $0x1]]
        %v2848 = vstv %s2847
        %v2849 = vmul.f32 %v2753, %v2848
        %v2850 = vmul.f32 %v2754, %v2848
        %s2851 = sld [smem:[#allocation5 + $0x81]]
        %v2852 = vstv %s2851
        %v2853 = vmul.f32 %v2759, %v2852
        %v2854 = vmul.f32 %v2760, %v2852
        %v2855 = vadd.f32 %v2849, %v2853
        %v2856 = vadd.f32 %v2850, %v2854
        %s2857 = sld [smem:[#allocation5 + $0x101]]
        %v2858 = vstv %s2857
        %v2859 = vmul.f32 %v2765, %v2858
        %v2860 = vmul.f32 %v2766, %v2858
        %v2861 = vadd.f32 %v2855, %v2859
        %v2862 = vadd.f32 %v2856, %v2860
        %s2863 = sld [smem:[#allocation5 + $0x181]]
        %v2864 = vstv %s2863
        %v2865 = vmul.f32 %v2771, %v2864
        %v2866 = vmul.f32 %v2772, %v2864
        %v2867 = vadd.f32 %v2861, %v2865
        %v2868 = vadd.f32 %v2862, %v2866
        %s2869 = sld [smem:[#allocation5 + $0x201]]
        %v2870 = vstv %s2869
        %v2871 = vmul.f32 %v2777, %v2870
        %v2872 = vmul.f32 %v2778, %v2870
        %v2873 = vadd.f32 %v2867, %v2871
        %v2874 = vadd.f32 %v2868, %v2872
        %s2875 = sld [smem:[#allocation5 + $0x281]]
        %v2876 = vstv %s2875
        %v2877 = vmul.f32 %v2783, %v2876
        %v2878 = vmul.f32 %v2784, %v2876
        %v2879 = vadd.f32 %v2873, %v2877
        %v2880 = vadd.f32 %v2874, %v2878
        %s2881 = sld [smem:[#allocation5 + $0x301]]
        %v2882 = vstv %s2881
        %v2883 = vmul.f32 %v2789, %v2882
        %v2884 = vmul.f32 %v2790, %v2882
        %v2885 = vadd.f32 %v2879, %v2883
        %v2886 = vadd.f32 %v2880, %v2884
        %s2887 = sld [smem:[#allocation5 + $0x381]]
        %v2888 = vstv %s2887
        %v2889 = vmul.f32 %v2795, %v2888
        %v2890 = vmul.f32 %v2796, %v2888
        %v2891 = vadd.f32 %v2885, %v2889
        %v2892 = vadd.f32 %v2886, %v2890
        %s2893 = sld [smem:[#allocation7 + $0x1]]
        %v2894 = vstv %s2893
        %v2895 = vadd.f32 %v2891, %v2894
        %v2896 = vadd.f32 %v2892, %v2894
        %s2897 = sld [smem:[#allocation5 + $0x2]]
        %v2898 = vstv %s2897
        %v2899 = vmul.f32 %v2753, %v2898
        %v2900 = vmul.f32 %v2754, %v2898
        %s2901 = sld [smem:[#allocation5 + $0x82]]
        %v2902 = vstv %s2901
        %v2903 = vmul.f32 %v2759, %v2902
        %v2904 = vmul.f32 %v2760, %v2902
        %v2905 = vadd.f32 %v2899, %v2903
        %v2906 = vadd.f32 %v2900, %v2904
        %s2907 = sld [smem:[#allocation5 + $0x102]]
        %v2908 = vstv %s2907
        %v2909 = vmul.f32 %v2765, %v2908
        %v2910 = vmul.f32 %v2766, %v2908
        %v2911 = vadd.f32 %v2905, %v2909
        %v2912 = vadd.f32 %v2906, %v2910
        %s2913 = sld [smem:[#allocation5 + $0x182]]
        %v2914 = vstv %s2913
        %v2915 = vmul.f32 %v2771, %v2914
        %v2916 = vmul.f32 %v2772, %v2914
        %v2917 = vadd.f32 %v2911, %v2915
        %v2918 = vadd.f32 %v2912, %v2916
        %s2919 = sld [smem:[#allocation5 + $0x202]]
        %v2920 = vstv %s2919
        %v2921 = vmul.f32 %v2777, %v2920
        %v2922 = vmul.f32 %v2778, %v2920
        %v2923 = vadd.f32 %v2917, %v2921
        %v2924 = vadd.f32 %v2918, %v2922
        %s2925 = sld [smem:[#allocation5 + $0x282]]
        %v2926 = vstv %s2925
        %v2927 = vmul.f32 %v2783, %v2926
        %v2928 = vmul.f32 %v2784, %v2926
        %v2929 = vadd.f32 %v2923, %v2927
        %v2930 = vadd.f32 %v2924, %v2928
        %s2931 = sld [smem:[#allocation5 + $0x302]]
        %v2932 = vstv %s2931
        %v2933 = vmul.f32 %v2789, %v2932
        %v2934 = vmul.f32 %v2790, %v2932
        %v2935 = vadd.f32 %v2929, %v2933
        %v2936 = vadd.f32 %v2930, %v2934
        %s2937 = sld [smem:[#allocation5 + $0x382]]
        %v2938 = vstv %s2937
        %v2939 = vmul.f32 %v2795, %v2938
        %v2940 = vmul.f32 %v2796, %v2938
        %v2941 = vadd.f32 %v2935, %v2939
        %v2942 = vadd.f32 %v2936, %v2940
        %s2943 = sld [smem:[#allocation7 + $0x2]]
        %v2944 = vstv %s2943
        %v2945 = vadd.f32 %v2941, %v2944
        %v2946 = vadd.f32 %v2942, %v2944
        %s2947 = sld [smem:[#allocation5 + $0x3]]
        %v2948 = vstv %s2947
        %v2949 = vmul.f32 %v2753, %v2948
        %v2950 = vmul.f32 %v2754, %v2948
        %s2951 = sld [smem:[#allocation5 + $0x83]]
        %v2952 = vstv %s2951
        %v2953 = vmul.f32 %v2759, %v2952
        %v2954 = vmul.f32 %v2760, %v2952
        %v2955 = vadd.f32 %v2949, %v2953
        %v2956 = vadd.f32 %v2950, %v2954
        %s2957 = sld [smem:[#allocation5 + $0x103]]
        %v2958 = vstv %s2957
        %v2959 = vmul.f32 %v2765, %v2958
        %v2960 = vmul.f32 %v2766, %v2958
        %v2961 = vadd.f32 %v2955, %v2959
        %v2962 = vadd.f32 %v2956, %v2960
        %s2963 = sld [smem:[#allocation5 + $0x183]]
        %v2964 = vstv %s2963
        %v2965 = vmul.f32 %v2771, %v2964
        %v2966 = vmul.f32 %v2772, %v2964
        %v2967 = vadd.f32 %v2961, %v2965
        %v2968 = vadd.f32 %v2962, %v2966
        %s2969 = sld [smem:[#allocation5 + $0x203]]
        %v2970 = vstv %s2969
        %v2971 = vmul.f32 %v2777, %v2970
        %v2972 = vmul.f32 %v2778, %v2970
        %v2973 = vadd.f32 %v2967, %v2971
        %v2974 = vadd.f32 %v2968, %v2972
        %s2975 = sld [smem:[#allocation5 + $0x283]]
        %v2976 = vstv %s2975
        %v2977 = vmul.f32 %v2783, %v2976
        %v2978 = vmul.f32 %v2784, %v2976
        %v2979 = vadd.f32 %v2973, %v2977
        %v2980 = vadd.f32 %v2974, %v2978
        %s2981 = sld [smem:[#allocation5 + $0x303]]
        %v2982 = vstv %s2981
        %v2983 = vmul.f32 %v2789, %v2982
        %v2984 = vmul.f32 %v2790, %v2982
        %v2985 = vadd.f32 %v2979, %v2983
        %v2986 = vadd.f32 %v2980, %v2984
        %s2987 = sld [smem:[#allocation5 + $0x383]]
        %v2988 = vstv %s2987
        %v2989 = vmul.f32 %v2795, %v2988
        %v2990 = vmul.f32 %v2796, %v2988
        %v2991 = vadd.f32 %v2985, %v2989
        %v2992 = vadd.f32 %v2986, %v2990
        %s2993 = sld [smem:[#allocation7 + $0x3]]
        %v2994 = vstv %s2993
        %v2995 = vadd.f32 %v2991, %v2994
        %v2996 = vadd.f32 %v2992, %v2994
        %s2997 = sld [smem:[#allocation5 + $0x4]]
        %v2998 = vstv %s2997
        %v2999 = vmul.f32 %v2753, %v2998
        %v3000 = vmul.f32 %v2754, %v2998
        %s3001 = sld [smem:[#allocation5 + $0x84]]
        %v3002 = vstv %s3001
        %v3003 = vmul.f32 %v2759, %v3002
        %v3004 = vmul.f32 %v2760, %v3002
        %v3005 = vadd.f32 %v2999, %v3003
        %v3006 = vadd.f32 %v3000, %v3004
        %s3007 = sld [smem:[#allocation5 + $0x104]]
        %v3008 = vstv %s3007
        %v3009 = vmul.f32 %v2765, %v3008
        %v3010 = vmul.f32 %v2766, %v3008
        %v3011 = vadd.f32 %v3005, %v3009
        %v3012 = vadd.f32 %v3006, %v3010
        %s3013 = sld [smem:[#allocation5 + $0x184]]
        %v3014 = vstv %s3013
        %v3015 = vmul.f32 %v2771, %v3014
        %v3016 = vmul.f32 %v2772, %v3014
        %v3017 = vadd.f32 %v3011, %v3015
        %v3018 = vadd.f32 %v3012, %v3016
        %s3019 = sld [smem:[#allocation5 + $0x204]]
        %v3020 = vstv %s3019
        %v3021 = vmul.f32 %v2777, %v3020
        %v3022 = vmul.f32 %v2778, %v3020
        %v3023 = vadd.f32 %v3017, %v3021
        %v3024 = vadd.f32 %v3018, %v3022
        %s3025 = sld [smem:[#allocation5 + $0x284]]
        %v3026 = vstv %s3025
        %v3027 = vmul.f32 %v2783, %v3026
        %v3028 = vmul.f32 %v2784, %v3026
        %v3029 = vadd.f32 %v3023, %v3027
        %v3030 = vadd.f32 %v3024, %v3028
        %s3031 = sld [smem:[#allocation5 + $0x304]]
        %v3032 = vstv %s3031
        %v3033 = vmul.f32 %v2789, %v3032
        %v3034 = vmul.f32 %v2790, %v3032
        %v3035 = vadd.f32 %v3029, %v3033
        %v3036 = vadd.f32 %v3030, %v3034
        %s3037 = sld [smem:[#allocation5 + $0x384]]
        %v3038 = vstv %s3037
        %v3039 = vmul.f32 %v2795, %v3038
        %v3040 = vmul.f32 %v2796, %v3038
        %v3041 = vadd.f32 %v3035, %v3039
        %v3042 = vadd.f32 %v3036, %v3040
        %s3043 = sld [smem:[#allocation7 + $0x4]]
        %v3044 = vstv %s3043
        %v3045 = vadd.f32 %v3041, %v3044
        %v3046 = vadd.f32 %v3042, %v3044
        %s3047 = sld [smem:[#allocation5 + $0x5]]
        %v3048 = vstv %s3047
        %v3049 = vmul.f32 %v2753, %v3048
        %v3050 = vmul.f32 %v2754, %v3048
        %s3051 = sld [smem:[#allocation5 + $0x85]]
        %v3052 = vstv %s3051
        %v3053 = vmul.f32 %v2759, %v3052
        %v3054 = vmul.f32 %v2760, %v3052
        %v3055 = vadd.f32 %v3049, %v3053
        %v3056 = vadd.f32 %v3050, %v3054
        %s3057 = sld [smem:[#allocation5 + $0x105]]
        %v3058 = vstv %s3057
        %v3059 = vmul.f32 %v2765, %v3058
        %v3060 = vmul.f32 %v2766, %v3058
        %v3061 = vadd.f32 %v3055, %v3059
        %v3062 = vadd.f32 %v3056, %v3060
        %s3063 = sld [smem:[#allocation5 + $0x185]]
        %v3064 = vstv %s3063
        %v3065 = vmul.f32 %v2771, %v3064
        %v3066 = vmul.f32 %v2772, %v3064
        %v3067 = vadd.f32 %v3061, %v3065
        %v3068 = vadd.f32 %v3062, %v3066
        %s3069 = sld [smem:[#allocation5 + $0x205]]
        %v3070 = vstv %s3069
        %v3071 = vmul.f32 %v2777, %v3070
        %v3072 = vmul.f32 %v2778, %v3070
        %v3073 = vadd.f32 %v3067, %v3071
        %v3074 = vadd.f32 %v3068, %v3072
        %s3075 = sld [smem:[#allocation5 + $0x285]]
        %v3076 = vstv %s3075
        %v3077 = vmul.f32 %v2783, %v3076
        %v3078 = vmul.f32 %v2784, %v3076
        %v3079 = vadd.f32 %v3073, %v3077
        %v3080 = vadd.f32 %v3074, %v3078
        %s3081 = sld [smem:[#allocation5 + $0x305]]
        %v3082 = vstv %s3081
        %v3083 = vmul.f32 %v2789, %v3082
        %v3084 = vmul.f32 %v2790, %v3082
        %v3085 = vadd.f32 %v3079, %v3083
        %v3086 = vadd.f32 %v3080, %v3084
        %s3087 = sld [smem:[#allocation5 + $0x385]]
        %v3088 = vstv %s3087
        %v3089 = vmul.f32 %v2795, %v3088
        %v3090 = vmul.f32 %v2796, %v3088
        %v3091 = vadd.f32 %v3085, %v3089
        %v3092 = vadd.f32 %v3086, %v3090
        %s3093 = sld [smem:[#allocation7 + $0x5]]
        %v3094 = vstv %s3093
        %v3095 = vadd.f32 %v3091, %v3094
        %v3096 = vadd.f32 %v3092, %v3094
        %s3097 = sld [smem:[#allocation5 + $0x6]]
        %v3098 = vstv %s3097
        %v3099 = vmul.f32 %v2753, %v3098
        %v3100 = vmul.f32 %v2754, %v3098
        %s3101 = sld [smem:[#allocation5 + $0x86]]
        %v3102 = vstv %s3101
        %v3103 = vmul.f32 %v2759, %v3102
        %v3104 = vmul.f32 %v2760, %v3102
        %v3105 = vadd.f32 %v3099, %v3103
        %v3106 = vadd.f32 %v3100, %v3104
        %s3107 = sld [smem:[#allocation5 + $0x106]]
        %v3108 = vstv %s3107
        %v3109 = vmul.f32 %v2765, %v3108
        %v3110 = vmul.f32 %v2766, %v3108
        %v3111 = vadd.f32 %v3105, %v3109
        %v3112 = vadd.f32 %v3106, %v3110
        %s3113 = sld [smem:[#allocation5 + $0x186]]
        %v3114 = vstv %s3113
        %v3115 = vmul.f32 %v2771, %v3114
        %v3116 = vmul.f32 %v2772, %v3114
        %v3117 = vadd.f32 %v3111, %v3115
        %v3118 = vadd.f32 %v3112, %v3116
        %s3119 = sld [smem:[#allocation5 + $0x206]]
        %v3120 = vstv %s3119
        %v3121 = vmul.f32 %v2777, %v3120
        %v3122 = vmul.f32 %v2778, %v3120
        %v3123 = vadd.f32 %v3117, %v3121
        %v3124 = vadd.f32 %v3118, %v3122
        %s3125 = sld [smem:[#allocation5 + $0x286]]
        %v3126 = vstv %s3125
        %v3127 = vmul.f32 %v2783, %v3126
        %v3128 = vmul.f32 %v2784, %v3126
        %v3129 = vadd.f32 %v3123, %v3127
        %v3130 = vadd.f32 %v3124, %v3128
        %s3131 = sld [smem:[#allocation5 + $0x306]]
        %v3132 = vstv %s3131
        %v3133 = vmul.f32 %v2789, %v3132
        %v3134 = vmul.f32 %v2790, %v3132
        %v3135 = vadd.f32 %v3129, %v3133
        %v3136 = vadd.f32 %v3130, %v3134
        %s3137 = sld [smem:[#allocation5 + $0x386]]
        %v3138 = vstv %s3137
        %v3139 = vmul.f32 %v2795, %v3138
        %v3140 = vmul.f32 %v2796, %v3138
        %v3141 = vadd.f32 %v3135, %v3139
        %v3142 = vadd.f32 %v3136, %v3140
        %s3143 = sld [smem:[#allocation7 + $0x6]]
        %v3144 = vstv %s3143
        %v3145 = vadd.f32 %v3141, %v3144
        %v3146 = vadd.f32 %v3142, %v3144
        %s3147 = sld [smem:[#allocation5 + $0x7]]
        %v3148 = vstv %s3147
        %v3149 = vmul.f32 %v2753, %v3148
        %v3150 = vmul.f32 %v2754, %v3148
        %s3151 = sld [smem:[#allocation5 + $0x87]]
        %v3152 = vstv %s3151
        %v3153 = vmul.f32 %v2759, %v3152
        %v3154 = vmul.f32 %v2760, %v3152
        %v3155 = vadd.f32 %v3149, %v3153
        %v3156 = vadd.f32 %v3150, %v3154
        %s3157 = sld [smem:[#allocation5 + $0x107]]
        %v3158 = vstv %s3157
        %v3159 = vmul.f32 %v2765, %v3158
        %v3160 = vmul.f32 %v2766, %v3158
        %v3161 = vadd.f32 %v3155, %v3159
        %v3162 = vadd.f32 %v3156, %v3160
        %s3163 = sld [smem:[#allocation5 + $0x187]]
        %v3164 = vstv %s3163
        %v3165 = vmul.f32 %v2771, %v3164
        %v3166 = vmul.f32 %v2772, %v3164
        %v3167 = vadd.f32 %v3161, %v3165
        %v3168 = vadd.f32 %v3162, %v3166
        %s3169 = sld [smem:[#allocation5 + $0x207]]
        %v3170 = vstv %s3169
        %v3171 = vmul.f32 %v2777, %v3170
        %v3172 = vmul.f32 %v2778, %v3170
        %v3173 = vadd.f32 %v3167, %v3171
        %v3174 = vadd.f32 %v3168, %v3172
        %s3175 = sld [smem:[#allocation5 + $0x287]]
        %v3176 = vstv %s3175
        %v3177 = vmul.f32 %v2783, %v3176
        %v3178 = vmul.f32 %v2784, %v3176
        %v3179 = vadd.f32 %v3173, %v3177
        %v3180 = vadd.f32 %v3174, %v3178
        %s3181 = sld [smem:[#allocation5 + $0x307]]
        %v3182 = vstv %s3181
        %v3183 = vmul.f32 %v2789, %v3182
        %v3184 = vmul.f32 %v2790, %v3182
        %v3185 = vadd.f32 %v3179, %v3183
        %v3186 = vadd.f32 %v3180, %v3184
        %s3187 = sld [smem:[#allocation5 + $0x387]]
        %v3188 = vstv %s3187
        %v3189 = vmul.f32 %v2795, %v3188
        %v3190 = vmul.f32 %v2796, %v3188
        %v3191 = vadd.f32 %v3185, %v3189
        %v3192 = vadd.f32 %v3186, %v3190
        %s3193 = sld [smem:[#allocation7 + $0x7]]
        %v3194 = vstv %s3193
        %v3195 = vadd.f32 %v3191, %v3194
        %v3196 = vadd.f32 %v3192, %v3194
        %s3197 = sld [smem:[#allocation8]]
        %v3198 = vstv %s3197
        %v3199 = vmul.f32 %v2845, %v3198
        %v3200 = vmul.f32 %v2846, %v3198
        %s3201 = sld [smem:[#allocation8 + $0x80]]
        %v3202 = vstv %s3201
        %v3203 = vmul.f32 %v2895, %v3202
        %v3204 = vmul.f32 %v2896, %v3202
        %v3205 = vadd.f32 %v3199, %v3203
        %v3206 = vadd.f32 %v3200, %v3204
        %s3207 = sld [smem:[#allocation8 + $0x100]]
        %v3208 = vstv %s3207
        %v3209 = vmul.f32 %v2945, %v3208
        %v3210 = vmul.f32 %v2946, %v3208
        %v3211 = vadd.f32 %v3205, %v3209
        %v3212 = vadd.f32 %v3206, %v3210
        %s3213 = sld [smem:[#allocation8 + $0x180]]
        %v3214 = vstv %s3213
        %v3215 = vmul.f32 %v2995, %v3214
        %v3216 = vmul.f32 %v2996, %v3214
        %v3217 = vadd.f32 %v3211, %v3215
        %v3218 = vadd.f32 %v3212, %v3216
        %s3219 = sld [smem:[#allocation8 + $0x200]]
        %v3220 = vstv %s3219
        %v3221 = vmul.f32 %v3045, %v3220
        %v3222 = vmul.f32 %v3046, %v3220
        %v3223 = vadd.f32 %v3217, %v3221
        %v3224 = vadd.f32 %v3218, %v3222
        %s3225 = sld [smem:[#allocation8 + $0x280]]
        %v3226 = vstv %s3225
        %v3227 = vmul.f32 %v3095, %v3226
        %v3228 = vmul.f32 %v3096, %v3226
        %v3229 = vadd.f32 %v3223, %v3227
        %v3230 = vadd.f32 %v3224, %v3228
        %s3231 = sld [smem:[#allocation8 + $0x300]]
        %v3232 = vstv %s3231
        %v3233 = vmul.f32 %v3145, %v3232
        %v3234 = vmul.f32 %v3146, %v3232
        %v3235 = vadd.f32 %v3229, %v3233
        %v3236 = vadd.f32 %v3230, %v3234
        %s3237 = sld [smem:[#allocation8 + $0x380]]
        %v3238 = vstv %s3237
        %v3239 = vmul.f32 %v3195, %v3238
        %v3240 = vmul.f32 %v3196, %v3238
        %v3241 = vadd.f32 %v3235, %v3239
        %v3242 = vadd.f32 %v3236, %v3240
        %s3243 = sld [smem:[#allocation10]]
        %v3244 = vstv %s3243
        %v3245 = vadd.f32 %v3241, %v3244
        %v3246 = vadd.f32 %v3242, %v3244
        %s3247 = sld [smem:[#allocation8 + $0x1]]
        %v3248 = vstv %s3247
        %v3249 = vmul.f32 %v2845, %v3248
        %v3250 = vmul.f32 %v2846, %v3248
        %s3251 = sld [smem:[#allocation8 + $0x81]]
        %v3252 = vstv %s3251
        %v3253 = vmul.f32 %v2895, %v3252
        %v3254 = vmul.f32 %v2896, %v3252
        %v3255 = vadd.f32 %v3249, %v3253
        %v3256 = vadd.f32 %v3250, %v3254
        %s3257 = sld [smem:[#allocation8 + $0x101]]
        %v3258 = vstv %s3257
        %v3259 = vmul.f32 %v2945, %v3258
        %v3260 = vmul.f32 %v2946, %v3258
        %v3261 = vadd.f32 %v3255, %v3259
        %v3262 = vadd.f32 %v3256, %v3260
        %s3263 = sld [smem:[#allocation8 + $0x181]]
        %v3264 = vstv %s3263
        %v3265 = vmul.f32 %v2995, %v3264
        %v3266 = vmul.f32 %v2996, %v3264
        %v3267 = vadd.f32 %v3261, %v3265
        %v3268 = vadd.f32 %v3262, %v3266
        %s3269 = sld [smem:[#allocation8 + $0x201]]
        %v3270 = vstv %s3269
        %v3271 = vmul.f32 %v3045, %v3270
        %v3272 = vmul.f32 %v3046, %v3270
        %v3273 = vadd.f32 %v3267, %v3271
        %v3274 = vadd.f32 %v3268, %v3272
        %s3275 = sld [smem:[#allocation8 + $0x281]]
        %v3276 = vstv %s3275
        %v3277 = vmul.f32 %v3095, %v3276
        %v3278 = vmul.f32 %v3096, %v3276
        %v3279 = vadd.f32 %v3273, %v3277
        %v3280 = vadd.f32 %v3274, %v3278
        %s3281 = sld [smem:[#allocation8 + $0x301]]
        %v3282 = vstv %s3281
        %v3283 = vmul.f32 %v3145, %v3282
        %v3284 = vmul.f32 %v3146, %v3282
        %v3285 = vadd.f32 %v3279, %v3283
        %v3286 = vadd.f32 %v3280, %v3284
        %s3287 = sld [smem:[#allocation8 + $0x381]]
        %v3288 = vstv %s3287
        %v3289 = vmul.f32 %v3195, %v3288
        %v3290 = vmul.f32 %v3196, %v3288
        %v3291 = vadd.f32 %v3285, %v3289
        %v3292 = vadd.f32 %v3286, %v3290
        %s3293 = sld [smem:[#allocation10 + $0x1]]
        %v3294 = vstv %s3293
        %v3295 = vadd.f32 %v3291, %v3294
        %v3296 = vadd.f32 %v3292, %v3294
        %s3297 = sld [smem:[#allocation8 + $0x2]]
        %v3298 = vstv %s3297
        %v3299 = vmul.f32 %v2845, %v3298
        %v3300 = vmul.f32 %v2846, %v3298
        %s3301 = sld [smem:[#allocation8 + $0x82]]
        %v3302 = vstv %s3301
        %v3303 = vmul.f32 %v2895, %v3302
        %v3304 = vmul.f32 %v2896, %v3302
        %v3305 = vadd.f32 %v3299, %v3303
        %v3306 = vadd.f32 %v3300, %v3304
        %s3307 = sld [smem:[#allocation8 + $0x102]]
        %v3308 = vstv %s3307
        %v3309 = vmul.f32 %v2945, %v3308
        %v3310 = vmul.f32 %v2946, %v3308
        %v3311 = vadd.f32 %v3305, %v3309
        %v3312 = vadd.f32 %v3306, %v3310
        %s3313 = sld [smem:[#allocation8 + $0x182]]
        %v3314 = vstv %s3313
        %v3315 = vmul.f32 %v2995, %v3314
        %v3316 = vmul.f32 %v2996, %v3314
        %v3317 = vadd.f32 %v3311, %v3315
        %v3318 = vadd.f32 %v3312, %v3316
        %s3319 = sld [smem:[#allocation8 + $0x202]]
        %v3320 = vstv %s3319
        %v3321 = vmul.f32 %v3045, %v3320
        %v3322 = vmul.f32 %v3046, %v3320
        %v3323 = vadd.f32 %v3317, %v3321
        %v3324 = vadd.f32 %v3318, %v3322
        %s3325 = sld [smem:[#allocation8 + $0x282]]
        %v3326 = vstv %s3325
        %v3327 = vmul.f32 %v3095, %v3326
        %v3328 = vmul.f32 %v3096, %v3326
        %v3329 = vadd.f32 %v3323, %v3327
        %v3330 = vadd.f32 %v3324, %v3328
        %s3331 = sld [smem:[#allocation8 + $0x302]]
        %v3332 = vstv %s3331
        %v3333 = vmul.f32 %v3145, %v3332
        %v3334 = vmul.f32 %v3146, %v3332
        %v3335 = vadd.f32 %v3329, %v3333
        %v3336 = vadd.f32 %v3330, %v3334
        %s3337 = sld [smem:[#allocation8 + $0x382]]
        %v3338 = vstv %s3337
        %v3339 = vmul.f32 %v3195, %v3338
        %v3340 = vmul.f32 %v3196, %v3338
        %v3341 = vadd.f32 %v3335, %v3339
        %v3342 = vadd.f32 %v3336, %v3340
        %s3343 = sld [smem:[#allocation10 + $0x2]]
        %v3344 = vstv %s3343
        %v3345 = vadd.f32 %v3341, %v3344
        %v3346 = vadd.f32 %v3342, %v3344
        %s3347 = sld [smem:[#allocation8 + $0x3]]
        %v3348 = vstv %s3347
        %v3349 = vmul.f32 %v2845, %v3348
        %v3350 = vmul.f32 %v2846, %v3348
        %s3351 = sld [smem:[#allocation8 + $0x83]]
        %v3352 = vstv %s3351
        %v3353 = vmul.f32 %v2895, %v3352
        %v3354 = vmul.f32 %v2896, %v3352
        %v3355 = vadd.f32 %v3349, %v3353
        %v3356 = vadd.f32 %v3350, %v3354
        %s3357 = sld [smem:[#allocation8 + $0x103]]
        %v3358 = vstv %s3357
        %v3359 = vmul.f32 %v2945, %v3358
        %v3360 = vmul.f32 %v2946, %v3358
        %v3361 = vadd.f32 %v3355, %v3359
        %v3362 = vadd.f32 %v3356, %v3360
        %s3363 = sld [smem:[#allocation8 + $0x183]]
        %v3364 = vstv %s3363
        %v3365 = vmul.f32 %v2995, %v3364
        %v3366 = vmul.f32 %v2996, %v3364
        %v3367 = vadd.f32 %v3361, %v3365
        %v3368 = vadd.f32 %v3362, %v3366
        %s3369 = sld [smem:[#allocation8 + $0x203]]
        %v3370 = vstv %s3369
        %v3371 = vmul.f32 %v3045, %v3370
        %v3372 = vmul.f32 %v3046, %v3370
        %v3373 = vadd.f32 %v3367, %v3371
        %v3374 = vadd.f32 %v3368, %v3372
        %s3375 = sld [smem:[#allocation8 + $0x283]]
        %v3376 = vstv %s3375
        %v3377 = vmul.f32 %v3095, %v3376
        %v3378 = vmul.f32 %v3096, %v3376
        %v3379 = vadd.f32 %v3373, %v3377
        %v3380 = vadd.f32 %v3374, %v3378
        %s3381 = sld [smem:[#allocation8 + $0x303]]
        %v3382 = vstv %s3381
        %v3383 = vmul.f32 %v3145, %v3382
        %v3384 = vmul.f32 %v3146, %v3382
        %v3385 = vadd.f32 %v3379, %v3383
        %v3386 = vadd.f32 %v3380, %v3384
        %s3387 = sld [smem:[#allocation8 + $0x383]]
        %v3388 = vstv %s3387
        %v3389 = vmul.f32 %v3195, %v3388
        %v3390 = vmul.f32 %v3196, %v3388
        %v3391 = vadd.f32 %v3385, %v3389
        %v3392 = vadd.f32 %v3386, %v3390
        %s3393 = sld [smem:[#allocation10 + $0x3]]
        %v3394 = vstv %s3393
        %v3395 = vadd.f32 %v3391, %v3394
        %v3396 = vadd.f32 %v3392, %v3394
        %s3397 = sld [smem:[#allocation8 + $0x4]]
        %v3398 = vstv %s3397
        %v3399 = vmul.f32 %v2845, %v3398
        %v3400 = vmul.f32 %v2846, %v3398
        %s3401 = sld [smem:[#allocation8 + $0x84]]
        %v3402 = vstv %s3401
        %v3403 = vmul.f32 %v2895, %v3402
        %v3404 = vmul.f32 %v2896, %v3402
        %v3405 = vadd.f32 %v3399, %v3403
        %v3406 = vadd.f32 %v3400, %v3404
        %s3407 = sld [smem:[#allocation8 + $0x104]]
        %v3408 = vstv %s3407
        %v3409 = vmul.f32 %v2945, %v3408
        %v3410 = vmul.f32 %v2946, %v3408
        %v3411 = vadd.f32 %v3405, %v3409
        %v3412 = vadd.f32 %v3406, %v3410
        %s3413 = sld [smem:[#allocation8 + $0x184]]
        %v3414 = vstv %s3413
        %v3415 = vmul.f32 %v2995, %v3414
        %v3416 = vmul.f32 %v2996, %v3414
        %v3417 = vadd.f32 %v3411, %v3415
        %v3418 = vadd.f32 %v3412, %v3416
        %s3419 = sld [smem:[#allocation8 + $0x204]]
        %v3420 = vstv %s3419
        %v3421 = vmul.f32 %v3045, %v3420
        %v3422 = vmul.f32 %v3046, %v3420
        %v3423 = vadd.f32 %v3417, %v3421
        %v3424 = vadd.f32 %v3418, %v3422
        %s3425 = sld [smem:[#allocation8 + $0x284]]
        %v3426 = vstv %s3425
        %v3427 = vmul.f32 %v3095, %v3426
        %v3428 = vmul.f32 %v3096, %v3426
        %v3429 = vadd.f32 %v3423, %v3427
        %v3430 = vadd.f32 %v3424, %v3428
        %s3431 = sld [smem:[#allocation8 + $0x304]]
        %v3432 = vstv %s3431
        %v3433 = vmul.f32 %v3145, %v3432
        %v3434 = vmul.f32 %v3146, %v3432
        %v3435 = vadd.f32 %v3429, %v3433
        %v3436 = vadd.f32 %v3430, %v3434
        %s3437 = sld [smem:[#allocation8 + $0x384]]
        %v3438 = vstv %s3437
        %v3439 = vmul.f32 %v3195, %v3438
        %v3440 = vmul.f32 %v3196, %v3438
        %v3441 = vadd.f32 %v3435, %v3439
        %v3442 = vadd.f32 %v3436, %v3440
        %s3443 = sld [smem:[#allocation10 + $0x4]]
        %v3444 = vstv %s3443
        %v3445 = vadd.f32 %v3441, %v3444
        %v3446 = vadd.f32 %v3442, %v3444
        %s3447 = sld [smem:[#allocation8 + $0x5]]
        %v3448 = vstv %s3447
        %v3449 = vmul.f32 %v2845, %v3448
        %v3450 = vmul.f32 %v2846, %v3448
        %s3451 = sld [smem:[#allocation8 + $0x85]]
        %v3452 = vstv %s3451
        %v3453 = vmul.f32 %v2895, %v3452
        %v3454 = vmul.f32 %v2896, %v3452
        %v3455 = vadd.f32 %v3449, %v3453
        %v3456 = vadd.f32 %v3450, %v3454
        %s3457 = sld [smem:[#allocation8 + $0x105]]
        %v3458 = vstv %s3457
        %v3459 = vmul.f32 %v2945, %v3458
        %v3460 = vmul.f32 %v2946, %v3458
        %v3461 = vadd.f32 %v3455, %v3459
        %v3462 = vadd.f32 %v3456, %v3460
        %s3463 = sld [smem:[#allocation8 + $0x185]]
        %v3464 = vstv %s3463
        %v3465 = vmul.f32 %v2995, %v3464
        %v3466 = vmul.f32 %v2996, %v3464
        %v3467 = vadd.f32 %v3461, %v3465
        %v3468 = vadd.f32 %v3462, %v3466
        %s3469 = sld [smem:[#allocation8 + $0x205]]
        %v3470 = vstv %s3469
        %v3471 = vmul.f32 %v3045, %v3470
        %v3472 = vmul.f32 %v3046, %v3470
        %v3473 = vadd.f32 %v3467, %v3471
        %v3474 = vadd.f32 %v3468, %v3472
        %s3475 = sld [smem:[#allocation8 + $0x285]]
        %v3476 = vstv %s3475
        %v3477 = vmul.f32 %v3095, %v3476
        %v3478 = vmul.f32 %v3096, %v3476
        %v3479 = vadd.f32 %v3473, %v3477
        %v3480 = vadd.f32 %v3474, %v3478
        %s3481 = sld [smem:[#allocation8 + $0x305]]
        %v3482 = vstv %s3481
        %v3483 = vmul.f32 %v3145, %v3482
        %v3484 = vmul.f32 %v3146, %v3482
        %v3485 = vadd.f32 %v3479, %v3483
        %v3486 = vadd.f32 %v3480, %v3484
        %s3487 = sld [smem:[#allocation8 + $0x385]]
        %v3488 = vstv %s3487
        %v3489 = vmul.f32 %v3195, %v3488
        %v3490 = vmul.f32 %v3196, %v3488
        %v3491 = vadd.f32 %v3485, %v3489
        %v3492 = vadd.f32 %v3486, %v3490
        %s3493 = sld [smem:[#allocation10 + $0x5]]
        %v3494 = vstv %s3493
        %v3495 = vadd.f32 %v3491, %v3494
        %v3496 = vadd.f32 %v3492, %v3494
        %s3497 = sld [smem:[#allocation8 + $0x6]]
        %v3498 = vstv %s3497
        %v3499 = vmul.f32 %v2845, %v3498
        %v3500 = vmul.f32 %v2846, %v3498
        %s3501 = sld [smem:[#allocation8 + $0x86]]
        %v3502 = vstv %s3501
        %v3503 = vmul.f32 %v2895, %v3502
        %v3504 = vmul.f32 %v2896, %v3502
        %v3505 = vadd.f32 %v3499, %v3503
        %v3506 = vadd.f32 %v3500, %v3504
        %s3507 = sld [smem:[#allocation8 + $0x106]]
        %v3508 = vstv %s3507
        %v3509 = vmul.f32 %v2945, %v3508
        %v3510 = vmul.f32 %v2946, %v3508
        %v3511 = vadd.f32 %v3505, %v3509
        %v3512 = vadd.f32 %v3506, %v3510
        %s3513 = sld [smem:[#allocation8 + $0x186]]
        %v3514 = vstv %s3513
        %v3515 = vmul.f32 %v2995, %v3514
        %v3516 = vmul.f32 %v2996, %v3514
        %v3517 = vadd.f32 %v3511, %v3515
        %v3518 = vadd.f32 %v3512, %v3516
        %s3519 = sld [smem:[#allocation8 + $0x206]]
        %v3520 = vstv %s3519
        %v3521 = vmul.f32 %v3045, %v3520
        %v3522 = vmul.f32 %v3046, %v3520
        %v3523 = vadd.f32 %v3517, %v3521
        %v3524 = vadd.f32 %v3518, %v3522
        %s3525 = sld [smem:[#allocation8 + $0x286]]
        %v3526 = vstv %s3525
        %v3527 = vmul.f32 %v3095, %v3526
        %v3528 = vmul.f32 %v3096, %v3526
        %v3529 = vadd.f32 %v3523, %v3527
        %v3530 = vadd.f32 %v3524, %v3528
        %s3531 = sld [smem:[#allocation8 + $0x306]]
        %v3532 = vstv %s3531
        %v3533 = vmul.f32 %v3145, %v3532
        %v3534 = vmul.f32 %v3146, %v3532
        %v3535 = vadd.f32 %v3529, %v3533
        %v3536 = vadd.f32 %v3530, %v3534
        %s3537 = sld [smem:[#allocation8 + $0x386]]
        %v3538 = vstv %s3537
        %v3539 = vmul.f32 %v3195, %v3538
        %v3540 = vmul.f32 %v3196, %v3538
        %v3541 = vadd.f32 %v3535, %v3539
        %v3542 = vadd.f32 %v3536, %v3540
        %s3543 = sld [smem:[#allocation10 + $0x6]]
        %v3544 = vstv %s3543
        %v3545 = vadd.f32 %v3541, %v3544
        %v3546 = vadd.f32 %v3542, %v3544
        %s3547 = sld [smem:[#allocation8 + $0x7]]
        %v3548 = vstv %s3547
        %v3549 = vmul.f32 %v2845, %v3548
        %v3550 = vmul.f32 %v2846, %v3548
        %s3551 = sld [smem:[#allocation8 + $0x87]]
        %v3552 = vstv %s3551
        %v3553 = vmul.f32 %v2895, %v3552
        %v3554 = vmul.f32 %v2896, %v3552
        %v3555 = vadd.f32 %v3549, %v3553
        %v3556 = vadd.f32 %v3550, %v3554
        %s3557 = sld [smem:[#allocation8 + $0x107]]
        %v3558 = vstv %s3557
        %v3559 = vmul.f32 %v2945, %v3558
        %v3560 = vmul.f32 %v2946, %v3558
        %v3561 = vadd.f32 %v3555, %v3559
        %v3562 = vadd.f32 %v3556, %v3560
        %s3563 = sld [smem:[#allocation8 + $0x187]]
        %v3564 = vstv %s3563
        %v3565 = vmul.f32 %v2995, %v3564
        %v3566 = vmul.f32 %v2996, %v3564
        %v3567 = vadd.f32 %v3561, %v3565
        %v3568 = vadd.f32 %v3562, %v3566
        %s3569 = sld [smem:[#allocation8 + $0x207]]
        %v3570 = vstv %s3569
        %v3571 = vmul.f32 %v3045, %v3570
        %v3572 = vmul.f32 %v3046, %v3570
        %v3573 = vadd.f32 %v3567, %v3571
        %v3574 = vadd.f32 %v3568, %v3572
        %s3575 = sld [smem:[#allocation8 + $0x287]]
        %v3576 = vstv %s3575
        %v3577 = vmul.f32 %v3095, %v3576
        %v3578 = vmul.f32 %v3096, %v3576
        %v3579 = vadd.f32 %v3573, %v3577
        %v3580 = vadd.f32 %v3574, %v3578
        %s3581 = sld [smem:[#allocation8 + $0x307]]
        %v3582 = vstv %s3581
        %v3583 = vmul.f32 %v3145, %v3582
        %v3584 = vmul.f32 %v3146, %v3582
        %v3585 = vadd.f32 %v3579, %v3583
        %v3586 = vadd.f32 %v3580, %v3584
        %s3587 = sld [smem:[#allocation8 + $0x387]]
        %v3588 = vstv %s3587
        %v3589 = vmul.f32 %v3195, %v3588
        %v3590 = vmul.f32 %v3196, %v3588
        %v3591 = vadd.f32 %v3585, %v3589
        %v3592 = vadd.f32 %v3586, %v3590
        %s3593 = sld [smem:[#allocation10 + $0x7]]
        %v3594 = vstv %s3593
        %v3595 = vadd.f32 %v3591, %v3594
        %v3596 = vadd.f32 %v3592, %v3594
        %v3597 = vmax.f32 %v3245, 0.0
        %v3598 = vmax.f32 %v3246, 0.0
        %v3599 = vadd.f32 %v2607, %v3597
        %v3600 = vadd.f32 %v2608, %v3598
        %3601 = vst [vmem:[%s399] sm:$0xff] %v3599
        %3602 = vst [vmem:[%s399 + $0x8] sm:$0xff] %v3600
        %v3603 = vmax.f32 %v3295, 0.0
        %v3604 = vmax.f32 %v3296, 0.0
        %v3605 = vadd.f32 %v2609, %v3603
        %v3606 = vadd.f32 %v2610, %v3604
        %s3607 = scalar_lea.vmem %s399, 16 [#allocation13]
        %3608 = vst [vmem:[%s3607] sm:$0xff] %v3605
        %3609 = vst [vmem:[%s3607 + $0x8] sm:$0xff] %v3606
        %v3610 = vmax.f32 %v3345, 0.0
        %v3611 = vmax.f32 %v3346, 0.0
        %v3612 = vadd.f32 %v2611, %v3610
        %v3613 = vadd.f32 %v2612, %v3611
        %s3614 = scalar_lea.vmem %s399, 32 [#allocation13]
        %3615 = vst [vmem:[%s3614] sm:$0xff] %v3612
        %3616 = vst [vmem:[%s3614 + $0x8] sm:$0xff] %v3613
        %v3617 = vmax.f32 %v3395, 0.0
        %v3618 = vmax.f32 %v3396, 0.0
        %v3619 = vadd.f32 %v2613, %v3617
        %v3620 = vadd.f32 %v2614, %v3618
        %s3621 = scalar_lea.vmem %s399, 48 [#allocation13]
        %3622 = vst [vmem:[%s3621] sm:$0xff] %v3619
        %3623 = vst [vmem:[%s3621 + $0x8] sm:$0xff] %v3620
        %v3624 = vmax.f32 %v3445, 0.0
        %v3625 = vmax.f32 %v3446, 0.0
        %v3626 = vadd.f32 %v2615, %v3624
        %v3627 = vadd.f32 %v2616, %v3625
        %s3628 = scalar_lea.vmem %s399, 64 [#allocation13]
        %3629 = vst [vmem:[%s3628] sm:$0xff] %v3626
        %3630 = vst [vmem:[%s3628 + $0x8] sm:$0xff] %v3627
        %v3631 = vmax.f32 %v3495, 0.0
        %v3632 = vmax.f32 %v3496, 0.0
        %v3633 = vadd.f32 %v2617, %v3631
        %v3634 = vadd.f32 %v2618, %v3632
        %s3635 = scalar_lea.vmem %s399, 80 [#allocation13]
        %3636 = vst [vmem:[%s3635] sm:$0xff] %v3633
        %3637 = vst [vmem:[%s3635 + $0x8] sm:$0xff] %v3634
        %v3638 = vmax.f32 %v3545, 0.0
        %v3639 = vmax.f32 %v3546, 0.0
        %v3640 = vadd.f32 %v2619, %v3638
        %v3641 = vadd.f32 %v2620, %v3639
        %s3642 = scalar_lea.vmem %s399, 96 [#allocation13]
        %3643 = vst [vmem:[%s3642] sm:$0xff] %v3640
        %3644 = vst [vmem:[%s3642 + $0x8] sm:$0xff] %v3641
        %v3645 = vmax.f32 %v3595, 0.0
        %v3646 = vmax.f32 %v3596, 0.0
        %v3647 = vadd.f32 %v2621, %v3645
        %v3648 = vadd.f32 %v2622, %v3646
        %s3649 = scalar_lea.vmem %s399, 112 [#allocation13]
        %3650 = vst [vmem:[%s3649] sm:$0xff] %v3647
        %3651 = vst [vmem:[%s3649 + $0x8] sm:$0xff] %v3648
        %s3652 = sand.u32 %s182, 1
        %s3653 = sand.u32 %s182, 1
        %s3654 = smul.addr %s3653, 128
        %s3655 = scalar_lea.vmem [#allocation13], %s3654
        // Predicated region
        $region96: #{block_forward.1} parent=66 // pred_check
          %p3656 = pneg %p192
        $region97: #{block_forward.1} parent=66 // pred_check_branch
          %3658 = sbr.rel (%p3656) target = $region99
        $region98: #{block_forward.1} parent=66 // pred_region
          %s3659 = smul.u32 2, %s22
          %s3660 = smul.addr %s3659, 8
          %s3661 = scalar_lea.vmem %s7, %s3660
          // Predicated region
          $region100: #{block_forward.1} parent=98 // pred_check
            _
          $region101: #{block_forward.1} parent=98 // pred_check_branch
            %3663 = sbr.rel (0) target = $region103
          $region102: #{block_forward.1} parent=98 // pred_region
            // Predicated region
            $region104: #{block_forward.1} parent=102 // pred_check
              _
            $region105: #{block_forward.1} parent=102 // pred_check_branch
              %3665 = sbr.rel (0) target = $region107
            $region106: #{block_forward.1} parent=102 // pred_region
              loop: start=0, step=1, limit=1
              $region108: #{block_forward.1} parent=106 // loop_pre_header
                _
              $region109: #{block_forward.1} parent=106 // loop_header
                %s3667 = sphi 0, %s3671
                %p3668 = scmp.ge.s32.totalorder %s3667, 1
                %s3672 = sphi %s3655, %s3655
                %s3673 = sphi %s3661, %s3661
              $region110: #{block_forward.1} parent=106 // loop_header_branch
                %3670 = sbr.rel (%p3668) target = $region114
              $region111: #{block_forward.1} parent=106 // loop_body
                %v3674 = vld [vmem:[%s3672] sm:$0xff]
                %3675 = vst [vmem:[%s3673] sm:$0xff] %v3674
                %v3676 = vld [vmem:[%s3672 + $0x8] sm:$0xff]
                %3677 = vst [vmem:[%s3673 + $0x8] sm:$0xff] %v3676
                %v3678 = vld [vmem:[%s3672 + $0x10] sm:$0xff]
                %3679 = vst [vmem:[%s3673 + $0x40] sm:$0xff] %v3678
                %v3680 = vld [vmem:[%s3672 + $0x18] sm:$0xff]
                %3681 = vst [vmem:[%s3673 + $0x48] sm:$0xff] %v3680
                %v3682 = vld [vmem:[%s3672 + $0x20] sm:$0xff]
                %3683 = vst [vmem:[%s3673 + $0x80] sm:$0xff] %v3682
                %v3684 = vld [vmem:[%s3672 + $0x28] sm:$0xff]
                %3685 = vst [vmem:[%s3673 + $0x88] sm:$0xff] %v3684
                %v3686 = vld [vmem:[%s3672 + $0x30] sm:$0xff]
                %3687 = vst [vmem:[%s3673 + $0xc0] sm:$0xff] %v3686
                %v3688 = vld [vmem:[%s3672 + $0x38] sm:$0xff]
                %3689 = vst [vmem:[%s3673 + $0xc8] sm:$0xff] %v3688
                %v3690 = vld [vmem:[%s3672 + $0x40] sm:$0xff]
                %3691 = vst [vmem:[%s3673 + $0x100] sm:$0xff] %v3690
                %v3692 = vld [vmem:[%s3672 + $0x48] sm:$0xff]
                %3693 = vst [vmem:[%s3673 + $0x108] sm:$0xff] %v3692
                %v3694 = vld [vmem:[%s3672 + $0x50] sm:$0xff]
                %3695 = vst [vmem:[%s3673 + $0x140] sm:$0xff] %v3694
                %v3696 = vld [vmem:[%s3672 + $0x58] sm:$0xff]
                %3697 = vst [vmem:[%s3673 + $0x148] sm:$0xff] %v3696
                %v3698 = vld [vmem:[%s3672 + $0x60] sm:$0xff]
                %3699 = vst [vmem:[%s3673 + $0x180] sm:$0xff] %v3698
                %v3700 = vld [vmem:[%s3672 + $0x68] sm:$0xff]
                %3701 = vst [vmem:[%s3673 + $0x188] sm:$0xff] %v3700
                %v3702 = vld [vmem:[%s3672 + $0x70] sm:$0xff]
                %3703 = vst [vmem:[%s3673 + $0x1c0] sm:$0xff] %v3702
                %v3704 = vld [vmem:[%s3672 + $0x78] sm:$0xff]
                %3705 = vst [vmem:[%s3673 + $0x1c8] sm:$0xff] %v3704
              $region112: #{block_forward.1} parent=106 // loop_footer
                %s3671 = sadd.s32 1, %s3667
              $region113: #{block_forward.1} parent=106 // loop_footer_branch
                %3666 = sbr.rel target = $region109
              $region114: #{block_forward.1} parent=106 // loop_exit
                _
            $region107: #{block_forward.1} parent=102 // pred_fallthru
              _
            // Predicated region
            $region115: #{block_forward.1} parent=102 // pred_check
              _
            $region116: #{block_forward.1} parent=102 // pred_check_branch
              %3707 = sbr.rel target = $region118
            $region117: #{block_forward.1} parent=102 // pred_region
              _
            $region118: #{block_forward.1} parent=102 // pred_fallthru
              _
          $region103: #{block_forward.1} parent=98 // pred_fallthru
            _
          %3708 = vnop
        $region99: #{block_forward.1} parent=66 // pred_fallthru
          _
      $region67: #{block_forward.1} parent=5 // pred_fallthru
        _
      %p3709 = scmp.le.s32.totalorder 2, %s17
      // Predicated region
      $region119: #{block_forward.1} parent=5 // pred_check
        %p3710 = pneg %p3709
      $region120: #{block_forward.1} parent=5 // pred_check_branch
        %3712 = sbr.rel (%p3710) target = $region122
      $region121: #{block_forward.1} parent=5 // pred_region
        %s3713 = ssub.s32 %s17, 2
        // Predicated region
        $region123: #{block_forward.1} parent=121 // pred_check
          %p3714 = pneg %p198
        $region124: #{block_forward.1} parent=121 // pred_check_branch
          %3716 = sbr.rel (%p3714) target = $region126
        $region125: #{block_forward.1} parent=121 // pred_region
          %s3717 = sand.u32 %s183, 1
          %s3718 = sand.u32 %s183, 1
          %s3719 = smul.addr %s3718, 128
          %s3720 = scalar_lea.vmem [#allocation13], %s3719
        $region126: #{block_forward.1} parent=121 // pred_fallthru
          _
      $region122: #{block_forward.1} parent=5 // pred_fallthru
        _
    $region6: #{block_forward.1} parent=1 // loop_footer
      %s21 = sadd.s32 1, %s17
    $region7: #{block_forward.1} parent=1 // loop_footer_branch
      %16 = sbr.rel target = $region3
    $region8: #{block_forward.1} parent=1 // loop_exit
      _
    %3721 = vsyncpa [#allocation4], 1
    %s3722 = scalar_lea.sflag [#allocation4], 1
    %3723 = vsyncpa %s3722, 1
    %3724 = vsyncpa [#allocation6], 1
    %3725 = vsyncpa [#allocation9], 1
    %3726 = vsyncpa [#allocation12], 1

</llo_original>
